<compile_context>
chip_gen: v5e
topology: v5e:2x2
jax: 0.10.0
libtpu: 0.0.40
codegen_flags: <defaults>
</compile_context>

<pallas_src>
import numpy as np
import jax
import jax.numpy as jnp
from jax.experimental import pallas as pl
from jax.experimental.pallas import tpu as pltpu


LANE_PITCH = 256  # per-image lane pitch (196 = 14*14 spatial positions, padded)
# lane offset of conv2 tap t = 3*ky + kx  ->  14*(ky-1) + (kx-1)
TAP_OFFS = [(t // 3 - 1) * 14 + (t % 3 - 1) for t in range(9)]


# ----------------------------------------------------------------------------
# Kernel 1: conv1 + relu + pool1 + conv2 + relu + pool2  (G images / grid step)
# ----------------------------------------------------------------------------
def _make_conv_kernel(G):
    W = G * LANE_PITCH
    f32, bf16 = jnp.float32, jnp.bfloat16

    def kernel(p_ref, w1_ref, b1_ref, mask_ref, w2_ref, b2_ref, sel_ref,
               out_ref, taps_ref):
        # ---- conv1 + relu + 2x2/2 max-pool ---------------------------------
        # p_ref[0] is (9, 4W): im2col taps on sublanes, the 4 pooling corners
        # (each G lane-packed images wide) on lanes.  One bf16 MXU dot, then an
        # elementwise max over the 4 aligned corner slabs (bias/relu commute).
        c1 = jnp.dot(w1_ref[...], p_ref[0], preferred_element_type=f32)  # (32, 4W)
        m = jnp.maximum(jnp.maximum(c1[:, 0 * W:1 * W], c1[:, 1 * W:2 * W]),
                        jnp.maximum(c1[:, 2 * W:3 * W], c1[:, 3 * W:4 * W]))
        pooled1 = jnp.maximum(m + b1_ref[...], 0.0)                       # (32, W)

        # ---- conv2 + relu ----------------------------------------------------
        # Each 3x3 tap = lane roll (XLU) + static edge mask (VPU); the 9 shifted
        # slabs are stacked into a (288, W) bf16 scratch (32-row aligned blocks)
        # so the contraction is a single (50,288)x(288,W) MXU dot.
        for t in range(9):
            sh = pltpu.roll(pooled1, shift=(-TAP_OFFS[t]) % W, axis=1)
            sh = sh * mask_ref[t:t + 1, :]
            taps_ref[pl.ds(32 * t, 32), :] = sh.astype(bf16)
        y2 = jnp.dot(w2_ref[...], taps_ref[...], preferred_element_type=f32)
        y2 = jnp.maximum(y2 + b2_ref[...], 0.0)                           # (50, W)

        # ---- 2x2/2 max-pool + lane compaction -------------------------------
        # roll-max builds the 2x2 max at even (h, w) positions; a single {0,1}
        # (256,128) selector dot per image compacts 49 valid lanes into a
        # lane-dense 128-wide output block (lanes 49..127 are exact zeros).
        t1 = jnp.maximum(y2, pltpu.roll(y2, shift=(-1) % W, axis=1))
        u = jnp.maximum(t1, pltpu.roll(t1, shift=(-14) % W, axis=1))      # (50, W)
        for g in range(G):
            seg = u[:, g * LANE_PITCH:(g + 1) * LANE_PITCH].astype(bf16)  # (50,256)
            pc = jnp.dot(seg, sel_ref[...], preferred_element_type=f32)   # (50,128)
            out_ref[0, g] = pc.astype(bf16)

    return kernel


# ----------------------------------------------------------------------------
# Kernel 2: fc1 (+relu) + fc2 for the whole batch at once (full-M MXU use)
# ----------------------------------------------------------------------------
def _fc_kernel(x_ref, w1_ref, b1_ref, w2_ref, b2_ref, out_ref):
    f32 = jnp.float32
    h = jnp.dot(x_ref[...], w1_ref[...], preferred_element_type=f32) + b1_ref[...]
    h = jnp.maximum(h, 0.0)
    out_ref[...] = (jnp.dot(h.astype(jnp.bfloat16), w2_ref[...],
                            preferred_element_type=f32) + b2_ref[...])


# ----------------------------------------------------------------------------
# Host-side one-time constant preparation
# ----------------------------------------------------------------------------
def prepare_constants(params, G):
    bf16 = jnp.bfloat16
    c = {}

    # conv1 weight/bias padded 30 -> 32 output channels (pad rows exact zero)
    w1 = np.zeros((32, 9), np.float32)
    w1[:30] = np.asarray(params["conv1_w"], np.float32).reshape(30, 9)
    c["w1"] = jnp.asarray(w1).astype(bf16)
    b1 = np.zeros((32, 1), np.float32)
    b1[:30, 0] = np.asarray(params["conv1_b"], np.float32)
    c["b1"] = jnp.asarray(b1)

    # per-tap validity masks (zero the rows/cols rolled in from outside the
    # 14x14 image and the 196->256 lane padding), tiled to G images
    m = np.zeros((9, LANE_PITCH), np.float32)
    for t in range(9):
        dy, dx = t // 3 - 1, t % 3 - 1
        for j in range(196):
            hj, wj = j // 14, j % 14
            if 0 <= hj + dy < 14 and 0 <= wj + dx < 14:
                m[t, j] = 1.0
    c["masks"] = jnp.asarray(np.tile(m, (1, G)))

    # conv2 weights packed as (50, 9*32) to match the stacked-taps scratch
    w2 = np.zeros((50, 288), np.float32)
    w2src = np.asarray(params["conv2_w"], np.float32)                  # (50,30,3,3)
    for t in range(9):
        w2[:, 32 * t:32 * t + 30] = w2src[:, :, t // 3, t % 3]
    c["w2"] = jnp.asarray(w2).astype(bf16)
    c["b2"] = jnp.asarray(np.asarray(params["conv2_b"], np.float32).reshape(50, 1))

    # pool2 lane-compaction selector: picks even-row/even-col positions into
    # 49 lanes, zero-padded to 128 so the output store is lane dense
    sel = np.zeros((LANE_PITCH, 128), np.float32)
    for q in range(7):
        for p_ in range(7):
            sel[28 * q + 2 * p_, 7 * q + p_] = 1.0
    c["sel"] = jnp.asarray(sel).astype(bf16)

    # fc1 weight re-indexed to the (c*128 + k) layout produced by the conv kernel
    wfc1 = np.asarray(params["fc1_w"], np.float32).reshape(100, 50, 49)
    w1fc = np.zeros((50, 128, 100), np.float32)
    w1fc[:, :49, :] = np.transpose(wfc1, (1, 2, 0))
    c["w1fc"] = jnp.asarray(w1fc.reshape(50 * 128, 100)).astype(bf16)
    c["b1fc"] = jnp.asarray(np.asarray(params["fc1_b"], np.float32).reshape(1, 100))

    # fc2 zero-padded to 128 output lanes (wrapper slices [:, :10])
    w2fc = np.zeros((100, 128), np.float32)
    w2fc[:, :10] = np.asarray(params["fc2_w"], np.float32).T
    c["w2fc"] = jnp.asarray(w2fc).astype(bf16)
    b2fc = np.zeros((1, 128), np.float32)
    b2fc[0, :10] = np.asarray(params["fc2_b"], np.float32)
    c["b2fc"] = jnp.asarray(b2fc)
    return c


def _build_patches(x_nchw, G):
    """(B,1,28,28) -> conv1 im2col (B//G, 9, 4*G*256) bf16.

    Lane index = corner*(G*256) + image_in_group*256 + (h*14 + w)."""
    B = x_nchw.shape[0]
    xp = jnp.pad(x_nchw[:, 0], ((0, 0), (1, 1), (1, 1)))               # (B,30,30)
    corners = []
    for k4 in range(4):
        dr, dc = k4 // 2, k4 % 2
        taps = []
        for t in range(9):
            ky, kx = t // 3, t % 3
            sl = xp[:, dr + ky: dr + ky + 28: 2, dc + kx: dc + kx + 28: 2]
            taps.append(sl.reshape(B, 1, 196))
        corner = jnp.concatenate(taps, axis=1)                          # (B,9,196)
        corners.append(jnp.pad(corner, ((0, 0), (0, 0), (0, 60))))      # (B,9,256)
    p = jnp.concatenate(corners, axis=2)                                # (B,9,1024)
    p = p.reshape(B // G, G, 9, 4, 256).transpose(0, 2, 3, 1, 4)
    return p.reshape(B // G, 9, 4 * G * 256).astype(jnp.bfloat16)


# ----------------------------------------------------------------------------
# Forward pass
# ----------------------------------------------------------------------------
def cnn_forward(x_nchw, consts, G):
    B = x_nchw.shape[0]
    assert B % G == 0
    W = G * LANE_PITCH
    p = _build_patches(x_nchw, G)

    def cspec(shape):
        nd = len(shape)
        return pl.BlockSpec(shape, lambda i, _nd=nd: (0,) * _nd)

    pooled2 = pl.pallas_call(
        _make_conv_kernel(G),
        out_shape=jax.ShapeDtypeStruct((B // G, G, 50, 128), jnp.bfloat16),
        grid=(B // G,),
        in_specs=[
            pl.BlockSpec((1, 9, 4 * W), lambda i: (i, 0, 0)),
            cspec((32, 9)),
            cspec((32, 1)),
            cspec((9, W)),
            cspec((50, 288)),
            cspec((50, 1)),
            cspec((256, 128)),
        ],
        out_specs=pl.BlockSpec((1, G, 50, 128), lambda i: (i, 0, 0, 0)),
        scratch_shapes=[pltpu.VMEM((288, W), jnp.bfloat16)],
        compiler_params=pltpu.CompilerParams(dimension_semantics=("parallel",)),
    )(p, consts["w1"], consts["b1"], consts["masks"], consts["w2"],
      consts["b2"], consts["sel"])

    # free (contiguous) reshape to torch's c*49+k flatten order, zero-padded to
    # 128 lanes per channel; the fc1 weight is host-permuted to match
    x2 = pooled2.reshape(B, 50 * 128)

    logits = pl.pallas_call(
        _fc_kernel,
        out_shape=jax.ShapeDtypeStruct((B, 128), jnp.float32),
        grid=(1,),
        in_specs=[
            pl.BlockSpec((B, 50 * 128), lambda i: (0, 0)),
            cspec((50 * 128, 100)),
            cspec((1, 100)),
            cspec((100, 128)),
            cspec((1, 128)),
        ],
        out_specs=pl.BlockSpec((B, 128), lambda i: (0, 0)),
    )(x2, consts["w1fc"], consts["b1fc"], consts["w2fc"], consts["b2fc"])
    return logits[:, :10]


# ----------------------------------------------------------------------------
# Parameters (PyTorch conventions) and pure-XLA f32 reference
# ----------------------------------------------------------------------------
def init_params(key):
    ks = jax.random.split(key, 8)
    s = 0.1
    return {
        "conv1_w": jax.random.normal(ks[0], (30, 1, 3, 3), jnp.float32) * s,
        "conv1_b": jax.random.normal(ks[1], (30,), jnp.float32) * s,
        "conv2_w": jax.random.normal(ks[2], (50, 30, 3, 3), jnp.float32) * s,
        "conv2_b": jax.random.normal(ks[3], (50,), jnp.float32) * s,
        "fc1_w": jax.random.normal(ks[4], (100, 50 * 7 * 7), jnp.float32) * (s / 10),
        "fc1_b": jax.random.normal(ks[5], (100,), jnp.float32) * s,
        "fc2_w": jax.random.normal(ks[6], (10, 100), jnp.float32) * s,
        "fc2_b": jax.random.normal(ks[7], (10,), jnp.float32) * s,
    }


def reference_forward(x, p):
    def conv(x, w, b):
        y = jax.lax.conv_general_dilated(
            x, w, window_strides=(1, 1), padding=((1, 1), (1, 1)),
            dimension_numbers=("NCHW", "OIHW", "NCHW"))
        return y + b[None, :, None, None]

    def pool(x):
        return jax.lax.reduce_window(
            x, -jnp.inf, jax.lax.max, (1, 1, 2, 2), (1, 1, 2, 2), "VALID")

    x = pool(jax.nn.relu(conv(x, p["conv1_w"], p["conv1_b"])))
    x = pool(jax.nn.relu(conv(x, p["conv2_w"], p["conv2_b"])))
    x = x.reshape(x.shape[0], -1)
    x = jax.nn.relu(x @ p["fc1_w"].T + p["fc1_b"])
    return x @ p["fc2_w"].T + p["fc2_b"]


if __name__ == "__main__":
    key = jax.random.PRNGKey(0)
    pkey, xkey = jax.random.split(key)
    params = init_params(pkey)

    # fc1 expects 50*7*7 -> 28x28 single-channel images.  B=4 with G=2 images
    # lane-packed per grid step exercises the batching path and keeps two
    # parallel grid steps for v7x's two TensorCores.
    B, G = 4, 2
    x = jax.random.normal(xkey, (B, 1, 28, 28), jnp.float32)

    consts = prepare_constants(params, G=G)
    fwd = jax.jit(lambda inp: cnn_forward(inp, consts, G))
    out = jax.block_until_ready(fwd(x))
    assert out.shape == (B, 10)

    ref = reference_forward(x, params)
    err = float(jnp.max(jnp.abs(out - ref)))
    # bf16 MXU operands (f32 accumulation) -> a few e-3 absolute error on ~0.3
    # magnitude logits; structural bugs would be >=0.1.
    assert jnp.allclose(out, ref, rtol=4e-2, atol=4e-2), err
    print("KERNEL_OK")
</pallas_src>

<mosaic_0001>
module attributes {stable_mosaic.version = 11 : i64} {
  func.func @kernel(%arg0: i32, %arg1: memref<1x9x2048xbf16, #tpu.memory_space<vmem>>, %arg2: memref<32x9xbf16, #tpu.memory_space<vmem>>, %arg3: memref<32x1xf32, #tpu.memory_space<vmem>>, %arg4: memref<9x512xf32, #tpu.memory_space<vmem>>, %arg5: memref<50x288xbf16, #tpu.memory_space<vmem>>, %arg6: memref<50x1xf32, #tpu.memory_space<vmem>>, %arg7: memref<256x128xbf16, #tpu.memory_space<vmem>>, %arg8: memref<1x2x50x128xbf16, #tpu.memory_space<vmem>>, %arg9: memref<288x512xbf16, #tpu.memory_space<vmem>>) attributes {dimension_semantics = [#tpu.dimension_semantics<parallel>], iteration_bounds = array<i64: 2>, scalar_prefetch = 0 : i64, scratch_operands = 1 : i64, tpu.core_type = #tpu.core_type<tc>, window_params = [{transform_indices = @transform_0, window_bounds = array<i64: 1, 9, 2048>}, {pipeline_mode = #tpu.pipeline_mode<synchronous>, transform_indices = @transform_1, window_bounds = array<i64: 32, 9>}, {pipeline_mode = #tpu.pipeline_mode<synchronous>, transform_indices = @transform_2, window_bounds = array<i64: 32, 1>}, {pipeline_mode = #tpu.pipeline_mode<synchronous>, transform_indices = @transform_3, window_bounds = array<i64: 9, 512>}, {pipeline_mode = #tpu.pipeline_mode<synchronous>, transform_indices = @transform_4, window_bounds = array<i64: 50, 288>}, {pipeline_mode = #tpu.pipeline_mode<synchronous>, transform_indices = @transform_5, window_bounds = array<i64: 50, 1>}, {pipeline_mode = #tpu.pipeline_mode<synchronous>, transform_indices = @transform_6, window_bounds = array<i64: 256, 128>}, {transform_indices = @transform_7, window_bounds = array<i64: 1, 2, 50, 128>}]} {
    %c0 = arith.constant 0 : index
    %c0_0 = arith.constant 0 : index
    %0 = vector.load %arg2[%c0, %c0_0] : memref<32x9xbf16, #tpu.memory_space<vmem>>, vector<32x9xbf16>
    %c0_1 = arith.constant 0 : index
    %c0_2 = arith.constant 0 : index
    %c0_3 = arith.constant 0 : index
    %1 = vector.load %arg1[%c0_1, %c0_2, %c0_3] : memref<1x9x2048xbf16, #tpu.memory_space<vmem>>, vector<1x9x2048xbf16>
    %2 = vector.shape_cast %1 : vector<1x9x2048xbf16> to vector<9x2048xbf16>
    %cst = arith.constant dense<0.000000e+00> : vector<32x2048xf32>
    %3 = tpu.matmul %0, %2, %cst {dimension_numbers = #tpu.dot_dimension_numbers<[1], [0], [0], [1], [0, 0, 1, 1], [], []>} : vector<32x9xbf16>, vector<9x2048xbf16>, vector<32x2048xf32> -> vector<32x2048xf32>
    %4 = vector.extract_strided_slice %3 {offsets = [0, 0], sizes = [32, 512], strides = [1, 1]} : vector<32x2048xf32> to vector<32x512xf32>
    %5 = vector.extract_strided_slice %3 {offsets = [0, 512], sizes = [32, 512], strides = [1, 1]} : vector<32x2048xf32> to vector<32x512xf32>
    %6 = arith.maximumf %4, %5 : vector<32x512xf32>
    %7 = vector.extract_strided_slice %3 {offsets = [0, 1024], sizes = [32, 512], strides = [1, 1]} : vector<32x2048xf32> to vector<32x512xf32>
    %8 = vector.extract_strided_slice %3 {offsets = [0, 1536], sizes = [32, 512], strides = [1, 1]} : vector<32x2048xf32> to vector<32x512xf32>
    %9 = arith.maximumf %7, %8 : vector<32x512xf32>
    %10 = arith.maximumf %6, %9 : vector<32x512xf32>
    %c0_4 = arith.constant 0 : index
    %c0_5 = arith.constant 0 : index
    %11 = vector.load %arg3[%c0_4, %c0_5] : memref<32x1xf32, #tpu.memory_space<vmem>>, vector<32x1xf32>
    %12 = vector.broadcast %11 : vector<32x1xf32> to vector<32x512xf32>
    %13 = arith.addf %10, %12 : vector<32x512xf32>
    %cst_6 = arith.constant 0.000000e+00 : f32
    %14 = vector.broadcast %cst_6 : f32 to vector<32x512xf32>
    %15 = arith.maximumf %13, %14 : vector<32x512xf32>
    %c15_i32 = arith.constant 15 : i32
    %16 = tpu.dynamic_rotate %15 by %c15_i32 dim 1 : vector<32x512xf32>, i32 -> vector<32x512xf32>
    %c0_7 = arith.constant 0 : index
    %c0_8 = arith.constant 0 : index
    %17 = vector.load %arg4[%c0_7, %c0_8] : memref<9x512xf32, #tpu.memory_space<vmem>>, vector<1x512xf32>
    %18 = vector.broadcast %17 : vector<1x512xf32> to vector<32x512xf32>
    %19 = arith.mulf %16, %18 : vector<32x512xf32>
    %20 = arith.truncf %19 : vector<32x512xf32> to vector<32x512xbf16>
    %c0_9 = arith.constant 0 : index
    %c0_10 = arith.constant 0 : index
    %21 = vector.load %arg9[%c0_9, %c0_10] : memref<288x512xbf16, #tpu.memory_space<vmem>>, vector<32x512xbf16>
    tpu.vector_store %arg9[%c0_9, %c0_10], %20 {strides = array<i32>} : memref<288x512xbf16, #tpu.memory_space<vmem>>, vector<32x512xbf16>,
    %c14_i32 = arith.constant 14 : i32
    %22 = tpu.dynamic_rotate %15 by %c14_i32 dim 1 : vector<32x512xf32>, i32 -> vector<32x512xf32>
    %c1 = arith.constant 1 : index
    %c0_11 = arith.constant 0 : index
    %23 = vector.load %arg4[%c1, %c0_11] : memref<9x512xf32, #tpu.memory_space<vmem>>, vector<1x512xf32>
    %24 = vector.broadcast %23 : vector<1x512xf32> to vector<32x512xf32>
    %25 = arith.mulf %22, %24 : vector<32x512xf32>
    %26 = arith.truncf %25 : vector<32x512xf32> to vector<32x512xbf16>
    %c32 = arith.constant 32 : index
    %c0_12 = arith.constant 0 : index
    %27 = vector.load %arg9[%c32, %c0_12] : memref<288x512xbf16, #tpu.memory_space<vmem>>, vector<32x512xbf16>
    tpu.vector_store %arg9[%c32, %c0_12], %26 {strides = array<i32>} : memref<288x512xbf16, #tpu.memory_space<vmem>>, vector<32x512xbf16>,
    %c13_i32 = arith.constant 13 : i32
    %28 = tpu.dynamic_rotate %15 by %c13_i32 dim 1 : vector<32x512xf32>, i32 -> vector<32x512xf32>
    %c2 = arith.constant 2 : index
    %c0_13 = arith.constant 0 : index
    %29 = vector.load %arg4[%c2, %c0_13] : memref<9x512xf32, #tpu.memory_space<vmem>>, vector<1x512xf32>
    %30 = vector.broadcast %29 : vector<1x512xf32> to vector<32x512xf32>
    %31 = arith.mulf %28, %30 : vector<32x512xf32>
    %32 = arith.truncf %31 : vector<32x512xf32> to vector<32x512xbf16>
    %c64 = arith.constant 64 : index
    %c0_14 = arith.constant 0 : index
    %33 = vector.load %arg9[%c64, %c0_14] : memref<288x512xbf16, #tpu.memory_space<vmem>>, vector<32x512xbf16>
    tpu.vector_store %arg9[%c64, %c0_14], %32 {strides = array<i32>} : memref<288x512xbf16, #tpu.memory_space<vmem>>, vector<32x512xbf16>,
    %c1_i32 = arith.constant 1 : i32
    %34 = tpu.dynamic_rotate %15 by %c1_i32 dim 1 : vector<32x512xf32>, i32 -> vector<32x512xf32>
    %c3 = arith.constant 3 : index
    %c0_15 = arith.constant 0 : index
    %35 = vector.load %arg4[%c3, %c0_15] : memref<9x512xf32, #tpu.memory_space<vmem>>, vector<1x512xf32>
    %36 = vector.broadcast %35 : vector<1x512xf32> to vector<32x512xf32>
    %37 = arith.mulf %34, %36 : vector<32x512xf32>
    %38 = arith.truncf %37 : vector<32x512xf32> to vector<32x512xbf16>
    %c96 = arith.constant 96 : index
    %c0_16 = arith.constant 0 : index
    %39 = vector.load %arg9[%c96, %c0_16] : memref<288x512xbf16, #tpu.memory_space<vmem>>, vector<32x512xbf16>
    tpu.vector_store %arg9[%c96, %c0_16], %38 {strides = array<i32>} : memref<288x512xbf16, #tpu.memory_space<vmem>>, vector<32x512xbf16>,
    %c0_i32 = arith.constant 0 : i32
    %40 = tpu.dynamic_rotate %15 by %c0_i32 dim 1 : vector<32x512xf32>, i32 -> vector<32x512xf32>
    %c4 = arith.constant 4 : index
    %c0_17 = arith.constant 0 : index
    %41 = vector.load %arg4[%c4, %c0_17] : memref<9x512xf32, #tpu.memory_space<vmem>>, vector<1x512xf32>
    %42 = vector.broadcast %41 : vector<1x512xf32> to vector<32x512xf32>
    %43 = arith.mulf %40, %42 : vector<32x512xf32>
    %44 = arith.truncf %43 : vector<32x512xf32> to vector<32x512xbf16>
    %c128 = arith.constant 128 : index
    %c0_18 = arith.constant 0 : index
    %45 = vector.load %arg9[%c128, %c0_18] : memref<288x512xbf16, #tpu.memory_space<vmem>>, vector<32x512xbf16>
    tpu.vector_store %arg9[%c128, %c0_18], %44 {strides = array<i32>} : memref<288x512xbf16, #tpu.memory_space<vmem>>, vector<32x512xbf16>,
    %c511_i32 = arith.constant 511 : i32
    %46 = tpu.dynamic_rotate %15 by %c511_i32 dim 1 : vector<32x512xf32>, i32 -> vector<32x512xf32>
    %c5 = arith.constant 5 : index
    %c0_19 = arith.constant 0 : index
    %47 = vector.load %arg4[%c5, %c0_19] : memref<9x512xf32, #tpu.memory_space<vmem>>, vector<1x512xf32>
    %48 = vector.broadcast %47 : vector<1x512xf32> to vector<32x512xf32>
    %49 = arith.mulf %46, %48 : vector<32x512xf32>
    %50 = arith.truncf %49 : vector<32x512xf32> to vector<32x512xbf16>
    %c160 = arith.constant 160 : index
    %c0_20 = arith.constant 0 : index
    %51 = vector.load %arg9[%c160, %c0_20] : memref<288x512xbf16, #tpu.memory_space<vmem>>, vector<32x512xbf16>
    tpu.vector_store %arg9[%c160, %c0_20], %50 {strides = array<i32>} : memref<288x512xbf16, #tpu.memory_space<vmem>>, vector<32x512xbf16>,
    %c499_i32 = arith.constant 499 : i32
    %52 = tpu.dynamic_rotate %15 by %c499_i32 dim 1 : vector<32x512xf32>, i32 -> vector<32x512xf32>
    %c6 = arith.constant 6 : index
    %c0_21 = arith.constant 0 : index
    %53 = vector.load %arg4[%c6, %c0_21] : memref<9x512xf32, #tpu.memory_space<vmem>>, vector<1x512xf32>
    %54 = vector.broadcast %53 : vector<1x512xf32> to vector<32x512xf32>
    %55 = arith.mulf %52, %54 : vector<32x512xf32>
    %56 = arith.truncf %55 : vector<32x512xf32> to vector<32x512xbf16>
    %c192 = arith.constant 192 : index
    %c0_22 = arith.constant 0 : index
    %57 = vector.load %arg9[%c192, %c0_22] : memref<288x512xbf16, #tpu.memory_space<vmem>>, vector<32x512xbf16>
    tpu.vector_store %arg9[%c192, %c0_22], %56 {strides = array<i32>} : memref<288x512xbf16, #tpu.memory_space<vmem>>, vector<32x512xbf16>,
    %c498_i32 = arith.constant 498 : i32
    %58 = tpu.dynamic_rotate %15 by %c498_i32 dim 1 : vector<32x512xf32>, i32 -> vector<32x512xf32>
    %c7 = arith.constant 7 : index
    %c0_23 = arith.constant 0 : index
    %59 = vector.load %arg4[%c7, %c0_23] : memref<9x512xf32, #tpu.memory_space<vmem>>, vector<1x512xf32>
    %60 = vector.broadcast %59 : vector<1x512xf32> to vector<32x512xf32>
    %61 = arith.mulf %58, %60 : vector<32x512xf32>
    %62 = arith.truncf %61 : vector<32x512xf32> to vector<32x512xbf16>
    %c224 = arith.constant 224 : index
    %c0_24 = arith.constant 0 : index
    %63 = vector.load %arg9[%c224, %c0_24] : memref<288x512xbf16, #tpu.memory_space<vmem>>, vector<32x512xbf16>
    tpu.vector_store %arg9[%c224, %c0_24], %62 {strides = array<i32>} : memref<288x512xbf16, #tpu.memory_space<vmem>>, vector<32x512xbf16>,
    %c497_i32 = arith.constant 497 : i32
    %64 = tpu.dynamic_rotate %15 by %c497_i32 dim 1 : vector<32x512xf32>, i32 -> vector<32x512xf32>
    %c8 = arith.constant 8 : index
    %c0_25 = arith.constant 0 : index
    %65 = vector.load %arg4[%c8, %c0_25] : memref<9x512xf32, #tpu.memory_space<vmem>>, vector<1x512xf32>
    %66 = vector.broadcast %65 : vector<1x512xf32> to vector<32x512xf32>
    %67 = arith.mulf %64, %66 : vector<32x512xf32>
    %68 = arith.truncf %67 : vector<32x512xf32> to vector<32x512xbf16>
    %c256 = arith.constant 256 : index
    %c0_26 = arith.constant 0 : index
    %69 = vector.load %arg9[%c256, %c0_26] : memref<288x512xbf16, #tpu.memory_space<vmem>>, vector<32x512xbf16>
    tpu.vector_store %arg9[%c256, %c0_26], %68 {strides = array<i32>} : memref<288x512xbf16, #tpu.memory_space<vmem>>, vector<32x512xbf16>,
    %c0_27 = arith.constant 0 : index
    %c0_28 = arith.constant 0 : index
    %70 = vector.load %arg5[%c0_27, %c0_28] : memref<50x288xbf16, #tpu.memory_space<vmem>>, vector<50x288xbf16>
    %c0_29 = arith.constant 0 : index
    %c0_30 = arith.constant 0 : index
    %71 = vector.load %arg9[%c0_29, %c0_30] : memref<288x512xbf16, #tpu.memory_space<vmem>>, vector<288x512xbf16>
    %cst_31 = arith.constant dense<0.000000e+00> : vector<50x512xf32>
    %72 = tpu.matmul %70, %71, %cst_31 {dimension_numbers = #tpu.dot_dimension_numbers<[1], [0], [0], [1], [0, 0, 1, 1], [], []>} : vector<50x288xbf16>, vector<288x512xbf16>, vector<50x512xf32> -> vector<50x512xf32>
    %c0_32 = arith.constant 0 : index
    %c0_33 = arith.constant 0 : index
    %73 = vector.load %arg6[%c0_32, %c0_33] : memref<50x1xf32, #tpu.memory_space<vmem>>, vector<50x1xf32>
    %74 = vector.broadcast %73 : vector<50x1xf32> to vector<50x512xf32>
    %75 = arith.addf %72, %74 : vector<50x512xf32>
    %cst_34 = arith.constant 0.000000e+00 : f32
    %76 = vector.broadcast %cst_34 : f32 to vector<50x512xf32>
    %77 = arith.maximumf %75, %76 : vector<50x512xf32>
    %c511_i32_35 = arith.constant 511 : i32
    %78 = tpu.dynamic_rotate %77 by %c511_i32_35 dim 1 : vector<50x512xf32>, i32 -> vector<50x512xf32>
    %79 = arith.maximumf %77, %78 : vector<50x512xf32>
    %c498_i32_36 = arith.constant 498 : i32
    %80 = tpu.dynamic_rotate %79 by %c498_i32_36 dim 1 : vector<50x512xf32>, i32 -> vector<50x512xf32>
    %81 = arith.maximumf %79, %80 : vector<50x512xf32>
    %82 = vector.extract_strided_slice %81 {offsets = [0, 0], sizes = [50, 256], strides = [1, 1]} : vector<50x512xf32> to vector<50x256xf32>
    %83 = arith.truncf %82 : vector<50x256xf32> to vector<50x256xbf16>
    %c0_37 = arith.constant 0 : index
    %c0_38 = arith.constant 0 : index
    %84 = vector.load %arg7[%c0_37, %c0_38] : memref<256x128xbf16, #tpu.memory_space<vmem>>, vector<256x128xbf16>
    %cst_39 = arith.constant dense<0.000000e+00> : vector<50x128xf32>
    %85 = tpu.matmul %83, %84, %cst_39 {dimension_numbers = #tpu.dot_dimension_numbers<[1], [0], [0], [1], [0, 0, 1, 1], [], []>} : vector<50x256xbf16>, vector<256x128xbf16>, vector<50x128xf32> -> vector<50x128xf32>
    %86 = arith.truncf %85 : vector<50x128xf32> to vector<50x128xbf16>
    %c0_40 = arith.constant 0 : index
    %c0_41 = arith.constant 0 : index
    %c0_42 = arith.constant 0 : index
    %c0_43 = arith.constant 0 : index
    %87 = vector.load %arg8[%c0_40, %c0_41, %c0_42, %c0_43] : memref<1x2x50x128xbf16, #tpu.memory_space<vmem>>, vector<1x1x50x128xbf16>
    %88 = vector.shape_cast %87 : vector<1x1x50x128xbf16> to vector<50x128xbf16>
    %89 = vector.shape_cast %86 : vector<50x128xbf16> to vector<1x1x50x128xbf16>
    tpu.vector_store %arg8[%c0_40, %c0_41, %c0_42, %c0_43], %89 {strides = array<i32>} : memref<1x2x50x128xbf16, #tpu.memory_space<vmem>>, vector<1x1x50x128xbf16>,
    %90 = vector.extract_strided_slice %81 {offsets = [0, 256], sizes = [50, 256], strides = [1, 1]} : vector<50x512xf32> to vector<50x256xf32>
    %91 = arith.truncf %90 : vector<50x256xf32> to vector<50x256xbf16>
    %c0_44 = arith.constant 0 : index
    %c0_45 = arith.constant 0 : index
    %92 = vector.load %arg7[%c0_44, %c0_45] : memref<256x128xbf16, #tpu.memory_space<vmem>>, vector<256x128xbf16>
    %cst_46 = arith.constant dense<0.000000e+00> : vector<50x128xf32>
    %93 = tpu.matmul %91, %92, %cst_46 {dimension_numbers = #tpu.dot_dimension_numbers<[1], [0], [0], [1], [0, 0, 1, 1], [], []>} : vector<50x256xbf16>, vector<256x128xbf16>, vector<50x128xf32> -> vector<50x128xf32>
    %94 = arith.truncf %93 : vector<50x128xf32> to vector<50x128xbf16>
    %c0_47 = arith.constant 0 : index
    %c1_48 = arith.constant 1 : index
    %c0_49 = arith.constant 0 : index
    %c0_50 = arith.constant 0 : index
    %95 = vector.load %arg8[%c0_47, %c1_48, %c0_49, %c0_50] : memref<1x2x50x128xbf16, #tpu.memory_space<vmem>>, vector<1x1x50x128xbf16>
    %96 = vector.shape_cast %95 : vector<1x1x50x128xbf16> to vector<50x128xbf16>
    %97 = vector.shape_cast %94 : vector<50x128xbf16> to vector<1x1x50x128xbf16>
    tpu.vector_store %arg8[%c0_47, %c1_48, %c0_49, %c0_50], %97 {strides = array<i32>} : memref<1x2x50x128xbf16, #tpu.memory_space<vmem>>, vector<1x1x50x128xbf16>,
    return
  }
  func.func @transform_0(%arg0: i32) -> (i32, i32, i32) {
    %c0_i32 = arith.constant 0 : i32
    %c0_i32_0 = arith.constant 0 : i32
    %c0_i32_1 = arith.constant 0 : i32
    return %arg0, %c0_i32, %c0_i32_0 : i32, i32, i32
  }
  func.func @transform_1(%arg0: i32) -> (i32, i32) {
    %c0_i32 = arith.constant 0 : i32
    %c0_i32_0 = arith.constant 0 : i32
    %c0_i32_1 = arith.constant 0 : i32
    return %c0_i32, %c0_i32_0 : i32, i32
  }
  func.func @transform_2(%arg0: i32) -> (i32, i32) {
    %c0_i32 = arith.constant 0 : i32
    %c0_i32_0 = arith.constant 0 : i32
    %c0_i32_1 = arith.constant 0 : i32
    return %c0_i32, %c0_i32_0 : i32, i32
  }
  func.func @transform_3(%arg0: i32) -> (i32, i32) {
    %c0_i32 = arith.constant 0 : i32
    %c0_i32_0 = arith.constant 0 : i32
    %c0_i32_1 = arith.constant 0 : i32
    return %c0_i32, %c0_i32_0 : i32, i32
  }
  func.func @transform_4(%arg0: i32) -> (i32, i32) {
    %c0_i32 = arith.constant 0 : i32
    %c0_i32_0 = arith.constant 0 : i32
    %c0_i32_1 = arith.constant 0 : i32
    return %c0_i32, %c0_i32_0 : i32, i32
  }
  func.func @transform_5(%arg0: i32) -> (i32, i32) {
    %c0_i32 = arith.constant 0 : i32
    %c0_i32_0 = arith.constant 0 : i32
    %c0_i32_1 = arith.constant 0 : i32
    return %c0_i32, %c0_i32_0 : i32, i32
  }
  func.func @transform_6(%arg0: i32) -> (i32, i32) {
    %c0_i32 = arith.constant 0 : i32
    %c0_i32_0 = arith.constant 0 : i32
    %c0_i32_1 = arith.constant 0 : i32
    return %c0_i32, %c0_i32_0 : i32, i32
  }
  func.func @transform_7(%arg0: i32) -> (i32, i32, i32, i32) {
    %c0_i32 = arith.constant 0 : i32
    %c0_i32_0 = arith.constant 0 : i32
    %c0_i32_1 = arith.constant 0 : i32
    %c0_i32_2 = arith.constant 0 : i32
    return %arg0, %c0_i32, %c0_i32_0, %c0_i32_1 : i32, i32, i32, i32
  }
}

module attributes {stable_mosaic.version = 11 : i64} {
  func.func @_fc_kernel(%arg0: i32, %arg1: memref<4x6400xbf16, #tpu.memory_space<vmem>>, %arg2: memref<6400x100xbf16, #tpu.memory_space<vmem>>, %arg3: memref<1x100xf32, #tpu.memory_space<vmem>>, %arg4: memref<100x128xbf16, #tpu.memory_space<vmem>>, %arg5: memref<1x128xf32, #tpu.memory_space<vmem>>, %arg6: memref<4x128xf32, #tpu.memory_space<vmem>>) attributes {dimension_semantics = [#tpu.dimension_semantics<arbitrary>], iteration_bounds = array<i64: 1>, scalar_prefetch = 0 : i64, scratch_operands = 0 : i64, tpu.core_type = #tpu.core_type<tc>, window_params = [{pipeline_mode = #tpu.pipeline_mode<synchronous>, transform_indices = @transform_0, window_bounds = array<i64: 4, 6400>}, {pipeline_mode = #tpu.pipeline_mode<synchronous>, transform_indices = @transform_1, window_bounds = array<i64: 6400, 100>}, {pipeline_mode = #tpu.pipeline_mode<synchronous>, transform_indices = @transform_2, window_bounds = array<i64: 1, 100>}, {pipeline_mode = #tpu.pipeline_mode<synchronous>, transform_indices = @transform_3, window_bounds = array<i64: 100, 128>}, {pipeline_mode = #tpu.pipeline_mode<synchronous>, transform_indices = @transform_4, window_bounds = array<i64: 1, 128>}, {pipeline_mode = #tpu.pipeline_mode<synchronous>, transform_indices = @transform_5, window_bounds = array<i64: 4, 128>}]} {
    %c0 = arith.constant 0 : index
    %c0_0 = arith.constant 0 : index
    %0 = vector.load %arg1[%c0, %c0_0] : memref<4x6400xbf16, #tpu.memory_space<vmem>>, vector<4x6400xbf16>
    %c0_1 = arith.constant 0 : index
    %c0_2 = arith.constant 0 : index
    %1 = vector.load %arg2[%c0_1, %c0_2] : memref<6400x100xbf16, #tpu.memory_space<vmem>>, vector<6400x100xbf16>
    %cst = arith.constant dense<0.000000e+00> : vector<4x100xf32>
    %2 = tpu.matmul %0, %1, %cst {dimension_numbers = #tpu.dot_dimension_numbers<[1], [0], [0], [1], [0, 0, 1, 1], [], []>} : vector<4x6400xbf16>, vector<6400x100xbf16>, vector<4x100xf32> -> vector<4x100xf32>
    %c0_3 = arith.constant 0 : index
    %c0_4 = arith.constant 0 : index
    %3 = vector.load %arg3[%c0_3, %c0_4] : memref<1x100xf32, #tpu.memory_space<vmem>>, vector<1x100xf32>
    %4 = vector.broadcast %3 : vector<1x100xf32> to vector<4x100xf32>
    %5 = arith.addf %2, %4 : vector<4x100xf32>
    %cst_5 = arith.constant 0.000000e+00 : f32
    %6 = vector.broadcast %cst_5 : f32 to vector<4x100xf32>
    %7 = arith.maximumf %5, %6 : vector<4x100xf32>
    %8 = arith.truncf %7 : vector<4x100xf32> to vector<4x100xbf16>
    %c0_6 = arith.constant 0 : index
    %c0_7 = arith.constant 0 : index
    %9 = vector.load %arg4[%c0_6, %c0_7] : memref<100x128xbf16, #tpu.memory_space<vmem>>, vector<100x128xbf16>
    %cst_8 = arith.constant dense<0.000000e+00> : vector<4x128xf32>
    %10 = tpu.matmul %8, %9, %cst_8 {dimension_numbers = #tpu.dot_dimension_numbers<[1], [0], [0], [1], [0, 0, 1, 1], [], []>} : vector<4x100xbf16>, vector<100x128xbf16>, vector<4x128xf32> -> vector<4x128xf32>
    %c0_9 = arith.constant 0 : index
    %c0_10 = arith.constant 0 : index
    %11 = vector.load %arg5[%c0_9, %c0_10] : memref<1x128xf32, #tpu.memory_space<vmem>>, vector<1x128xf32>
    %12 = vector.broadcast %11 : vector<1x128xf32> to vector<4x128xf32>
    %13 = arith.addf %10, %12 : vector<4x128xf32>
    %c0_11 = arith.constant 0 : index
    %c0_12 = arith.constant 0 : index
    %14 = vector.load %arg6[%c0_11, %c0_12] : memref<4x128xf32, #tpu.memory_space<vmem>>, vector<4x128xf32>
    tpu.vector_store %arg6[%c0_11, %c0_12], %13 {strides = array<i32>} : memref<4x128xf32, #tpu.memory_space<vmem>>, vector<4x128xf32>,
    return
  }
  func.func @transform_0(%arg0: i32) -> (i32, i32) {
    %c0_i32 = arith.constant 0 : i32
    %c0_i32_0 = arith.constant 0 : i32
    %c0_i32_1 = arith.constant 0 : i32
    return %c0_i32, %c0_i32_0 : i32, i32
  }
  func.func @transform_1(%arg0: i32) -> (i32, i32) {
    %c0_i32 = arith.constant 0 : i32
    %c0_i32_0 = arith.constant 0 : i32
    %c0_i32_1 = arith.constant 0 : i32
    return %c0_i32, %c0_i32_0 : i32, i32
  }
  func.func @transform_2(%arg0: i32) -> (i32, i32) {
    %c0_i32 = arith.constant 0 : i32
    %c0_i32_0 = arith.constant 0 : i32
    %c0_i32_1 = arith.constant 0 : i32
    return %c0_i32, %c0_i32_0 : i32, i32
  }
  func.func @transform_3(%arg0: i32) -> (i32, i32) {
    %c0_i32 = arith.constant 0 : i32
    %c0_i32_0 = arith.constant 0 : i32
    %c0_i32_1 = arith.constant 0 : i32
    return %c0_i32, %c0_i32_0 : i32, i32
  }
  func.func @transform_4(%arg0: i32) -> (i32, i32) {
    %c0_i32 = arith.constant 0 : i32
    %c0_i32_0 = arith.constant 0 : i32
    %c0_i32_1 = arith.constant 0 : i32
    return %c0_i32, %c0_i32_0 : i32, i32
  }
  func.func @transform_5(%arg0: i32) -> (i32, i32) {
    %c0_i32 = arith.constant 0 : i32
    %c0_i32_0 = arith.constant 0 : i32
    %c0_i32_1 = arith.constant 0 : i32
    return %c0_i32, %c0_i32_0 : i32, i32
  }
}

</mosaic_0001>

<llo_original>
// kernel: _lambda_.2
$region0: #{_lambda_.2}
  #allocation0 [shape = 'u32[]', space=smem, size = 0x4, offset = 0x4, fixed_abs, tag = 'smem constant byte address 0x4 - core index']
  #allocation1 [shape = 'u32[72,128]{1,0:T(1,128)}', space=vmem, size = 0x9000, scoped, tag = 'internal scratch']
  #allocation2 [shape = 'bf16[288,512]{1,0:T(8,128)(2,1)}', space=vmem, size = 0x48000, scoped, tag = 'scratch operand']
  %s0 = inlined_call_operand.vmem [shape: bf16[2,9,2048], index: 0, kind: input, shape index: {}]
  %s1 = inlined_call_operand.vmem [shape: bf16[32,9], index: 1, kind: input, shape index: {}]
  %s2 = inlined_call_operand.vmem [shape: f32[32,1], index: 2, kind: input, shape index: {}]
  %s3 = inlined_call_operand.vmem [shape: f32[9,512], index: 3, kind: input, shape index: {}]
  %s4 = inlined_call_operand.vmem [shape: bf16[50,288], index: 4, kind: input, shape index: {}]
  %s5 = inlined_call_operand.vmem [shape: f32[50,1], index: 5, kind: input, shape index: {}]
  %s6 = inlined_call_operand.vmem [shape: bf16[256,128], index: 6, kind: input, shape index: {}]
  %s7 = inlined_call_operand.vmem [shape: bf16[2,2,50,128], index: 7, kind: output, shape index: {}]
  %s8 = sld [smem:[#allocation0]]
  $region61: #{_lambda_.2} parent=0
    _
  %s10 = ssub.s32 1, %s8
  %s11 = scalar_select 0, %s10, %s8
  loop: start=0, step=1, limit=4
  $region2: #{_lambda_.2} parent=0 // loop_pre_header
    _
  $region3: #{_lambda_.2} parent=0 // loop_header
    %s13 = sphi 0, %s17
    %p14 = scmp.ge.s32.totalorder %s13, 4
    %s23 = sphi 0, %s25
    %s26 = sphi 0, %s23
    %s27 = sphi 0, %s26
    %s43 = sphi 0, %s27
    %s47 = sphi 0, %s47
    %s49 = sphi 0, %s47
    %s50 = sphi 0, %s49
    %s64 = sphi 0, %s50
    %s68 = sphi 0, %s68
    %s70 = sphi 0, %s68
    %s71 = sphi 0, %s70
    %s85 = sphi 0, %s71
    %s89 = sphi 0, %s89
    %s91 = sphi 0, %s89
    %s92 = sphi 0, %s91
    %s106 = sphi 0, %s92
    %s110 = sphi 0, %s110
    %s112 = sphi 0, %s110
    %s113 = sphi 0, %s112
    %s127 = sphi 0, %s113
    %s131 = sphi 0, %s131
    %s133 = sphi 0, %s131
    %s134 = sphi 0, %s133
    %s148 = sphi 0, %s134
    %s152 = sphi 0, %s152
    %s154 = sphi 0, %s152
    %s155 = sphi 0, %s154
    %s169 = sphi 0, %s155
    %s175 = sphi 0, %s177
    %s178 = sphi 0, %s175
    %s179 = sphi 0, %s178
    %s195 = sphi 0, %s179
  $region4: #{_lambda_.2} parent=0 // loop_header_branch
    %16 = sbr.rel (%p14) target = $region8
  $region5: #{_lambda_.2} parent=0 // loop_body
    %s18 = ssub.s32 %s13, 1
    %s19 = ssub.s32 %s13, 2
    %s20 = sadd.s32 %s13, 1
    %s21 = ssub.s32 %s13, %s20
    %p22 = scmp.eq.s32.totalorder %s21, 0
    %s24 = sadd.s32 %s23, 1
    %s25 = scalar_select %p22, %s23, %s24
    %p28 = pneg %p22
    %p29 = scmp.eq.s32.totalorder %s13, 1
    %p30 = por %p28, %p29
    %p31 = scmp.ne.s32.totalorder %s23, %s26
    %p32 = scmp.eq.s32.totalorder %s13, 0
    %p33 = por %p31, %p32
    %p34 = scmp.ne.s32.totalorder %s23, %s26
    %p35 = scmp.eq.s32.totalorder %s18, 1
    %p36 = por %p34, %p35
    %p37 = scmp.ne.s32.totalorder %s26, %s27
    %p38 = scmp.eq.s32.totalorder %s18, 0
    %p39 = por %p37, %p38
    %p40 = scmp.ne.s32.totalorder %s26, %s27
    %p41 = scmp.eq.s32.totalorder %s19, 1
    %p42 = por %p40, %p41
    %p44 = scmp.ne.s32.totalorder %s27, %s43
    %p45 = scmp.eq.s32.totalorder %s19, 0
    %p46 = por %p44, %p45
    %s48 = sadd.s32 %s47, 1
    %p51 = scmp.eq.s32.totalorder %s13, 1
    %p52 = scmp.ne.s32.totalorder %s47, %s49
    %p53 = scmp.eq.s32.totalorder %s13, 0
    %p54 = por %p52, %p53
    %p55 = scmp.ne.s32.totalorder %s47, %s49
    %p56 = scmp.eq.s32.totalorder %s18, 1
    %p57 = por %p55, %p56
    %p58 = scmp.ne.s32.totalorder %s49, %s50
    %p59 = scmp.eq.s32.totalorder %s18, 0
    %p60 = por %p58, %p59
    %p61 = scmp.ne.s32.totalorder %s49, %s50
    %p62 = scmp.eq.s32.totalorder %s19, 1
    %p63 = por %p61, %p62
    %p65 = scmp.ne.s32.totalorder %s50, %s64
    %p66 = scmp.eq.s32.totalorder %s19, 0
    %p67 = por %p65, %p66
    %s69 = sadd.s32 %s68, 1
    %p72 = scmp.eq.s32.totalorder %s13, 1
    %p73 = scmp.ne.s32.totalorder %s68, %s70
    %p74 = scmp.eq.s32.totalorder %s13, 0
    %p75 = por %p73, %p74
    %p76 = scmp.ne.s32.totalorder %s68, %s70
    %p77 = scmp.eq.s32.totalorder %s18, 1
    %p78 = por %p76, %p77
    %p79 = scmp.ne.s32.totalorder %s70, %s71
    %p80 = scmp.eq.s32.totalorder %s18, 0
    %p81 = por %p79, %p80
    %p82 = scmp.ne.s32.totalorder %s70, %s71
    %p83 = scmp.eq.s32.totalorder %s19, 1
    %p84 = por %p82, %p83
    %p86 = scmp.ne.s32.totalorder %s71, %s85
    %p87 = scmp.eq.s32.totalorder %s19, 0
    %p88 = por %p86, %p87
    %s90 = sadd.s32 %s89, 1
    %p93 = scmp.eq.s32.totalorder %s13, 1
    %p94 = scmp.ne.s32.totalorder %s89, %s91
    %p95 = scmp.eq.s32.totalorder %s13, 0
    %p96 = por %p94, %p95
    %p97 = scmp.ne.s32.totalorder %s89, %s91
    %p98 = scmp.eq.s32.totalorder %s18, 1
    %p99 = por %p97, %p98
    %p100 = scmp.ne.s32.totalorder %s91, %s92
    %p101 = scmp.eq.s32.totalorder %s18, 0
    %p102 = por %p100, %p101
    %p103 = scmp.ne.s32.totalorder %s91, %s92
    %p104 = scmp.eq.s32.totalorder %s19, 1
    %p105 = por %p103, %p104
    %p107 = scmp.ne.s32.totalorder %s92, %s106
    %p108 = scmp.eq.s32.totalorder %s19, 0
    %p109 = por %p107, %p108
    %s111 = sadd.s32 %s110, 1
    %p114 = scmp.eq.s32.totalorder %s13, 1
    %p115 = scmp.ne.s32.totalorder %s110, %s112
    %p116 = scmp.eq.s32.totalorder %s13, 0
    %p117 = por %p115, %p116
    %p118 = scmp.ne.s32.totalorder %s110, %s112
    %p119 = scmp.eq.s32.totalorder %s18, 1
    %p120 = por %p118, %p119
    %p121 = scmp.ne.s32.totalorder %s112, %s113
    %p122 = scmp.eq.s32.totalorder %s18, 0
    %p123 = por %p121, %p122
    %p124 = scmp.ne.s32.totalorder %s112, %s113
    %p125 = scmp.eq.s32.totalorder %s19, 1
    %p126 = por %p124, %p125
    %p128 = scmp.ne.s32.totalorder %s113, %s127
    %p129 = scmp.eq.s32.totalorder %s19, 0
    %p130 = por %p128, %p129
    %s132 = sadd.s32 %s131, 1
    %p135 = scmp.eq.s32.totalorder %s13, 1
    %p136 = scmp.ne.s32.totalorder %s131, %s133
    %p137 = scmp.eq.s32.totalorder %s13, 0
    %p138 = por %p136, %p137
    %p139 = scmp.ne.s32.totalorder %s131, %s133
    %p140 = scmp.eq.s32.totalorder %s18, 1
    %p141 = por %p139, %p140
    %p142 = scmp.ne.s32.totalorder %s133, %s134
    %p143 = scmp.eq.s32.totalorder %s18, 0
    %p144 = por %p142, %p143
    %p145 = scmp.ne.s32.totalorder %s133, %s134
    %p146 = scmp.eq.s32.totalorder %s19, 1
    %p147 = por %p145, %p146
    %p149 = scmp.ne.s32.totalorder %s134, %s148
    %p150 = scmp.eq.s32.totalorder %s19, 0
    %p151 = por %p149, %p150
    %s153 = sadd.s32 %s152, 1
    %p156 = scmp.eq.s32.totalorder %s13, 1
    %p157 = scmp.ne.s32.totalorder %s152, %s154
    %p158 = scmp.eq.s32.totalorder %s13, 0
    %p159 = por %p157, %p158
    %p160 = scmp.ne.s32.totalorder %s152, %s154
    %p161 = scmp.eq.s32.totalorder %s18, 1
    %p162 = por %p160, %p161
    %p163 = scmp.ne.s32.totalorder %s154, %s155
    %p164 = scmp.eq.s32.totalorder %s18, 0
    %p165 = por %p163, %p164
    %p166 = scmp.ne.s32.totalorder %s154, %s155
    %p167 = scmp.eq.s32.totalorder %s19, 1
    %p168 = por %p166, %p167
    %p170 = scmp.ne.s32.totalorder %s155, %s169
    %p171 = scmp.eq.s32.totalorder %s19, 0
    %p172 = por %p170, %p171
    %s173 = ssub.s32 %s13, %s20
    %p174 = scmp.eq.s32.totalorder %s173, 0
    %s176 = sadd.s32 %s175, 1
    %s177 = scalar_select %p174, %s175, %s176
    %p180 = pneg %p174
    %p181 = scmp.eq.s32.totalorder %s13, 1
    %p182 = por %p180, %p181
    %p183 = scmp.ne.s32.totalorder %s175, %s178
    %p184 = scmp.eq.s32.totalorder %s13, 0
    %p185 = por %p183, %p184
    %p186 = scmp.ne.s32.totalorder %s175, %s178
    %p187 = scmp.eq.s32.totalorder %s18, 1
    %p188 = por %p186, %p187
    %p189 = scmp.ne.s32.totalorder %s178, %s179
    %p190 = scmp.eq.s32.totalorder %s18, 0
    %p191 = por %p189, %p190
    %p192 = scmp.ne.s32.totalorder %s178, %s179
    %p193 = scmp.eq.s32.totalorder %s19, 1
    %p194 = por %p192, %p193
    %p196 = scmp.ne.s32.totalorder %s179, %s195
    %p197 = scmp.eq.s32.totalorder %s19, 0
    %p198 = por %p196, %p197
    %p199 = scmp.le.s32.totalorder 1, %s13
    %p200 = scmp.lt.s32.totalorder %s13, 3
    %p201 = pnand %p199, %p200
    %p202 = pneg %p201
    // Predicated region
    $region9: #{_lambda_.2} parent=5 // pred_check
      _
    $region10: #{_lambda_.2} parent=5 // pred_check_branch
      %204 = sbr.rel (%p201) target = $region12
    $region11: #{_lambda_.2} parent=5 // pred_region
      %s205 = ssub.s32 %s13, 1
      // Predicated region
      $region13: #{_lambda_.2} parent=11 // pred_check
        %p206 = pneg %p60
      $region14: #{_lambda_.2} parent=11 // pred_check_branch
        %208 = sbr.rel (%p206) target = $region16
      $region15: #{_lambda_.2} parent=11 // pred_region
        _
      $region16: #{_lambda_.2} parent=11 // pred_fallthru
        _
      // Predicated region
      $region17: #{_lambda_.2} parent=11 // pred_check
        %p209 = pneg %p81
      $region18: #{_lambda_.2} parent=11 // pred_check_branch
        %211 = sbr.rel (%p209) target = $region20
      $region19: #{_lambda_.2} parent=11 // pred_region
        _
      $region20: #{_lambda_.2} parent=11 // pred_fallthru
        _
      // Predicated region
      $region21: #{_lambda_.2} parent=11 // pred_check
        %p212 = pneg %p102
      $region22: #{_lambda_.2} parent=11 // pred_check_branch
        %214 = sbr.rel (%p212) target = $region24
      $region23: #{_lambda_.2} parent=11 // pred_region
        _
      $region24: #{_lambda_.2} parent=11 // pred_fallthru
        _
      // Predicated region
      $region25: #{_lambda_.2} parent=11 // pred_check
        %p215 = pneg %p123
      $region26: #{_lambda_.2} parent=11 // pred_check_branch
        %217 = sbr.rel (%p215) target = $region28
      $region27: #{_lambda_.2} parent=11 // pred_region
        _
      $region28: #{_lambda_.2} parent=11 // pred_fallthru
        _
      // Predicated region
      $region29: #{_lambda_.2} parent=11 // pred_check
        %p218 = pneg %p144
      $region30: #{_lambda_.2} parent=11 // pred_check_branch
        %220 = sbr.rel (%p218) target = $region32
      $region31: #{_lambda_.2} parent=11 // pred_region
        _
      $region32: #{_lambda_.2} parent=11 // pred_fallthru
        _
      // Predicated region
      $region33: #{_lambda_.2} parent=11 // pred_check
        %p221 = pneg %p165
      $region34: #{_lambda_.2} parent=11 // pred_check_branch
        %223 = sbr.rel (%p221) target = $region36
      $region35: #{_lambda_.2} parent=11 // pred_region
        _
      $region36: #{_lambda_.2} parent=11 // pred_fallthru
        _
    $region12: #{_lambda_.2} parent=5 // pred_fallthru
      _
    %p224 = scmp.lt.s32.totalorder %s13, 2
    // Predicated region
    $region37: #{_lambda_.2} parent=5 // pred_check
      %p225 = pneg %p224
    $region38: #{_lambda_.2} parent=5 // pred_check_branch
      %227 = sbr.rel (%p225) target = $region40
    $region39: #{_lambda_.2} parent=5 // pred_region
      // Predicated region
      $region41: #{_lambda_.2} parent=39 // pred_check
        %p228 = pneg %p33
      $region42: #{_lambda_.2} parent=39 // pred_check_branch
        %230 = sbr.rel (%p228) target = $region44
      $region43: #{_lambda_.2} parent=39 // pred_region
        %p231 = scmp.lt.s32.totalorder %s13, 1
        %s232 = scalar_select %p231, %s13, 1
        %s233 = smul.addr %s232, 32
        %s234 = smul.addr %s233, 4
        %s235 = scalar_lea.vmem %s0, %s234
      $region44: #{_lambda_.2} parent=39 // pred_fallthru
        _
    $region40: #{_lambda_.2} parent=5 // pred_fallthru
      _
    %p236 = scmp.le.s32.totalorder 1, %s13
    %p237 = scmp.lt.s32.totalorder %s13, 3
    %p238 = pnand %p236, %p237
    %p239 = pneg %p238
    // Predicated region
    $region45: #{_lambda_.2} parent=5 // pred_check
      _
    $region46: #{_lambda_.2} parent=5 // pred_check_branch
      %241 = sbr.rel (%p238) target = $region48
    $region47: #{_lambda_.2} parent=5 // pred_region
      %s242 = ssub.s32 %s13, 1
      %p243 = scmp.lt.s32.totalorder %s18, 1
      %s244 = scalar_select %p243, %s18, 1
      %s245 = smul.addr %s244, 32
      %s246 = smul.addr %s245, 4
      %s247 = scalar_lea.vmem %s0, %s246
      %p248 = pneg %p39
      %p249 = pneg %p36
      %p250 = pneg %p60
      %p251 = pneg %p57
      %p252 = pneg %p81
      %p253 = pneg %p78
      %p254 = pneg %p102
      %p255 = pneg %p99
      %p256 = pneg %p123
      %p257 = pneg %p120
      %p258 = pneg %p144
      %p259 = pneg %p141
      %p260 = pneg %p165
      %p261 = pneg %p162
      %p262 = pneg %p191
      %p263 = pneg %p188
      %p264 = scmp.lt.s32.totalorder %s18, 1
      %s265 = scalar_select %p264, %s18, 1
      %s266 = smul.addr %s265, 14
      %s267 = smul.addr %s266, 4
      %s268 = scalar_lea.vmem %s7, %s267
      %p269 = scmp.lt.s32.totalorder %s18, 1
      %s270 = scalar_select %p269, %s18, 1
      %s271 = smul.addr %s270, 32
      %s272 = smul.addr %s271, 4
      %s273 = scalar_lea.vmem %s0, %s272
      %p274 = scmp.lt.s32.totalorder %s18, 1
      %s275 = scalar_select %p274, %s18, 1
      %s276 = smul.addr %s275, 14
      %s277 = smul.addr %s276, 4
      %s278 = scalar_lea.vmem %s7, %s277
      %v280 = vld [vmem:[%s1] sm:$0xf]
      %v281 = vld [vmem:[%s1 + $0x4] sm:$0xf]
      %v282 = vld [vmem:[%s1 + $0x8] sm:$0xf]
      %v283 = vld [vmem:[%s1 + $0xc] sm:$0xf]
      %v284 = vld [vmem:[%s273] sm:$0xff]
      %v285 = vld [vmem:[%s273 + $0x8] sm:$0xff]
      %v286 = vld [vmem:[%s273 + $0x10] sm:$0xff]
      %v287 = vld [vmem:[%s273 + $0x18] sm:$0xff]
      %v288 = vld [vmem:[%s273 + $0x20] sm:$0xff]
      %v289 = vld [vmem:[%s273 + $0x28] sm:$0xff]
      %v290 = vld [vmem:[%s273 + $0x30] sm:$0xff]
      %v291 = vld [vmem:[%s273 + $0x38] sm:$0xff]
      %v292 = vld [vmem:[%s273 + $0x40] sm:$0x11]
      %v293 = vld [vmem:[%s273 + $0x48] sm:$0x11]
      %v294 = vld [vmem:[%s273 + $0x50] sm:$0x11]
      %v295 = vld [vmem:[%s273 + $0x58] sm:$0x11]
      %v296 = vld [vmem:[%s273 + $0x60] sm:$0x11]
      %v297 = vld [vmem:[%s273 + $0x68] sm:$0x11]
      %v298 = vld [vmem:[%s273 + $0x70] sm:$0x11]
      %v299 = vld [vmem:[%s273 + $0x78] sm:$0x11]
      %v304 = vunpack.c.l.b16 %v280
      %v305 = vunpack.c.l.b16 %v281
      %v306 = vunpack.c.l.b16 %v282
      %v307 = vunpack.c.l.b16 %v283
      %v308 = vpack.c.b16 %v305, %v304
      %v309 = vpack.c.b16 %v307, %v306
      %v326 = vunpack.c.l.b16 %v284
      %v327 = vunpack.c.h.b16 %v284
      %v328 = vunpack.c.l.b16 %v285
      %v329 = vunpack.c.h.b16 %v285
      %v330 = vunpack.c.l.b16 %v286
      %v331 = vunpack.c.h.b16 %v286
      %v332 = vunpack.c.l.b16 %v287
      %v333 = vunpack.c.h.b16 %v287
      %v334 = vunpack.c.l.b16 %v288
      %v335 = vunpack.c.h.b16 %v288
      %v336 = vunpack.c.l.b16 %v289
      %v337 = vunpack.c.h.b16 %v289
      %v338 = vunpack.c.l.b16 %v290
      %v339 = vunpack.c.h.b16 %v290
      %v340 = vunpack.c.l.b16 %v291
      %v341 = vunpack.c.h.b16 %v291
      %v342 = vunpack.c.l.b16 %v292
      %v343 = vunpack.c.h.b16 %v292
      %v344 = vunpack.c.l.b16 %v293
      %v345 = vunpack.c.h.b16 %v293
      %v346 = vunpack.c.l.b16 %v294
      %v347 = vunpack.c.h.b16 %v294
      %v348 = vunpack.c.l.b16 %v295
      %v349 = vunpack.c.h.b16 %v295
      %v350 = vunpack.c.l.b16 %v296
      %v351 = vunpack.c.h.b16 %v296
      %v352 = vunpack.c.l.b16 %v297
      %v353 = vunpack.c.h.b16 %v297
      %v354 = vunpack.c.l.b16 %v298
      %v355 = vunpack.c.h.b16 %v298
      %v356 = vunpack.c.l.b16 %v299
      %v357 = vunpack.c.h.b16 %v299
      %v358 = vpack.c.b16 %v342, %v326
      %v359 = vpack.c.b16 %v343, %v327
      %v360 = vpack.c.b16 %v344, %v328
      %v361 = vpack.c.b16 %v345, %v329
      %v362 = vpack.c.b16 %v346, %v330
      %v363 = vpack.c.b16 %v347, %v331
      %v364 = vpack.c.b16 %v348, %v332
      %v365 = vpack.c.b16 %v349, %v333
      %v366 = vpack.c.b16 %v350, %v334
      %v367 = vpack.c.b16 %v351, %v335
      %v368 = vpack.c.b16 %v352, %v336
      %v369 = vpack.c.b16 %v353, %v337
      %v370 = vpack.c.b16 %v354, %v338
      %v371 = vpack.c.b16 %v355, %v339
      %v372 = vpack.c.b16 %v356, %v340
      %v373 = vpack.c.b16 %v357, %v341
      %vm374 = vcmask 72704
      %v376 = vsel %vm374, %v308, 0
      %v379 = vsel %vm374, %v309, 0
      %vm381 = vcmask 1043456
      %vm382 = vcmask 1044480
      %v383 = vsel %vm381, 4294967295, 65535
      %v384 = vsel %vm382, %v383, 0
      %v386 = vand.u32 %v358, %v384
      %v389 = vand.u32 %v359, %v384
      %v392 = vand.u32 %v360, %v384
      %v395 = vand.u32 %v361, %v384
      %v398 = vand.u32 %v362, %v384
      %v401 = vand.u32 %v363, %v384
      %v404 = vand.u32 %v364, %v384
      %v407 = vand.u32 %v365, %v384
      %v410 = vand.u32 %v366, %v384
      %v413 = vand.u32 %v367, %v384
      %v416 = vand.u32 %v368, %v384
      %v419 = vand.u32 %v369, %v384
      %v422 = vand.u32 %v370, %v384
      %v425 = vand.u32 %v371, %v384
      %v428 = vand.u32 %v372, %v384
      %v431 = vand.u32 %v373, %v384
      %433 = vmatpush.bf16.msra.mxu0 0
      %434 = vmatpush.bf16.msra.mxu0 0
      %435 = vmatpush.bf16.msra.mxu0 0
      %436 = vmatpush.bf16.msra.mxu0 0
      %437 = vmatpush.bf16.msra.mxu0 0
      %438 = vmatpush.bf16.msra.mxu0 0
      %439 = vmatpush.bf16.msra.mxu0 0
      %440 = vmatpush.bf16.msra.mxu0 %v386
      %441 = vmatmul.bf16.gmra.mxu0 %v376
      %v442 = vpop.f32.mrf.mxu0
      %v443 = vadd.f32 0.0, %v442
      %v444 = vpop.f32.mrf.mxu0
      %v445 = vadd.f32 0.0, %v444
      %446 = vmatmul.bf16.gmra.mxu0 %v379
      %v447 = vpop.f32.mrf.mxu0
      %v448 = vadd.f32 0.0, %v447
      %v449 = vpop.f32.mrf.mxu0
      %v450 = vadd.f32 0.0, %v449
      %451 = vdwg.mxu0
      %452 = vmatpush.bf16.msra.mxu0 0
      %453 = vmatpush.bf16.msra.mxu0 0
      %454 = vmatpush.bf16.msra.mxu0 0
      %455 = vmatpush.bf16.msra.mxu0 0
      %456 = vmatpush.bf16.msra.mxu0 0
      %457 = vmatpush.bf16.msra.mxu0 0
      %458 = vmatpush.bf16.msra.mxu0 0
      %459 = vmatpush.bf16.msra.mxu0 %v389
      %460 = vmatmul.bf16.gmra.mxu0 %v376
      %v461 = vpop.f32.mrf.mxu0
      %v462 = vadd.f32 0.0, %v461
      %v463 = vpop.f32.mrf.mxu0
      %v464 = vadd.f32 0.0, %v463
      %465 = vmatmul.bf16.gmra.mxu0 %v379
      %v466 = vpop.f32.mrf.mxu0
      %v467 = vadd.f32 0.0, %v466
      %v468 = vpop.f32.mrf.mxu0
      %v469 = vadd.f32 0.0, %v468
      %470 = vdwg.mxu0
      %471 = vmatpush.bf16.msra.mxu0 0
      %472 = vmatpush.bf16.msra.mxu0 0
      %473 = vmatpush.bf16.msra.mxu0 0
      %474 = vmatpush.bf16.msra.mxu0 0
      %475 = vmatpush.bf16.msra.mxu0 0
      %476 = vmatpush.bf16.msra.mxu0 0
      %477 = vmatpush.bf16.msra.mxu0 0
      %478 = vmatpush.bf16.msra.mxu0 %v392
      %479 = vmatmul.bf16.gmra.mxu0 %v376
      %v480 = vpop.f32.mrf.mxu0
      %v481 = vadd.f32 0.0, %v480
      %v482 = vpop.f32.mrf.mxu0
      %v483 = vadd.f32 0.0, %v482
      %484 = vmatmul.bf16.gmra.mxu0 %v379
      %v485 = vpop.f32.mrf.mxu0
      %v486 = vadd.f32 0.0, %v485
      %v487 = vpop.f32.mrf.mxu0
      %v488 = vadd.f32 0.0, %v487
      %489 = vdwg.mxu0
      %490 = vmatpush.bf16.msra.mxu0 0
      %491 = vmatpush.bf16.msra.mxu0 0
      %492 = vmatpush.bf16.msra.mxu0 0
      %493 = vmatpush.bf16.msra.mxu0 0
      %494 = vmatpush.bf16.msra.mxu0 0
      %495 = vmatpush.bf16.msra.mxu0 0
      %496 = vmatpush.bf16.msra.mxu0 0
      %497 = vmatpush.bf16.msra.mxu0 %v395
      %498 = vmatmul.bf16.gmra.mxu0 %v376
      %v499 = vpop.f32.mrf.mxu0
      %v500 = vadd.f32 0.0, %v499
      %v501 = vpop.f32.mrf.mxu0
      %v502 = vadd.f32 0.0, %v501
      %503 = vmatmul.bf16.gmra.mxu0 %v379
      %v504 = vpop.f32.mrf.mxu0
      %v505 = vadd.f32 0.0, %v504
      %v506 = vpop.f32.mrf.mxu0
      %v507 = vadd.f32 0.0, %v506
      %508 = vdwg.mxu0
      %509 = vmatpush.bf16.msra.mxu0 0
      %510 = vmatpush.bf16.msra.mxu0 0
      %511 = vmatpush.bf16.msra.mxu0 0
      %512 = vmatpush.bf16.msra.mxu0 0
      %513 = vmatpush.bf16.msra.mxu0 0
      %514 = vmatpush.bf16.msra.mxu0 0
      %515 = vmatpush.bf16.msra.mxu0 0
      %516 = vmatpush.bf16.msra.mxu0 %v398
      %517 = vmatmul.bf16.gmra.mxu0 %v376
      %v518 = vpop.f32.mrf.mxu0
      %v519 = vadd.f32 0.0, %v518
      %v520 = vpop.f32.mrf.mxu0
      %v521 = vadd.f32 0.0, %v520
      %522 = vmatmul.bf16.gmra.mxu0 %v379
      %v523 = vpop.f32.mrf.mxu0
      %v524 = vadd.f32 0.0, %v523
      %v525 = vpop.f32.mrf.mxu0
      %v526 = vadd.f32 0.0, %v525
      %527 = vdwg.mxu0
      %528 = vmatpush.bf16.msra.mxu0 0
      %529 = vmatpush.bf16.msra.mxu0 0
      %530 = vmatpush.bf16.msra.mxu0 0
      %531 = vmatpush.bf16.msra.mxu0 0
      %532 = vmatpush.bf16.msra.mxu0 0
      %533 = vmatpush.bf16.msra.mxu0 0
      %534 = vmatpush.bf16.msra.mxu0 0
      %535 = vmatpush.bf16.msra.mxu0 %v401
      %536 = vmatmul.bf16.gmra.mxu0 %v376
      %v537 = vpop.f32.mrf.mxu0
      %v538 = vadd.f32 0.0, %v537
      %v539 = vpop.f32.mrf.mxu0
      %v540 = vadd.f32 0.0, %v539
      %541 = vmatmul.bf16.gmra.mxu0 %v379
      %v542 = vpop.f32.mrf.mxu0
      %v543 = vadd.f32 0.0, %v542
      %v544 = vpop.f32.mrf.mxu0
      %v545 = vadd.f32 0.0, %v544
      %546 = vdwg.mxu0
      %547 = vmatpush.bf16.msra.mxu0 0
      %548 = vmatpush.bf16.msra.mxu0 0
      %549 = vmatpush.bf16.msra.mxu0 0
      %550 = vmatpush.bf16.msra.mxu0 0
      %551 = vmatpush.bf16.msra.mxu0 0
      %552 = vmatpush.bf16.msra.mxu0 0
      %553 = vmatpush.bf16.msra.mxu0 0
      %554 = vmatpush.bf16.msra.mxu0 %v404
      %555 = vmatmul.bf16.gmra.mxu0 %v376
      %v556 = vpop.f32.mrf.mxu0
      %v557 = vadd.f32 0.0, %v556
      %v558 = vpop.f32.mrf.mxu0
      %v559 = vadd.f32 0.0, %v558
      %560 = vmatmul.bf16.gmra.mxu0 %v379
      %v561 = vpop.f32.mrf.mxu0
      %v562 = vadd.f32 0.0, %v561
      %v563 = vpop.f32.mrf.mxu0
      %v564 = vadd.f32 0.0, %v563
      %565 = vdwg.mxu0
      %566 = vmatpush.bf16.msra.mxu0 0
      %567 = vmatpush.bf16.msra.mxu0 0
      %568 = vmatpush.bf16.msra.mxu0 0
      %569 = vmatpush.bf16.msra.mxu0 0
      %570 = vmatpush.bf16.msra.mxu0 0
      %571 = vmatpush.bf16.msra.mxu0 0
      %572 = vmatpush.bf16.msra.mxu0 0
      %573 = vmatpush.bf16.msra.mxu0 %v407
      %574 = vmatmul.bf16.gmra.mxu0 %v376
      %v575 = vpop.f32.mrf.mxu0
      %v576 = vadd.f32 0.0, %v575
      %v577 = vpop.f32.mrf.mxu0
      %v578 = vadd.f32 0.0, %v577
      %579 = vmatmul.bf16.gmra.mxu0 %v379
      %v580 = vpop.f32.mrf.mxu0
      %v581 = vadd.f32 0.0, %v580
      %v582 = vpop.f32.mrf.mxu0
      %v583 = vadd.f32 0.0, %v582
      %584 = vdwg.mxu0
      %585 = vmatpush.bf16.msra.mxu0 0
      %586 = vmatpush.bf16.msra.mxu0 0
      %587 = vmatpush.bf16.msra.mxu0 0
      %588 = vmatpush.bf16.msra.mxu0 0
      %589 = vmatpush.bf16.msra.mxu0 0
      %590 = vmatpush.bf16.msra.mxu0 0
      %591 = vmatpush.bf16.msra.mxu0 0
      %592 = vmatpush.bf16.msra.mxu0 %v410
      %593 = vmatmul.bf16.gmra.mxu0 %v376
      %v594 = vpop.f32.mrf.mxu0
      %v595 = vadd.f32 0.0, %v594
      %v596 = vpop.f32.mrf.mxu0
      %v597 = vadd.f32 0.0, %v596
      %598 = vmatmul.bf16.gmra.mxu0 %v379
      %v599 = vpop.f32.mrf.mxu0
      %v600 = vadd.f32 0.0, %v599
      %v601 = vpop.f32.mrf.mxu0
      %v602 = vadd.f32 0.0, %v601
      %603 = vdwg.mxu0
      %604 = vmatpush.bf16.msra.mxu0 0
      %605 = vmatpush.bf16.msra.mxu0 0
      %606 = vmatpush.bf16.msra.mxu0 0
      %607 = vmatpush.bf16.msra.mxu0 0
      %608 = vmatpush.bf16.msra.mxu0 0
      %609 = vmatpush.bf16.msra.mxu0 0
      %610 = vmatpush.bf16.msra.mxu0 0
      %611 = vmatpush.bf16.msra.mxu0 %v413
      %612 = vmatmul.bf16.gmra.mxu0 %v376
      %v613 = vpop.f32.mrf.mxu0
      %v614 = vadd.f32 0.0, %v613
      %v615 = vpop.f32.mrf.mxu0
      %v616 = vadd.f32 0.0, %v615
      %617 = vmatmul.bf16.gmra.mxu0 %v379
      %v618 = vpop.f32.mrf.mxu0
      %v619 = vadd.f32 0.0, %v618
      %v620 = vpop.f32.mrf.mxu0
      %v621 = vadd.f32 0.0, %v620
      %622 = vdwg.mxu0
      %623 = vmatpush.bf16.msra.mxu0 0
      %624 = vmatpush.bf16.msra.mxu0 0
      %625 = vmatpush.bf16.msra.mxu0 0
      %626 = vmatpush.bf16.msra.mxu0 0
      %627 = vmatpush.bf16.msra.mxu0 0
      %628 = vmatpush.bf16.msra.mxu0 0
      %629 = vmatpush.bf16.msra.mxu0 0
      %630 = vmatpush.bf16.msra.mxu0 %v416
      %631 = vmatmul.bf16.gmra.mxu0 %v376
      %v632 = vpop.f32.mrf.mxu0
      %v633 = vadd.f32 0.0, %v632
      %v634 = vpop.f32.mrf.mxu0
      %v635 = vadd.f32 0.0, %v634
      %636 = vmatmul.bf16.gmra.mxu0 %v379
      %v637 = vpop.f32.mrf.mxu0
      %v638 = vadd.f32 0.0, %v637
      %v639 = vpop.f32.mrf.mxu0
      %v640 = vadd.f32 0.0, %v639
      %641 = vdwg.mxu0
      %642 = vmatpush.bf16.msra.mxu0 0
      %643 = vmatpush.bf16.msra.mxu0 0
      %644 = vmatpush.bf16.msra.mxu0 0
      %645 = vmatpush.bf16.msra.mxu0 0
      %646 = vmatpush.bf16.msra.mxu0 0
      %647 = vmatpush.bf16.msra.mxu0 0
      %648 = vmatpush.bf16.msra.mxu0 0
      %649 = vmatpush.bf16.msra.mxu0 %v419
      %650 = vmatmul.bf16.gmra.mxu0 %v376
      %v651 = vpop.f32.mrf.mxu0
      %v652 = vadd.f32 0.0, %v651
      %v653 = vpop.f32.mrf.mxu0
      %v654 = vadd.f32 0.0, %v653
      %655 = vmatmul.bf16.gmra.mxu0 %v379
      %v656 = vpop.f32.mrf.mxu0
      %v657 = vadd.f32 0.0, %v656
      %v658 = vpop.f32.mrf.mxu0
      %v659 = vadd.f32 0.0, %v658
      %660 = vdwg.mxu0
      %661 = vmatpush.bf16.msra.mxu0 0
      %662 = vmatpush.bf16.msra.mxu0 0
      %663 = vmatpush.bf16.msra.mxu0 0
      %664 = vmatpush.bf16.msra.mxu0 0
      %665 = vmatpush.bf16.msra.mxu0 0
      %666 = vmatpush.bf16.msra.mxu0 0
      %667 = vmatpush.bf16.msra.mxu0 0
      %668 = vmatpush.bf16.msra.mxu0 %v422
      %669 = vmatmul.bf16.gmra.mxu0 %v376
      %v670 = vpop.f32.mrf.mxu0
      %v671 = vadd.f32 0.0, %v670
      %v672 = vpop.f32.mrf.mxu0
      %v673 = vadd.f32 0.0, %v672
      %674 = vmatmul.bf16.gmra.mxu0 %v379
      %v675 = vpop.f32.mrf.mxu0
      %v676 = vadd.f32 0.0, %v675
      %v677 = vpop.f32.mrf.mxu0
      %v678 = vadd.f32 0.0, %v677
      %679 = vdwg.mxu0
      %680 = vmatpush.bf16.msra.mxu0 0
      %681 = vmatpush.bf16.msra.mxu0 0
      %682 = vmatpush.bf16.msra.mxu0 0
      %683 = vmatpush.bf16.msra.mxu0 0
      %684 = vmatpush.bf16.msra.mxu0 0
      %685 = vmatpush.bf16.msra.mxu0 0
      %686 = vmatpush.bf16.msra.mxu0 0
      %687 = vmatpush.bf16.msra.mxu0 %v425
      %688 = vmatmul.bf16.gmra.mxu0 %v376
      %v689 = vpop.f32.mrf.mxu0
      %v690 = vadd.f32 0.0, %v689
      %v691 = vpop.f32.mrf.mxu0
      %v692 = vadd.f32 0.0, %v691
      %693 = vmatmul.bf16.gmra.mxu0 %v379
      %v694 = vpop.f32.mrf.mxu0
      %v695 = vadd.f32 0.0, %v694
      %v696 = vpop.f32.mrf.mxu0
      %v697 = vadd.f32 0.0, %v696
      %698 = vdwg.mxu0
      %699 = vmatpush.bf16.msra.mxu0 0
      %700 = vmatpush.bf16.msra.mxu0 0
      %701 = vmatpush.bf16.msra.mxu0 0
      %702 = vmatpush.bf16.msra.mxu0 0
      %703 = vmatpush.bf16.msra.mxu0 0
      %704 = vmatpush.bf16.msra.mxu0 0
      %705 = vmatpush.bf16.msra.mxu0 0
      %706 = vmatpush.bf16.msra.mxu0 %v428
      %707 = vmatmul.bf16.gmra.mxu0 %v376
      %v708 = vpop.f32.mrf.mxu0
      %v709 = vadd.f32 0.0, %v708
      %v710 = vpop.f32.mrf.mxu0
      %v711 = vadd.f32 0.0, %v710
      %712 = vmatmul.bf16.gmra.mxu0 %v379
      %v713 = vpop.f32.mrf.mxu0
      %v714 = vadd.f32 0.0, %v713
      %v715 = vpop.f32.mrf.mxu0
      %v716 = vadd.f32 0.0, %v715
      %717 = vdwg.mxu0
      %718 = vmatpush.bf16.msra.mxu0 0
      %719 = vmatpush.bf16.msra.mxu0 0
      %720 = vmatpush.bf16.msra.mxu0 0
      %721 = vmatpush.bf16.msra.mxu0 0
      %722 = vmatpush.bf16.msra.mxu0 0
      %723 = vmatpush.bf16.msra.mxu0 0
      %724 = vmatpush.bf16.msra.mxu0 0
      %725 = vmatpush.bf16.msra.mxu0 %v431
      %726 = vmatmul.bf16.gmra.mxu0 %v376
      %v727 = vpop.f32.mrf.mxu0
      %v728 = vadd.f32 0.0, %v727
      %v729 = vpop.f32.mrf.mxu0
      %v730 = vadd.f32 0.0, %v729
      %731 = vmatmul.bf16.gmra.mxu0 %v379
      %v732 = vpop.f32.mrf.mxu0
      %v733 = vadd.f32 0.0, %v732
      %v734 = vpop.f32.mrf.mxu0
      %v735 = vadd.f32 0.0, %v734
      %736 = vdwg.mxu0
      %v737 = vmax.f32 %v443, %v519
      %v738 = vmax.f32 %v462, %v538
      %v739 = vmax.f32 %v481, %v557
      %v740 = vmax.f32 %v500, %v576
      %v741 = vmax.f32 %v445, %v521
      %v742 = vmax.f32 %v464, %v540
      %v743 = vmax.f32 %v483, %v559
      %v744 = vmax.f32 %v502, %v578
      %v745 = vmax.f32 %v448, %v524
      %v746 = vmax.f32 %v467, %v543
      %v747 = vmax.f32 %v486, %v562
      %v748 = vmax.f32 %v505, %v581
      %v749 = vmax.f32 %v450, %v526
      %v750 = vmax.f32 %v469, %v545
      %v751 = vmax.f32 %v488, %v564
      %v752 = vmax.f32 %v507, %v583
      %v753 = vmax.f32 %v595, %v671
      %v754 = vmax.f32 %v614, %v690
      %v755 = vmax.f32 %v633, %v709
      %v756 = vmax.f32 %v652, %v728
      %v757 = vmax.f32 %v597, %v673
      %v758 = vmax.f32 %v616, %v692
      %v759 = vmax.f32 %v635, %v711
      %v760 = vmax.f32 %v654, %v730
      %v761 = vmax.f32 %v600, %v676
      %v762 = vmax.f32 %v619, %v695
      %v763 = vmax.f32 %v638, %v714
      %v764 = vmax.f32 %v657, %v733
      %v765 = vmax.f32 %v602, %v678
      %v766 = vmax.f32 %v621, %v697
      %v767 = vmax.f32 %v640, %v716
      %v768 = vmax.f32 %v659, %v735
      %v769 = vmax.f32 %v737, %v753
      %v770 = vmax.f32 %v738, %v754
      %v771 = vmax.f32 %v739, %v755
      %v772 = vmax.f32 %v740, %v756
      %v773 = vmax.f32 %v741, %v757
      %v774 = vmax.f32 %v742, %v758
      %v775 = vmax.f32 %v743, %v759
      %v776 = vmax.f32 %v744, %v760
      %v777 = vmax.f32 %v745, %v761
      %v778 = vmax.f32 %v746, %v762
      %v779 = vmax.f32 %v747, %v763
      %v780 = vmax.f32 %v748, %v764
      %v781 = vmax.f32 %v749, %v765
      %v782 = vmax.f32 %v750, %v766
      %v783 = vmax.f32 %v751, %v767
      %v784 = vmax.f32 %v752, %v768
      %v785 = vld [vmem:[%s2] sm:$0xff]
      %v786 = vld [vmem:[%s2 + $0x8] sm:$0xff]
      %v787 = vld [vmem:[%s2 + $0x10] sm:$0xff]
      %v788 = vld [vmem:[%s2 + $0x18] sm:$0xff]
      %790 = vset.pattern.permute.xlu0 0
      %791 = vperm.xlu0 %790, %v785
      %v792 = vpop.permute.xlu0 %791
      %795 = vset.pattern.permute.xlu0 0
      %796 = vperm.xlu0 %795, %v786
      %v797 = vpop.permute.xlu0 %796
      %800 = vset.pattern.permute.xlu0 0
      %801 = vperm.xlu0 %800, %v787
      %v802 = vpop.permute.xlu0 %801
      %805 = vset.pattern.permute.xlu0 0
      %806 = vperm.xlu0 %805, %v788
      %v807 = vpop.permute.xlu0 %806
      %v809 = vadd.f32 %v769, %v792
      %v810 = vadd.f32 %v770, %v792
      %v811 = vadd.f32 %v771, %v792
      %v812 = vadd.f32 %v772, %v792
      %v813 = vadd.f32 %v773, %v797
      %v814 = vadd.f32 %v774, %v797
      %v815 = vadd.f32 %v775, %v797
      %v816 = vadd.f32 %v776, %v797
      %v817 = vadd.f32 %v777, %v802
      %v818 = vadd.f32 %v778, %v802
      %v819 = vadd.f32 %v779, %v802
      %v820 = vadd.f32 %v780, %v802
      %v821 = vadd.f32 %v781, %v807
      %v822 = vadd.f32 %v782, %v807
      %v823 = vadd.f32 %v783, %v807
      %v824 = vadd.f32 %v784, %v807
      %v825 = vmax.f32 %v809, 0.0
      %v826 = vmax.f32 %v810, 0.0
      %v827 = vmax.f32 %v811, 0.0
      %v828 = vmax.f32 %v812, 0.0
      %v829 = vmax.f32 %v813, 0.0
      %v830 = vmax.f32 %v814, 0.0
      %v831 = vmax.f32 %v815, 0.0
      %v832 = vmax.f32 %v816, 0.0
      %v833 = vmax.f32 %v817, 0.0
      %v834 = vmax.f32 %v818, 0.0
      %v835 = vmax.f32 %v819, 0.0
      %v836 = vmax.f32 %v820, 0.0
      %v837 = vmax.f32 %v821, 0.0
      %v838 = vmax.f32 %v822, 0.0
      %v839 = vmax.f32 %v823, 0.0
      %v840 = vmax.f32 %v824, 0.0
      %841 = vrot.lane.b32.xlu0 %v825, 15
      %v842 = vpop.permute.xlu0 %841
      %843 = vrot.lane.b32.xlu0 %v829, 15
      %v844 = vpop.permute.xlu0 %843
      %845 = vrot.lane.b32.xlu0 %v833, 15
      %v846 = vpop.permute.xlu0 %845
      %847 = vrot.lane.b32.xlu0 %v837, 15
      %v848 = vpop.permute.xlu0 %847
      %849 = vrot.lane.b32.xlu0 %v826, 15
      %v850 = vpop.permute.xlu0 %849
      %851 = vrot.lane.b32.xlu0 %v830, 15
      %v852 = vpop.permute.xlu0 %851
      %853 = vrot.lane.b32.xlu0 %v834, 15
      %v854 = vpop.permute.xlu0 %853
      %855 = vrot.lane.b32.xlu0 %v838, 15
      %v856 = vpop.permute.xlu0 %855
      %857 = vrot.lane.b32.xlu0 %v827, 15
      %v858 = vpop.permute.xlu0 %857
      %859 = vrot.lane.b32.xlu0 %v831, 15
      %v860 = vpop.permute.xlu0 %859
      %861 = vrot.lane.b32.xlu0 %v835, 15
      %v862 = vpop.permute.xlu0 %861
      %863 = vrot.lane.b32.xlu0 %v839, 15
      %v864 = vpop.permute.xlu0 %863
      %865 = vrot.lane.b32.xlu0 %v828, 15
      %v866 = vpop.permute.xlu0 %865
      %867 = vrot.lane.b32.xlu0 %v832, 15
      %v868 = vpop.permute.xlu0 %867
      %869 = vrot.lane.b32.xlu0 %v836, 15
      %v870 = vpop.permute.xlu0 %869
      %871 = vrot.lane.b32.xlu0 %v840, 15
      %v872 = vpop.permute.xlu0 %871
      %v873 = vlaneseq
      %v874 = vand.u32 %v873, 127
      %vm875 = vcmp.lt.s32.totalorder %v874, 15
      %v876 = vsel %vm875, %v858, %v866
      %v877 = vsel %vm875, %v860, %v868
      %v878 = vsel %vm875, %v862, %v870
      %v879 = vsel %vm875, %v864, %v872
      %v880 = vsel %vm875, %v850, %v858
      %v881 = vsel %vm875, %v852, %v860
      %v882 = vsel %vm875, %v854, %v862
      %v883 = vsel %vm875, %v856, %v864
      %v884 = vsel %vm875, %v842, %v850
      %v885 = vsel %vm875, %v844, %v852
      %v886 = vsel %vm875, %v846, %v854
      %v887 = vsel %vm875, %v848, %v856
      %v888 = vsel %vm875, %v866, %v842
      %v889 = vsel %vm875, %v868, %v844
      %v890 = vsel %vm875, %v870, %v846
      %v891 = vsel %vm875, %v872, %v848
      %v892 = vld [vmem:[%s3] ss:$8 sm:$0xf]
      %v894 = vperm.slane %v892, 0
      %v895 = vperm.slane %v892, 1
      %v896 = vperm.slane %v892, 2
      %v897 = vperm.slane %v892, 3
      %v902 = vmul.f32 %v888, %v894
      %v903 = vmul.f32 %v884, %v895
      %v904 = vmul.f32 %v880, %v896
      %v905 = vmul.f32 %v876, %v897
      %v906 = vmul.f32 %v889, %v894
      %v907 = vmul.f32 %v885, %v895
      %v908 = vmul.f32 %v881, %v896
      %v909 = vmul.f32 %v877, %v897
      %v910 = vmul.f32 %v890, %v894
      %v911 = vmul.f32 %v886, %v895
      %v912 = vmul.f32 %v882, %v896
      %v913 = vmul.f32 %v878, %v897
      %v914 = vmul.f32 %v891, %v894
      %v915 = vmul.f32 %v887, %v895
      %v916 = vmul.f32 %v883, %v896
      %v917 = vmul.f32 %v879, %v897
      %v918 = vpack.c.bf16 %v903, %v902
      %v919 = vpack.c.bf16 %v905, %v904
      %v920 = vpack.c.bf16 %v907, %v906
      %v921 = vpack.c.bf16 %v909, %v908
      %v922 = vpack.c.bf16 %v911, %v910
      %v923 = vpack.c.bf16 %v913, %v912
      %v924 = vpack.c.bf16 %v915, %v914
      %v925 = vpack.c.bf16 %v917, %v916
      %926 = vst [vmem:[#allocation2] sm:$0xff] %v918
      %927 = vst [vmem:[#allocation2 + $0x8] sm:$0xff] %v919
      %928 = vst [vmem:[#allocation2 + $0x10] sm:$0xff] %v920
      %929 = vst [vmem:[#allocation2 + $0x18] sm:$0xff] %v921
      %930 = vst [vmem:[#allocation2 + $0x20] sm:$0xff] %v922
      %931 = vst [vmem:[#allocation2 + $0x28] sm:$0xff] %v923
      %932 = vst [vmem:[#allocation2 + $0x30] sm:$0xff] %v924
      %933 = vst [vmem:[#allocation2 + $0x38] sm:$0xff] %v925
      %934 = vrot.lane.b32.xlu0 %v825, 14
      %v935 = vpop.permute.xlu0 %934
      %936 = vrot.lane.b32.xlu0 %v829, 14
      %v937 = vpop.permute.xlu0 %936
      %938 = vrot.lane.b32.xlu0 %v833, 14
      %v939 = vpop.permute.xlu0 %938
      %940 = vrot.lane.b32.xlu0 %v837, 14
      %v941 = vpop.permute.xlu0 %940
      %942 = vrot.lane.b32.xlu0 %v826, 14
      %v943 = vpop.permute.xlu0 %942
      %944 = vrot.lane.b32.xlu0 %v830, 14
      %v945 = vpop.permute.xlu0 %944
      %946 = vrot.lane.b32.xlu0 %v834, 14
      %v947 = vpop.permute.xlu0 %946
      %948 = vrot.lane.b32.xlu0 %v838, 14
      %v949 = vpop.permute.xlu0 %948
      %950 = vrot.lane.b32.xlu0 %v827, 14
      %v951 = vpop.permute.xlu0 %950
      %952 = vrot.lane.b32.xlu0 %v831, 14
      %v953 = vpop.permute.xlu0 %952
      %954 = vrot.lane.b32.xlu0 %v835, 14
      %v955 = vpop.permute.xlu0 %954
      %956 = vrot.lane.b32.xlu0 %v839, 14
      %v957 = vpop.permute.xlu0 %956
      %958 = vrot.lane.b32.xlu0 %v828, 14
      %v959 = vpop.permute.xlu0 %958
      %960 = vrot.lane.b32.xlu0 %v832, 14
      %v961 = vpop.permute.xlu0 %960
      %962 = vrot.lane.b32.xlu0 %v836, 14
      %v963 = vpop.permute.xlu0 %962
      %964 = vrot.lane.b32.xlu0 %v840, 14
      %v965 = vpop.permute.xlu0 %964
      %vm966 = vcmp.lt.s32.totalorder %v874, 14
      %v967 = vsel %vm966, %v951, %v959
      %v968 = vsel %vm966, %v953, %v961
      %v969 = vsel %vm966, %v955, %v963
      %v970 = vsel %vm966, %v957, %v965
      %v971 = vsel %vm966, %v943, %v951
      %v972 = vsel %vm966, %v945, %v953
      %v973 = vsel %vm966, %v947, %v955
      %v974 = vsel %vm966, %v949, %v957
      %v975 = vsel %vm966, %v935, %v943
      %v976 = vsel %vm966, %v937, %v945
      %v977 = vsel %vm966, %v939, %v947
      %v978 = vsel %vm966, %v941, %v949
      %v979 = vsel %vm966, %v959, %v935
      %v980 = vsel %vm966, %v961, %v937
      %v981 = vsel %vm966, %v963, %v939
      %v982 = vsel %vm966, %v965, %v941
      %s983 = scalar_lea.vmem %s3, 1
      %v984 = vld [vmem:[%s983] ss:$8 sm:$0xf]
      %v986 = vperm.slane %v984, 0
      %v987 = vperm.slane %v984, 1
      %v988 = vperm.slane %v984, 2
      %v989 = vperm.slane %v984, 3
      %v994 = vmul.f32 %v979, %v986
      %v995 = vmul.f32 %v975, %v987
      %v996 = vmul.f32 %v971, %v988
      %v997 = vmul.f32 %v967, %v989
      %v998 = vmul.f32 %v980, %v986
      %v999 = vmul.f32 %v976, %v987
      %v1000 = vmul.f32 %v972, %v988
      %v1001 = vmul.f32 %v968, %v989
      %v1002 = vmul.f32 %v981, %v986
      %v1003 = vmul.f32 %v977, %v987
      %v1004 = vmul.f32 %v973, %v988
      %v1005 = vmul.f32 %v969, %v989
      %v1006 = vmul.f32 %v982, %v986
      %v1007 = vmul.f32 %v978, %v987
      %v1008 = vmul.f32 %v974, %v988
      %v1009 = vmul.f32 %v970, %v989
      %v1010 = vpack.c.bf16 %v995, %v994
      %v1011 = vpack.c.bf16 %v997, %v996
      %v1012 = vpack.c.bf16 %v999, %v998
      %v1013 = vpack.c.bf16 %v1001, %v1000
      %v1014 = vpack.c.bf16 %v1003, %v1002
      %v1015 = vpack.c.bf16 %v1005, %v1004
      %v1016 = vpack.c.bf16 %v1007, %v1006
      %v1017 = vpack.c.bf16 %v1009, %v1008
      %1018 = vst [vmem:[#allocation2 + $0x40] sm:$0xff] %v1010
      %1019 = vst [vmem:[#allocation2 + $0x48] sm:$0xff] %v1011
      %1020 = vst [vmem:[#allocation2 + $0x50] sm:$0xff] %v1012
      %1021 = vst [vmem:[#allocation2 + $0x58] sm:$0xff] %v1013
      %1022 = vst [vmem:[#allocation2 + $0x60] sm:$0xff] %v1014
      %1023 = vst [vmem:[#allocation2 + $0x68] sm:$0xff] %v1015
      %1024 = vst [vmem:[#allocation2 + $0x70] sm:$0xff] %v1016
      %1025 = vst [vmem:[#allocation2 + $0x78] sm:$0xff] %v1017
      %1026 = vrot.lane.b32.xlu0 %v825, 13
      %v1027 = vpop.permute.xlu0 %1026
      %1028 = vrot.lane.b32.xlu0 %v829, 13
      %v1029 = vpop.permute.xlu0 %1028
      %1030 = vrot.lane.b32.xlu0 %v833, 13
      %v1031 = vpop.permute.xlu0 %1030
      %1032 = vrot.lane.b32.xlu0 %v837, 13
      %v1033 = vpop.permute.xlu0 %1032
      %1034 = vrot.lane.b32.xlu0 %v826, 13
      %v1035 = vpop.permute.xlu0 %1034
      %1036 = vrot.lane.b32.xlu0 %v830, 13
      %v1037 = vpop.permute.xlu0 %1036
      %1038 = vrot.lane.b32.xlu0 %v834, 13
      %v1039 = vpop.permute.xlu0 %1038
      %1040 = vrot.lane.b32.xlu0 %v838, 13
      %v1041 = vpop.permute.xlu0 %1040
      %1042 = vrot.lane.b32.xlu0 %v827, 13
      %v1043 = vpop.permute.xlu0 %1042
      %1044 = vrot.lane.b32.xlu0 %v831, 13
      %v1045 = vpop.permute.xlu0 %1044
      %1046 = vrot.lane.b32.xlu0 %v835, 13
      %v1047 = vpop.permute.xlu0 %1046
      %1048 = vrot.lane.b32.xlu0 %v839, 13
      %v1049 = vpop.permute.xlu0 %1048
      %1050 = vrot.lane.b32.xlu0 %v828, 13
      %v1051 = vpop.permute.xlu0 %1050
      %1052 = vrot.lane.b32.xlu0 %v832, 13
      %v1053 = vpop.permute.xlu0 %1052
      %1054 = vrot.lane.b32.xlu0 %v836, 13
      %v1055 = vpop.permute.xlu0 %1054
      %1056 = vrot.lane.b32.xlu0 %v840, 13
      %v1057 = vpop.permute.xlu0 %1056
      %vm1058 = vcmp.lt.s32.totalorder %v874, 13
      %v1059 = vsel %vm1058, %v1043, %v1051
      %v1060 = vsel %vm1058, %v1045, %v1053
      %v1061 = vsel %vm1058, %v1047, %v1055
      %v1062 = vsel %vm1058, %v1049, %v1057
      %v1063 = vsel %vm1058, %v1035, %v1043
      %v1064 = vsel %vm1058, %v1037, %v1045
      %v1065 = vsel %vm1058, %v1039, %v1047
      %v1066 = vsel %vm1058, %v1041, %v1049
      %v1067 = vsel %vm1058, %v1027, %v1035
      %v1068 = vsel %vm1058, %v1029, %v1037
      %v1069 = vsel %vm1058, %v1031, %v1039
      %v1070 = vsel %vm1058, %v1033, %v1041
      %v1071 = vsel %vm1058, %v1051, %v1027
      %v1072 = vsel %vm1058, %v1053, %v1029
      %v1073 = vsel %vm1058, %v1055, %v1031
      %v1074 = vsel %vm1058, %v1057, %v1033
      %s1075 = scalar_lea.vmem %s3, 2
      %v1076 = vld [vmem:[%s1075] ss:$8 sm:$0xf]
      %v1078 = vperm.slane %v1076, 0
      %v1079 = vperm.slane %v1076, 1
      %v1080 = vperm.slane %v1076, 2
      %v1081 = vperm.slane %v1076, 3
      %v1086 = vmul.f32 %v1071, %v1078
      %v1087 = vmul.f32 %v1067, %v1079
      %v1088 = vmul.f32 %v1063, %v1080
      %v1089 = vmul.f32 %v1059, %v1081
      %v1090 = vmul.f32 %v1072, %v1078
      %v1091 = vmul.f32 %v1068, %v1079
      %v1092 = vmul.f32 %v1064, %v1080
      %v1093 = vmul.f32 %v1060, %v1081
      %v1094 = vmul.f32 %v1073, %v1078
      %v1095 = vmul.f32 %v1069, %v1079
      %v1096 = vmul.f32 %v1065, %v1080
      %v1097 = vmul.f32 %v1061, %v1081
      %v1098 = vmul.f32 %v1074, %v1078
      %v1099 = vmul.f32 %v1070, %v1079
      %v1100 = vmul.f32 %v1066, %v1080
      %v1101 = vmul.f32 %v1062, %v1081
      %v1102 = vpack.c.bf16 %v1087, %v1086
      %v1103 = vpack.c.bf16 %v1089, %v1088
      %v1104 = vpack.c.bf16 %v1091, %v1090
      %v1105 = vpack.c.bf16 %v1093, %v1092
      %v1106 = vpack.c.bf16 %v1095, %v1094
      %v1107 = vpack.c.bf16 %v1097, %v1096
      %v1108 = vpack.c.bf16 %v1099, %v1098
      %v1109 = vpack.c.bf16 %v1101, %v1100
      %1110 = vst [vmem:[#allocation2 + $0x80] sm:$0xff] %v1102
      %1111 = vst [vmem:[#allocation2 + $0x88] sm:$0xff] %v1103
      %1112 = vst [vmem:[#allocation2 + $0x90] sm:$0xff] %v1104
      %1113 = vst [vmem:[#allocation2 + $0x98] sm:$0xff] %v1105
      %1114 = vst [vmem:[#allocation2 + $0xa0] sm:$0xff] %v1106
      %1115 = vst [vmem:[#allocation2 + $0xa8] sm:$0xff] %v1107
      %1116 = vst [vmem:[#allocation2 + $0xb0] sm:$0xff] %v1108
      %1117 = vst [vmem:[#allocation2 + $0xb8] sm:$0xff] %v1109
      %1118 = vrot.lane.b32.xlu0 %v825, 1
      %v1119 = vpop.permute.xlu0 %1118
      %1120 = vrot.lane.b32.xlu0 %v829, 1
      %v1121 = vpop.permute.xlu0 %1120
      %1122 = vrot.lane.b32.xlu0 %v833, 1
      %v1123 = vpop.permute.xlu0 %1122
      %1124 = vrot.lane.b32.xlu0 %v837, 1
      %v1125 = vpop.permute.xlu0 %1124
      %1126 = vrot.lane.b32.xlu0 %v826, 1
      %v1127 = vpop.permute.xlu0 %1126
      %1128 = vrot.lane.b32.xlu0 %v830, 1
      %v1129 = vpop.permute.xlu0 %1128
      %1130 = vrot.lane.b32.xlu0 %v834, 1
      %v1131 = vpop.permute.xlu0 %1130
      %1132 = vrot.lane.b32.xlu0 %v838, 1
      %v1133 = vpop.permute.xlu0 %1132
      %1134 = vrot.lane.b32.xlu0 %v827, 1
      %v1135 = vpop.permute.xlu0 %1134
      %1136 = vrot.lane.b32.xlu0 %v831, 1
      %v1137 = vpop.permute.xlu0 %1136
      %1138 = vrot.lane.b32.xlu0 %v835, 1
      %v1139 = vpop.permute.xlu0 %1138
      %1140 = vrot.lane.b32.xlu0 %v839, 1
      %v1141 = vpop.permute.xlu0 %1140
      %1142 = vrot.lane.b32.xlu0 %v828, 1
      %v1143 = vpop.permute.xlu0 %1142
      %1144 = vrot.lane.b32.xlu0 %v832, 1
      %v1145 = vpop.permute.xlu0 %1144
      %1146 = vrot.lane.b32.xlu0 %v836, 1
      %v1147 = vpop.permute.xlu0 %1146
      %1148 = vrot.lane.b32.xlu0 %v840, 1
      %v1149 = vpop.permute.xlu0 %1148
      %vm1150 = vcmp.lt.s32.totalorder %v874, 1
      %v1151 = vsel %vm1150, %v1135, %v1143
      %v1152 = vsel %vm1150, %v1137, %v1145
      %v1153 = vsel %vm1150, %v1139, %v1147
      %v1154 = vsel %vm1150, %v1141, %v1149
      %v1155 = vsel %vm1150, %v1127, %v1135
      %v1156 = vsel %vm1150, %v1129, %v1137
      %v1157 = vsel %vm1150, %v1131, %v1139
      %v1158 = vsel %vm1150, %v1133, %v1141
      %v1159 = vsel %vm1150, %v1119, %v1127
      %v1160 = vsel %vm1150, %v1121, %v1129
      %v1161 = vsel %vm1150, %v1123, %v1131
      %v1162 = vsel %vm1150, %v1125, %v1133
      %v1163 = vsel %vm1150, %v1143, %v1119
      %v1164 = vsel %vm1150, %v1145, %v1121
      %v1165 = vsel %vm1150, %v1147, %v1123
      %v1166 = vsel %vm1150, %v1149, %v1125
      %s1167 = scalar_lea.vmem %s3, 3
      %v1168 = vld [vmem:[%s1167] ss:$8 sm:$0xf]
      %v1170 = vperm.slane %v1168, 0
      %v1171 = vperm.slane %v1168, 1
      %v1172 = vperm.slane %v1168, 2
      %v1173 = vperm.slane %v1168, 3
      %v1178 = vmul.f32 %v1163, %v1170
      %v1179 = vmul.f32 %v1159, %v1171
      %v1180 = vmul.f32 %v1155, %v1172
      %v1181 = vmul.f32 %v1151, %v1173
      %v1182 = vmul.f32 %v1164, %v1170
      %v1183 = vmul.f32 %v1160, %v1171
      %v1184 = vmul.f32 %v1156, %v1172
      %v1185 = vmul.f32 %v1152, %v1173
      %v1186 = vmul.f32 %v1165, %v1170
      %v1187 = vmul.f32 %v1161, %v1171
      %v1188 = vmul.f32 %v1157, %v1172
      %v1189 = vmul.f32 %v1153, %v1173
      %v1190 = vmul.f32 %v1166, %v1170
      %v1191 = vmul.f32 %v1162, %v1171
      %v1192 = vmul.f32 %v1158, %v1172
      %v1193 = vmul.f32 %v1154, %v1173
      %v1194 = vpack.c.bf16 %v1179, %v1178
      %v1195 = vpack.c.bf16 %v1181, %v1180
      %v1196 = vpack.c.bf16 %v1183, %v1182
      %v1197 = vpack.c.bf16 %v1185, %v1184
      %v1198 = vpack.c.bf16 %v1187, %v1186
      %v1199 = vpack.c.bf16 %v1189, %v1188
      %v1200 = vpack.c.bf16 %v1191, %v1190
      %v1201 = vpack.c.bf16 %v1193, %v1192
      %1202 = vst [vmem:[#allocation2 + $0xc0] sm:$0xff] %v1194
      %1203 = vst [vmem:[#allocation2 + $0xc8] sm:$0xff] %v1195
      %1204 = vst [vmem:[#allocation2 + $0xd0] sm:$0xff] %v1196
      %1205 = vst [vmem:[#allocation2 + $0xd8] sm:$0xff] %v1197
      %1206 = vst [vmem:[#allocation2 + $0xe0] sm:$0xff] %v1198
      %1207 = vst [vmem:[#allocation2 + $0xe8] sm:$0xff] %v1199
      %1208 = vst [vmem:[#allocation2 + $0xf0] sm:$0xff] %v1200
      %1209 = vst [vmem:[#allocation2 + $0xf8] sm:$0xff] %v1201
      %s1210 = scalar_lea.vmem %s3, 4
      %v1211 = vld [vmem:[%s1210] ss:$8 sm:$0xf]
      %v1213 = vperm.slane %v1211, 0
      %v1214 = vperm.slane %v1211, 1
      %v1215 = vperm.slane %v1211, 2
      %v1216 = vperm.slane %v1211, 3
      %v1221 = vmul.f32 %v825, %v1213
      %v1222 = vmul.f32 %v826, %v1214
      %v1223 = vmul.f32 %v827, %v1215
      %v1224 = vmul.f32 %v828, %v1216
      %v1225 = vmul.f32 %v829, %v1213
      %v1226 = vmul.f32 %v830, %v1214
      %v1227 = vmul.f32 %v831, %v1215
      %v1228 = vmul.f32 %v832, %v1216
      %v1229 = vmul.f32 %v833, %v1213
      %v1230 = vmul.f32 %v834, %v1214
      %v1231 = vmul.f32 %v835, %v1215
      %v1232 = vmul.f32 %v836, %v1216
      %v1233 = vmul.f32 %v837, %v1213
      %v1234 = vmul.f32 %v838, %v1214
      %v1235 = vmul.f32 %v839, %v1215
      %v1236 = vmul.f32 %v840, %v1216
      %v1237 = vpack.c.bf16 %v1222, %v1221
      %v1238 = vpack.c.bf16 %v1224, %v1223
      %v1239 = vpack.c.bf16 %v1226, %v1225
      %v1240 = vpack.c.bf16 %v1228, %v1227
      %v1241 = vpack.c.bf16 %v1230, %v1229
      %v1242 = vpack.c.bf16 %v1232, %v1231
      %v1243 = vpack.c.bf16 %v1234, %v1233
      %v1244 = vpack.c.bf16 %v1236, %v1235
      %1245 = vst [vmem:[#allocation2 + $0x100] sm:$0xff] %v1237
      %1246 = vst [vmem:[#allocation2 + $0x108] sm:$0xff] %v1238
      %1247 = vst [vmem:[#allocation2 + $0x110] sm:$0xff] %v1239
      %1248 = vst [vmem:[#allocation2 + $0x118] sm:$0xff] %v1240
      %1249 = vst [vmem:[#allocation2 + $0x120] sm:$0xff] %v1241
      %1250 = vst [vmem:[#allocation2 + $0x128] sm:$0xff] %v1242
      %1251 = vst [vmem:[#allocation2 + $0x130] sm:$0xff] %v1243
      %1252 = vst [vmem:[#allocation2 + $0x138] sm:$0xff] %v1244
      %1253 = vrot.lane.b32.xlu0 %v825, 127
      %v1254 = vpop.permute.xlu0 %1253
      %1255 = vrot.lane.b32.xlu0 %v829, 127
      %v1256 = vpop.permute.xlu0 %1255
      %1257 = vrot.lane.b32.xlu0 %v833, 127
      %v1258 = vpop.permute.xlu0 %1257
      %1259 = vrot.lane.b32.xlu0 %v837, 127
      %v1260 = vpop.permute.xlu0 %1259
      %1261 = vrot.lane.b32.xlu0 %v826, 127
      %v1262 = vpop.permute.xlu0 %1261
      %1263 = vrot.lane.b32.xlu0 %v830, 127
      %v1264 = vpop.permute.xlu0 %1263
      %1265 = vrot.lane.b32.xlu0 %v834, 127
      %v1266 = vpop.permute.xlu0 %1265
      %1267 = vrot.lane.b32.xlu0 %v838, 127
      %v1268 = vpop.permute.xlu0 %1267
      %1269 = vrot.lane.b32.xlu0 %v827, 127
      %v1270 = vpop.permute.xlu0 %1269
      %1271 = vrot.lane.b32.xlu0 %v831, 127
      %v1272 = vpop.permute.xlu0 %1271
      %1273 = vrot.lane.b32.xlu0 %v835, 127
      %v1274 = vpop.permute.xlu0 %1273
      %1275 = vrot.lane.b32.xlu0 %v839, 127
      %v1276 = vpop.permute.xlu0 %1275
      %1277 = vrot.lane.b32.xlu0 %v828, 127
      %v1278 = vpop.permute.xlu0 %1277
      %1279 = vrot.lane.b32.xlu0 %v832, 127
      %v1280 = vpop.permute.xlu0 %1279
      %1281 = vrot.lane.b32.xlu0 %v836, 127
      %v1282 = vpop.permute.xlu0 %1281
      %1283 = vrot.lane.b32.xlu0 %v840, 127
      %v1284 = vpop.permute.xlu0 %1283
      %vm1285 = vcmp.lt.s32.totalorder %v874, 127
      %v1286 = vsel %vm1285, %v1270, %v1278
      %v1287 = vsel %vm1285, %v1272, %v1280
      %v1288 = vsel %vm1285, %v1274, %v1282
      %v1289 = vsel %vm1285, %v1276, %v1284
      %v1290 = vsel %vm1285, %v1262, %v1270
      %v1291 = vsel %vm1285, %v1264, %v1272
      %v1292 = vsel %vm1285, %v1266, %v1274
      %v1293 = vsel %vm1285, %v1268, %v1276
      %v1294 = vsel %vm1285, %v1254, %v1262
      %v1295 = vsel %vm1285, %v1256, %v1264
      %v1296 = vsel %vm1285, %v1258, %v1266
      %v1297 = vsel %vm1285, %v1260, %v1268
      %v1298 = vsel %vm1285, %v1278, %v1254
      %v1299 = vsel %vm1285, %v1280, %v1256
      %v1300 = vsel %vm1285, %v1282, %v1258
      %v1301 = vsel %vm1285, %v1284, %v1260
      %s1302 = scalar_lea.vmem %s3, 5
      %v1303 = vld [vmem:[%s1302] ss:$8 sm:$0xf]
      %v1305 = vperm.slane %v1303, 0
      %v1306 = vperm.slane %v1303, 1
      %v1307 = vperm.slane %v1303, 2
      %v1308 = vperm.slane %v1303, 3
      %v1313 = vmul.f32 %v1294, %v1305
      %v1314 = vmul.f32 %v1290, %v1306
      %v1315 = vmul.f32 %v1286, %v1307
      %v1316 = vmul.f32 %v1298, %v1308
      %v1317 = vmul.f32 %v1295, %v1305
      %v1318 = vmul.f32 %v1291, %v1306
      %v1319 = vmul.f32 %v1287, %v1307
      %v1320 = vmul.f32 %v1299, %v1308
      %v1321 = vmul.f32 %v1296, %v1305
      %v1322 = vmul.f32 %v1292, %v1306
      %v1323 = vmul.f32 %v1288, %v1307
      %v1324 = vmul.f32 %v1300, %v1308
      %v1325 = vmul.f32 %v1297, %v1305
      %v1326 = vmul.f32 %v1293, %v1306
      %v1327 = vmul.f32 %v1289, %v1307
      %v1328 = vmul.f32 %v1301, %v1308
      %v1329 = vpack.c.bf16 %v1314, %v1313
      %v1330 = vpack.c.bf16 %v1316, %v1315
      %v1331 = vpack.c.bf16 %v1318, %v1317
      %v1332 = vpack.c.bf16 %v1320, %v1319
      %v1333 = vpack.c.bf16 %v1322, %v1321
      %v1334 = vpack.c.bf16 %v1324, %v1323
      %v1335 = vpack.c.bf16 %v1326, %v1325
      %v1336 = vpack.c.bf16 %v1328, %v1327
      %1337 = vst [vmem:[#allocation2 + $0x140] sm:$0xff] %v1329
      %1338 = vst [vmem:[#allocation2 + $0x148] sm:$0xff] %v1330
      %1339 = vst [vmem:[#allocation2 + $0x150] sm:$0xff] %v1331
      %1340 = vst [vmem:[#allocation2 + $0x158] sm:$0xff] %v1332
      %1341 = vst [vmem:[#allocation2 + $0x160] sm:$0xff] %v1333
      %1342 = vst [vmem:[#allocation2 + $0x168] sm:$0xff] %v1334
      %1343 = vst [vmem:[#allocation2 + $0x170] sm:$0xff] %v1335
      %1344 = vst [vmem:[#allocation2 + $0x178] sm:$0xff] %v1336
      %1345 = vrot.lane.b32.xlu0 %v825, 115
      %v1346 = vpop.permute.xlu0 %1345
      %1347 = vrot.lane.b32.xlu0 %v829, 115
      %v1348 = vpop.permute.xlu0 %1347
      %1349 = vrot.lane.b32.xlu0 %v833, 115
      %v1350 = vpop.permute.xlu0 %1349
      %1351 = vrot.lane.b32.xlu0 %v837, 115
      %v1352 = vpop.permute.xlu0 %1351
      %1353 = vrot.lane.b32.xlu0 %v826, 115
      %v1354 = vpop.permute.xlu0 %1353
      %1355 = vrot.lane.b32.xlu0 %v830, 115
      %v1356 = vpop.permute.xlu0 %1355
      %1357 = vrot.lane.b32.xlu0 %v834, 115
      %v1358 = vpop.permute.xlu0 %1357
      %1359 = vrot.lane.b32.xlu0 %v838, 115
      %v1360 = vpop.permute.xlu0 %1359
      %1361 = vrot.lane.b32.xlu0 %v827, 115
      %v1362 = vpop.permute.xlu0 %1361
      %1363 = vrot.lane.b32.xlu0 %v831, 115
      %v1364 = vpop.permute.xlu0 %1363
      %1365 = vrot.lane.b32.xlu0 %v835, 115
      %v1366 = vpop.permute.xlu0 %1365
      %1367 = vrot.lane.b32.xlu0 %v839, 115
      %v1368 = vpop.permute.xlu0 %1367
      %1369 = vrot.lane.b32.xlu0 %v828, 115
      %v1370 = vpop.permute.xlu0 %1369
      %1371 = vrot.lane.b32.xlu0 %v832, 115
      %v1372 = vpop.permute.xlu0 %1371
      %1373 = vrot.lane.b32.xlu0 %v836, 115
      %v1374 = vpop.permute.xlu0 %1373
      %1375 = vrot.lane.b32.xlu0 %v840, 115
      %v1376 = vpop.permute.xlu0 %1375
      %vm1377 = vcmp.lt.s32.totalorder %v874, 115
      %v1378 = vsel %vm1377, %v1362, %v1370
      %v1379 = vsel %vm1377, %v1364, %v1372
      %v1380 = vsel %vm1377, %v1366, %v1374
      %v1381 = vsel %vm1377, %v1368, %v1376
      %v1382 = vsel %vm1377, %v1354, %v1362
      %v1383 = vsel %vm1377, %v1356, %v1364
      %v1384 = vsel %vm1377, %v1358, %v1366
      %v1385 = vsel %vm1377, %v1360, %v1368
      %v1386 = vsel %vm1377, %v1346, %v1354
      %v1387 = vsel %vm1377, %v1348, %v1356
      %v1388 = vsel %vm1377, %v1350, %v1358
      %v1389 = vsel %vm1377, %v1352, %v1360
      %v1390 = vsel %vm1377, %v1370, %v1346
      %v1391 = vsel %vm1377, %v1372, %v1348
      %v1392 = vsel %vm1377, %v1374, %v1350
      %v1393 = vsel %vm1377, %v1376, %v1352
      %s1394 = scalar_lea.vmem %s3, 6
      %v1395 = vld [vmem:[%s1394] ss:$8 sm:$0xf]
      %v1397 = vperm.slane %v1395, 0
      %v1398 = vperm.slane %v1395, 1
      %v1399 = vperm.slane %v1395, 2
      %v1400 = vperm.slane %v1395, 3
      %v1405 = vmul.f32 %v1386, %v1397
      %v1406 = vmul.f32 %v1382, %v1398
      %v1407 = vmul.f32 %v1378, %v1399
      %v1408 = vmul.f32 %v1390, %v1400
      %v1409 = vmul.f32 %v1387, %v1397
      %v1410 = vmul.f32 %v1383, %v1398
      %v1411 = vmul.f32 %v1379, %v1399
      %v1412 = vmul.f32 %v1391, %v1400
      %v1413 = vmul.f32 %v1388, %v1397
      %v1414 = vmul.f32 %v1384, %v1398
      %v1415 = vmul.f32 %v1380, %v1399
      %v1416 = vmul.f32 %v1392, %v1400
      %v1417 = vmul.f32 %v1389, %v1397
      %v1418 = vmul.f32 %v1385, %v1398
      %v1419 = vmul.f32 %v1381, %v1399
      %v1420 = vmul.f32 %v1393, %v1400
      %v1421 = vpack.c.bf16 %v1406, %v1405
      %v1422 = vpack.c.bf16 %v1408, %v1407
      %v1423 = vpack.c.bf16 %v1410, %v1409
      %v1424 = vpack.c.bf16 %v1412, %v1411
      %v1425 = vpack.c.bf16 %v1414, %v1413
      %v1426 = vpack.c.bf16 %v1416, %v1415
      %v1427 = vpack.c.bf16 %v1418, %v1417
      %v1428 = vpack.c.bf16 %v1420, %v1419
      %1429 = vst [vmem:[#allocation2 + $0x180] sm:$0xff] %v1421
      %1430 = vst [vmem:[#allocation2 + $0x188] sm:$0xff] %v1422
      %1431 = vst [vmem:[#allocation2 + $0x190] sm:$0xff] %v1423
      %1432 = vst [vmem:[#allocation2 + $0x198] sm:$0xff] %v1424
      %1433 = vst [vmem:[#allocation2 + $0x1a0] sm:$0xff] %v1425
      %1434 = vst [vmem:[#allocation2 + $0x1a8] sm:$0xff] %v1426
      %1435 = vst [vmem:[#allocation2 + $0x1b0] sm:$0xff] %v1427
      %1436 = vst [vmem:[#allocation2 + $0x1b8] sm:$0xff] %v1428
      %1437 = vrot.lane.b32.xlu0 %v825, 114
      %v1438 = vpop.permute.xlu0 %1437
      %1439 = vrot.lane.b32.xlu0 %v829, 114
      %v1440 = vpop.permute.xlu0 %1439
      %1441 = vrot.lane.b32.xlu0 %v833, 114
      %v1442 = vpop.permute.xlu0 %1441
      %1443 = vrot.lane.b32.xlu0 %v837, 114
      %v1444 = vpop.permute.xlu0 %1443
      %1445 = vrot.lane.b32.xlu0 %v826, 114
      %v1446 = vpop.permute.xlu0 %1445
      %1447 = vrot.lane.b32.xlu0 %v830, 114
      %v1448 = vpop.permute.xlu0 %1447
      %1449 = vrot.lane.b32.xlu0 %v834, 114
      %v1450 = vpop.permute.xlu0 %1449
      %1451 = vrot.lane.b32.xlu0 %v838, 114
      %v1452 = vpop.permute.xlu0 %1451
      %1453 = vrot.lane.b32.xlu0 %v827, 114
      %v1454 = vpop.permute.xlu0 %1453
      %1455 = vrot.lane.b32.xlu0 %v831, 114
      %v1456 = vpop.permute.xlu0 %1455
      %1457 = vrot.lane.b32.xlu0 %v835, 114
      %v1458 = vpop.permute.xlu0 %1457
      %1459 = vrot.lane.b32.xlu0 %v839, 114
      %v1460 = vpop.permute.xlu0 %1459
      %1461 = vrot.lane.b32.xlu0 %v828, 114
      %v1462 = vpop.permute.xlu0 %1461
      %1463 = vrot.lane.b32.xlu0 %v832, 114
      %v1464 = vpop.permute.xlu0 %1463
      %1465 = vrot.lane.b32.xlu0 %v836, 114
      %v1466 = vpop.permute.xlu0 %1465
      %1467 = vrot.lane.b32.xlu0 %v840, 114
      %v1468 = vpop.permute.xlu0 %1467
      %vm1469 = vcmp.lt.s32.totalorder %v874, 114
      %v1470 = vsel %vm1469, %v1454, %v1462
      %v1471 = vsel %vm1469, %v1456, %v1464
      %v1472 = vsel %vm1469, %v1458, %v1466
      %v1473 = vsel %vm1469, %v1460, %v1468
      %v1474 = vsel %vm1469, %v1446, %v1454
      %v1475 = vsel %vm1469, %v1448, %v1456
      %v1476 = vsel %vm1469, %v1450, %v1458
      %v1477 = vsel %vm1469, %v1452, %v1460
      %v1478 = vsel %vm1469, %v1438, %v1446
      %v1479 = vsel %vm1469, %v1440, %v1448
      %v1480 = vsel %vm1469, %v1442, %v1450
      %v1481 = vsel %vm1469, %v1444, %v1452
      %v1482 = vsel %vm1469, %v1462, %v1438
      %v1483 = vsel %vm1469, %v1464, %v1440
      %v1484 = vsel %vm1469, %v1466, %v1442
      %v1485 = vsel %vm1469, %v1468, %v1444
      %s1486 = scalar_lea.vmem %s3, 7
      %v1487 = vld [vmem:[%s1486] ss:$8 sm:$0xf]
      %v1489 = vperm.slane %v1487, 0
      %v1490 = vperm.slane %v1487, 1
      %v1491 = vperm.slane %v1487, 2
      %v1492 = vperm.slane %v1487, 3
      %v1497 = vmul.f32 %v1478, %v1489
      %v1498 = vmul.f32 %v1474, %v1490
      %v1499 = vmul.f32 %v1470, %v1491
      %v1500 = vmul.f32 %v1482, %v1492
      %v1501 = vmul.f32 %v1479, %v1489
      %v1502 = vmul.f32 %v1475, %v1490
      %v1503 = vmul.f32 %v1471, %v1491
      %v1504 = vmul.f32 %v1483, %v1492
      %v1505 = vmul.f32 %v1480, %v1489
      %v1506 = vmul.f32 %v1476, %v1490
      %v1507 = vmul.f32 %v1472, %v1491
      %v1508 = vmul.f32 %v1484, %v1492
      %v1509 = vmul.f32 %v1481, %v1489
      %v1510 = vmul.f32 %v1477, %v1490
      %v1511 = vmul.f32 %v1473, %v1491
      %v1512 = vmul.f32 %v1485, %v1492
      %v1513 = vpack.c.bf16 %v1498, %v1497
      %v1514 = vpack.c.bf16 %v1500, %v1499
      %v1515 = vpack.c.bf16 %v1502, %v1501
      %v1516 = vpack.c.bf16 %v1504, %v1503
      %v1517 = vpack.c.bf16 %v1506, %v1505
      %v1518 = vpack.c.bf16 %v1508, %v1507
      %v1519 = vpack.c.bf16 %v1510, %v1509
      %v1520 = vpack.c.bf16 %v1512, %v1511
      %1521 = vst [vmem:[#allocation2 + $0x1c0] sm:$0xff] %v1513
      %1522 = vst [vmem:[#allocation2 + $0x1c8] sm:$0xff] %v1514
      %1523 = vst [vmem:[#allocation2 + $0x1d0] sm:$0xff] %v1515
      %1524 = vst [vmem:[#allocation2 + $0x1d8] sm:$0xff] %v1516
      %1525 = vst [vmem:[#allocation2 + $0x1e0] sm:$0xff] %v1517
      %1526 = vst [vmem:[#allocation2 + $0x1e8] sm:$0xff] %v1518
      %1527 = vst [vmem:[#allocation2 + $0x1f0] sm:$0xff] %v1519
      %1528 = vst [vmem:[#allocation2 + $0x1f8] sm:$0xff] %v1520
      %1529 = vrot.lane.b32.xlu0 %v825, 113
      %v1530 = vpop.permute.xlu0 %1529
      %1531 = vrot.lane.b32.xlu0 %v829, 113
      %v1532 = vpop.permute.xlu0 %1531
      %1533 = vrot.lane.b32.xlu0 %v833, 113
      %v1534 = vpop.permute.xlu0 %1533
      %1535 = vrot.lane.b32.xlu0 %v837, 113
      %v1536 = vpop.permute.xlu0 %1535
      %1537 = vrot.lane.b32.xlu0 %v826, 113
      %v1538 = vpop.permute.xlu0 %1537
      %1539 = vrot.lane.b32.xlu0 %v830, 113
      %v1540 = vpop.permute.xlu0 %1539
      %1541 = vrot.lane.b32.xlu0 %v834, 113
      %v1542 = vpop.permute.xlu0 %1541
      %1543 = vrot.lane.b32.xlu0 %v838, 113
      %v1544 = vpop.permute.xlu0 %1543
      %1545 = vrot.lane.b32.xlu0 %v827, 113
      %v1546 = vpop.permute.xlu0 %1545
      %1547 = vrot.lane.b32.xlu0 %v831, 113
      %v1548 = vpop.permute.xlu0 %1547
      %1549 = vrot.lane.b32.xlu0 %v835, 113
      %v1550 = vpop.permute.xlu0 %1549
      %1551 = vrot.lane.b32.xlu0 %v839, 113
      %v1552 = vpop.permute.xlu0 %1551
      %1553 = vrot.lane.b32.xlu0 %v828, 113
      %v1554 = vpop.permute.xlu0 %1553
      %1555 = vrot.lane.b32.xlu0 %v832, 113
      %v1556 = vpop.permute.xlu0 %1555
      %1557 = vrot.lane.b32.xlu0 %v836, 113
      %v1558 = vpop.permute.xlu0 %1557
      %1559 = vrot.lane.b32.xlu0 %v840, 113
      %v1560 = vpop.permute.xlu0 %1559
      %vm1561 = vcmp.lt.s32.totalorder %v874, 113
      %v1562 = vsel %vm1561, %v1546, %v1554
      %v1563 = vsel %vm1561, %v1548, %v1556
      %v1564 = vsel %vm1561, %v1550, %v1558
      %v1565 = vsel %vm1561, %v1552, %v1560
      %v1566 = vsel %vm1561, %v1538, %v1546
      %v1567 = vsel %vm1561, %v1540, %v1548
      %v1568 = vsel %vm1561, %v1542, %v1550
      %v1569 = vsel %vm1561, %v1544, %v1552
      %v1570 = vsel %vm1561, %v1530, %v1538
      %v1571 = vsel %vm1561, %v1532, %v1540
      %v1572 = vsel %vm1561, %v1534, %v1542
      %v1573 = vsel %vm1561, %v1536, %v1544
      %v1574 = vsel %vm1561, %v1554, %v1530
      %v1575 = vsel %vm1561, %v1556, %v1532
      %v1576 = vsel %vm1561, %v1558, %v1534
      %v1577 = vsel %vm1561, %v1560, %v1536
      %s1578 = scalar_lea.vmem %s3, 32
      %v1579 = vld [vmem:[%s1578] ss:$8 sm:$0xf]
      %v1581 = vperm.slane %v1579, 0
      %v1582 = vperm.slane %v1579, 1
      %v1583 = vperm.slane %v1579, 2
      %v1584 = vperm.slane %v1579, 3
      %v1589 = vmul.f32 %v1570, %v1581
      %v1590 = vmul.f32 %v1566, %v1582
      %v1591 = vmul.f32 %v1562, %v1583
      %v1592 = vmul.f32 %v1574, %v1584
      %v1593 = vmul.f32 %v1571, %v1581
      %v1594 = vmul.f32 %v1567, %v1582
      %v1595 = vmul.f32 %v1563, %v1583
      %v1596 = vmul.f32 %v1575, %v1584
      %v1597 = vmul.f32 %v1572, %v1581
      %v1598 = vmul.f32 %v1568, %v1582
      %v1599 = vmul.f32 %v1564, %v1583
      %v1600 = vmul.f32 %v1576, %v1584
      %v1601 = vmul.f32 %v1573, %v1581
      %v1602 = vmul.f32 %v1569, %v1582
      %v1603 = vmul.f32 %v1565, %v1583
      %v1604 = vmul.f32 %v1577, %v1584
      %v1605 = vpack.c.bf16 %v1590, %v1589
      %v1606 = vpack.c.bf16 %v1592, %v1591
      %v1607 = vpack.c.bf16 %v1594, %v1593
      %v1608 = vpack.c.bf16 %v1596, %v1595
      %v1609 = vpack.c.bf16 %v1598, %v1597
      %v1610 = vpack.c.bf16 %v1600, %v1599
      %v1611 = vpack.c.bf16 %v1602, %v1601
      %v1612 = vpack.c.bf16 %v1604, %v1603
      %1613 = vst [vmem:[#allocation2 + $0x200] sm:$0xff] %v1605
      %1614 = vst [vmem:[#allocation2 + $0x208] sm:$0xff] %v1606
      %1615 = vst [vmem:[#allocation2 + $0x210] sm:$0xff] %v1607
      %1616 = vst [vmem:[#allocation2 + $0x218] sm:$0xff] %v1608
      %1617 = vst [vmem:[#allocation2 + $0x220] sm:$0xff] %v1609
      %1618 = vst [vmem:[#allocation2 + $0x228] sm:$0xff] %v1610
      %1619 = vst [vmem:[#allocation2 + $0x230] sm:$0xff] %v1611
      %1620 = vst [vmem:[#allocation2 + $0x238] sm:$0xff] %v1612
      %v1621 = vld [vmem:[%s4] sm:$0xff]
      %v1622 = vld [vmem:[%s4 + $0x8] sm:$0xf]
      %v1623 = vld [vmem:[%s4 + $0xc] sm:$0xff]
      %v1624 = vld [vmem:[%s4 + $0x14] sm:$0xf]
      %v1625 = vld [vmem:[%s4 + $0x18] sm:$0xff]
      %v1626 = vld [vmem:[%s4 + $0x20] sm:$0xf]
      %v1627 = vld [vmem:[%s4 + $0x24] sm:$0xff]
      %v1628 = vld [vmem:[%s4 + $0x2c] sm:$0xf]
      %v1629 = vld [vmem:[%s4 + $0x30] sm:$0xff]
      %v1630 = vld [vmem:[%s4 + $0x38] sm:$0xf]
      %v1631 = vld [vmem:[%s4 + $0x3c] sm:$0xff]
      %v1632 = vld [vmem:[%s4 + $0x44] sm:$0xf]
      %v1633 = vld [vmem:[%s4 + $0x48] sm:$0x11]
      %v1634 = vld [vmem:[%s4 + $0x50] sm:$0x1]
      %v1635 = vld [vmem:[#allocation2] sm:$0xff]
      %v1636 = vld [vmem:[#allocation2 + $0x8] sm:$0xff]
      %v1637 = vld [vmem:[#allocation2 + $0x10] sm:$0xff]
      %v1638 = vld [vmem:[#allocation2 + $0x18] sm:$0xff]
      %v1639 = vld [vmem:[#allocation2 + $0x20] sm:$0xff]
      %v1640 = vld [vmem:[#allocation2 + $0x28] sm:$0xff]
      %v1641 = vld [vmem:[#allocation2 + $0x30] sm:$0xff]
      %v1642 = vld [vmem:[#allocation2 + $0x38] sm:$0xff]
      %v1643 = vld [vmem:[#allocation2 + $0x40] sm:$0xff]
      %v1644 = vld [vmem:[#allocation2 + $0x48] sm:$0xff]
      %v1645 = vld [vmem:[#allocation2 + $0x50] sm:$0xff]
      %v1646 = vld [vmem:[#allocation2 + $0x58] sm:$0xff]
      %v1647 = vld [vmem:[#allocation2 + $0x60] sm:$0xff]
      %v1648 = vld [vmem:[#allocation2 + $0x68] sm:$0xff]
      %v1649 = vld [vmem:[#allocation2 + $0x70] sm:$0xff]
      %v1650 = vld [vmem:[#allocation2 + $0x78] sm:$0xff]
      %v1651 = vld [vmem:[#allocation2 + $0x80] sm:$0xff]
      %v1652 = vld [vmem:[#allocation2 + $0x88] sm:$0xff]
      %v1653 = vld [vmem:[#allocation2 + $0x90] sm:$0xff]
      %v1654 = vld [vmem:[#allocation2 + $0x98] sm:$0xff]
      %v1655 = vld [vmem:[#allocation2 + $0xa0] sm:$0xff]
      %v1656 = vld [vmem:[#allocation2 + $0xa8] sm:$0xff]
      %v1657 = vld [vmem:[#allocation2 + $0xb0] sm:$0xff]
      %v1658 = vld [vmem:[#allocation2 + $0xb8] sm:$0xff]
      %v1659 = vld [vmem:[#allocation2 + $0xc0] sm:$0xff]
      %v1660 = vld [vmem:[#allocation2 + $0xc8] sm:$0xff]
      %v1661 = vld [vmem:[#allocation2 + $0xd0] sm:$0xff]
      %v1662 = vld [vmem:[#allocation2 + $0xd8] sm:$0xff]
      %v1663 = vld [vmem:[#allocation2 + $0xe0] sm:$0xff]
      %v1664 = vld [vmem:[#allocation2 + $0xe8] sm:$0xff]
      %v1665 = vld [vmem:[#allocation2 + $0xf0] sm:$0xff]
      %v1666 = vld [vmem:[#allocation2 + $0xf8] sm:$0xff]
      %v1667 = vld [vmem:[#allocation2 + $0x100] sm:$0xff]
      %v1668 = vld [vmem:[#allocation2 + $0x108] sm:$0xff]
      %v1669 = vld [vmem:[#allocation2 + $0x110] sm:$0xff]
      %v1670 = vld [vmem:[#allocation2 + $0x118] sm:$0xff]
      %v1671 = vld [vmem:[#allocation2 + $0x120] sm:$0xff]
      %v1672 = vld [vmem:[#allocation2 + $0x128] sm:$0xff]
      %v1673 = vld [vmem:[#allocation2 + $0x130] sm:$0xff]
      %v1674 = vld [vmem:[#allocation2 + $0x138] sm:$0xff]
      %v1675 = vld [vmem:[#allocation2 + $0x140] sm:$0xff]
      %v1676 = vld [vmem:[#allocation2 + $0x148] sm:$0xff]
      %v1677 = vld [vmem:[#allocation2 + $0x150] sm:$0xff]
      %v1678 = vld [vmem:[#allocation2 + $0x158] sm:$0xff]
      %v1679 = vld [vmem:[#allocation2 + $0x160] sm:$0xff]
      %v1680 = vld [vmem:[#allocation2 + $0x168] sm:$0xff]
      %v1681 = vld [vmem:[#allocation2 + $0x170] sm:$0xff]
      %v1682 = vld [vmem:[#allocation2 + $0x178] sm:$0xff]
      %v1683 = vld [vmem:[#allocation2 + $0x180] sm:$0xff]
      %v1684 = vld [vmem:[#allocation2 + $0x188] sm:$0xff]
      %v1685 = vld [vmem:[#allocation2 + $0x190] sm:$0xff]
      %v1686 = vld [vmem:[#allocation2 + $0x198] sm:$0xff]
      %v1687 = vld [vmem:[#allocation2 + $0x1a0] sm:$0xff]
      %v1688 = vld [vmem:[#allocation2 + $0x1a8] sm:$0xff]
      %v1689 = vld [vmem:[#allocation2 + $0x1b0] sm:$0xff]
      %v1690 = vld [vmem:[#allocation2 + $0x1b8] sm:$0xff]
      %v1691 = vld [vmem:[#allocation2 + $0x1c0] sm:$0xff]
      %v1692 = vld [vmem:[#allocation2 + $0x1c8] sm:$0xff]
      %v1693 = vld [vmem:[#allocation2 + $0x1d0] sm:$0xff]
      %v1694 = vld [vmem:[#allocation2 + $0x1d8] sm:$0xff]
      %v1695 = vld [vmem:[#allocation2 + $0x1e0] sm:$0xff]
      %v1696 = vld [vmem:[#allocation2 + $0x1e8] sm:$0xff]
      %v1697 = vld [vmem:[#allocation2 + $0x1f0] sm:$0xff]
      %v1698 = vld [vmem:[#allocation2 + $0x1f8] sm:$0xff]
      %v1699 = vld [vmem:[#allocation2 + $0x200] sm:$0xff]
      %v1700 = vld [vmem:[#allocation2 + $0x208] sm:$0xff]
      %v1701 = vld [vmem:[#allocation2 + $0x210] sm:$0xff]
      %v1702 = vld [vmem:[#allocation2 + $0x218] sm:$0xff]
      %v1703 = vld [vmem:[#allocation2 + $0x220] sm:$0xff]
      %v1704 = vld [vmem:[#allocation2 + $0x228] sm:$0xff]
      %v1705 = vld [vmem:[#allocation2 + $0x230] sm:$0xff]
      %v1706 = vld [vmem:[#allocation2 + $0x238] sm:$0xff]
      %v1707 = vld [vmem:[%s5] sm:$0xff]
      %v1708 = vld [vmem:[%s5 + $0x8] sm:$0xff]
      %v1709 = vld [vmem:[%s5 + $0x10] sm:$0xff]
      %v1710 = vld [vmem:[%s5 + $0x18] sm:$0xff]
      %v1711 = vld [vmem:[%s5 + $0x20] sm:$0xff]
      %v1712 = vld [vmem:[%s5 + $0x28] sm:$0xff]
      %v1713 = vld [vmem:[%s5 + $0x30] sm:$0x3]
      %1715 = vset.pattern.permute.xlu0 0
      %1716 = vperm.xlu0 %1715, %v1707
      %v1717 = vpop.permute.xlu0 %1716
      %1720 = vset.pattern.permute.xlu0 0
      %1721 = vperm.xlu0 %1720, %v1708
      %v1722 = vpop.permute.xlu0 %1721
      %1725 = vset.pattern.permute.xlu0 0
      %1726 = vperm.xlu0 %1725, %v1709
      %v1727 = vpop.permute.xlu0 %1726
      %1730 = vset.pattern.permute.xlu0 0
      %1731 = vperm.xlu0 %1730, %v1710
      %v1732 = vpop.permute.xlu0 %1731
      %1735 = vset.pattern.permute.xlu0 0
      %1736 = vperm.xlu0 %1735, %v1711
      %v1737 = vpop.permute.xlu0 %1736
      %1740 = vset.pattern.permute.xlu0 0
      %1741 = vperm.xlu0 %1740, %v1712
      %v1742 = vpop.permute.xlu0 %1741
      %1745 = vset.pattern.permute.xlu0 0
      %1746 = vperm.xlu0 %1745, %v1713
      %v1747 = vpop.permute.xlu0 %1746
      %v1763 = vunpack.c.l.b16 %v1621
      %v1764 = vunpack.c.h.b16 %v1621
      %v1765 = vunpack.c.l.b16 %v1622
      %v1766 = vunpack.c.l.b16 %v1623
      %v1767 = vunpack.c.h.b16 %v1623
      %v1768 = vunpack.c.l.b16 %v1624
      %v1769 = vunpack.c.l.b16 %v1625
      %v1770 = vunpack.c.h.b16 %v1625
      %v1771 = vunpack.c.l.b16 %v1626
      %v1772 = vunpack.c.l.b16 %v1627
      %v1773 = vunpack.c.h.b16 %v1627
      %v1774 = vunpack.c.l.b16 %v1628
      %v1775 = vunpack.c.l.b16 %v1629
      %v1776 = vunpack.c.h.b16 %v1629
      %v1777 = vunpack.c.l.b16 %v1630
      %v1778 = vunpack.c.l.b16 %v1631
      %v1779 = vunpack.c.h.b16 %v1631
      %v1780 = vunpack.c.l.b16 %v1632
      %v1781 = vunpack.c.l.b16 %v1633
      %v1782 = vunpack.c.h.b16 %v1633
      %v1783 = vunpack.c.l.b16 %v1634
      %v1784 = vpack.c.b16 %v1766, %v1763
      %v1785 = vpack.c.b16 %v1767, %v1764
      %v1786 = vpack.c.b16 %v1768, %v1765
      %v1787 = vpack.c.b16 %v1772, %v1769
      %v1788 = vpack.c.b16 %v1773, %v1770
      %v1789 = vpack.c.b16 %v1774, %v1771
      %v1790 = vpack.c.b16 %v1778, %v1775
      %v1791 = vpack.c.b16 %v1779, %v1776
      %v1792 = vpack.c.b16 %v1780, %v1777
      %v1793 = vpack.c.b16 %v1781, %v1781
      %v1794 = vpack.c.b16 %v1782, %v1782
      %v1795 = vpack.c.b16 %v1783, %v1783
      %v1876 = vunpack.c.l.b16 %v1635
      %v1877 = vunpack.c.h.b16 %v1635
      %v1878 = vunpack.c.l.b16 %v1636
      %v1879 = vunpack.c.h.b16 %v1636
      %v1880 = vunpack.c.l.b16 %v1637
      %v1881 = vunpack.c.h.b16 %v1637
      %v1882 = vunpack.c.l.b16 %v1638
      %v1883 = vunpack.c.h.b16 %v1638
      %v1884 = vunpack.c.l.b16 %v1639
      %v1885 = vunpack.c.h.b16 %v1639
      %v1886 = vunpack.c.l.b16 %v1640
      %v1887 = vunpack.c.h.b16 %v1640
      %v1888 = vunpack.c.l.b16 %v1641
      %v1889 = vunpack.c.h.b16 %v1641
      %v1890 = vunpack.c.l.b16 %v1642
      %v1891 = vunpack.c.h.b16 %v1642
      %v1892 = vunpack.c.l.b16 %v1643
      %v1893 = vunpack.c.h.b16 %v1643
      %v1894 = vunpack.c.l.b16 %v1644
      %v1895 = vunpack.c.h.b16 %v1644
      %v1896 = vunpack.c.l.b16 %v1645
      %v1897 = vunpack.c.h.b16 %v1645
      %v1898 = vunpack.c.l.b16 %v1646
      %v1899 = vunpack.c.h.b16 %v1646
      %v1900 = vunpack.c.l.b16 %v1647
      %v1901 = vunpack.c.h.b16 %v1647
      %v1902 = vunpack.c.l.b16 %v1648
      %v1903 = vunpack.c.h.b16 %v1648
      %v1904 = vunpack.c.l.b16 %v1649
      %v1905 = vunpack.c.h.b16 %v1649
      %v1906 = vunpack.c.l.b16 %v1650
      %v1907 = vunpack.c.h.b16 %v1650
      %v1908 = vunpack.c.l.b16 %v1651
      %v1909 = vunpack.c.h.b16 %v1651
      %v1910 = vunpack.c.l.b16 %v1652
      %v1911 = vunpack.c.h.b16 %v1652
      %v1912 = vunpack.c.l.b16 %v1653
      %v1913 = vunpack.c.h.b16 %v1653
      %v1914 = vunpack.c.l.b16 %v1654
      %v1915 = vunpack.c.h.b16 %v1654
      %v1916 = vunpack.c.l.b16 %v1655
      %v1917 = vunpack.c.h.b16 %v1655
      %v1918 = vunpack.c.l.b16 %v1656
      %v1919 = vunpack.c.h.b16 %v1656
      %v1920 = vunpack.c.l.b16 %v1657
      %v1921 = vunpack.c.h.b16 %v1657
      %v1922 = vunpack.c.l.b16 %v1658
      %v1923 = vunpack.c.h.b16 %v1658
      %v1924 = vunpack.c.l.b16 %v1659
      %v1925 = vunpack.c.h.b16 %v1659
      %v1926 = vunpack.c.l.b16 %v1660
      %v1927 = vunpack.c.h.b16 %v1660
      %v1928 = vunpack.c.l.b16 %v1661
      %v1929 = vunpack.c.h.b16 %v1661
      %v1930 = vunpack.c.l.b16 %v1662
      %v1931 = vunpack.c.h.b16 %v1662
      %v1932 = vunpack.c.l.b16 %v1663
      %v1933 = vunpack.c.h.b16 %v1663
      %v1934 = vunpack.c.l.b16 %v1664
      %v1935 = vunpack.c.h.b16 %v1664
      %v1936 = vunpack.c.l.b16 %v1665
      %v1937 = vunpack.c.h.b16 %v1665
      %v1938 = vunpack.c.l.b16 %v1666
      %v1939 = vunpack.c.h.b16 %v1666
      %v1940 = vunpack.c.l.b16 %v1667
      %v1941 = vunpack.c.h.b16 %v1667
      %v1942 = vunpack.c.l.b16 %v1668
      %v1943 = vunpack.c.h.b16 %v1668
      %v1944 = vunpack.c.l.b16 %v1669
      %v1945 = vunpack.c.h.b16 %v1669
      %v1946 = vunpack.c.l.b16 %v1670
      %v1947 = vunpack.c.h.b16 %v1670
      %v1948 = vunpack.c.l.b16 %v1671
      %v1949 = vunpack.c.h.b16 %v1671
      %v1950 = vunpack.c.l.b16 %v1672
      %v1951 = vunpack.c.h.b16 %v1672
      %v1952 = vunpack.c.l.b16 %v1673
      %v1953 = vunpack.c.h.b16 %v1673
      %v1954 = vunpack.c.l.b16 %v1674
      %v1955 = vunpack.c.h.b16 %v1674
      %v1956 = vunpack.c.l.b16 %v1675
      %v1957 = vunpack.c.h.b16 %v1675
      %v1958 = vunpack.c.l.b16 %v1676
      %v1959 = vunpack.c.h.b16 %v1676
      %v1960 = vunpack.c.l.b16 %v1677
      %v1961 = vunpack.c.h.b16 %v1677
      %v1962 = vunpack.c.l.b16 %v1678
      %v1963 = vunpack.c.h.b16 %v1678
      %v1964 = vunpack.c.l.b16 %v1679
      %v1965 = vunpack.c.h.b16 %v1679
      %v1966 = vunpack.c.l.b16 %v1680
      %v1967 = vunpack.c.h.b16 %v1680
      %v1968 = vunpack.c.l.b16 %v1681
      %v1969 = vunpack.c.h.b16 %v1681
      %v1970 = vunpack.c.l.b16 %v1682
      %v1971 = vunpack.c.h.b16 %v1682
      %v1972 = vunpack.c.l.b16 %v1683
      %v1973 = vunpack.c.h.b16 %v1683
      %v1974 = vunpack.c.l.b16 %v1684
      %v1975 = vunpack.c.h.b16 %v1684
      %v1976 = vunpack.c.l.b16 %v1685
      %v1977 = vunpack.c.h.b16 %v1685
      %v1978 = vunpack.c.l.b16 %v1686
      %v1979 = vunpack.c.h.b16 %v1686
      %v1980 = vunpack.c.l.b16 %v1687
      %v1981 = vunpack.c.h.b16 %v1687
      %v1982 = vunpack.c.l.b16 %v1688
      %v1983 = vunpack.c.h.b16 %v1688
      %v1984 = vunpack.c.l.b16 %v1689
      %v1985 = vunpack.c.h.b16 %v1689
      %v1986 = vunpack.c.l.b16 %v1690
      %v1987 = vunpack.c.h.b16 %v1690
      %v1988 = vunpack.c.l.b16 %v1691
      %v1989 = vunpack.c.h.b16 %v1691
      %v1990 = vunpack.c.l.b16 %v1692
      %v1991 = vunpack.c.h.b16 %v1692
      %v1992 = vunpack.c.l.b16 %v1693
      %v1993 = vunpack.c.h.b16 %v1693
      %v1994 = vunpack.c.l.b16 %v1694
      %v1995 = vunpack.c.h.b16 %v1694
      %v1996 = vunpack.c.l.b16 %v1695
      %v1997 = vunpack.c.h.b16 %v1695
      %v1998 = vunpack.c.l.b16 %v1696
      %v1999 = vunpack.c.h.b16 %v1696
      %v2000 = vunpack.c.l.b16 %v1697
      %v2001 = vunpack.c.h.b16 %v1697
      %v2002 = vunpack.c.l.b16 %v1698
      %v2003 = vunpack.c.h.b16 %v1698
      %v2004 = vunpack.c.l.b16 %v1699
      %v2005 = vunpack.c.h.b16 %v1699
      %v2006 = vunpack.c.l.b16 %v1700
      %v2007 = vunpack.c.h.b16 %v1700
      %v2008 = vunpack.c.l.b16 %v1701
      %v2009 = vunpack.c.h.b16 %v1701
      %v2010 = vunpack.c.l.b16 %v1702
      %v2011 = vunpack.c.h.b16 %v1702
      %v2012 = vunpack.c.l.b16 %v1703
      %v2013 = vunpack.c.h.b16 %v1703
      %v2014 = vunpack.c.l.b16 %v1704
      %v2015 = vunpack.c.h.b16 %v1704
      %v2016 = vunpack.c.l.b16 %v1705
      %v2017 = vunpack.c.h.b16 %v1705
      %v2018 = vunpack.c.l.b16 %v1706
      %v2019 = vunpack.c.h.b16 %v1706
      %v2020 = vpack.c.b16 %v1880, %v1876
      %v2021 = vpack.c.b16 %v1881, %v1877
      %v2022 = vpack.c.b16 %v1882, %v1878
      %v2023 = vpack.c.b16 %v1883, %v1879
      %v2024 = vpack.c.b16 %v1888, %v1884
      %v2025 = vpack.c.b16 %v1889, %v1885
      %v2026 = vpack.c.b16 %v1890, %v1886
      %v2027 = vpack.c.b16 %v1891, %v1887
      %v2028 = vpack.c.b16 %v1896, %v1892
      %v2029 = vpack.c.b16 %v1897, %v1893
      %v2030 = vpack.c.b16 %v1898, %v1894
      %v2031 = vpack.c.b16 %v1899, %v1895
      %v2032 = vpack.c.b16 %v1904, %v1900
      %v2033 = vpack.c.b16 %v1905, %v1901
      %v2034 = vpack.c.b16 %v1906, %v1902
      %v2035 = vpack.c.b16 %v1907, %v1903
      %v2036 = vpack.c.b16 %v1912, %v1908
      %v2037 = vpack.c.b16 %v1913, %v1909
      %v2038 = vpack.c.b16 %v1914, %v1910
      %v2039 = vpack.c.b16 %v1915, %v1911
      %v2040 = vpack.c.b16 %v1920, %v1916
      %v2041 = vpack.c.b16 %v1921, %v1917
      %v2042 = vpack.c.b16 %v1922, %v1918
      %v2043 = vpack.c.b16 %v1923, %v1919
      %v2044 = vpack.c.b16 %v1928, %v1924
      %v2045 = vpack.c.b16 %v1929, %v1925
      %v2046 = vpack.c.b16 %v1930, %v1926
      %v2047 = vpack.c.b16 %v1931, %v1927
      %v2048 = vpack.c.b16 %v1936, %v1932
      %v2049 = vpack.c.b16 %v1937, %v1933
      %v2050 = vpack.c.b16 %v1938, %v1934
      %v2051 = vpack.c.b16 %v1939, %v1935
      %v2052 = vpack.c.b16 %v1944, %v1940
      %v2053 = vpack.c.b16 %v1945, %v1941
      %v2054 = vpack.c.b16 %v1946, %v1942
      %v2055 = vpack.c.b16 %v1947, %v1943
      %v2056 = vpack.c.b16 %v1952, %v1948
      %v2057 = vpack.c.b16 %v1953, %v1949
      %v2058 = vpack.c.b16 %v1954, %v1950
      %v2059 = vpack.c.b16 %v1955, %v1951
      %v2060 = vpack.c.b16 %v1960, %v1956
      %v2061 = vpack.c.b16 %v1961, %v1957
      %v2062 = vpack.c.b16 %v1962, %v1958
      %v2063 = vpack.c.b16 %v1963, %v1959
      %v2064 = vpack.c.b16 %v1968, %v1964
      %v2065 = vpack.c.b16 %v1969, %v1965
      %v2066 = vpack.c.b16 %v1970, %v1966
      %v2067 = vpack.c.b16 %v1971, %v1967
      %v2068 = vpack.c.b16 %v1976, %v1972
      %v2069 = vpack.c.b16 %v1977, %v1973
      %v2070 = vpack.c.b16 %v1978, %v1974
      %v2071 = vpack.c.b16 %v1979, %v1975
      %v2072 = vpack.c.b16 %v1984, %v1980
      %v2073 = vpack.c.b16 %v1985, %v1981
      %v2074 = vpack.c.b16 %v1986, %v1982
      %v2075 = vpack.c.b16 %v1987, %v1983
      %v2076 = vpack.c.b16 %v1992, %v1988
      %v2077 = vpack.c.b16 %v1993, %v1989
      %v2078 = vpack.c.b16 %v1994, %v1990
      %v2079 = vpack.c.b16 %v1995, %v1991
      %v2080 = vpack.c.b16 %v2000, %v1996
      %v2081 = vpack.c.b16 %v2001, %v1997
      %v2082 = vpack.c.b16 %v2002, %v1998
      %v2083 = vpack.c.b16 %v2003, %v1999
      %v2084 = vpack.c.b16 %v2008, %v2004
      %v2085 = vpack.c.b16 %v2009, %v2005
      %v2086 = vpack.c.b16 %v2010, %v2006
      %v2087 = vpack.c.b16 %v2011, %v2007
      %v2088 = vpack.c.b16 %v2016, %v2012
      %v2089 = vpack.c.b16 %v2017, %v2013
      %v2090 = vpack.c.b16 %v2018, %v2014
      %v2091 = vpack.c.b16 %v2019, %v2015
      %vm2164 = vcmask 261120
      %v2166 = vsel %vm2164, %v1786, 0
      %v2169 = vsel %vm2164, %v1789, 0
      %v2172 = vsel %vm2164, %v1792, 0
      %v2175 = vsel %vm2164, %v1795, 0
      %2177 = vmatpush.bf16.msra.mxu0 %v2048
      %2178 = vmatpush.bf16.msra.mxu0 %v2044
      %2179 = vmatpush.bf16.msra.mxu0 %v2040
      %2180 = vmatpush.bf16.msra.mxu0 %v2036
      %2181 = vmatpush.bf16.msra.mxu0 %v2032
      %2182 = vmatpush.bf16.msra.mxu0 %v2028
      %2183 = vmatpush.bf16.msra.mxu0 %v2024
      %2184 = vmatpush.bf16.msra.mxu0 %v2020
      %2185 = vmatmul.bf16.gmra.mxu0 %v1784
      %v2186 = vpop.f32.mrf.mxu0
      %v2187 = vadd.f32 %v1717, %v2186
      %v2188 = vpop.f32.mrf.mxu0
      %v2189 = vadd.f32 %v1722, %v2188
      %2190 = vmatmul.bf16.gmra.mxu0 %v1787
      %v2191 = vpop.f32.mrf.mxu0
      %v2192 = vadd.f32 %v1727, %v2191
      %v2193 = vpop.f32.mrf.mxu0
      %v2194 = vadd.f32 %v1732, %v2193
      %2195 = vmatmul.bf16.gmra.mxu0 %v1790
      %v2196 = vpop.f32.mrf.mxu0
      %v2197 = vadd.f32 %v1737, %v2196
      %v2198 = vpop.f32.mrf.mxu0
      %v2199 = vadd.f32 %v1742, %v2198
      %2200 = vmatmul.bf16.gmra.mxu0 %v1793
      %v2201 = vpop.f32.mrf.mxu0
      %v2202 = vadd.f32 %v1747, %v2201
      %v2203 = vpop.f32.mrf.mxu0
      %2204 = vdwg.mxu0
      %2205 = vmatpush.bf16.msra.mxu0 %v2080
      %2206 = vmatpush.bf16.msra.mxu0 %v2076
      %2207 = vmatpush.bf16.msra.mxu0 %v2072
      %2208 = vmatpush.bf16.msra.mxu0 %v2068
      %2209 = vmatpush.bf16.msra.mxu0 %v2064
      %2210 = vmatpush.bf16.msra.mxu0 %v2060
      %2211 = vmatpush.bf16.msra.mxu0 %v2056
      %2212 = vmatpush.bf16.msra.mxu0 %v2052
      %2213 = vmatmul.bf16.gmra.mxu0 %v1785
      %v2214 = vpop.f32.mrf.mxu0
      %v2215 = vadd.f32 %v2187, %v2214
      %v2216 = vpop.f32.mrf.mxu0
      %v2217 = vadd.f32 %v2189, %v2216
      %2218 = vmatmul.bf16.gmra.mxu0 %v1788
      %v2219 = vpop.f32.mrf.mxu0
      %v2220 = vadd.f32 %v2192, %v2219
      %v2221 = vpop.f32.mrf.mxu0
      %v2222 = vadd.f32 %v2194, %v2221
      %2223 = vmatmul.bf16.gmra.mxu0 %v1791
      %v2224 = vpop.f32.mrf.mxu0
      %v2225 = vadd.f32 %v2197, %v2224
      %v2226 = vpop.f32.mrf.mxu0
      %v2227 = vadd.f32 %v2199, %v2226
      %2228 = vmatmul.bf16.gmra.mxu0 %v1794
      %v2229 = vpop.f32.mrf.mxu0
      %v2230 = vadd.f32 %v2202, %v2229
      %v2231 = vpop.f32.mrf.mxu0
      %2232 = vdwg.mxu0
      %2233 = vmatpush.bf16.msra.mxu0 0
      %2234 = vmatpush.bf16.msra.mxu0 0
      %2235 = vmatpush.bf16.msra.mxu0 0
      %2236 = vmatpush.bf16.msra.mxu0 0
      %2237 = vmatpush.bf16.msra.mxu0 0
      %2238 = vmatpush.bf16.msra.mxu0 0
      %2239 = vmatpush.bf16.msra.mxu0 %v2088
      %2240 = vmatpush.bf16.msra.mxu0 %v2084
      %2241 = vmatmul.bf16.gmra.mxu0 %v2166
      %v2242 = vpop.f32.mrf.mxu0
      %v2243 = vadd.f32 %v2215, %v2242
      %v2244 = vpop.f32.mrf.mxu0
      %v2245 = vadd.f32 %v2217, %v2244
      %2246 = vmatmul.bf16.gmra.mxu0 %v2169
      %v2247 = vpop.f32.mrf.mxu0
      %v2248 = vadd.f32 %v2220, %v2247
      %v2249 = vpop.f32.mrf.mxu0
      %v2250 = vadd.f32 %v2222, %v2249
      %2251 = vmatmul.bf16.gmra.mxu0 %v2172
      %v2252 = vpop.f32.mrf.mxu0
      %v2253 = vadd.f32 %v2225, %v2252
      %v2254 = vpop.f32.mrf.mxu0
      %v2255 = vadd.f32 %v2227, %v2254
      %2256 = vmatmul.bf16.gmra.mxu0 %v2175
      %v2257 = vpop.f32.mrf.mxu0
      %v2258 = vadd.f32 %v2230, %v2257
      %v2259 = vpop.f32.mrf.mxu0
      %2260 = vdwg.mxu0
      %2261 = vmatpush.bf16.msra.mxu0 %v2049
      %2262 = vmatpush.bf16.msra.mxu0 %v2045
      %2263 = vmatpush.bf16.msra.mxu0 %v2041
      %2264 = vmatpush.bf16.msra.mxu0 %v2037
      %2265 = vmatpush.bf16.msra.mxu0 %v2033
      %2266 = vmatpush.bf16.msra.mxu0 %v2029
      %2267 = vmatpush.bf16.msra.mxu0 %v2025
      %2268 = vmatpush.bf16.msra.mxu0 %v2021
      %2269 = vmatmul.bf16.gmra.mxu0 %v1784
      %v2270 = vpop.f32.mrf.mxu0
      %v2271 = vadd.f32 %v1717, %v2270
      %v2272 = vpop.f32.mrf.mxu0
      %v2273 = vadd.f32 %v1722, %v2272
      %2274 = vmatmul.bf16.gmra.mxu0 %v1787
      %v2275 = vpop.f32.mrf.mxu0
      %v2276 = vadd.f32 %v1727, %v2275
      %v2277 = vpop.f32.mrf.mxu0
      %v2278 = vadd.f32 %v1732, %v2277
      %2279 = vmatmul.bf16.gmra.mxu0 %v1790
      %v2280 = vpop.f32.mrf.mxu0
      %v2281 = vadd.f32 %v1737, %v2280
      %v2282 = vpop.f32.mrf.mxu0
      %v2283 = vadd.f32 %v1742, %v2282
      %2284 = vmatmul.bf16.gmra.mxu0 %v1793
      %v2285 = vpop.f32.mrf.mxu0
      %v2286 = vadd.f32 %v1747, %v2285
      %v2287 = vpop.f32.mrf.mxu0
      %2288 = vdwg.mxu0
      %2289 = vmatpush.bf16.msra.mxu0 %v2081
      %2290 = vmatpush.bf16.msra.mxu0 %v2077
      %2291 = vmatpush.bf16.msra.mxu0 %v2073
      %2292 = vmatpush.bf16.msra.mxu0 %v2069
      %2293 = vmatpush.bf16.msra.mxu0 %v2065
      %2294 = vmatpush.bf16.msra.mxu0 %v2061
      %2295 = vmatpush.bf16.msra.mxu0 %v2057
      %2296 = vmatpush.bf16.msra.mxu0 %v2053
      %2297 = vmatmul.bf16.gmra.mxu0 %v1785
      %v2298 = vpop.f32.mrf.mxu0
      %v2299 = vadd.f32 %v2271, %v2298
      %v2300 = vpop.f32.mrf.mxu0
      %v2301 = vadd.f32 %v2273, %v2300
      %2302 = vmatmul.bf16.gmra.mxu0 %v1788
      %v2303 = vpop.f32.mrf.mxu0
      %v2304 = vadd.f32 %v2276, %v2303
      %v2305 = vpop.f32.mrf.mxu0
      %v2306 = vadd.f32 %v2278, %v2305
      %2307 = vmatmul.bf16.gmra.mxu0 %v1791
      %v2308 = vpop.f32.mrf.mxu0
      %v2309 = vadd.f32 %v2281, %v2308
      %v2310 = vpop.f32.mrf.mxu0
      %v2311 = vadd.f32 %v2283, %v2310
      %2312 = vmatmul.bf16.gmra.mxu0 %v1794
      %v2313 = vpop.f32.mrf.mxu0
      %v2314 = vadd.f32 %v2286, %v2313
      %v2315 = vpop.f32.mrf.mxu0
      %2316 = vdwg.mxu0
      %2317 = vmatpush.bf16.msra.mxu0 0
      %2318 = vmatpush.bf16.msra.mxu0 0
      %2319 = vmatpush.bf16.msra.mxu0 0
      %2320 = vmatpush.bf16.msra.mxu0 0
      %2321 = vmatpush.bf16.msra.mxu0 0
      %2322 = vmatpush.bf16.msra.mxu0 0
      %2323 = vmatpush.bf16.msra.mxu0 %v2089
      %2324 = vmatpush.bf16.msra.mxu0 %v2085
      %2325 = vmatmul.bf16.gmra.mxu0 %v2166
      %v2326 = vpop.f32.mrf.mxu0
      %v2327 = vadd.f32 %v2299, %v2326
      %v2328 = vpop.f32.mrf.mxu0
      %v2329 = vadd.f32 %v2301, %v2328
      %2330 = vmatmul.bf16.gmra.mxu0 %v2169
      %v2331 = vpop.f32.mrf.mxu0
      %v2332 = vadd.f32 %v2304, %v2331
      %v2333 = vpop.f32.mrf.mxu0
      %v2334 = vadd.f32 %v2306, %v2333
      %2335 = vmatmul.bf16.gmra.mxu0 %v2172
      %v2336 = vpop.f32.mrf.mxu0
      %v2337 = vadd.f32 %v2309, %v2336
      %v2338 = vpop.f32.mrf.mxu0
      %v2339 = vadd.f32 %v2311, %v2338
      %2340 = vmatmul.bf16.gmra.mxu0 %v2175
      %v2341 = vpop.f32.mrf.mxu0
      %v2342 = vadd.f32 %v2314, %v2341
      %v2343 = vpop.f32.mrf.mxu0
      %2344 = vdwg.mxu0
      %2345 = vmatpush.bf16.msra.mxu0 %v2050
      %2346 = vmatpush.bf16.msra.mxu0 %v2046
      %2347 = vmatpush.bf16.msra.mxu0 %v2042
      %2348 = vmatpush.bf16.msra.mxu0 %v2038
      %2349 = vmatpush.bf16.msra.mxu0 %v2034
      %2350 = vmatpush.bf16.msra.mxu0 %v2030
      %2351 = vmatpush.bf16.msra.mxu0 %v2026
      %2352 = vmatpush.bf16.msra.mxu0 %v2022
      %2353 = vmatmul.bf16.gmra.mxu0 %v1784
      %v2354 = vpop.f32.mrf.mxu0
      %v2355 = vadd.f32 %v1717, %v2354
      %v2356 = vpop.f32.mrf.mxu0
      %v2357 = vadd.f32 %v1722, %v2356
      %2358 = vmatmul.bf16.gmra.mxu0 %v1787
      %v2359 = vpop.f32.mrf.mxu0
      %v2360 = vadd.f32 %v1727, %v2359
      %v2361 = vpop.f32.mrf.mxu0
      %v2362 = vadd.f32 %v1732, %v2361
      %2363 = vmatmul.bf16.gmra.mxu0 %v1790
      %v2364 = vpop.f32.mrf.mxu0
      %v2365 = vadd.f32 %v1737, %v2364
      %v2366 = vpop.f32.mrf.mxu0
      %v2367 = vadd.f32 %v1742, %v2366
      %2368 = vmatmul.bf16.gmra.mxu0 %v1793
      %v2369 = vpop.f32.mrf.mxu0
      %v2370 = vadd.f32 %v1747, %v2369
      %v2371 = vpop.f32.mrf.mxu0
      %2372 = vdwg.mxu0
      %2373 = vmatpush.bf16.msra.mxu0 %v2082
      %2374 = vmatpush.bf16.msra.mxu0 %v2078
      %2375 = vmatpush.bf16.msra.mxu0 %v2074
      %2376 = vmatpush.bf16.msra.mxu0 %v2070
      %2377 = vmatpush.bf16.msra.mxu0 %v2066
      %2378 = vmatpush.bf16.msra.mxu0 %v2062
      %2379 = vmatpush.bf16.msra.mxu0 %v2058
      %2380 = vmatpush.bf16.msra.mxu0 %v2054
      %2381 = vmatmul.bf16.gmra.mxu0 %v1785
      %v2382 = vpop.f32.mrf.mxu0
      %v2383 = vadd.f32 %v2355, %v2382
      %v2384 = vpop.f32.mrf.mxu0
      %v2385 = vadd.f32 %v2357, %v2384
      %2386 = vmatmul.bf16.gmra.mxu0 %v1788
      %v2387 = vpop.f32.mrf.mxu0
      %v2388 = vadd.f32 %v2360, %v2387
      %v2389 = vpop.f32.mrf.mxu0
      %v2390 = vadd.f32 %v2362, %v2389
      %2391 = vmatmul.bf16.gmra.mxu0 %v1791
      %v2392 = vpop.f32.mrf.mxu0
      %v2393 = vadd.f32 %v2365, %v2392
      %v2394 = vpop.f32.mrf.mxu0
      %v2395 = vadd.f32 %v2367, %v2394
      %2396 = vmatmul.bf16.gmra.mxu0 %v1794
      %v2397 = vpop.f32.mrf.mxu0
      %v2398 = vadd.f32 %v2370, %v2397
      %v2399 = vpop.f32.mrf.mxu0
      %2400 = vdwg.mxu0
      %2401 = vmatpush.bf16.msra.mxu0 0
      %2402 = vmatpush.bf16.msra.mxu0 0
      %2403 = vmatpush.bf16.msra.mxu0 0
      %2404 = vmatpush.bf16.msra.mxu0 0
      %2405 = vmatpush.bf16.msra.mxu0 0
      %2406 = vmatpush.bf16.msra.mxu0 0
      %2407 = vmatpush.bf16.msra.mxu0 %v2090
      %2408 = vmatpush.bf16.msra.mxu0 %v2086
      %2409 = vmatmul.bf16.gmra.mxu0 %v2166
      %v2410 = vpop.f32.mrf.mxu0
      %v2411 = vadd.f32 %v2383, %v2410
      %v2412 = vpop.f32.mrf.mxu0
      %v2413 = vadd.f32 %v2385, %v2412
      %2414 = vmatmul.bf16.gmra.mxu0 %v2169
      %v2415 = vpop.f32.mrf.mxu0
      %v2416 = vadd.f32 %v2388, %v2415
      %v2417 = vpop.f32.mrf.mxu0
      %v2418 = vadd.f32 %v2390, %v2417
      %2419 = vmatmul.bf16.gmra.mxu0 %v2172
      %v2420 = vpop.f32.mrf.mxu0
      %v2421 = vadd.f32 %v2393, %v2420
      %v2422 = vpop.f32.mrf.mxu0
      %v2423 = vadd.f32 %v2395, %v2422
      %2424 = vmatmul.bf16.gmra.mxu0 %v2175
      %v2425 = vpop.f32.mrf.mxu0
      %v2426 = vadd.f32 %v2398, %v2425
      %v2427 = vpop.f32.mrf.mxu0
      %2428 = vdwg.mxu0
      %2429 = vmatpush.bf16.msra.mxu0 %v2051
      %2430 = vmatpush.bf16.msra.mxu0 %v2047
      %2431 = vmatpush.bf16.msra.mxu0 %v2043
      %2432 = vmatpush.bf16.msra.mxu0 %v2039
      %2433 = vmatpush.bf16.msra.mxu0 %v2035
      %2434 = vmatpush.bf16.msra.mxu0 %v2031
      %2435 = vmatpush.bf16.msra.mxu0 %v2027
      %2436 = vmatpush.bf16.msra.mxu0 %v2023
      %2437 = vmatmul.bf16.gmra.mxu0 %v1784
      %v2438 = vpop.f32.mrf.mxu0
      %v2439 = vadd.f32 %v1717, %v2438
      %v2440 = vpop.f32.mrf.mxu0
      %v2441 = vadd.f32 %v1722, %v2440
      %2442 = vmatmul.bf16.gmra.mxu0 %v1787
      %v2443 = vpop.f32.mrf.mxu0
      %v2444 = vadd.f32 %v1727, %v2443
      %v2445 = vpop.f32.mrf.mxu0
      %v2446 = vadd.f32 %v1732, %v2445
      %2447 = vmatmul.bf16.gmra.mxu0 %v1790
      %v2448 = vpop.f32.mrf.mxu0
      %v2449 = vadd.f32 %v1737, %v2448
      %v2450 = vpop.f32.mrf.mxu0
      %v2451 = vadd.f32 %v1742, %v2450
      %2452 = vmatmul.bf16.gmra.mxu0 %v1793
      %v2453 = vpop.f32.mrf.mxu0
      %v2454 = vadd.f32 %v1747, %v2453
      %v2455 = vpop.f32.mrf.mxu0
      %2456 = vdwg.mxu0
      %2457 = vmatpush.bf16.msra.mxu0 %v2083
      %2458 = vmatpush.bf16.msra.mxu0 %v2079
      %2459 = vmatpush.bf16.msra.mxu0 %v2075
      %2460 = vmatpush.bf16.msra.mxu0 %v2071
      %2461 = vmatpush.bf16.msra.mxu0 %v2067
      %2462 = vmatpush.bf16.msra.mxu0 %v2063
      %2463 = vmatpush.bf16.msra.mxu0 %v2059
      %2464 = vmatpush.bf16.msra.mxu0 %v2055
      %2465 = vmatmul.bf16.gmra.mxu0 %v1785
      %v2466 = vpop.f32.mrf.mxu0
      %v2467 = vadd.f32 %v2439, %v2466
      %v2468 = vpop.f32.mrf.mxu0
      %v2469 = vadd.f32 %v2441, %v2468
      %2470 = vmatmul.bf16.gmra.mxu0 %v1788
      %v2471 = vpop.f32.mrf.mxu0
      %v2472 = vadd.f32 %v2444, %v2471
      %v2473 = vpop.f32.mrf.mxu0
      %v2474 = vadd.f32 %v2446, %v2473
      %2475 = vmatmul.bf16.gmra.mxu0 %v1791
      %v2476 = vpop.f32.mrf.mxu0
      %v2477 = vadd.f32 %v2449, %v2476
      %v2478 = vpop.f32.mrf.mxu0
      %v2479 = vadd.f32 %v2451, %v2478
      %2480 = vmatmul.bf16.gmra.mxu0 %v1794
      %v2481 = vpop.f32.mrf.mxu0
      %v2482 = vadd.f32 %v2454, %v2481
      %v2483 = vpop.f32.mrf.mxu0
      %2484 = vdwg.mxu0
      %2485 = vmatpush.bf16.msra.mxu0 0
      %2486 = vmatpush.bf16.msra.mxu0 0
      %2487 = vmatpush.bf16.msra.mxu0 0
      %2488 = vmatpush.bf16.msra.mxu0 0
      %2489 = vmatpush.bf16.msra.mxu0 0
      %2490 = vmatpush.bf16.msra.mxu0 0
      %2491 = vmatpush.bf16.msra.mxu0 %v2091
      %2492 = vmatpush.bf16.msra.mxu0 %v2087
      %2493 = vmatmul.bf16.gmra.mxu0 %v2166
      %v2494 = vpop.f32.mrf.mxu0
      %v2495 = vadd.f32 %v2467, %v2494
      %v2496 = vpop.f32.mrf.mxu0
      %v2497 = vadd.f32 %v2469, %v2496
      %2498 = vmatmul.bf16.gmra.mxu0 %v2169
      %v2499 = vpop.f32.mrf.mxu0
      %v2500 = vadd.f32 %v2472, %v2499
      %v2501 = vpop.f32.mrf.mxu0
      %v2502 = vadd.f32 %v2474, %v2501
      %2503 = vmatmul.bf16.gmra.mxu0 %v2172
      %v2504 = vpop.f32.mrf.mxu0
      %v2505 = vadd.f32 %v2477, %v2504
      %v2506 = vpop.f32.mrf.mxu0
      %v2507 = vadd.f32 %v2479, %v2506
      %2508 = vmatmul.bf16.gmra.mxu0 %v2175
      %v2509 = vpop.f32.mrf.mxu0
      %v2510 = vadd.f32 %v2482, %v2509
      %v2511 = vpop.f32.mrf.mxu0
      %2512 = vdwg.mxu0
      %v2513 = vmax.f32 %v2243, 0.0
      %v2514 = vmax.f32 %v2327, 0.0
      %v2515 = vmax.f32 %v2411, 0.0
      %v2516 = vmax.f32 %v2495, 0.0
      %v2517 = vmax.f32 %v2245, 0.0
      %v2518 = vmax.f32 %v2329, 0.0
      %v2519 = vmax.f32 %v2413, 0.0
      %v2520 = vmax.f32 %v2497, 0.0
      %v2521 = vmax.f32 %v2248, 0.0
      %v2522 = vmax.f32 %v2332, 0.0
      %v2523 = vmax.f32 %v2416, 0.0
      %v2524 = vmax.f32 %v2500, 0.0
      %v2525 = vmax.f32 %v2250, 0.0
      %v2526 = vmax.f32 %v2334, 0.0
      %v2527 = vmax.f32 %v2418, 0.0
      %v2528 = vmax.f32 %v2502, 0.0
      %v2529 = vmax.f32 %v2253, 0.0
      %v2530 = vmax.f32 %v2337, 0.0
      %v2531 = vmax.f32 %v2421, 0.0
      %v2532 = vmax.f32 %v2505, 0.0
      %v2533 = vmax.f32 %v2255, 0.0
      %v2534 = vmax.f32 %v2339, 0.0
      %v2535 = vmax.f32 %v2423, 0.0
      %v2536 = vmax.f32 %v2507, 0.0
      %v2537 = vmax.f32 %v2258, 0.0
      %v2538 = vmax.f32 %v2342, 0.0
      %v2539 = vmax.f32 %v2426, 0.0
      %v2540 = vmax.f32 %v2510, 0.0
      %2541 = vrot.lane.b32.xlu0 %v2513, 127
      %v2542 = vpop.permute.xlu0 %2541
      %2543 = vrot.lane.b32.xlu0 %v2517, 127
      %v2544 = vpop.permute.xlu0 %2543
      %2545 = vrot.lane.b32.xlu0 %v2521, 127
      %v2546 = vpop.permute.xlu0 %2545
      %2547 = vrot.lane.b32.xlu0 %v2525, 127
      %v2548 = vpop.permute.xlu0 %2547
      %2549 = vrot.lane.b32.xlu0 %v2529, 127
      %v2550 = vpop.permute.xlu0 %2549
      %2551 = vrot.lane.b32.xlu0 %v2533, 127
      %v2552 = vpop.permute.xlu0 %2551
      %2553 = vrot.lane.b32.xlu0 %v2537, 127
      %v2554 = vpop.permute.xlu0 %2553
      %2555 = vrot.lane.b32.xlu0 %v2514, 127
      %v2556 = vpop.permute.xlu0 %2555
      %2557 = vrot.lane.b32.xlu0 %v2518, 127
      %v2558 = vpop.permute.xlu0 %2557
      %2559 = vrot.lane.b32.xlu0 %v2522, 127
      %v2560 = vpop.permute.xlu0 %2559
      %2561 = vrot.lane.b32.xlu0 %v2526, 127
      %v2562 = vpop.permute.xlu0 %2561
      %2563 = vrot.lane.b32.xlu0 %v2530, 127
      %v2564 = vpop.permute.xlu0 %2563
      %2565 = vrot.lane.b32.xlu0 %v2534, 127
      %v2566 = vpop.permute.xlu0 %2565
      %2567 = vrot.lane.b32.xlu0 %v2538, 127
      %v2568 = vpop.permute.xlu0 %2567
      %2569 = vrot.lane.b32.xlu0 %v2515, 127
      %v2570 = vpop.permute.xlu0 %2569
      %2571 = vrot.lane.b32.xlu0 %v2519, 127
      %v2572 = vpop.permute.xlu0 %2571
      %2573 = vrot.lane.b32.xlu0 %v2523, 127
      %v2574 = vpop.permute.xlu0 %2573
      %2575 = vrot.lane.b32.xlu0 %v2527, 127
      %v2576 = vpop.permute.xlu0 %2575
      %2577 = vrot.lane.b32.xlu0 %v2531, 127
      %v2578 = vpop.permute.xlu0 %2577
      %2579 = vrot.lane.b32.xlu0 %v2535, 127
      %v2580 = vpop.permute.xlu0 %2579
      %2581 = vrot.lane.b32.xlu0 %v2539, 127
      %v2582 = vpop.permute.xlu0 %2581
      %2583 = vrot.lane.b32.xlu0 %v2516, 127
      %v2584 = vpop.permute.xlu0 %2583
      %2585 = vrot.lane.b32.xlu0 %v2520, 127
      %v2586 = vpop.permute.xlu0 %2585
      %2587 = vrot.lane.b32.xlu0 %v2524, 127
      %v2588 = vpop.permute.xlu0 %2587
      %2589 = vrot.lane.b32.xlu0 %v2528, 127
      %v2590 = vpop.permute.xlu0 %2589
      %2591 = vrot.lane.b32.xlu0 %v2532, 127
      %v2592 = vpop.permute.xlu0 %2591
      %2593 = vrot.lane.b32.xlu0 %v2536, 127
      %v2594 = vpop.permute.xlu0 %2593
      %2595 = vrot.lane.b32.xlu0 %v2540, 127
      %v2596 = vpop.permute.xlu0 %2595
      %v2597 = vsel %vm1285, %v2570, %v2584
      %v2598 = vsel %vm1285, %v2572, %v2586
      %v2599 = vsel %vm1285, %v2574, %v2588
      %v2600 = vsel %vm1285, %v2576, %v2590
      %v2601 = vsel %vm1285, %v2578, %v2592
      %v2602 = vsel %vm1285, %v2580, %v2594
      %v2603 = vsel %vm1285, %v2582, %v2596
      %v2604 = vsel %vm1285, %v2556, %v2570
      %v2605 = vsel %vm1285, %v2558, %v2572
      %v2606 = vsel %vm1285, %v2560, %v2574
      %v2607 = vsel %vm1285, %v2562, %v2576
      %v2608 = vsel %vm1285, %v2564, %v2578
      %v2609 = vsel %vm1285, %v2566, %v2580
      %v2610 = vsel %vm1285, %v2568, %v2582
      %v2611 = vsel %vm1285, %v2542, %v2556
      %v2612 = vsel %vm1285, %v2544, %v2558
      %v2613 = vsel %vm1285, %v2546, %v2560
      %v2614 = vsel %vm1285, %v2548, %v2562
      %v2615 = vsel %vm1285, %v2550, %v2564
      %v2616 = vsel %vm1285, %v2552, %v2566
      %v2617 = vsel %vm1285, %v2554, %v2568
      %v2618 = vsel %vm1285, %v2584, %v2542
      %v2619 = vsel %vm1285, %v2586, %v2544
      %v2620 = vsel %vm1285, %v2588, %v2546
      %v2621 = vsel %vm1285, %v2590, %v2548
      %v2622 = vsel %vm1285, %v2592, %v2550
      %v2623 = vsel %vm1285, %v2594, %v2552
      %v2624 = vsel %vm1285, %v2596, %v2554
      %v2625 = vmax.f32 %v2513, %v2611
      %v2626 = vmax.f32 %v2514, %v2604
      %v2627 = vmax.f32 %v2515, %v2597
      %v2628 = vmax.f32 %v2516, %v2618
      %v2629 = vmax.f32 %v2517, %v2612
      %v2630 = vmax.f32 %v2518, %v2605
      %v2631 = vmax.f32 %v2519, %v2598
      %v2632 = vmax.f32 %v2520, %v2619
      %v2633 = vmax.f32 %v2521, %v2613
      %v2634 = vmax.f32 %v2522, %v2606
      %v2635 = vmax.f32 %v2523, %v2599
      %v2636 = vmax.f32 %v2524, %v2620
      %v2637 = vmax.f32 %v2525, %v2614
      %v2638 = vmax.f32 %v2526, %v2607
      %v2639 = vmax.f32 %v2527, %v2600
      %v2640 = vmax.f32 %v2528, %v2621
      %v2641 = vmax.f32 %v2529, %v2615
      %v2642 = vmax.f32 %v2530, %v2608
      %v2643 = vmax.f32 %v2531, %v2601
      %v2644 = vmax.f32 %v2532, %v2622
      %v2645 = vmax.f32 %v2533, %v2616
      %v2646 = vmax.f32 %v2534, %v2609
      %v2647 = vmax.f32 %v2535, %v2602
      %v2648 = vmax.f32 %v2536, %v2623
      %v2649 = vmax.f32 %v2537, %v2617
      %v2650 = vmax.f32 %v2538, %v2610
      %v2651 = vmax.f32 %v2539, %v2603
      %v2652 = vmax.f32 %v2540, %v2624
      %2653 = vrot.lane.b32.xlu0 %v2625, 114
      %v2654 = vpop.permute.xlu0 %2653
      %2655 = vrot.lane.b32.xlu0 %v2629, 114
      %v2656 = vpop.permute.xlu0 %2655
      %2657 = vrot.lane.b32.xlu0 %v2633, 114
      %v2658 = vpop.permute.xlu0 %2657
      %2659 = vrot.lane.b32.xlu0 %v2637, 114
      %v2660 = vpop.permute.xlu0 %2659
      %2661 = vrot.lane.b32.xlu0 %v2641, 114
      %v2662 = vpop.permute.xlu0 %2661
      %2663 = vrot.lane.b32.xlu0 %v2645, 114
      %v2664 = vpop.permute.xlu0 %2663
      %2665 = vrot.lane.b32.xlu0 %v2649, 114
      %v2666 = vpop.permute.xlu0 %2665
      %2667 = vrot.lane.b32.xlu0 %v2626, 114
      %v2668 = vpop.permute.xlu0 %2667
      %2669 = vrot.lane.b32.xlu0 %v2630, 114
      %v2670 = vpop.permute.xlu0 %2669
      %2671 = vrot.lane.b32.xlu0 %v2634, 114
      %v2672 = vpop.permute.xlu0 %2671
      %2673 = vrot.lane.b32.xlu0 %v2638, 114
      %v2674 = vpop.permute.xlu0 %2673
      %2675 = vrot.lane.b32.xlu0 %v2642, 114
      %v2676 = vpop.permute.xlu0 %2675
      %2677 = vrot.lane.b32.xlu0 %v2646, 114
      %v2678 = vpop.permute.xlu0 %2677
      %2679 = vrot.lane.b32.xlu0 %v2650, 114
      %v2680 = vpop.permute.xlu0 %2679
      %2681 = vrot.lane.b32.xlu0 %v2627, 114
      %v2682 = vpop.permute.xlu0 %2681
      %2683 = vrot.lane.b32.xlu0 %v2631, 114
      %v2684 = vpop.permute.xlu0 %2683
      %2685 = vrot.lane.b32.xlu0 %v2635, 114
      %v2686 = vpop.permute.xlu0 %2685
      %2687 = vrot.lane.b32.xlu0 %v2639, 114
      %v2688 = vpop.permute.xlu0 %2687
      %2689 = vrot.lane.b32.xlu0 %v2643, 114
      %v2690 = vpop.permute.xlu0 %2689
      %2691 = vrot.lane.b32.xlu0 %v2647, 114
      %v2692 = vpop.permute.xlu0 %2691
      %2693 = vrot.lane.b32.xlu0 %v2651, 114
      %v2694 = vpop.permute.xlu0 %2693
      %2695 = vrot.lane.b32.xlu0 %v2628, 114
      %v2696 = vpop.permute.xlu0 %2695
      %2697 = vrot.lane.b32.xlu0 %v2632, 114
      %v2698 = vpop.permute.xlu0 %2697
      %2699 = vrot.lane.b32.xlu0 %v2636, 114
      %v2700 = vpop.permute.xlu0 %2699
      %2701 = vrot.lane.b32.xlu0 %v2640, 114
      %v2702 = vpop.permute.xlu0 %2701
      %2703 = vrot.lane.b32.xlu0 %v2644, 114
      %v2704 = vpop.permute.xlu0 %2703
      %2705 = vrot.lane.b32.xlu0 %v2648, 114
      %v2706 = vpop.permute.xlu0 %2705
      %2707 = vrot.lane.b32.xlu0 %v2652, 114
      %v2708 = vpop.permute.xlu0 %2707
      %v2709 = vsel %vm1469, %v2682, %v2696
      %v2710 = vsel %vm1469, %v2684, %v2698
      %v2711 = vsel %vm1469, %v2686, %v2700
      %v2712 = vsel %vm1469, %v2688, %v2702
      %v2713 = vsel %vm1469, %v2690, %v2704
      %v2714 = vsel %vm1469, %v2692, %v2706
      %v2715 = vsel %vm1469, %v2694, %v2708
      %v2716 = vsel %vm1469, %v2668, %v2682
      %v2717 = vsel %vm1469, %v2670, %v2684
      %v2718 = vsel %vm1469, %v2672, %v2686
      %v2719 = vsel %vm1469, %v2674, %v2688
      %v2720 = vsel %vm1469, %v2676, %v2690
      %v2721 = vsel %vm1469, %v2678, %v2692
      %v2722 = vsel %vm1469, %v2680, %v2694
      %v2723 = vsel %vm1469, %v2654, %v2668
      %v2724 = vsel %vm1469, %v2656, %v2670
      %v2725 = vsel %vm1469, %v2658, %v2672
      %v2726 = vsel %vm1469, %v2660, %v2674
      %v2727 = vsel %vm1469, %v2662, %v2676
      %v2728 = vsel %vm1469, %v2664, %v2678
      %v2729 = vsel %vm1469, %v2666, %v2680
      %v2730 = vsel %vm1469, %v2696, %v2654
      %v2731 = vsel %vm1469, %v2698, %v2656
      %v2732 = vsel %vm1469, %v2700, %v2658
      %v2733 = vsel %vm1469, %v2702, %v2660
      %v2734 = vsel %vm1469, %v2704, %v2662
      %v2735 = vsel %vm1469, %v2706, %v2664
      %v2736 = vsel %vm1469, %v2708, %v2666
      %v2737 = vmax.f32 %v2625, %v2723
      %v2738 = vmax.f32 %v2626, %v2716
      %v2739 = vmax.f32 %v2627, %v2709
      %v2740 = vmax.f32 %v2628, %v2730
      %v2741 = vmax.f32 %v2629, %v2724
      %v2742 = vmax.f32 %v2630, %v2717
      %v2743 = vmax.f32 %v2631, %v2710
      %v2744 = vmax.f32 %v2632, %v2731
      %v2745 = vmax.f32 %v2633, %v2725
      %v2746 = vmax.f32 %v2634, %v2718
      %v2747 = vmax.f32 %v2635, %v2711
      %v2748 = vmax.f32 %v2636, %v2732
      %v2749 = vmax.f32 %v2637, %v2726
      %v2750 = vmax.f32 %v2638, %v2719
      %v2751 = vmax.f32 %v2639, %v2712
      %v2752 = vmax.f32 %v2640, %v2733
      %v2753 = vmax.f32 %v2641, %v2727
      %v2754 = vmax.f32 %v2642, %v2720
      %v2755 = vmax.f32 %v2643, %v2713
      %v2756 = vmax.f32 %v2644, %v2734
      %v2757 = vmax.f32 %v2645, %v2728
      %v2758 = vmax.f32 %v2646, %v2721
      %v2759 = vmax.f32 %v2647, %v2714
      %v2760 = vmax.f32 %v2648, %v2735
      %v2761 = vmax.f32 %v2649, %v2729
      %v2762 = vmax.f32 %v2650, %v2722
      %v2763 = vmax.f32 %v2651, %v2715
      %v2764 = vmax.f32 %v2652, %v2736
      %v2765 = vpack.c.bf16 %v2741, %v2737
      %v2766 = vpack.c.bf16 %v2742, %v2738
      %v2767 = vpack.c.bf16 %v2749, %v2745
      %v2768 = vpack.c.bf16 %v2750, %v2746
      %v2769 = vpack.c.bf16 %v2757, %v2753
      %v2770 = vpack.c.bf16 %v2758, %v2754
      %v2771 = vpack.c.bf16 %v2761, %v2761
      %v2772 = vpack.c.bf16 %v2762, %v2762
      %v2773 = vld [vmem:[%s6] sm:$0xf]
      %v2774 = vld [vmem:[%s6 + $0x4] sm:$0xf]
      %v2775 = vld [vmem:[%s6 + $0x8] sm:$0xf]
      %v2776 = vld [vmem:[%s6 + $0xc] sm:$0xf]
      %v2777 = vld [vmem:[%s6 + $0x10] sm:$0xf]
      %v2778 = vld [vmem:[%s6 + $0x14] sm:$0xf]
      %v2779 = vld [vmem:[%s6 + $0x18] sm:$0xf]
      %v2780 = vld [vmem:[%s6 + $0x1c] sm:$0xf]
      %v2781 = vld [vmem:[%s6 + $0x20] sm:$0xf]
      %v2782 = vld [vmem:[%s6 + $0x24] sm:$0xf]
      %v2783 = vld [vmem:[%s6 + $0x28] sm:$0xf]
      %v2784 = vld [vmem:[%s6 + $0x2c] sm:$0xf]
      %v2785 = vld [vmem:[%s6 + $0x30] sm:$0xf]
      %v2786 = vld [vmem:[%s6 + $0x34] sm:$0xf]
      %v2787 = vld [vmem:[%s6 + $0x38] sm:$0xf]
      %v2788 = vld [vmem:[%s6 + $0x3c] sm:$0xf]
      %v2789 = vld [vmem:[%s6 + $0x40] sm:$0xf]
      %v2790 = vld [vmem:[%s6 + $0x44] sm:$0xf]
      %v2791 = vld [vmem:[%s6 + $0x48] sm:$0xf]
      %v2792 = vld [vmem:[%s6 + $0x4c] sm:$0xf]
      %v2793 = vld [vmem:[%s6 + $0x50] sm:$0xf]
      %v2794 = vld [vmem:[%s6 + $0x54] sm:$0xf]
      %v2795 = vld [vmem:[%s6 + $0x58] sm:$0xf]
      %v2796 = vld [vmem:[%s6 + $0x5c] sm:$0xf]
      %v2797 = vld [vmem:[%s6 + $0x60] sm:$0xf]
      %v2798 = vld [vmem:[%s6 + $0x64] sm:$0xf]
      %v2799 = vld [vmem:[%s6 + $0x68] sm:$0xf]
      %v2800 = vld [vmem:[%s6 + $0x6c] sm:$0xf]
      %v2801 = vld [vmem:[%s6 + $0x70] sm:$0xf]
      %v2802 = vld [vmem:[%s6 + $0x74] sm:$0xf]
      %v2803 = vld [vmem:[%s6 + $0x78] sm:$0xf]
      %v2804 = vld [vmem:[%s6 + $0x7c] sm:$0xf]
      %v2837 = vunpack.c.l.b16 %v2773
      %v2838 = vunpack.c.l.b16 %v2774
      %v2839 = vunpack.c.l.b16 %v2775
      %v2840 = vunpack.c.l.b16 %v2776
      %v2841 = vunpack.c.l.b16 %v2777
      %v2842 = vunpack.c.l.b16 %v2778
      %v2843 = vunpack.c.l.b16 %v2779
      %v2844 = vunpack.c.l.b16 %v2780
      %v2845 = vunpack.c.l.b16 %v2781
      %v2846 = vunpack.c.l.b16 %v2782
      %v2847 = vunpack.c.l.b16 %v2783
      %v2848 = vunpack.c.l.b16 %v2784
      %v2849 = vunpack.c.l.b16 %v2785
      %v2850 = vunpack.c.l.b16 %v2786
      %v2851 = vunpack.c.l.b16 %v2787
      %v2852 = vunpack.c.l.b16 %v2788
      %v2853 = vunpack.c.l.b16 %v2789
      %v2854 = vunpack.c.l.b16 %v2790
      %v2855 = vunpack.c.l.b16 %v2791
      %v2856 = vunpack.c.l.b16 %v2792
      %v2857 = vunpack.c.l.b16 %v2793
      %v2858 = vunpack.c.l.b16 %v2794
      %v2859 = vunpack.c.l.b16 %v2795
      %v2860 = vunpack.c.l.b16 %v2796
      %v2861 = vunpack.c.l.b16 %v2797
      %v2862 = vunpack.c.l.b16 %v2798
      %v2863 = vunpack.c.l.b16 %v2799
      %v2864 = vunpack.c.l.b16 %v2800
      %v2865 = vunpack.c.l.b16 %v2801
      %v2866 = vunpack.c.l.b16 %v2802
      %v2867 = vunpack.c.l.b16 %v2803
      %v2868 = vunpack.c.l.b16 %v2804
      %v2869 = vpack.c.b16 %v2838, %v2837
      %v2870 = vpack.c.b16 %v2840, %v2839
      %v2871 = vpack.c.b16 %v2842, %v2841
      %v2872 = vpack.c.b16 %v2844, %v2843
      %v2873 = vpack.c.b16 %v2846, %v2845
      %v2874 = vpack.c.b16 %v2848, %v2847
      %v2875 = vpack.c.b16 %v2850, %v2849
      %v2876 = vpack.c.b16 %v2852, %v2851
      %v2877 = vpack.c.b16 %v2854, %v2853
      %v2878 = vpack.c.b16 %v2856, %v2855
      %v2879 = vpack.c.b16 %v2858, %v2857
      %v2880 = vpack.c.b16 %v2860, %v2859
      %v2881 = vpack.c.b16 %v2862, %v2861
      %v2882 = vpack.c.b16 %v2864, %v2863
      %v2883 = vpack.c.b16 %v2866, %v2865
      %v2884 = vpack.c.b16 %v2868, %v2867
      %2901 = vmatpush.bf16.msra.mxu0 %v2876
      %2902 = vmatpush.bf16.msra.mxu0 %v2875
      %2903 = vmatpush.bf16.msra.mxu0 %v2874
      %2904 = vmatpush.bf16.msra.mxu0 %v2873
      %2905 = vmatpush.bf16.msra.mxu0 %v2872
      %2906 = vmatpush.bf16.msra.mxu0 %v2871
      %2907 = vmatpush.bf16.msra.mxu0 %v2870
      %2908 = vmatpush.bf16.msra.mxu0 %v2869
      %2909 = vmatmul.bf16.gmra.mxu0 %v2765
      %v2910 = vpop.f32.mrf.mxu0
      %v2911 = vadd.f32 0.0, %v2910
      %v2912 = vpop.f32.mrf.mxu0
      %v2913 = vadd.f32 0.0, %v2912
      %2914 = vmatmul.bf16.gmra.mxu0 %v2767
      %v2915 = vpop.f32.mrf.mxu0
      %v2916 = vadd.f32 0.0, %v2915
      %v2917 = vpop.f32.mrf.mxu0
      %v2918 = vadd.f32 0.0, %v2917
      %2919 = vmatmul.bf16.gmra.mxu0 %v2769
      %v2920 = vpop.f32.mrf.mxu0
      %v2921 = vadd.f32 0.0, %v2920
      %v2922 = vpop.f32.mrf.mxu0
      %v2923 = vadd.f32 0.0, %v2922
      %2924 = vmatmul.bf16.gmra.mxu0 %v2771
      %v2925 = vpop.f32.mrf.mxu0
      %v2926 = vadd.f32 0.0, %v2925
      %v2927 = vpop.f32.mrf.mxu0
      %2928 = vdwg.mxu0
      %2929 = vmatpush.bf16.msra.mxu0 %v2884
      %2930 = vmatpush.bf16.msra.mxu0 %v2883
      %2931 = vmatpush.bf16.msra.mxu0 %v2882
      %2932 = vmatpush.bf16.msra.mxu0 %v2881
      %2933 = vmatpush.bf16.msra.mxu0 %v2880
      %2934 = vmatpush.bf16.msra.mxu0 %v2879
      %2935 = vmatpush.bf16.msra.mxu0 %v2878
      %2936 = vmatpush.bf16.msra.mxu0 %v2877
      %2937 = vmatmul.bf16.gmra.mxu0 %v2766
      %v2938 = vpop.f32.mrf.mxu0
      %v2939 = vadd.f32 %v2911, %v2938
      %v2940 = vpop.f32.mrf.mxu0
      %v2941 = vadd.f32 %v2913, %v2940
      %2942 = vmatmul.bf16.gmra.mxu0 %v2768
      %v2943 = vpop.f32.mrf.mxu0
      %v2944 = vadd.f32 %v2916, %v2943
      %v2945 = vpop.f32.mrf.mxu0
      %v2946 = vadd.f32 %v2918, %v2945
      %2947 = vmatmul.bf16.gmra.mxu0 %v2770
      %v2948 = vpop.f32.mrf.mxu0
      %v2949 = vadd.f32 %v2921, %v2948
      %v2950 = vpop.f32.mrf.mxu0
      %v2951 = vadd.f32 %v2923, %v2950
      %2952 = vmatmul.bf16.gmra.mxu0 %v2772
      %v2953 = vpop.f32.mrf.mxu0
      %v2954 = vadd.f32 %v2926, %v2953
      %v2955 = vpop.f32.mrf.mxu0
      %2956 = vdwg.mxu0
      %v2957 = vpack.c.bf16 %v2939, %v2939
      %v2958 = vpack.c.bf16 %v2941, %v2941
      %v2959 = vpack.c.bf16 %v2944, %v2944
      %v2960 = vpack.c.bf16 %v2946, %v2946
      %v2961 = vpack.c.bf16 %v2949, %v2949
      %v2962 = vpack.c.bf16 %v2951, %v2951
      %v2963 = vpack.c.bf16 %v2954, %v2954
      %2964 = vst [vmem:[%s278] sm:$0xf] %v2957
      %2965 = vst [vmem:[%s278 + $0x4] sm:$0xf] %v2958
      %2966 = vst [vmem:[%s278 + $0x8] sm:$0xf] %v2959
      %2967 = vst [vmem:[%s278 + $0xc] sm:$0xf] %v2960
      %2968 = vst [vmem:[%s278 + $0x10] sm:$0xf] %v2961
      %2969 = vst [vmem:[%s278 + $0x14] sm:$0xf] %v2962
      %2970 = vst [vmem:[%s278 + $0x18] sm:$0x1] %v2963
      %v2971 = vpack.c.bf16 %v2743, %v2739
      %v2972 = vpack.c.bf16 %v2744, %v2740
      %v2973 = vpack.c.bf16 %v2751, %v2747
      %v2974 = vpack.c.bf16 %v2752, %v2748
      %v2975 = vpack.c.bf16 %v2759, %v2755
      %v2976 = vpack.c.bf16 %v2760, %v2756
      %v2977 = vpack.c.bf16 %v2763, %v2763
      %v2978 = vpack.c.bf16 %v2764, %v2764
      %v2979 = vld [vmem:[%s6] sm:$0xf]
      %v2980 = vld [vmem:[%s6 + $0x4] sm:$0xf]
      %v2981 = vld [vmem:[%s6 + $0x8] sm:$0xf]
      %v2982 = vld [vmem:[%s6 + $0xc] sm:$0xf]
      %v2983 = vld [vmem:[%s6 + $0x10] sm:$0xf]
      %v2984 = vld [vmem:[%s6 + $0x14] sm:$0xf]
      %v2985 = vld [vmem:[%s6 + $0x18] sm:$0xf]
      %v2986 = vld [vmem:[%s6 + $0x1c] sm:$0xf]
      %v2987 = vld [vmem:[%s6 + $0x20] sm:$0xf]
      %v2988 = vld [vmem:[%s6 + $0x24] sm:$0xf]
      %v2989 = vld [vmem:[%s6 + $0x28] sm:$0xf]
      %v2990 = vld [vmem:[%s6 + $0x2c] sm:$0xf]
      %v2991 = vld [vmem:[%s6 + $0x30] sm:$0xf]
      %v2992 = vld [vmem:[%s6 + $0x34] sm:$0xf]
      %v2993 = vld [vmem:[%s6 + $0x38] sm:$0xf]
      %v2994 = vld [vmem:[%s6 + $0x3c] sm:$0xf]
      %v2995 = vld [vmem:[%s6 + $0x40] sm:$0xf]
      %v2996 = vld [vmem:[%s6 + $0x44] sm:$0xf]
      %v2997 = vld [vmem:[%s6 + $0x48] sm:$0xf]
      %v2998 = vld [vmem:[%s6 + $0x4c] sm:$0xf]
      %v2999 = vld [vmem:[%s6 + $0x50] sm:$0xf]
      %v3000 = vld [vmem:[%s6 + $0x54] sm:$0xf]
      %v3001 = vld [vmem:[%s6 + $0x58] sm:$0xf]
      %v3002 = vld [vmem:[%s6 + $0x5c] sm:$0xf]
      %v3003 = vld [vmem:[%s6 + $0x60] sm:$0xf]
      %v3004 = vld [vmem:[%s6 + $0x64] sm:$0xf]
      %v3005 = vld [vmem:[%s6 + $0x68] sm:$0xf]
      %v3006 = vld [vmem:[%s6 + $0x6c] sm:$0xf]
      %v3007 = vld [vmem:[%s6 + $0x70] sm:$0xf]
      %v3008 = vld [vmem:[%s6 + $0x74] sm:$0xf]
      %v3009 = vld [vmem:[%s6 + $0x78] sm:$0xf]
      %v3010 = vld [vmem:[%s6 + $0x7c] sm:$0xf]
      %v3043 = vunpack.c.l.b16 %v2979
      %v3044 = vunpack.c.l.b16 %v2980
      %v3045 = vunpack.c.l.b16 %v2981
      %v3046 = vunpack.c.l.b16 %v2982
      %v3047 = vunpack.c.l.b16 %v2983
      %v3048 = vunpack.c.l.b16 %v2984
      %v3049 = vunpack.c.l.b16 %v2985
      %v3050 = vunpack.c.l.b16 %v2986
      %v3051 = vunpack.c.l.b16 %v2987
      %v3052 = vunpack.c.l.b16 %v2988
      %v3053 = vunpack.c.l.b16 %v2989
      %v3054 = vunpack.c.l.b16 %v2990
      %v3055 = vunpack.c.l.b16 %v2991
      %v3056 = vunpack.c.l.b16 %v2992
      %v3057 = vunpack.c.l.b16 %v2993
      %v3058 = vunpack.c.l.b16 %v2994
      %v3059 = vunpack.c.l.b16 %v2995
      %v3060 = vunpack.c.l.b16 %v2996
      %v3061 = vunpack.c.l.b16 %v2997
      %v3062 = vunpack.c.l.b16 %v2998
      %v3063 = vunpack.c.l.b16 %v2999
      %v3064 = vunpack.c.l.b16 %v3000
      %v3065 = vunpack.c.l.b16 %v3001
      %v3066 = vunpack.c.l.b16 %v3002
      %v3067 = vunpack.c.l.b16 %v3003
      %v3068 = vunpack.c.l.b16 %v3004
      %v3069 = vunpack.c.l.b16 %v3005
      %v3070 = vunpack.c.l.b16 %v3006
      %v3071 = vunpack.c.l.b16 %v3007
      %v3072 = vunpack.c.l.b16 %v3008
      %v3073 = vunpack.c.l.b16 %v3009
      %v3074 = vunpack.c.l.b16 %v3010
      %v3075 = vpack.c.b16 %v3044, %v3043
      %v3076 = vpack.c.b16 %v3046, %v3045
      %v3077 = vpack.c.b16 %v3048, %v3047
      %v3078 = vpack.c.b16 %v3050, %v3049
      %v3079 = vpack.c.b16 %v3052, %v3051
      %v3080 = vpack.c.b16 %v3054, %v3053
      %v3081 = vpack.c.b16 %v3056, %v3055
      %v3082 = vpack.c.b16 %v3058, %v3057
      %v3083 = vpack.c.b16 %v3060, %v3059
      %v3084 = vpack.c.b16 %v3062, %v3061
      %v3085 = vpack.c.b16 %v3064, %v3063
      %v3086 = vpack.c.b16 %v3066, %v3065
      %v3087 = vpack.c.b16 %v3068, %v3067
      %v3088 = vpack.c.b16 %v3070, %v3069
      %v3089 = vpack.c.b16 %v3072, %v3071
      %v3090 = vpack.c.b16 %v3074, %v3073
      %3107 = vmatpush.bf16.msra.mxu0 %v3082
      %3108 = vmatpush.bf16.msra.mxu0 %v3081
      %3109 = vmatpush.bf16.msra.mxu0 %v3080
      %3110 = vmatpush.bf16.msra.mxu0 %v3079
      %3111 = vmatpush.bf16.msra.mxu0 %v3078
      %3112 = vmatpush.bf16.msra.mxu0 %v3077
      %3113 = vmatpush.bf16.msra.mxu0 %v3076
      %3114 = vmatpush.bf16.msra.mxu0 %v3075
      %3115 = vmatmul.bf16.gmra.mxu0 %v2971
      %v3116 = vpop.f32.mrf.mxu0
      %v3117 = vadd.f32 0.0, %v3116
      %v3118 = vpop.f32.mrf.mxu0
      %v3119 = vadd.f32 0.0, %v3118
      %3120 = vmatmul.bf16.gmra.mxu0 %v2973
      %v3121 = vpop.f32.mrf.mxu0
      %v3122 = vadd.f32 0.0, %v3121
      %v3123 = vpop.f32.mrf.mxu0
      %v3124 = vadd.f32 0.0, %v3123
      %3125 = vmatmul.bf16.gmra.mxu0 %v2975
      %v3126 = vpop.f32.mrf.mxu0
      %v3127 = vadd.f32 0.0, %v3126
      %v3128 = vpop.f32.mrf.mxu0
      %v3129 = vadd.f32 0.0, %v3128
      %3130 = vmatmul.bf16.gmra.mxu0 %v2977
      %v3131 = vpop.f32.mrf.mxu0
      %v3132 = vadd.f32 0.0, %v3131
      %v3133 = vpop.f32.mrf.mxu0
      %3134 = vdwg.mxu0
      %3135 = vmatpush.bf16.msra.mxu0 %v3090
      %3136 = vmatpush.bf16.msra.mxu0 %v3089
      %3137 = vmatpush.bf16.msra.mxu0 %v3088
      %3138 = vmatpush.bf16.msra.mxu0 %v3087
      %3139 = vmatpush.bf16.msra.mxu0 %v3086
      %3140 = vmatpush.bf16.msra.mxu0 %v3085
      %3141 = vmatpush.bf16.msra.mxu0 %v3084
      %3142 = vmatpush.bf16.msra.mxu0 %v3083
      %3143 = vmatmul.bf16.gmra.mxu0 %v2972
      %v3144 = vpop.f32.mrf.mxu0
      %v3145 = vadd.f32 %v3117, %v3144
      %v3146 = vpop.f32.mrf.mxu0
      %v3147 = vadd.f32 %v3119, %v3146
      %3148 = vmatmul.bf16.gmra.mxu0 %v2974
      %v3149 = vpop.f32.mrf.mxu0
      %v3150 = vadd.f32 %v3122, %v3149
      %v3151 = vpop.f32.mrf.mxu0
      %v3152 = vadd.f32 %v3124, %v3151
      %3153 = vmatmul.bf16.gmra.mxu0 %v2976
      %v3154 = vpop.f32.mrf.mxu0
      %v3155 = vadd.f32 %v3127, %v3154
      %v3156 = vpop.f32.mrf.mxu0
      %v3157 = vadd.f32 %v3129, %v3156
      %3158 = vmatmul.bf16.gmra.mxu0 %v2978
      %v3159 = vpop.f32.mrf.mxu0
      %v3160 = vadd.f32 %v3132, %v3159
      %v3161 = vpop.f32.mrf.mxu0
      %3162 = vdwg.mxu0
      %v3163 = vpack.c.bf16 %v3145, %v3145
      %v3164 = vpack.c.bf16 %v3147, %v3147
      %v3165 = vpack.c.bf16 %v3150, %v3150
      %v3166 = vpack.c.bf16 %v3152, %v3152
      %v3167 = vpack.c.bf16 %v3155, %v3155
      %v3168 = vpack.c.bf16 %v3157, %v3157
      %v3169 = vpack.c.bf16 %v3160, %v3160
      %s3170 = scalar_lea.vmem %s278, 28
      %3171 = vst [vmem:[%s3170] sm:$0xf] %v3163
      %3172 = vst [vmem:[%s3170 + $0x4] sm:$0xf] %v3164
      %3173 = vst [vmem:[%s3170 + $0x8] sm:$0xf] %v3165
      %3174 = vst [vmem:[%s3170 + $0xc] sm:$0xf] %v3166
      %3175 = vst [vmem:[%s3170 + $0x10] sm:$0xf] %v3167
      %3176 = vst [vmem:[%s3170 + $0x14] sm:$0xf] %v3168
      %3177 = vst [vmem:[%s3170 + $0x18] sm:$0x1] %v3169
      %p3178 = scmp.lt.s32.totalorder %s18, 1
      %s3179 = scalar_select %p3178, %s18, 1
      %s3180 = smul.addr %s3179, 14
      %s3181 = smul.addr %s3180, 4
      %s3182 = scalar_lea.vmem %s7, %s3181
      // Predicated region
      $region49: #{_lambda_.2} parent=47 // pred_check
        %p3183 = pneg %p188
      $region50: #{_lambda_.2} parent=47 // pred_check_branch
        %3185 = sbr.rel (%p3183) target = $region52
      $region51: #{_lambda_.2} parent=47 // pred_region
        _
      $region52: #{_lambda_.2} parent=47 // pred_fallthru
        _
    $region48: #{_lambda_.2} parent=5 // pred_fallthru
      _
    %p3186 = scmp.le.s32.totalorder 2, %s13
    // Predicated region
    $region53: #{_lambda_.2} parent=5 // pred_check
      %p3187 = pneg %p3186
    $region54: #{_lambda_.2} parent=5 // pred_check_branch
      %3189 = sbr.rel (%p3187) target = $region56
    $region55: #{_lambda_.2} parent=5 // pred_region
      %s3190 = ssub.s32 %s13, 2
      // Predicated region
      $region57: #{_lambda_.2} parent=55 // pred_check
        %p3191 = pneg %p194
      $region58: #{_lambda_.2} parent=55 // pred_check_branch
        %3193 = sbr.rel (%p3191) target = $region60
      $region59: #{_lambda_.2} parent=55 // pred_region
        %p3194 = scmp.lt.s32.totalorder %s19, 1
        %s3195 = scalar_select %p3194, %s19, 1
        %s3196 = smul.addr %s3195, 14
        %s3197 = smul.addr %s3196, 4
        %s3198 = scalar_lea.vmem %s7, %s3197
      $region60: #{_lambda_.2} parent=55 // pred_fallthru
        _
    $region56: #{_lambda_.2} parent=5 // pred_fallthru
      _
  $region6: #{_lambda_.2} parent=0 // loop_footer
    %s17 = sadd.s32 1, %s13
  $region7: #{_lambda_.2} parent=0 // loop_footer_branch
    %12 = sbr.rel target = $region3
  $region8: #{_lambda_.2} parent=0 // loop_exit
    _

// kernel: _lambda_.3
$region0: #{_lambda_.3}
  #allocation0 [shape = 'u32[]', space=smem, size = 0x4, offset = 0x4, fixed_abs, tag = 'smem constant byte address 0x4 - core index']
  #allocation1 [shape = 'u32[72,128]{1,0:T(1,128)}', space=vmem, size = 0x9000, scoped, tag = 'internal scratch']
  %s0 = inlined_call_operand.vmem [shape: bf16[4,6400], index: 0, kind: input, shape index: {}]
  %s1 = inlined_call_operand.vmem [shape: bf16[6400,100], index: 1, kind: input, shape index: {}]
  %s2 = inlined_call_operand.vmem [shape: f32[1,100], index: 2, kind: input, shape index: {}]
  %s3 = inlined_call_operand.vmem [shape: bf16[100,128], index: 3, kind: input, shape index: {}]
  %s4 = inlined_call_operand.vmem [shape: f32[1,128], index: 4, kind: input, shape index: {}]
  %s5 = inlined_call_operand.hbm [shape: f32[4,128], index: 5, kind: output, shape index: {}]
  %s6 = sld [smem:[#allocation0]]
  $region30: #{_lambda_.3} parent=0
    _
  %s8 = ssub.s32 1, %s6
  %s9 = scalar_select 0, %s8, %s6
  $region1: #{_lambda_.3} parent=0
    #allocation2 [shape = 'u8[2048]{0}', space=vmem, size = 0x800, scoped, tag = 'output window, operand 0, single buffered']
    #allocation3 [shape = 's32[1]{0}', space=sflag, size = 0x4, scoped, tag = 'scoped memory for _lambda_.3']
    %10 = vsyncpa [#allocation3], 0
    // Predicated region
    $region2: #{_lambda_.3} parent=1 // pred_check
      _
    $region3: #{_lambda_.3} parent=1 // pred_check_branch
      %12 = sbr.rel (0) target = $region5
    $region4: #{_lambda_.3} parent=1 // pred_region
      _
    $region5: #{_lambda_.3} parent=1 // pred_fallthru
      _
    // Predicated region
    $region6: #{_lambda_.3} parent=1 // pred_check
      _
    $region7: #{_lambda_.3} parent=1 // pred_check_branch
      %14 = sbr.rel (0) target = $region9
    $region8: #{_lambda_.3} parent=1 // pred_region
      _
    $region9: #{_lambda_.3} parent=1 // pred_fallthru
      _
    // Predicated region
    $region10: #{_lambda_.3} parent=1 // pred_check
      _
    $region11: #{_lambda_.3} parent=1 // pred_check_branch
      %16 = sbr.rel (0) target = $region13
    $region12: #{_lambda_.3} parent=1 // pred_region
      _
    $region13: #{_lambda_.3} parent=1 // pred_fallthru
      _
    // Predicated region
    $region14: #{_lambda_.3} parent=1 // pred_check
      _
    $region15: #{_lambda_.3} parent=1 // pred_check_branch
      %18 = sbr.rel (0) target = $region17
    $region16: #{_lambda_.3} parent=1 // pred_region
      _
    $region17: #{_lambda_.3} parent=1 // pred_fallthru
      _
    // Predicated region
    $region18: #{_lambda_.3} parent=1 // pred_check
      _
    $region19: #{_lambda_.3} parent=1 // pred_check_branch
      %20 = sbr.rel (0) target = $region21
    $region20: #{_lambda_.3} parent=1 // pred_region
      _
    $region21: #{_lambda_.3} parent=1 // pred_fallthru
      _
    %v22 = vld [vmem:[%s0] sm:$0xff]
    %v23 = vld [vmem:[%s0 + $0x8] sm:$0xff]
    %v24 = vld [vmem:[%s0 + $0x10] sm:$0xff]
    %v25 = vld [vmem:[%s0 + $0x18] sm:$0xff]
    %v26 = vld [vmem:[%s0 + $0x20] sm:$0xff]
    %v27 = vld [vmem:[%s0 + $0x28] sm:$0xff]
    %v28 = vld [vmem:[%s0 + $0x30] sm:$0xff]
    %v29 = vld [vmem:[%s0 + $0x38] sm:$0xff]
    %v30 = vld [vmem:[%s0 + $0x40] sm:$0xff]
    %v31 = vld [vmem:[%s0 + $0x48] sm:$0xff]
    %v32 = vld [vmem:[%s0 + $0x50] sm:$0xff]
    %v33 = vld [vmem:[%s0 + $0x58] sm:$0xff]
    %v34 = vld [vmem:[%s0 + $0x60] sm:$0xf]
    %v35 = vld [vmem:[%s1] sm:$0xf]
    %v36 = vld [vmem:[%s1 + $0x4] sm:$0xf]
    %v37 = vld [vmem:[%s1 + $0x8] sm:$0xf]
    %v38 = vld [vmem:[%s1 + $0xc] sm:$0xf]
    %v39 = vld [vmem:[%s1 + $0x10] sm:$0xf]
    %v40 = vld [vmem:[%s1 + $0x14] sm:$0xf]
    %v41 = vld [vmem:[%s1 + $0x18] sm:$0xf]
    %v42 = vld [vmem:[%s1 + $0x1c] sm:$0xf]
    %v43 = vld [vmem:[%s1 + $0x20] sm:$0xf]
    %v44 = vld [vmem:[%s1 + $0x24] sm:$0xf]
    %v45 = vld [vmem:[%s1 + $0x28] sm:$0xf]
    %v46 = vld [vmem:[%s1 + $0x2c] sm:$0xf]
    %v47 = vld [vmem:[%s1 + $0x30] sm:$0xf]
    %v48 = vld [vmem:[%s1 + $0x34] sm:$0xf]
    %v49 = vld [vmem:[%s1 + $0x38] sm:$0xf]
    %v50 = vld [vmem:[%s1 + $0x3c] sm:$0xf]
    %v51 = vld [vmem:[%s1 + $0x40] sm:$0xf]
    %v52 = vld [vmem:[%s1 + $0x44] sm:$0xf]
    %v53 = vld [vmem:[%s1 + $0x48] sm:$0xf]
    %v54 = vld [vmem:[%s1 + $0x4c] sm:$0xf]
    %v55 = vld [vmem:[%s1 + $0x50] sm:$0xf]
    %v56 = vld [vmem:[%s1 + $0x54] sm:$0xf]
    %v57 = vld [vmem:[%s1 + $0x58] sm:$0xf]
    %v58 = vld [vmem:[%s1 + $0x5c] sm:$0xf]
    %v59 = vld [vmem:[%s1 + $0x60] sm:$0xf]
    %v60 = vld [vmem:[%s1 + $0x64] sm:$0xf]
    %v61 = vld [vmem:[%s1 + $0x68] sm:$0xf]
    %v62 = vld [vmem:[%s1 + $0x6c] sm:$0xf]
    %v63 = vld [vmem:[%s1 + $0x70] sm:$0xf]
    %v64 = vld [vmem:[%s1 + $0x74] sm:$0xf]
    %v65 = vld [vmem:[%s1 + $0x78] sm:$0xf]
    %v66 = vld [vmem:[%s1 + $0x7c] sm:$0xf]
    %v67 = vld [vmem:[%s1 + $0x80] sm:$0xf]
    %v68 = vld [vmem:[%s1 + $0x84] sm:$0xf]
    %v69 = vld [vmem:[%s1 + $0x88] sm:$0xf]
    %v70 = vld [vmem:[%s1 + $0x8c] sm:$0xf]
    %v71 = vld [vmem:[%s1 + $0x90] sm:$0xf]
    %v72 = vld [vmem:[%s1 + $0x94] sm:$0xf]
    %v73 = vld [vmem:[%s1 + $0x98] sm:$0xf]
    %v74 = vld [vmem:[%s1 + $0x9c] sm:$0xf]
    %v75 = vld [vmem:[%s1 + $0xa0] sm:$0xf]
    %v76 = vld [vmem:[%s1 + $0xa4] sm:$0xf]
    %v77 = vld [vmem:[%s1 + $0xa8] sm:$0xf]
    %v78 = vld [vmem:[%s1 + $0xac] sm:$0xf]
    %v79 = vld [vmem:[%s1 + $0xb0] sm:$0xf]
    %v80 = vld [vmem:[%s1 + $0xb4] sm:$0xf]
    %v81 = vld [vmem:[%s1 + $0xb8] sm:$0xf]
    %v82 = vld [vmem:[%s1 + $0xbc] sm:$0xf]
    %v83 = vld [vmem:[%s1 + $0xc0] sm:$0xf]
    %v84 = vld [vmem:[%s1 + $0xc4] sm:$0xf]
    %v85 = vld [vmem:[%s1 + $0xc8] sm:$0xf]
    %v86 = vld [vmem:[%s1 + $0xcc] sm:$0xf]
    %v87 = vld [vmem:[%s1 + $0xd0] sm:$0xf]
    %v88 = vld [vmem:[%s1 + $0xd4] sm:$0xf]
    %v89 = vld [vmem:[%s1 + $0xd8] sm:$0xf]
    %v90 = vld [vmem:[%s1 + $0xdc] sm:$0xf]
    %v91 = vld [vmem:[%s1 + $0xe0] sm:$0xf]
    %v92 = vld [vmem:[%s1 + $0xe4] sm:$0xf]
    %v93 = vld [vmem:[%s1 + $0xe8] sm:$0xf]
    %v94 = vld [vmem:[%s1 + $0xec] sm:$0xf]
    %v95 = vld [vmem:[%s1 + $0xf0] sm:$0xf]
    %v96 = vld [vmem:[%s1 + $0xf4] sm:$0xf]
    %v97 = vld [vmem:[%s1 + $0xf8] sm:$0xf]
    %v98 = vld [vmem:[%s1 + $0xfc] sm:$0xf]
    %v99 = vld [vmem:[%s1 + $0x100] sm:$0xf]
    %v100 = vld [vmem:[%s1 + $0x104] sm:$0xf]
    %v101 = vld [vmem:[%s1 + $0x108] sm:$0xf]
    %v102 = vld [vmem:[%s1 + $0x10c] sm:$0xf]
    %v103 = vld [vmem:[%s1 + $0x110] sm:$0xf]
    %v104 = vld [vmem:[%s1 + $0x114] sm:$0xf]
    %v105 = vld [vmem:[%s1 + $0x118] sm:$0xf]
    %v106 = vld [vmem:[%s1 + $0x11c] sm:$0xf]
    %v107 = vld [vmem:[%s1 + $0x120] sm:$0xf]
    %v108 = vld [vmem:[%s1 + $0x124] sm:$0xf]
    %v109 = vld [vmem:[%s1 + $0x128] sm:$0xf]
    %v110 = vld [vmem:[%s1 + $0x12c] sm:$0xf]
    %v111 = vld [vmem:[%s1 + $0x130] sm:$0xf]
    %v112 = vld [vmem:[%s1 + $0x134] sm:$0xf]
    %v113 = vld [vmem:[%s1 + $0x138] sm:$0xf]
    %v114 = vld [vmem:[%s1 + $0x13c] sm:$0xf]
    %v115 = vld [vmem:[%s1 + $0x140] sm:$0xf]
    %v116 = vld [vmem:[%s1 + $0x144] sm:$0xf]
    %v117 = vld [vmem:[%s1 + $0x148] sm:$0xf]
    %v118 = vld [vmem:[%s1 + $0x14c] sm:$0xf]
    %v119 = vld [vmem:[%s1 + $0x150] sm:$0xf]
    %v120 = vld [vmem:[%s1 + $0x154] sm:$0xf]
    %v121 = vld [vmem:[%s1 + $0x158] sm:$0xf]
    %v122 = vld [vmem:[%s1 + $0x15c] sm:$0xf]
    %v123 = vld [vmem:[%s1 + $0x160] sm:$0xf]
    %v124 = vld [vmem:[%s1 + $0x164] sm:$0xf]
    %v125 = vld [vmem:[%s1 + $0x168] sm:$0xf]
    %v126 = vld [vmem:[%s1 + $0x16c] sm:$0xf]
    %v127 = vld [vmem:[%s1 + $0x170] sm:$0xf]
    %v128 = vld [vmem:[%s1 + $0x174] sm:$0xf]
    %v129 = vld [vmem:[%s1 + $0x178] sm:$0xf]
    %v130 = vld [vmem:[%s1 + $0x17c] sm:$0xf]
    %v131 = vld [vmem:[%s1 + $0x180] sm:$0xf]
    %v132 = vld [vmem:[%s1 + $0x184] sm:$0xf]
    %v133 = vld [vmem:[%s1 + $0x188] sm:$0xf]
    %v134 = vld [vmem:[%s1 + $0x18c] sm:$0xf]
    %v135 = vld [vmem:[%s1 + $0x190] sm:$0xf]
    %v136 = vld [vmem:[%s1 + $0x194] sm:$0xf]
    %v137 = vld [vmem:[%s1 + $0x198] sm:$0xf]
    %v138 = vld [vmem:[%s1 + $0x19c] sm:$0xf]
    %v139 = vld [vmem:[%s1 + $0x1a0] sm:$0xf]
    %v140 = vld [vmem:[%s1 + $0x1a4] sm:$0xf]
    %v141 = vld [vmem:[%s1 + $0x1a8] sm:$0xf]
    %v142 = vld [vmem:[%s1 + $0x1ac] sm:$0xf]
    %v143 = vld [vmem:[%s1 + $0x1b0] sm:$0xf]
    %v144 = vld [vmem:[%s1 + $0x1b4] sm:$0xf]
    %v145 = vld [vmem:[%s1 + $0x1b8] sm:$0xf]
    %v146 = vld [vmem:[%s1 + $0x1bc] sm:$0xf]
    %v147 = vld [vmem:[%s1 + $0x1c0] sm:$0xf]
    %v148 = vld [vmem:[%s1 + $0x1c4] sm:$0xf]
    %v149 = vld [vmem:[%s1 + $0x1c8] sm:$0xf]
    %v150 = vld [vmem:[%s1 + $0x1cc] sm:$0xf]
    %v151 = vld [vmem:[%s1 + $0x1d0] sm:$0xf]
    %v152 = vld [vmem:[%s1 + $0x1d4] sm:$0xf]
    %v153 = vld [vmem:[%s1 + $0x1d8] sm:$0xf]
    %v154 = vld [vmem:[%s1 + $0x1dc] sm:$0xf]
    %v155 = vld [vmem:[%s1 + $0x1e0] sm:$0xf]
    %v156 = vld [vmem:[%s1 + $0x1e4] sm:$0xf]
    %v157 = vld [vmem:[%s1 + $0x1e8] sm:$0xf]
    %v158 = vld [vmem:[%s1 + $0x1ec] sm:$0xf]
    %v159 = vld [vmem:[%s1 + $0x1f0] sm:$0xf]
    %v160 = vld [vmem:[%s1 + $0x1f4] sm:$0xf]
    %v161 = vld [vmem:[%s1 + $0x1f8] sm:$0xf]
    %v162 = vld [vmem:[%s1 + $0x1fc] sm:$0xf]
    %v163 = vld [vmem:[%s1 + $0x200] sm:$0xf]
    %v164 = vld [vmem:[%s1 + $0x204] sm:$0xf]
    %v165 = vld [vmem:[%s1 + $0x208] sm:$0xf]
    %v166 = vld [vmem:[%s1 + $0x20c] sm:$0xf]
    %v167 = vld [vmem:[%s1 + $0x210] sm:$0xf]
    %v168 = vld [vmem:[%s1 + $0x214] sm:$0xf]
    %v169 = vld [vmem:[%s1 + $0x218] sm:$0xf]
    %v170 = vld [vmem:[%s1 + $0x21c] sm:$0xf]
    %v171 = vld [vmem:[%s1 + $0x220] sm:$0xf]
    %v172 = vld [vmem:[%s1 + $0x224] sm:$0xf]
    %v173 = vld [vmem:[%s1 + $0x228] sm:$0xf]
    %v174 = vld [vmem:[%s1 + $0x22c] sm:$0xf]
    %v175 = vld [vmem:[%s1 + $0x230] sm:$0xf]
    %v176 = vld [vmem:[%s1 + $0x234] sm:$0xf]
    %v177 = vld [vmem:[%s1 + $0x238] sm:$0xf]
    %v178 = vld [vmem:[%s1 + $0x23c] sm:$0xf]
    %v179 = vld [vmem:[%s1 + $0x240] sm:$0xf]
    %v180 = vld [vmem:[%s1 + $0x244] sm:$0xf]
    %v181 = vld [vmem:[%s1 + $0x248] sm:$0xf]
    %v182 = vld [vmem:[%s1 + $0x24c] sm:$0xf]
    %v183 = vld [vmem:[%s1 + $0x250] sm:$0xf]
    %v184 = vld [vmem:[%s1 + $0x254] sm:$0xf]
    %v185 = vld [vmem:[%s1 + $0x258] sm:$0xf]
    %v186 = vld [vmem:[%s1 + $0x25c] sm:$0xf]
    %v187 = vld [vmem:[%s1 + $0x260] sm:$0xf]
    %v188 = vld [vmem:[%s1 + $0x264] sm:$0xf]
    %v189 = vld [vmem:[%s1 + $0x268] sm:$0xf]
    %v190 = vld [vmem:[%s1 + $0x26c] sm:$0xf]
    %v191 = vld [vmem:[%s1 + $0x270] sm:$0xf]
    %v192 = vld [vmem:[%s1 + $0x274] sm:$0xf]
    %v193 = vld [vmem:[%s1 + $0x278] sm:$0xf]
    %v194 = vld [vmem:[%s1 + $0x27c] sm:$0xf]
    %v195 = vld [vmem:[%s1 + $0x280] sm:$0xf]
    %v196 = vld [vmem:[%s1 + $0x284] sm:$0xf]
    %v197 = vld [vmem:[%s1 + $0x288] sm:$0xf]
    %v198 = vld [vmem:[%s1 + $0x28c] sm:$0xf]
    %v199 = vld [vmem:[%s1 + $0x290] sm:$0xf]
    %v200 = vld [vmem:[%s1 + $0x294] sm:$0xf]
    %v201 = vld [vmem:[%s1 + $0x298] sm:$0xf]
    %v202 = vld [vmem:[%s1 + $0x29c] sm:$0xf]
    %v203 = vld [vmem:[%s1 + $0x2a0] sm:$0xf]
    %v204 = vld [vmem:[%s1 + $0x2a4] sm:$0xf]
    %v205 = vld [vmem:[%s1 + $0x2a8] sm:$0xf]
    %v206 = vld [vmem:[%s1 + $0x2ac] sm:$0xf]
    %v207 = vld [vmem:[%s1 + $0x2b0] sm:$0xf]
    %v208 = vld [vmem:[%s1 + $0x2b4] sm:$0xf]
    %v209 = vld [vmem:[%s1 + $0x2b8] sm:$0xf]
    %v210 = vld [vmem:[%s1 + $0x2bc] sm:$0xf]
    %v211 = vld [vmem:[%s1 + $0x2c0] sm:$0xf]
    %v212 = vld [vmem:[%s1 + $0x2c4] sm:$0xf]
    %v213 = vld [vmem:[%s1 + $0x2c8] sm:$0xf]
    %v214 = vld [vmem:[%s1 + $0x2cc] sm:$0xf]
    %v215 = vld [vmem:[%s1 + $0x2d0] sm:$0xf]
    %v216 = vld [vmem:[%s1 + $0x2d4] sm:$0xf]
    %v217 = vld [vmem:[%s1 + $0x2d8] sm:$0xf]
    %v218 = vld [vmem:[%s1 + $0x2dc] sm:$0xf]
    %v219 = vld [vmem:[%s1 + $0x2e0] sm:$0xf]
    %v220 = vld [vmem:[%s1 + $0x2e4] sm:$0xf]
    %v221 = vld [vmem:[%s1 + $0x2e8] sm:$0xf]
    %v222 = vld [vmem:[%s1 + $0x2ec] sm:$0xf]
    %v223 = vld [vmem:[%s1 + $0x2f0] sm:$0xf]
    %v224 = vld [vmem:[%s1 + $0x2f4] sm:$0xf]
    %v225 = vld [vmem:[%s1 + $0x2f8] sm:$0xf]
    %v226 = vld [vmem:[%s1 + $0x2fc] sm:$0xf]
    %v227 = vld [vmem:[%s1 + $0x300] sm:$0xf]
    %v228 = vld [vmem:[%s1 + $0x304] sm:$0xf]
    %v229 = vld [vmem:[%s1 + $0x308] sm:$0xf]
    %v230 = vld [vmem:[%s1 + $0x30c] sm:$0xf]
    %v231 = vld [vmem:[%s1 + $0x310] sm:$0xf]
    %v232 = vld [vmem:[%s1 + $0x314] sm:$0xf]
    %v233 = vld [vmem:[%s1 + $0x318] sm:$0xf]
    %v234 = vld [vmem:[%s1 + $0x31c] sm:$0xf]
    %v235 = vld [vmem:[%s1 + $0x320] sm:$0xf]
    %v236 = vld [vmem:[%s1 + $0x324] sm:$0xf]
    %v237 = vld [vmem:[%s1 + $0x328] sm:$0xf]
    %v238 = vld [vmem:[%s1 + $0x32c] sm:$0xf]
    %v239 = vld [vmem:[%s1 + $0x330] sm:$0xf]
    %v240 = vld [vmem:[%s1 + $0x334] sm:$0xf]
    %v241 = vld [vmem:[%s1 + $0x338] sm:$0xf]
    %v242 = vld [vmem:[%s1 + $0x33c] sm:$0xf]
    %v243 = vld [vmem:[%s1 + $0x340] sm:$0xf]
    %v244 = vld [vmem:[%s1 + $0x344] sm:$0xf]
    %v245 = vld [vmem:[%s1 + $0x348] sm:$0xf]
    %v246 = vld [vmem:[%s1 + $0x34c] sm:$0xf]
    %v247 = vld [vmem:[%s1 + $0x350] sm:$0xf]
    %v248 = vld [vmem:[%s1 + $0x354] sm:$0xf]
    %v249 = vld [vmem:[%s1 + $0x358] sm:$0xf]
    %v250 = vld [vmem:[%s1 + $0x35c] sm:$0xf]
    %v251 = vld [vmem:[%s1 + $0x360] sm:$0xf]
    %v252 = vld [vmem:[%s1 + $0x364] sm:$0xf]
    %v253 = vld [vmem:[%s1 + $0x368] sm:$0xf]
    %v254 = vld [vmem:[%s1 + $0x36c] sm:$0xf]
    %v255 = vld [vmem:[%s1 + $0x370] sm:$0xf]
    %v256 = vld [vmem:[%s1 + $0x374] sm:$0xf]
    %v257 = vld [vmem:[%s1 + $0x378] sm:$0xf]
    %v258 = vld [vmem:[%s1 + $0x37c] sm:$0xf]
    %v259 = vld [vmem:[%s1 + $0x380] sm:$0xf]
    %v260 = vld [vmem:[%s1 + $0x384] sm:$0xf]
    %v261 = vld [vmem:[%s1 + $0x388] sm:$0xf]
    %v262 = vld [vmem:[%s1 + $0x38c] sm:$0xf]
    %v263 = vld [vmem:[%s1 + $0x390] sm:$0xf]
    %v264 = vld [vmem:[%s1 + $0x394] sm:$0xf]
    %v265 = vld [vmem:[%s1 + $0x398] sm:$0xf]
    %v266 = vld [vmem:[%s1 + $0x39c] sm:$0xf]
    %v267 = vld [vmem:[%s1 + $0x3a0] sm:$0xf]
    %v268 = vld [vmem:[%s1 + $0x3a4] sm:$0xf]
    %v269 = vld [vmem:[%s1 + $0x3a8] sm:$0xf]
    %v270 = vld [vmem:[%s1 + $0x3ac] sm:$0xf]
    %v271 = vld [vmem:[%s1 + $0x3b0] sm:$0xf]
    %v272 = vld [vmem:[%s1 + $0x3b4] sm:$0xf]
    %v273 = vld [vmem:[%s1 + $0x3b8] sm:$0xf]
    %v274 = vld [vmem:[%s1 + $0x3bc] sm:$0xf]
    %v275 = vld [vmem:[%s1 + $0x3c0] sm:$0xf]
    %v276 = vld [vmem:[%s1 + $0x3c4] sm:$0xf]
    %v277 = vld [vmem:[%s1 + $0x3c8] sm:$0xf]
    %v278 = vld [vmem:[%s1 + $0x3cc] sm:$0xf]
    %v279 = vld [vmem:[%s1 + $0x3d0] sm:$0xf]
    %v280 = vld [vmem:[%s1 + $0x3d4] sm:$0xf]
    %v281 = vld [vmem:[%s1 + $0x3d8] sm:$0xf]
    %v282 = vld [vmem:[%s1 + $0x3dc] sm:$0xf]
    %v283 = vld [vmem:[%s1 + $0x3e0] sm:$0xf]
    %v284 = vld [vmem:[%s1 + $0x3e4] sm:$0xf]
    %v285 = vld [vmem:[%s1 + $0x3e8] sm:$0xf]
    %v286 = vld [vmem:[%s1 + $0x3ec] sm:$0xf]
    %v287 = vld [vmem:[%s1 + $0x3f0] sm:$0xf]
    %v288 = vld [vmem:[%s1 + $0x3f4] sm:$0xf]
    %v289 = vld [vmem:[%s1 + $0x3f8] sm:$0xf]
    %v290 = vld [vmem:[%s1 + $0x3fc] sm:$0xf]
    %v291 = vld [vmem:[%s1 + $0x400] sm:$0xf]
    %v292 = vld [vmem:[%s1 + $0x404] sm:$0xf]
    %v293 = vld [vmem:[%s1 + $0x408] sm:$0xf]
    %v294 = vld [vmem:[%s1 + $0x40c] sm:$0xf]
    %v295 = vld [vmem:[%s1 + $0x410] sm:$0xf]
    %v296 = vld [vmem:[%s1 + $0x414] sm:$0xf]
    %v297 = vld [vmem:[%s1 + $0x418] sm:$0xf]
    %v298 = vld [vmem:[%s1 + $0x41c] sm:$0xf]
    %v299 = vld [vmem:[%s1 + $0x420] sm:$0xf]
    %v300 = vld [vmem:[%s1 + $0x424] sm:$0xf]
    %v301 = vld [vmem:[%s1 + $0x428] sm:$0xf]
    %v302 = vld [vmem:[%s1 + $0x42c] sm:$0xf]
    %v303 = vld [vmem:[%s1 + $0x430] sm:$0xf]
    %v304 = vld [vmem:[%s1 + $0x434] sm:$0xf]
    %v305 = vld [vmem:[%s1 + $0x438] sm:$0xf]
    %v306 = vld [vmem:[%s1 + $0x43c] sm:$0xf]
    %v307 = vld [vmem:[%s1 + $0x440] sm:$0xf]
    %v308 = vld [vmem:[%s1 + $0x444] sm:$0xf]
    %v309 = vld [vmem:[%s1 + $0x448] sm:$0xf]
    %v310 = vld [vmem:[%s1 + $0x44c] sm:$0xf]
    %v311 = vld [vmem:[%s1 + $0x450] sm:$0xf]
    %v312 = vld [vmem:[%s1 + $0x454] sm:$0xf]
    %v313 = vld [vmem:[%s1 + $0x458] sm:$0xf]
    %v314 = vld [vmem:[%s1 + $0x45c] sm:$0xf]
    %v315 = vld [vmem:[%s1 + $0x460] sm:$0xf]
    %v316 = vld [vmem:[%s1 + $0x464] sm:$0xf]
    %v317 = vld [vmem:[%s1 + $0x468] sm:$0xf]
    %v318 = vld [vmem:[%s1 + $0x46c] sm:$0xf]
    %v319 = vld [vmem:[%s1 + $0x470] sm:$0xf]
    %v320 = vld [vmem:[%s1 + $0x474] sm:$0xf]
    %v321 = vld [vmem:[%s1 + $0x478] sm:$0xf]
    %v322 = vld [vmem:[%s1 + $0x47c] sm:$0xf]
    %v323 = vld [vmem:[%s1 + $0x480] sm:$0xf]
    %v324 = vld [vmem:[%s1 + $0x484] sm:$0xf]
    %v325 = vld [vmem:[%s1 + $0x488] sm:$0xf]
    %v326 = vld [vmem:[%s1 + $0x48c] sm:$0xf]
    %v327 = vld [vmem:[%s1 + $0x490] sm:$0xf]
    %v328 = vld [vmem:[%s1 + $0x494] sm:$0xf]
    %v329 = vld [vmem:[%s1 + $0x498] sm:$0xf]
    %v330 = vld [vmem:[%s1 + $0x49c] sm:$0xf]
    %v331 = vld [vmem:[%s1 + $0x4a0] sm:$0xf]
    %v332 = vld [vmem:[%s1 + $0x4a4] sm:$0xf]
    %v333 = vld [vmem:[%s1 + $0x4a8] sm:$0xf]
    %v334 = vld [vmem:[%s1 + $0x4ac] sm:$0xf]
    %v335 = vld [vmem:[%s1 + $0x4b0] sm:$0xf]
    %v336 = vld [vmem:[%s1 + $0x4b4] sm:$0xf]
    %v337 = vld [vmem:[%s1 + $0x4b8] sm:$0xf]
    %v338 = vld [vmem:[%s1 + $0x4bc] sm:$0xf]
    %v339 = vld [vmem:[%s1 + $0x4c0] sm:$0xf]
    %v340 = vld [vmem:[%s1 + $0x4c4] sm:$0xf]
    %v341 = vld [vmem:[%s1 + $0x4c8] sm:$0xf]
    %v342 = vld [vmem:[%s1 + $0x4cc] sm:$0xf]
    %v343 = vld [vmem:[%s1 + $0x4d0] sm:$0xf]
    %v344 = vld [vmem:[%s1 + $0x4d4] sm:$0xf]
    %v345 = vld [vmem:[%s1 + $0x4d8] sm:$0xf]
    %v346 = vld [vmem:[%s1 + $0x4dc] sm:$0xf]
    %v347 = vld [vmem:[%s1 + $0x4e0] sm:$0xf]
    %v348 = vld [vmem:[%s1 + $0x4e4] sm:$0xf]
    %v349 = vld [vmem:[%s1 + $0x4e8] sm:$0xf]
    %v350 = vld [vmem:[%s1 + $0x4ec] sm:$0xf]
    %v351 = vld [vmem:[%s1 + $0x4f0] sm:$0xf]
    %v352 = vld [vmem:[%s1 + $0x4f4] sm:$0xf]
    %v353 = vld [vmem:[%s1 + $0x4f8] sm:$0xf]
    %v354 = vld [vmem:[%s1 + $0x4fc] sm:$0xf]
    %v355 = vld [vmem:[%s1 + $0x500] sm:$0xf]
    %v356 = vld [vmem:[%s1 + $0x504] sm:$0xf]
    %v357 = vld [vmem:[%s1 + $0x508] sm:$0xf]
    %v358 = vld [vmem:[%s1 + $0x50c] sm:$0xf]
    %v359 = vld [vmem:[%s1 + $0x510] sm:$0xf]
    %v360 = vld [vmem:[%s1 + $0x514] sm:$0xf]
    %v361 = vld [vmem:[%s1 + $0x518] sm:$0xf]
    %v362 = vld [vmem:[%s1 + $0x51c] sm:$0xf]
    %v363 = vld [vmem:[%s1 + $0x520] sm:$0xf]
    %v364 = vld [vmem:[%s1 + $0x524] sm:$0xf]
    %v365 = vld [vmem:[%s1 + $0x528] sm:$0xf]
    %v366 = vld [vmem:[%s1 + $0x52c] sm:$0xf]
    %v367 = vld [vmem:[%s1 + $0x530] sm:$0xf]
    %v368 = vld [vmem:[%s1 + $0x534] sm:$0xf]
    %v369 = vld [vmem:[%s1 + $0x538] sm:$0xf]
    %v370 = vld [vmem:[%s1 + $0x53c] sm:$0xf]
    %v371 = vld [vmem:[%s1 + $0x540] sm:$0xf]
    %v372 = vld [vmem:[%s1 + $0x544] sm:$0xf]
    %v373 = vld [vmem:[%s1 + $0x548] sm:$0xf]
    %v374 = vld [vmem:[%s1 + $0x54c] sm:$0xf]
    %v375 = vld [vmem:[%s1 + $0x550] sm:$0xf]
    %v376 = vld [vmem:[%s1 + $0x554] sm:$0xf]
    %v377 = vld [vmem:[%s1 + $0x558] sm:$0xf]
    %v378 = vld [vmem:[%s1 + $0x55c] sm:$0xf]
    %v379 = vld [vmem:[%s1 + $0x560] sm:$0xf]
    %v380 = vld [vmem:[%s1 + $0x564] sm:$0xf]
    %v381 = vld [vmem:[%s1 + $0x568] sm:$0xf]
    %v382 = vld [vmem:[%s1 + $0x56c] sm:$0xf]
    %v383 = vld [vmem:[%s1 + $0x570] sm:$0xf]
    %v384 = vld [vmem:[%s1 + $0x574] sm:$0xf]
    %v385 = vld [vmem:[%s1 + $0x578] sm:$0xf]
    %v386 = vld [vmem:[%s1 + $0x57c] sm:$0xf]
    %v387 = vld [vmem:[%s1 + $0x580] sm:$0xf]
    %v388 = vld [vmem:[%s1 + $0x584] sm:$0xf]
    %v389 = vld [vmem:[%s1 + $0x588] sm:$0xf]
    %v390 = vld [vmem:[%s1 + $0x58c] sm:$0xf]
    %v391 = vld [vmem:[%s1 + $0x590] sm:$0xf]
    %v392 = vld [vmem:[%s1 + $0x594] sm:$0xf]
    %v393 = vld [vmem:[%s1 + $0x598] sm:$0xf]
    %v394 = vld [vmem:[%s1 + $0x59c] sm:$0xf]
    %v395 = vld [vmem:[%s1 + $0x5a0] sm:$0xf]
    %v396 = vld [vmem:[%s1 + $0x5a4] sm:$0xf]
    %v397 = vld [vmem:[%s1 + $0x5a8] sm:$0xf]
    %v398 = vld [vmem:[%s1 + $0x5ac] sm:$0xf]
    %v399 = vld [vmem:[%s1 + $0x5b0] sm:$0xf]
    %v400 = vld [vmem:[%s1 + $0x5b4] sm:$0xf]
    %v401 = vld [vmem:[%s1 + $0x5b8] sm:$0xf]
    %v402 = vld [vmem:[%s1 + $0x5bc] sm:$0xf]
    %v403 = vld [vmem:[%s1 + $0x5c0] sm:$0xf]
    %v404 = vld [vmem:[%s1 + $0x5c4] sm:$0xf]
    %v405 = vld [vmem:[%s1 + $0x5c8] sm:$0xf]
    %v406 = vld [vmem:[%s1 + $0x5cc] sm:$0xf]
    %v407 = vld [vmem:[%s1 + $0x5d0] sm:$0xf]
    %v408 = vld [vmem:[%s1 + $0x5d4] sm:$0xf]
    %v409 = vld [vmem:[%s1 + $0x5d8] sm:$0xf]
    %v410 = vld [vmem:[%s1 + $0x5dc] sm:$0xf]
    %v411 = vld [vmem:[%s1 + $0x5e0] sm:$0xf]
    %v412 = vld [vmem:[%s1 + $0x5e4] sm:$0xf]
    %v413 = vld [vmem:[%s1 + $0x5e8] sm:$0xf]
    %v414 = vld [vmem:[%s1 + $0x5ec] sm:$0xf]
    %v415 = vld [vmem:[%s1 + $0x5f0] sm:$0xf]
    %v416 = vld [vmem:[%s1 + $0x5f4] sm:$0xf]
    %v417 = vld [vmem:[%s1 + $0x5f8] sm:$0xf]
    %v418 = vld [vmem:[%s1 + $0x5fc] sm:$0xf]
    %v419 = vld [vmem:[%s1 + $0x600] sm:$0xf]
    %v420 = vld [vmem:[%s1 + $0x604] sm:$0xf]
    %v421 = vld [vmem:[%s1 + $0x608] sm:$0xf]
    %v422 = vld [vmem:[%s1 + $0x60c] sm:$0xf]
    %v423 = vld [vmem:[%s1 + $0x610] sm:$0xf]
    %v424 = vld [vmem:[%s1 + $0x614] sm:$0xf]
    %v425 = vld [vmem:[%s1 + $0x618] sm:$0xf]
    %v426 = vld [vmem:[%s1 + $0x61c] sm:$0xf]
    %v427 = vld [vmem:[%s1 + $0x620] sm:$0xf]
    %v428 = vld [vmem:[%s1 + $0x624] sm:$0xf]
    %v429 = vld [vmem:[%s1 + $0x628] sm:$0xf]
    %v430 = vld [vmem:[%s1 + $0x62c] sm:$0xf]
    %v431 = vld [vmem:[%s1 + $0x630] sm:$0xf]
    %v432 = vld [vmem:[%s1 + $0x634] sm:$0xf]
    %v433 = vld [vmem:[%s1 + $0x638] sm:$0xf]
    %v434 = vld [vmem:[%s1 + $0x63c] sm:$0xf]
    %v435 = vld [vmem:[%s1 + $0x640] sm:$0xf]
    %v436 = vld [vmem:[%s1 + $0x644] sm:$0xf]
    %v437 = vld [vmem:[%s1 + $0x648] sm:$0xf]
    %v438 = vld [vmem:[%s1 + $0x64c] sm:$0xf]
    %v439 = vld [vmem:[%s1 + $0x650] sm:$0xf]
    %v440 = vld [vmem:[%s1 + $0x654] sm:$0xf]
    %v441 = vld [vmem:[%s1 + $0x658] sm:$0xf]
    %v442 = vld [vmem:[%s1 + $0x65c] sm:$0xf]
    %v443 = vld [vmem:[%s1 + $0x660] sm:$0xf]
    %v444 = vld [vmem:[%s1 + $0x664] sm:$0xf]
    %v445 = vld [vmem:[%s1 + $0x668] sm:$0xf]
    %v446 = vld [vmem:[%s1 + $0x66c] sm:$0xf]
    %v447 = vld [vmem:[%s1 + $0x670] sm:$0xf]
    %v448 = vld [vmem:[%s1 + $0x674] sm:$0xf]
    %v449 = vld [vmem:[%s1 + $0x678] sm:$0xf]
    %v450 = vld [vmem:[%s1 + $0x67c] sm:$0xf]
    %v451 = vld [vmem:[%s1 + $0x680] sm:$0xf]
    %v452 = vld [vmem:[%s1 + $0x684] sm:$0xf]
    %v453 = vld [vmem:[%s1 + $0x688] sm:$0xf]
    %v454 = vld [vmem:[%s1 + $0x68c] sm:$0xf]
    %v455 = vld [vmem:[%s1 + $0x690] sm:$0xf]
    %v456 = vld [vmem:[%s1 + $0x694] sm:$0xf]
    %v457 = vld [vmem:[%s1 + $0x698] sm:$0xf]
    %v458 = vld [vmem:[%s1 + $0x69c] sm:$0xf]
    %v459 = vld [vmem:[%s1 + $0x6a0] sm:$0xf]
    %v460 = vld [vmem:[%s1 + $0x6a4] sm:$0xf]
    %v461 = vld [vmem:[%s1 + $0x6a8] sm:$0xf]
    %v462 = vld [vmem:[%s1 + $0x6ac] sm:$0xf]
    %v463 = vld [vmem:[%s1 + $0x6b0] sm:$0xf]
    %v464 = vld [vmem:[%s1 + $0x6b4] sm:$0xf]
    %v465 = vld [vmem:[%s1 + $0x6b8] sm:$0xf]
    %v466 = vld [vmem:[%s1 + $0x6bc] sm:$0xf]
    %v467 = vld [vmem:[%s1 + $0x6c0] sm:$0xf]
    %v468 = vld [vmem:[%s1 + $0x6c4] sm:$0xf]
    %v469 = vld [vmem:[%s1 + $0x6c8] sm:$0xf]
    %v470 = vld [vmem:[%s1 + $0x6cc] sm:$0xf]
    %v471 = vld [vmem:[%s1 + $0x6d0] sm:$0xf]
    %v472 = vld [vmem:[%s1 + $0x6d4] sm:$0xf]
    %v473 = vld [vmem:[%s1 + $0x6d8] sm:$0xf]
    %v474 = vld [vmem:[%s1 + $0x6dc] sm:$0xf]
    %v475 = vld [vmem:[%s1 + $0x6e0] sm:$0xf]
    %v476 = vld [vmem:[%s1 + $0x6e4] sm:$0xf]
    %v477 = vld [vmem:[%s1 + $0x6e8] sm:$0xf]
    %v478 = vld [vmem:[%s1 + $0x6ec] sm:$0xf]
    %v479 = vld [vmem:[%s1 + $0x6f0] sm:$0xf]
    %v480 = vld [vmem:[%s1 + $0x6f4] sm:$0xf]
    %v481 = vld [vmem:[%s1 + $0x6f8] sm:$0xf]
    %v482 = vld [vmem:[%s1 + $0x6fc] sm:$0xf]
    %v483 = vld [vmem:[%s1 + $0x700] sm:$0xf]
    %v484 = vld [vmem:[%s1 + $0x704] sm:$0xf]
    %v485 = vld [vmem:[%s1 + $0x708] sm:$0xf]
    %v486 = vld [vmem:[%s1 + $0x70c] sm:$0xf]
    %v487 = vld [vmem:[%s1 + $0x710] sm:$0xf]
    %v488 = vld [vmem:[%s1 + $0x714] sm:$0xf]
    %v489 = vld [vmem:[%s1 + $0x718] sm:$0xf]
    %v490 = vld [vmem:[%s1 + $0x71c] sm:$0xf]
    %v491 = vld [vmem:[%s1 + $0x720] sm:$0xf]
    %v492 = vld [vmem:[%s1 + $0x724] sm:$0xf]
    %v493 = vld [vmem:[%s1 + $0x728] sm:$0xf]
    %v494 = vld [vmem:[%s1 + $0x72c] sm:$0xf]
    %v495 = vld [vmem:[%s1 + $0x730] sm:$0xf]
    %v496 = vld [vmem:[%s1 + $0x734] sm:$0xf]
    %v497 = vld [vmem:[%s1 + $0x738] sm:$0xf]
    %v498 = vld [vmem:[%s1 + $0x73c] sm:$0xf]
    %v499 = vld [vmem:[%s1 + $0x740] sm:$0xf]
    %v500 = vld [vmem:[%s1 + $0x744] sm:$0xf]
    %v501 = vld [vmem:[%s1 + $0x748] sm:$0xf]
    %v502 = vld [vmem:[%s1 + $0x74c] sm:$0xf]
    %v503 = vld [vmem:[%s1 + $0x750] sm:$0xf]
    %v504 = vld [vmem:[%s1 + $0x754] sm:$0xf]
    %v505 = vld [vmem:[%s1 + $0x758] sm:$0xf]
    %v506 = vld [vmem:[%s1 + $0x75c] sm:$0xf]
    %v507 = vld [vmem:[%s1 + $0x760] sm:$0xf]
    %v508 = vld [vmem:[%s1 + $0x764] sm:$0xf]
    %v509 = vld [vmem:[%s1 + $0x768] sm:$0xf]
    %v510 = vld [vmem:[%s1 + $0x76c] sm:$0xf]
    %v511 = vld [vmem:[%s1 + $0x770] sm:$0xf]
    %v512 = vld [vmem:[%s1 + $0x774] sm:$0xf]
    %v513 = vld [vmem:[%s1 + $0x778] sm:$0xf]
    %v514 = vld [vmem:[%s1 + $0x77c] sm:$0xf]
    %v515 = vld [vmem:[%s1 + $0x780] sm:$0xf]
    %v516 = vld [vmem:[%s1 + $0x784] sm:$0xf]
    %v517 = vld [vmem:[%s1 + $0x788] sm:$0xf]
    %v518 = vld [vmem:[%s1 + $0x78c] sm:$0xf]
    %v519 = vld [vmem:[%s1 + $0x790] sm:$0xf]
    %v520 = vld [vmem:[%s1 + $0x794] sm:$0xf]
    %v521 = vld [vmem:[%s1 + $0x798] sm:$0xf]
    %v522 = vld [vmem:[%s1 + $0x79c] sm:$0xf]
    %v523 = vld [vmem:[%s1 + $0x7a0] sm:$0xf]
    %v524 = vld [vmem:[%s1 + $0x7a4] sm:$0xf]
    %v525 = vld [vmem:[%s1 + $0x7a8] sm:$0xf]
    %v526 = vld [vmem:[%s1 + $0x7ac] sm:$0xf]
    %v527 = vld [vmem:[%s1 + $0x7b0] sm:$0xf]
    %v528 = vld [vmem:[%s1 + $0x7b4] sm:$0xf]
    %v529 = vld [vmem:[%s1 + $0x7b8] sm:$0xf]
    %v530 = vld [vmem:[%s1 + $0x7bc] sm:$0xf]
    %v531 = vld [vmem:[%s1 + $0x7c0] sm:$0xf]
    %v532 = vld [vmem:[%s1 + $0x7c4] sm:$0xf]
    %v533 = vld [vmem:[%s1 + $0x7c8] sm:$0xf]
    %v534 = vld [vmem:[%s1 + $0x7cc] sm:$0xf]
    %v535 = vld [vmem:[%s1 + $0x7d0] sm:$0xf]
    %v536 = vld [vmem:[%s1 + $0x7d4] sm:$0xf]
    %v537 = vld [vmem:[%s1 + $0x7d8] sm:$0xf]
    %v538 = vld [vmem:[%s1 + $0x7dc] sm:$0xf]
    %v539 = vld [vmem:[%s1 + $0x7e0] sm:$0xf]
    %v540 = vld [vmem:[%s1 + $0x7e4] sm:$0xf]
    %v541 = vld [vmem:[%s1 + $0x7e8] sm:$0xf]
    %v542 = vld [vmem:[%s1 + $0x7ec] sm:$0xf]
    %v543 = vld [vmem:[%s1 + $0x7f0] sm:$0xf]
    %v544 = vld [vmem:[%s1 + $0x7f4] sm:$0xf]
    %v545 = vld [vmem:[%s1 + $0x7f8] sm:$0xf]
    %v546 = vld [vmem:[%s1 + $0x7fc] sm:$0xf]
    %v547 = vld [vmem:[%s1 + $0x800] sm:$0xf]
    %v548 = vld [vmem:[%s1 + $0x804] sm:$0xf]
    %v549 = vld [vmem:[%s1 + $0x808] sm:$0xf]
    %v550 = vld [vmem:[%s1 + $0x80c] sm:$0xf]
    %v551 = vld [vmem:[%s1 + $0x810] sm:$0xf]
    %v552 = vld [vmem:[%s1 + $0x814] sm:$0xf]
    %v553 = vld [vmem:[%s1 + $0x818] sm:$0xf]
    %v554 = vld [vmem:[%s1 + $0x81c] sm:$0xf]
    %v555 = vld [vmem:[%s1 + $0x820] sm:$0xf]
    %v556 = vld [vmem:[%s1 + $0x824] sm:$0xf]
    %v557 = vld [vmem:[%s1 + $0x828] sm:$0xf]
    %v558 = vld [vmem:[%s1 + $0x82c] sm:$0xf]
    %v559 = vld [vmem:[%s1 + $0x830] sm:$0xf]
    %v560 = vld [vmem:[%s1 + $0x834] sm:$0xf]
    %v561 = vld [vmem:[%s1 + $0x838] sm:$0xf]
    %v562 = vld [vmem:[%s1 + $0x83c] sm:$0xf]
    %v563 = vld [vmem:[%s1 + $0x840] sm:$0xf]
    %v564 = vld [vmem:[%s1 + $0x844] sm:$0xf]
    %v565 = vld [vmem:[%s1 + $0x848] sm:$0xf]
    %v566 = vld [vmem:[%s1 + $0x84c] sm:$0xf]
    %v567 = vld [vmem:[%s1 + $0x850] sm:$0xf]
    %v568 = vld [vmem:[%s1 + $0x854] sm:$0xf]
    %v569 = vld [vmem:[%s1 + $0x858] sm:$0xf]
    %v570 = vld [vmem:[%s1 + $0x85c] sm:$0xf]
    %v571 = vld [vmem:[%s1 + $0x860] sm:$0xf]
    %v572 = vld [vmem:[%s1 + $0x864] sm:$0xf]
    %v573 = vld [vmem:[%s1 + $0x868] sm:$0xf]
    %v574 = vld [vmem:[%s1 + $0x86c] sm:$0xf]
    %v575 = vld [vmem:[%s1 + $0x870] sm:$0xf]
    %v576 = vld [vmem:[%s1 + $0x874] sm:$0xf]
    %v577 = vld [vmem:[%s1 + $0x878] sm:$0xf]
    %v578 = vld [vmem:[%s1 + $0x87c] sm:$0xf]
    %v579 = vld [vmem:[%s1 + $0x880] sm:$0xf]
    %v580 = vld [vmem:[%s1 + $0x884] sm:$0xf]
    %v581 = vld [vmem:[%s1 + $0x888] sm:$0xf]
    %v582 = vld [vmem:[%s1 + $0x88c] sm:$0xf]
    %v583 = vld [vmem:[%s1 + $0x890] sm:$0xf]
    %v584 = vld [vmem:[%s1 + $0x894] sm:$0xf]
    %v585 = vld [vmem:[%s1 + $0x898] sm:$0xf]
    %v586 = vld [vmem:[%s1 + $0x89c] sm:$0xf]
    %v587 = vld [vmem:[%s1 + $0x8a0] sm:$0xf]
    %v588 = vld [vmem:[%s1 + $0x8a4] sm:$0xf]
    %v589 = vld [vmem:[%s1 + $0x8a8] sm:$0xf]
    %v590 = vld [vmem:[%s1 + $0x8ac] sm:$0xf]
    %v591 = vld [vmem:[%s1 + $0x8b0] sm:$0xf]
    %v592 = vld [vmem:[%s1 + $0x8b4] sm:$0xf]
    %v593 = vld [vmem:[%s1 + $0x8b8] sm:$0xf]
    %v594 = vld [vmem:[%s1 + $0x8bc] sm:$0xf]
    %v595 = vld [vmem:[%s1 + $0x8c0] sm:$0xf]
    %v596 = vld [vmem:[%s1 + $0x8c4] sm:$0xf]
    %v597 = vld [vmem:[%s1 + $0x8c8] sm:$0xf]
    %v598 = vld [vmem:[%s1 + $0x8cc] sm:$0xf]
    %v599 = vld [vmem:[%s1 + $0x8d0] sm:$0xf]
    %v600 = vld [vmem:[%s1 + $0x8d4] sm:$0xf]
    %v601 = vld [vmem:[%s1 + $0x8d8] sm:$0xf]
    %v602 = vld [vmem:[%s1 + $0x8dc] sm:$0xf]
    %v603 = vld [vmem:[%s1 + $0x8e0] sm:$0xf]
    %v604 = vld [vmem:[%s1 + $0x8e4] sm:$0xf]
    %v605 = vld [vmem:[%s1 + $0x8e8] sm:$0xf]
    %v606 = vld [vmem:[%s1 + $0x8ec] sm:$0xf]
    %v607 = vld [vmem:[%s1 + $0x8f0] sm:$0xf]
    %v608 = vld [vmem:[%s1 + $0x8f4] sm:$0xf]
    %v609 = vld [vmem:[%s1 + $0x8f8] sm:$0xf]
    %v610 = vld [vmem:[%s1 + $0x8fc] sm:$0xf]
    %v611 = vld [vmem:[%s1 + $0x900] sm:$0xf]
    %v612 = vld [vmem:[%s1 + $0x904] sm:$0xf]
    %v613 = vld [vmem:[%s1 + $0x908] sm:$0xf]
    %v614 = vld [vmem:[%s1 + $0x90c] sm:$0xf]
    %v615 = vld [vmem:[%s1 + $0x910] sm:$0xf]
    %v616 = vld [vmem:[%s1 + $0x914] sm:$0xf]
    %v617 = vld [vmem:[%s1 + $0x918] sm:$0xf]
    %v618 = vld [vmem:[%s1 + $0x91c] sm:$0xf]
    %v619 = vld [vmem:[%s1 + $0x920] sm:$0xf]
    %v620 = vld [vmem:[%s1 + $0x924] sm:$0xf]
    %v621 = vld [vmem:[%s1 + $0x928] sm:$0xf]
    %v622 = vld [vmem:[%s1 + $0x92c] sm:$0xf]
    %v623 = vld [vmem:[%s1 + $0x930] sm:$0xf]
    %v624 = vld [vmem:[%s1 + $0x934] sm:$0xf]
    %v625 = vld [vmem:[%s1 + $0x938] sm:$0xf]
    %v626 = vld [vmem:[%s1 + $0x93c] sm:$0xf]
    %v627 = vld [vmem:[%s1 + $0x940] sm:$0xf]
    %v628 = vld [vmem:[%s1 + $0x944] sm:$0xf]
    %v629 = vld [vmem:[%s1 + $0x948] sm:$0xf]
    %v630 = vld [vmem:[%s1 + $0x94c] sm:$0xf]
    %v631 = vld [vmem:[%s1 + $0x950] sm:$0xf]
    %v632 = vld [vmem:[%s1 + $0x954] sm:$0xf]
    %v633 = vld [vmem:[%s1 + $0x958] sm:$0xf]
    %v634 = vld [vmem:[%s1 + $0x95c] sm:$0xf]
    %v635 = vld [vmem:[%s1 + $0x960] sm:$0xf]
    %v636 = vld [vmem:[%s1 + $0x964] sm:$0xf]
    %v637 = vld [vmem:[%s1 + $0x968] sm:$0xf]
    %v638 = vld [vmem:[%s1 + $0x96c] sm:$0xf]
    %v639 = vld [vmem:[%s1 + $0x970] sm:$0xf]
    %v640 = vld [vmem:[%s1 + $0x974] sm:$0xf]
    %v641 = vld [vmem:[%s1 + $0x978] sm:$0xf]
    %v642 = vld [vmem:[%s1 + $0x97c] sm:$0xf]
    %v643 = vld [vmem:[%s1 + $0x980] sm:$0xf]
    %v644 = vld [vmem:[%s1 + $0x984] sm:$0xf]
    %v645 = vld [vmem:[%s1 + $0x988] sm:$0xf]
    %v646 = vld [vmem:[%s1 + $0x98c] sm:$0xf]
    %v647 = vld [vmem:[%s1 + $0x990] sm:$0xf]
    %v648 = vld [vmem:[%s1 + $0x994] sm:$0xf]
    %v649 = vld [vmem:[%s1 + $0x998] sm:$0xf]
    %v650 = vld [vmem:[%s1 + $0x99c] sm:$0xf]
    %v651 = vld [vmem:[%s1 + $0x9a0] sm:$0xf]
    %v652 = vld [vmem:[%s1 + $0x9a4] sm:$0xf]
    %v653 = vld [vmem:[%s1 + $0x9a8] sm:$0xf]
    %v654 = vld [vmem:[%s1 + $0x9ac] sm:$0xf]
    %v655 = vld [vmem:[%s1 + $0x9b0] sm:$0xf]
    %v656 = vld [vmem:[%s1 + $0x9b4] sm:$0xf]
    %v657 = vld [vmem:[%s1 + $0x9b8] sm:$0xf]
    %v658 = vld [vmem:[%s1 + $0x9bc] sm:$0xf]
    %v659 = vld [vmem:[%s1 + $0x9c0] sm:$0xf]
    %v660 = vld [vmem:[%s1 + $0x9c4] sm:$0xf]
    %v661 = vld [vmem:[%s1 + $0x9c8] sm:$0xf]
    %v662 = vld [vmem:[%s1 + $0x9cc] sm:$0xf]
    %v663 = vld [vmem:[%s1 + $0x9d0] sm:$0xf]
    %v664 = vld [vmem:[%s1 + $0x9d4] sm:$0xf]
    %v665 = vld [vmem:[%s1 + $0x9d8] sm:$0xf]
    %v666 = vld [vmem:[%s1 + $0x9dc] sm:$0xf]
    %v667 = vld [vmem:[%s1 + $0x9e0] sm:$0xf]
    %v668 = vld [vmem:[%s1 + $0x9e4] sm:$0xf]
    %v669 = vld [vmem:[%s1 + $0x9e8] sm:$0xf]
    %v670 = vld [vmem:[%s1 + $0x9ec] sm:$0xf]
    %v671 = vld [vmem:[%s1 + $0x9f0] sm:$0xf]
    %v672 = vld [vmem:[%s1 + $0x9f4] sm:$0xf]
    %v673 = vld [vmem:[%s1 + $0x9f8] sm:$0xf]
    %v674 = vld [vmem:[%s1 + $0x9fc] sm:$0xf]
    %v675 = vld [vmem:[%s1 + $0xa00] sm:$0xf]
    %v676 = vld [vmem:[%s1 + $0xa04] sm:$0xf]
    %v677 = vld [vmem:[%s1 + $0xa08] sm:$0xf]
    %v678 = vld [vmem:[%s1 + $0xa0c] sm:$0xf]
    %v679 = vld [vmem:[%s1 + $0xa10] sm:$0xf]
    %v680 = vld [vmem:[%s1 + $0xa14] sm:$0xf]
    %v681 = vld [vmem:[%s1 + $0xa18] sm:$0xf]
    %v682 = vld [vmem:[%s1 + $0xa1c] sm:$0xf]
    %v683 = vld [vmem:[%s1 + $0xa20] sm:$0xf]
    %v684 = vld [vmem:[%s1 + $0xa24] sm:$0xf]
    %v685 = vld [vmem:[%s1 + $0xa28] sm:$0xf]
    %v686 = vld [vmem:[%s1 + $0xa2c] sm:$0xf]
    %v687 = vld [vmem:[%s1 + $0xa30] sm:$0xf]
    %v688 = vld [vmem:[%s1 + $0xa34] sm:$0xf]
    %v689 = vld [vmem:[%s1 + $0xa38] sm:$0xf]
    %v690 = vld [vmem:[%s1 + $0xa3c] sm:$0xf]
    %v691 = vld [vmem:[%s1 + $0xa40] sm:$0xf]
    %v692 = vld [vmem:[%s1 + $0xa44] sm:$0xf]
    %v693 = vld [vmem:[%s1 + $0xa48] sm:$0xf]
    %v694 = vld [vmem:[%s1 + $0xa4c] sm:$0xf]
    %v695 = vld [vmem:[%s1 + $0xa50] sm:$0xf]
    %v696 = vld [vmem:[%s1 + $0xa54] sm:$0xf]
    %v697 = vld [vmem:[%s1 + $0xa58] sm:$0xf]
    %v698 = vld [vmem:[%s1 + $0xa5c] sm:$0xf]
    %v699 = vld [vmem:[%s1 + $0xa60] sm:$0xf]
    %v700 = vld [vmem:[%s1 + $0xa64] sm:$0xf]
    %v701 = vld [vmem:[%s1 + $0xa68] sm:$0xf]
    %v702 = vld [vmem:[%s1 + $0xa6c] sm:$0xf]
    %v703 = vld [vmem:[%s1 + $0xa70] sm:$0xf]
    %v704 = vld [vmem:[%s1 + $0xa74] sm:$0xf]
    %v705 = vld [vmem:[%s1 + $0xa78] sm:$0xf]
    %v706 = vld [vmem:[%s1 + $0xa7c] sm:$0xf]
    %v707 = vld [vmem:[%s1 + $0xa80] sm:$0xf]
    %v708 = vld [vmem:[%s1 + $0xa84] sm:$0xf]
    %v709 = vld [vmem:[%s1 + $0xa88] sm:$0xf]
    %v710 = vld [vmem:[%s1 + $0xa8c] sm:$0xf]
    %v711 = vld [vmem:[%s1 + $0xa90] sm:$0xf]
    %v712 = vld [vmem:[%s1 + $0xa94] sm:$0xf]
    %v713 = vld [vmem:[%s1 + $0xa98] sm:$0xf]
    %v714 = vld [vmem:[%s1 + $0xa9c] sm:$0xf]
    %v715 = vld [vmem:[%s1 + $0xaa0] sm:$0xf]
    %v716 = vld [vmem:[%s1 + $0xaa4] sm:$0xf]
    %v717 = vld [vmem:[%s1 + $0xaa8] sm:$0xf]
    %v718 = vld [vmem:[%s1 + $0xaac] sm:$0xf]
    %v719 = vld [vmem:[%s1 + $0xab0] sm:$0xf]
    %v720 = vld [vmem:[%s1 + $0xab4] sm:$0xf]
    %v721 = vld [vmem:[%s1 + $0xab8] sm:$0xf]
    %v722 = vld [vmem:[%s1 + $0xabc] sm:$0xf]
    %v723 = vld [vmem:[%s1 + $0xac0] sm:$0xf]
    %v724 = vld [vmem:[%s1 + $0xac4] sm:$0xf]
    %v725 = vld [vmem:[%s1 + $0xac8] sm:$0xf]
    %v726 = vld [vmem:[%s1 + $0xacc] sm:$0xf]
    %v727 = vld [vmem:[%s1 + $0xad0] sm:$0xf]
    %v728 = vld [vmem:[%s1 + $0xad4] sm:$0xf]
    %v729 = vld [vmem:[%s1 + $0xad8] sm:$0xf]
    %v730 = vld [vmem:[%s1 + $0xadc] sm:$0xf]
    %v731 = vld [vmem:[%s1 + $0xae0] sm:$0xf]
    %v732 = vld [vmem:[%s1 + $0xae4] sm:$0xf]
    %v733 = vld [vmem:[%s1 + $0xae8] sm:$0xf]
    %v734 = vld [vmem:[%s1 + $0xaec] sm:$0xf]
    %v735 = vld [vmem:[%s1 + $0xaf0] sm:$0xf]
    %v736 = vld [vmem:[%s1 + $0xaf4] sm:$0xf]
    %v737 = vld [vmem:[%s1 + $0xaf8] sm:$0xf]
    %v738 = vld [vmem:[%s1 + $0xafc] sm:$0xf]
    %v739 = vld [vmem:[%s1 + $0xb00] sm:$0xf]
    %v740 = vld [vmem:[%s1 + $0xb04] sm:$0xf]
    %v741 = vld [vmem:[%s1 + $0xb08] sm:$0xf]
    %v742 = vld [vmem:[%s1 + $0xb0c] sm:$0xf]
    %v743 = vld [vmem:[%s1 + $0xb10] sm:$0xf]
    %v744 = vld [vmem:[%s1 + $0xb14] sm:$0xf]
    %v745 = vld [vmem:[%s1 + $0xb18] sm:$0xf]
    %v746 = vld [vmem:[%s1 + $0xb1c] sm:$0xf]
    %v747 = vld [vmem:[%s1 + $0xb20] sm:$0xf]
    %v748 = vld [vmem:[%s1 + $0xb24] sm:$0xf]
    %v749 = vld [vmem:[%s1 + $0xb28] sm:$0xf]
    %v750 = vld [vmem:[%s1 + $0xb2c] sm:$0xf]
    %v751 = vld [vmem:[%s1 + $0xb30] sm:$0xf]
    %v752 = vld [vmem:[%s1 + $0xb34] sm:$0xf]
    %v753 = vld [vmem:[%s1 + $0xb38] sm:$0xf]
    %v754 = vld [vmem:[%s1 + $0xb3c] sm:$0xf]
    %v755 = vld [vmem:[%s1 + $0xb40] sm:$0xf]
    %v756 = vld [vmem:[%s1 + $0xb44] sm:$0xf]
    %v757 = vld [vmem:[%s1 + $0xb48] sm:$0xf]
    %v758 = vld [vmem:[%s1 + $0xb4c] sm:$0xf]
    %v759 = vld [vmem:[%s1 + $0xb50] sm:$0xf]
    %v760 = vld [vmem:[%s1 + $0xb54] sm:$0xf]
    %v761 = vld [vmem:[%s1 + $0xb58] sm:$0xf]
    %v762 = vld [vmem:[%s1 + $0xb5c] sm:$0xf]
    %v763 = vld [vmem:[%s1 + $0xb60] sm:$0xf]
    %v764 = vld [vmem:[%s1 + $0xb64] sm:$0xf]
    %v765 = vld [vmem:[%s1 + $0xb68] sm:$0xf]
    %v766 = vld [vmem:[%s1 + $0xb6c] sm:$0xf]
    %v767 = vld [vmem:[%s1 + $0xb70] sm:$0xf]
    %v768 = vld [vmem:[%s1 + $0xb74] sm:$0xf]
    %v769 = vld [vmem:[%s1 + $0xb78] sm:$0xf]
    %v770 = vld [vmem:[%s1 + $0xb7c] sm:$0xf]
    %v771 = vld [vmem:[%s1 + $0xb80] sm:$0xf]
    %v772 = vld [vmem:[%s1 + $0xb84] sm:$0xf]
    %v773 = vld [vmem:[%s1 + $0xb88] sm:$0xf]
    %v774 = vld [vmem:[%s1 + $0xb8c] sm:$0xf]
    %v775 = vld [vmem:[%s1 + $0xb90] sm:$0xf]
    %v776 = vld [vmem:[%s1 + $0xb94] sm:$0xf]
    %v777 = vld [vmem:[%s1 + $0xb98] sm:$0xf]
    %v778 = vld [vmem:[%s1 + $0xb9c] sm:$0xf]
    %v779 = vld [vmem:[%s1 + $0xba0] sm:$0xf]
    %v780 = vld [vmem:[%s1 + $0xba4] sm:$0xf]
    %v781 = vld [vmem:[%s1 + $0xba8] sm:$0xf]
    %v782 = vld [vmem:[%s1 + $0xbac] sm:$0xf]
    %v783 = vld [vmem:[%s1 + $0xbb0] sm:$0xf]
    %v784 = vld [vmem:[%s1 + $0xbb4] sm:$0xf]
    %v785 = vld [vmem:[%s1 + $0xbb8] sm:$0xf]
    %v786 = vld [vmem:[%s1 + $0xbbc] sm:$0xf]
    %v787 = vld [vmem:[%s1 + $0xbc0] sm:$0xf]
    %v788 = vld [vmem:[%s1 + $0xbc4] sm:$0xf]
    %v789 = vld [vmem:[%s1 + $0xbc8] sm:$0xf]
    %v790 = vld [vmem:[%s1 + $0xbcc] sm:$0xf]
    %v791 = vld [vmem:[%s1 + $0xbd0] sm:$0xf]
    %v792 = vld [vmem:[%s1 + $0xbd4] sm:$0xf]
    %v793 = vld [vmem:[%s1 + $0xbd8] sm:$0xf]
    %v794 = vld [vmem:[%s1 + $0xbdc] sm:$0xf]
    %v795 = vld [vmem:[%s1 + $0xbe0] sm:$0xf]
    %v796 = vld [vmem:[%s1 + $0xbe4] sm:$0xf]
    %v797 = vld [vmem:[%s1 + $0xbe8] sm:$0xf]
    %v798 = vld [vmem:[%s1 + $0xbec] sm:$0xf]
    %v799 = vld [vmem:[%s1 + $0xbf0] sm:$0xf]
    %v800 = vld [vmem:[%s1 + $0xbf4] sm:$0xf]
    %v801 = vld [vmem:[%s1 + $0xbf8] sm:$0xf]
    %v802 = vld [vmem:[%s1 + $0xbfc] sm:$0xf]
    %v803 = vld [vmem:[%s1 + $0xc00] sm:$0xf]
    %v804 = vld [vmem:[%s1 + $0xc04] sm:$0xf]
    %v805 = vld [vmem:[%s1 + $0xc08] sm:$0xf]
    %v806 = vld [vmem:[%s1 + $0xc0c] sm:$0xf]
    %v807 = vld [vmem:[%s1 + $0xc10] sm:$0xf]
    %v808 = vld [vmem:[%s1 + $0xc14] sm:$0xf]
    %v809 = vld [vmem:[%s1 + $0xc18] sm:$0xf]
    %v810 = vld [vmem:[%s1 + $0xc1c] sm:$0xf]
    %v811 = vld [vmem:[%s1 + $0xc20] sm:$0xf]
    %v812 = vld [vmem:[%s1 + $0xc24] sm:$0xf]
    %v813 = vld [vmem:[%s1 + $0xc28] sm:$0xf]
    %v814 = vld [vmem:[%s1 + $0xc2c] sm:$0xf]
    %v815 = vld [vmem:[%s1 + $0xc30] sm:$0xf]
    %v816 = vld [vmem:[%s1 + $0xc34] sm:$0xf]
    %v817 = vld [vmem:[%s1 + $0xc38] sm:$0xf]
    %v818 = vld [vmem:[%s1 + $0xc3c] sm:$0xf]
    %v819 = vld [vmem:[%s1 + $0xc40] sm:$0xf]
    %v820 = vld [vmem:[%s1 + $0xc44] sm:$0xf]
    %v821 = vld [vmem:[%s1 + $0xc48] sm:$0xf]
    %v822 = vld [vmem:[%s1 + $0xc4c] sm:$0xf]
    %v823 = vld [vmem:[%s1 + $0xc50] sm:$0xf]
    %v824 = vld [vmem:[%s1 + $0xc54] sm:$0xf]
    %v825 = vld [vmem:[%s1 + $0xc58] sm:$0xf]
    %v826 = vld [vmem:[%s1 + $0xc5c] sm:$0xf]
    %v827 = vld [vmem:[%s1 + $0xc60] sm:$0xf]
    %v828 = vld [vmem:[%s1 + $0xc64] sm:$0xf]
    %v829 = vld [vmem:[%s1 + $0xc68] sm:$0xf]
    %v830 = vld [vmem:[%s1 + $0xc6c] sm:$0xf]
    %v831 = vld [vmem:[%s1 + $0xc70] sm:$0xf]
    %v832 = vld [vmem:[%s1 + $0xc74] sm:$0xf]
    %v833 = vld [vmem:[%s1 + $0xc78] sm:$0xf]
    %v834 = vld [vmem:[%s1 + $0xc7c] sm:$0xf]
    %v835 = vld [vmem:[%s2] sm:$0x1]
    %v837 = vperm.slane %v835, 0
    %840 = vst [vmem:[#allocation1] ss:$4 sm:$0xff] %v22
    %s842 = scalar_lea.vmem [#allocation1], 32
    %843 = vst [vmem:[%s842] ss:$4 sm:$0xff] %v23
    %v844 = vld.sshfl [vmem:[#allocation1] sm:$0xff pattern:$0x73625140]
    %v845 = vld.sshfl [vmem:[#allocation1 + $0x8] sm:$0xff pattern:$0x73625140]
    %v846 = vld.sshfl [vmem:[#allocation1 + $0x10] sm:$0xff pattern:$0x73625140]
    %v847 = vld.sshfl [vmem:[#allocation1 + $0x18] sm:$0xff pattern:$0x73625140]
    %v848 = vld.sshfl [vmem:[#allocation1 + $0x20] sm:$0xff pattern:$0x73625140]
    %v849 = vld.sshfl [vmem:[#allocation1 + $0x28] sm:$0xff pattern:$0x73625140]
    %v850 = vld.sshfl [vmem:[#allocation1 + $0x30] sm:$0xff pattern:$0x73625140]
    %v851 = vld.sshfl [vmem:[#allocation1 + $0x38] sm:$0xff pattern:$0x73625140]
    %853 = vst [vmem:[#allocation1] ss:$4 sm:$0xff] %v24
    %855 = vst [vmem:[%s842] ss:$4 sm:$0xff] %v25
    %v856 = vld.sshfl [vmem:[#allocation1] sm:$0xff pattern:$0x73625140]
    %v857 = vld.sshfl [vmem:[#allocation1 + $0x8] sm:$0xff pattern:$0x73625140]
    %v858 = vld.sshfl [vmem:[#allocation1 + $0x10] sm:$0xff pattern:$0x73625140]
    %v859 = vld.sshfl [vmem:[#allocation1 + $0x18] sm:$0xff pattern:$0x73625140]
    %v860 = vld.sshfl [vmem:[#allocation1 + $0x20] sm:$0xff pattern:$0x73625140]
    %v861 = vld.sshfl [vmem:[#allocation1 + $0x28] sm:$0xff pattern:$0x73625140]
    %v862 = vld.sshfl [vmem:[#allocation1 + $0x30] sm:$0xff pattern:$0x73625140]
    %v863 = vld.sshfl [vmem:[#allocation1 + $0x38] sm:$0xff pattern:$0x73625140]
    %865 = vst [vmem:[#allocation1] ss:$4 sm:$0xff] %v26
    %867 = vst [vmem:[%s842] ss:$4 sm:$0xff] %v27
    %v868 = vld.sshfl [vmem:[#allocation1] sm:$0xff pattern:$0x73625140]
    %v869 = vld.sshfl [vmem:[#allocation1 + $0x8] sm:$0xff pattern:$0x73625140]
    %v870 = vld.sshfl [vmem:[#allocation1 + $0x10] sm:$0xff pattern:$0x73625140]
    %v871 = vld.sshfl [vmem:[#allocation1 + $0x18] sm:$0xff pattern:$0x73625140]
    %v872 = vld.sshfl [vmem:[#allocation1 + $0x20] sm:$0xff pattern:$0x73625140]
    %v873 = vld.sshfl [vmem:[#allocation1 + $0x28] sm:$0xff pattern:$0x73625140]
    %v874 = vld.sshfl [vmem:[#allocation1 + $0x30] sm:$0xff pattern:$0x73625140]
    %v875 = vld.sshfl [vmem:[#allocation1 + $0x38] sm:$0xff pattern:$0x73625140]
    %877 = vst [vmem:[#allocation1] ss:$4 sm:$0xff] %v28
    %879 = vst [vmem:[%s842] ss:$4 sm:$0xff] %v29
    %v880 = vld.sshfl [vmem:[#allocation1] sm:$0xff pattern:$0x73625140]
    %v881 = vld.sshfl [vmem:[#allocation1 + $0x8] sm:$0xff pattern:$0x73625140]
    %v882 = vld.sshfl [vmem:[#allocation1 + $0x10] sm:$0xff pattern:$0x73625140]
    %v883 = vld.sshfl [vmem:[#allocation1 + $0x18] sm:$0xff pattern:$0x73625140]
    %v884 = vld.sshfl [vmem:[#allocation1 + $0x20] sm:$0xff pattern:$0x73625140]
    %v885 = vld.sshfl [vmem:[#allocation1 + $0x28] sm:$0xff pattern:$0x73625140]
    %v886 = vld.sshfl [vmem:[#allocation1 + $0x30] sm:$0xff pattern:$0x73625140]
    %v887 = vld.sshfl [vmem:[#allocation1 + $0x38] sm:$0xff pattern:$0x73625140]
    %889 = vst [vmem:[#allocation1] ss:$4 sm:$0xff] %v30
    %891 = vst [vmem:[%s842] ss:$4 sm:$0xff] %v31
    %v892 = vld.sshfl [vmem:[#allocation1] sm:$0xff pattern:$0x73625140]
    %v893 = vld.sshfl [vmem:[#allocation1 + $0x8] sm:$0xff pattern:$0x73625140]
    %v894 = vld.sshfl [vmem:[#allocation1 + $0x10] sm:$0xff pattern:$0x73625140]
    %v895 = vld.sshfl [vmem:[#allocation1 + $0x18] sm:$0xff pattern:$0x73625140]
    %v896 = vld.sshfl [vmem:[#allocation1 + $0x20] sm:$0xff pattern:$0x73625140]
    %v897 = vld.sshfl [vmem:[#allocation1 + $0x28] sm:$0xff pattern:$0x73625140]
    %v898 = vld.sshfl [vmem:[#allocation1 + $0x30] sm:$0xff pattern:$0x73625140]
    %v899 = vld.sshfl [vmem:[#allocation1 + $0x38] sm:$0xff pattern:$0x73625140]
    %901 = vst [vmem:[#allocation1] ss:$4 sm:$0xff] %v32
    %903 = vst [vmem:[%s842] ss:$4 sm:$0xff] %v33
    %v904 = vld.sshfl [vmem:[#allocation1] sm:$0xff pattern:$0x73625140]
    %v905 = vld.sshfl [vmem:[#allocation1 + $0x8] sm:$0xff pattern:$0x73625140]
    %v906 = vld.sshfl [vmem:[#allocation1 + $0x10] sm:$0xff pattern:$0x73625140]
    %v907 = vld.sshfl [vmem:[#allocation1 + $0x18] sm:$0xff pattern:$0x73625140]
    %v908 = vld.sshfl [vmem:[#allocation1 + $0x20] sm:$0xff pattern:$0x73625140]
    %v909 = vld.sshfl [vmem:[#allocation1 + $0x28] sm:$0xff pattern:$0x73625140]
    %v910 = vld.sshfl [vmem:[#allocation1 + $0x30] sm:$0xff pattern:$0x73625140]
    %v911 = vld.sshfl [vmem:[#allocation1 + $0x38] sm:$0xff pattern:$0x73625140]
    %913 = vst [vmem:[#allocation1] ss:$4 sm:$0xff] %v34
    %v914 = vld.sshfl [vmem:[#allocation1] sm:$0xff pattern:$0x73625140]
    %v915 = vld.sshfl [vmem:[#allocation1 + $0x8] sm:$0xff pattern:$0x73625140]
    %v1766 = vunpack.c.l.b16 %v35
    %v1767 = vunpack.c.l.b16 %v36
    %v1768 = vunpack.c.l.b16 %v37
    %v1769 = vunpack.c.l.b16 %v38
    %v1770 = vunpack.c.l.b16 %v39
    %v1771 = vunpack.c.l.b16 %v40
    %v1772 = vunpack.c.l.b16 %v41
    %v1773 = vunpack.c.l.b16 %v42
    %v1774 = vunpack.c.l.b16 %v43
    %v1775 = vunpack.c.l.b16 %v44
    %v1776 = vunpack.c.l.b16 %v45
    %v1777 = vunpack.c.l.b16 %v46
    %v1778 = vunpack.c.l.b16 %v47
    %v1779 = vunpack.c.l.b16 %v48
    %v1780 = vunpack.c.l.b16 %v49
    %v1781 = vunpack.c.l.b16 %v50
    %v1782 = vunpack.c.l.b16 %v51
    %v1783 = vunpack.c.l.b16 %v52
    %v1784 = vunpack.c.l.b16 %v53
    %v1785 = vunpack.c.l.b16 %v54
    %v1786 = vunpack.c.l.b16 %v55
    %v1787 = vunpack.c.l.b16 %v56
    %v1788 = vunpack.c.l.b16 %v57
    %v1789 = vunpack.c.l.b16 %v58
    %v1790 = vunpack.c.l.b16 %v59
    %v1791 = vunpack.c.l.b16 %v60
    %v1792 = vunpack.c.l.b16 %v61
    %v1793 = vunpack.c.l.b16 %v62
    %v1794 = vunpack.c.l.b16 %v63
    %v1795 = vunpack.c.l.b16 %v64
    %v1796 = vunpack.c.l.b16 %v65
    %v1797 = vunpack.c.l.b16 %v66
    %v1798 = vunpack.c.l.b16 %v67
    %v1799 = vunpack.c.l.b16 %v68
    %v1800 = vunpack.c.l.b16 %v69
    %v1801 = vunpack.c.l.b16 %v70
    %v1802 = vunpack.c.l.b16 %v71
    %v1803 = vunpack.c.l.b16 %v72
    %v1804 = vunpack.c.l.b16 %v73
    %v1805 = vunpack.c.l.b16 %v74
    %v1806 = vunpack.c.l.b16 %v75
    %v1807 = vunpack.c.l.b16 %v76
    %v1808 = vunpack.c.l.b16 %v77
    %v1809 = vunpack.c.l.b16 %v78
    %v1810 = vunpack.c.l.b16 %v79
    %v1811 = vunpack.c.l.b16 %v80
    %v1812 = vunpack.c.l.b16 %v81
    %v1813 = vunpack.c.l.b16 %v82
    %v1814 = vunpack.c.l.b16 %v83
    %v1815 = vunpack.c.l.b16 %v84
    %v1816 = vunpack.c.l.b16 %v85
    %v1817 = vunpack.c.l.b16 %v86
    %v1818 = vunpack.c.l.b16 %v87
    %v1819 = vunpack.c.l.b16 %v88
    %v1820 = vunpack.c.l.b16 %v89
    %v1821 = vunpack.c.l.b16 %v90
    %v1822 = vunpack.c.l.b16 %v91
    %v1823 = vunpack.c.l.b16 %v92
    %v1824 = vunpack.c.l.b16 %v93
    %v1825 = vunpack.c.l.b16 %v94
    %v1826 = vunpack.c.l.b16 %v95
    %v1827 = vunpack.c.l.b16 %v96
    %v1828 = vunpack.c.l.b16 %v97
    %v1829 = vunpack.c.l.b16 %v98
    %v1830 = vunpack.c.l.b16 %v99
    %v1831 = vunpack.c.l.b16 %v100
    %v1832 = vunpack.c.l.b16 %v101
    %v1833 = vunpack.c.l.b16 %v102
    %v1834 = vunpack.c.l.b16 %v103
    %v1835 = vunpack.c.l.b16 %v104
    %v1836 = vunpack.c.l.b16 %v105
    %v1837 = vunpack.c.l.b16 %v106
    %v1838 = vunpack.c.l.b16 %v107
    %v1839 = vunpack.c.l.b16 %v108
    %v1840 = vunpack.c.l.b16 %v109
    %v1841 = vunpack.c.l.b16 %v110
    %v1842 = vunpack.c.l.b16 %v111
    %v1843 = vunpack.c.l.b16 %v112
    %v1844 = vunpack.c.l.b16 %v113
    %v1845 = vunpack.c.l.b16 %v114
    %v1846 = vunpack.c.l.b16 %v115
    %v1847 = vunpack.c.l.b16 %v116
    %v1848 = vunpack.c.l.b16 %v117
    %v1849 = vunpack.c.l.b16 %v118
    %v1850 = vunpack.c.l.b16 %v119
    %v1851 = vunpack.c.l.b16 %v120
    %v1852 = vunpack.c.l.b16 %v121
    %v1853 = vunpack.c.l.b16 %v122
    %v1854 = vunpack.c.l.b16 %v123
    %v1855 = vunpack.c.l.b16 %v124
    %v1856 = vunpack.c.l.b16 %v125
    %v1857 = vunpack.c.l.b16 %v126
    %v1858 = vunpack.c.l.b16 %v127
    %v1859 = vunpack.c.l.b16 %v128
    %v1860 = vunpack.c.l.b16 %v129
    %v1861 = vunpack.c.l.b16 %v130
    %v1862 = vunpack.c.l.b16 %v131
    %v1863 = vunpack.c.l.b16 %v132
    %v1864 = vunpack.c.l.b16 %v133
    %v1865 = vunpack.c.l.b16 %v134
    %v1866 = vunpack.c.l.b16 %v135
    %v1867 = vunpack.c.l.b16 %v136
    %v1868 = vunpack.c.l.b16 %v137
    %v1869 = vunpack.c.l.b16 %v138
    %v1870 = vunpack.c.l.b16 %v139
    %v1871 = vunpack.c.l.b16 %v140
    %v1872 = vunpack.c.l.b16 %v141
    %v1873 = vunpack.c.l.b16 %v142
    %v1874 = vunpack.c.l.b16 %v143
    %v1875 = vunpack.c.l.b16 %v144
    %v1876 = vunpack.c.l.b16 %v145
    %v1877 = vunpack.c.l.b16 %v146
    %v1878 = vunpack.c.l.b16 %v147
    %v1879 = vunpack.c.l.b16 %v148
    %v1880 = vunpack.c.l.b16 %v149
    %v1881 = vunpack.c.l.b16 %v150
    %v1882 = vunpack.c.l.b16 %v151
    %v1883 = vunpack.c.l.b16 %v152
    %v1884 = vunpack.c.l.b16 %v153
    %v1885 = vunpack.c.l.b16 %v154
    %v1886 = vunpack.c.l.b16 %v155
    %v1887 = vunpack.c.l.b16 %v156
    %v1888 = vunpack.c.l.b16 %v157
    %v1889 = vunpack.c.l.b16 %v158
    %v1890 = vunpack.c.l.b16 %v159
    %v1891 = vunpack.c.l.b16 %v160
    %v1892 = vunpack.c.l.b16 %v161
    %v1893 = vunpack.c.l.b16 %v162
    %v1894 = vunpack.c.l.b16 %v163
    %v1895 = vunpack.c.l.b16 %v164
    %v1896 = vunpack.c.l.b16 %v165
    %v1897 = vunpack.c.l.b16 %v166
    %v1898 = vunpack.c.l.b16 %v167
    %v1899 = vunpack.c.l.b16 %v168
    %v1900 = vunpack.c.l.b16 %v169
    %v1901 = vunpack.c.l.b16 %v170
    %v1902 = vunpack.c.l.b16 %v171
    %v1903 = vunpack.c.l.b16 %v172
    %v1904 = vunpack.c.l.b16 %v173
    %v1905 = vunpack.c.l.b16 %v174
    %v1906 = vunpack.c.l.b16 %v175
    %v1907 = vunpack.c.l.b16 %v176
    %v1908 = vunpack.c.l.b16 %v177
    %v1909 = vunpack.c.l.b16 %v178
    %v1910 = vunpack.c.l.b16 %v179
    %v1911 = vunpack.c.l.b16 %v180
    %v1912 = vunpack.c.l.b16 %v181
    %v1913 = vunpack.c.l.b16 %v182
    %v1914 = vunpack.c.l.b16 %v183
    %v1915 = vunpack.c.l.b16 %v184
    %v1916 = vunpack.c.l.b16 %v185
    %v1917 = vunpack.c.l.b16 %v186
    %v1918 = vunpack.c.l.b16 %v187
    %v1919 = vunpack.c.l.b16 %v188
    %v1920 = vunpack.c.l.b16 %v189
    %v1921 = vunpack.c.l.b16 %v190
    %v1922 = vunpack.c.l.b16 %v191
    %v1923 = vunpack.c.l.b16 %v192
    %v1924 = vunpack.c.l.b16 %v193
    %v1925 = vunpack.c.l.b16 %v194
    %v1926 = vunpack.c.l.b16 %v195
    %v1927 = vunpack.c.l.b16 %v196
    %v1928 = vunpack.c.l.b16 %v197
    %v1929 = vunpack.c.l.b16 %v198
    %v1930 = vunpack.c.l.b16 %v199
    %v1931 = vunpack.c.l.b16 %v200
    %v1932 = vunpack.c.l.b16 %v201
    %v1933 = vunpack.c.l.b16 %v202
    %v1934 = vunpack.c.l.b16 %v203
    %v1935 = vunpack.c.l.b16 %v204
    %v1936 = vunpack.c.l.b16 %v205
    %v1937 = vunpack.c.l.b16 %v206
    %v1938 = vunpack.c.l.b16 %v207
    %v1939 = vunpack.c.l.b16 %v208
    %v1940 = vunpack.c.l.b16 %v209
    %v1941 = vunpack.c.l.b16 %v210
    %v1942 = vunpack.c.l.b16 %v211
    %v1943 = vunpack.c.l.b16 %v212
    %v1944 = vunpack.c.l.b16 %v213
    %v1945 = vunpack.c.l.b16 %v214
    %v1946 = vunpack.c.l.b16 %v215
    %v1947 = vunpack.c.l.b16 %v216
    %v1948 = vunpack.c.l.b16 %v217
    %v1949 = vunpack.c.l.b16 %v218
    %v1950 = vunpack.c.l.b16 %v219
    %v1951 = vunpack.c.l.b16 %v220
    %v1952 = vunpack.c.l.b16 %v221
    %v1953 = vunpack.c.l.b16 %v222
    %v1954 = vunpack.c.l.b16 %v223
    %v1955 = vunpack.c.l.b16 %v224
    %v1956 = vunpack.c.l.b16 %v225
    %v1957 = vunpack.c.l.b16 %v226
    %v1958 = vunpack.c.l.b16 %v227
    %v1959 = vunpack.c.l.b16 %v228
    %v1960 = vunpack.c.l.b16 %v229
    %v1961 = vunpack.c.l.b16 %v230
    %v1962 = vunpack.c.l.b16 %v231
    %v1963 = vunpack.c.l.b16 %v232
    %v1964 = vunpack.c.l.b16 %v233
    %v1965 = vunpack.c.l.b16 %v234
    %v1966 = vunpack.c.l.b16 %v235
    %v1967 = vunpack.c.l.b16 %v236
    %v1968 = vunpack.c.l.b16 %v237
    %v1969 = vunpack.c.l.b16 %v238
    %v1970 = vunpack.c.l.b16 %v239
    %v1971 = vunpack.c.l.b16 %v240
    %v1972 = vunpack.c.l.b16 %v241
    %v1973 = vunpack.c.l.b16 %v242
    %v1974 = vunpack.c.l.b16 %v243
    %v1975 = vunpack.c.l.b16 %v244
    %v1976 = vunpack.c.l.b16 %v245
    %v1977 = vunpack.c.l.b16 %v246
    %v1978 = vunpack.c.l.b16 %v247
    %v1979 = vunpack.c.l.b16 %v248
    %v1980 = vunpack.c.l.b16 %v249
    %v1981 = vunpack.c.l.b16 %v250
    %v1982 = vunpack.c.l.b16 %v251
    %v1983 = vunpack.c.l.b16 %v252
    %v1984 = vunpack.c.l.b16 %v253
    %v1985 = vunpack.c.l.b16 %v254
    %v1986 = vunpack.c.l.b16 %v255
    %v1987 = vunpack.c.l.b16 %v256
    %v1988 = vunpack.c.l.b16 %v257
    %v1989 = vunpack.c.l.b16 %v258
    %v1990 = vunpack.c.l.b16 %v259
    %v1991 = vunpack.c.l.b16 %v260
    %v1992 = vunpack.c.l.b16 %v261
    %v1993 = vunpack.c.l.b16 %v262
    %v1994 = vunpack.c.l.b16 %v263
    %v1995 = vunpack.c.l.b16 %v264
    %v1996 = vunpack.c.l.b16 %v265
    %v1997 = vunpack.c.l.b16 %v266
    %v1998 = vunpack.c.l.b16 %v267
    %v1999 = vunpack.c.l.b16 %v268
    %v2000 = vunpack.c.l.b16 %v269
    %v2001 = vunpack.c.l.b16 %v270
    %v2002 = vunpack.c.l.b16 %v271
    %v2003 = vunpack.c.l.b16 %v272
    %v2004 = vunpack.c.l.b16 %v273
    %v2005 = vunpack.c.l.b16 %v274
    %v2006 = vunpack.c.l.b16 %v275
    %v2007 = vunpack.c.l.b16 %v276
    %v2008 = vunpack.c.l.b16 %v277
    %v2009 = vunpack.c.l.b16 %v278
    %v2010 = vunpack.c.l.b16 %v279
    %v2011 = vunpack.c.l.b16 %v280
    %v2012 = vunpack.c.l.b16 %v281
    %v2013 = vunpack.c.l.b16 %v282
    %v2014 = vunpack.c.l.b16 %v283
    %v2015 = vunpack.c.l.b16 %v284
    %v2016 = vunpack.c.l.b16 %v285
    %v2017 = vunpack.c.l.b16 %v286
    %v2018 = vunpack.c.l.b16 %v287
    %v2019 = vunpack.c.l.b16 %v288
    %v2020 = vunpack.c.l.b16 %v289
    %v2021 = vunpack.c.l.b16 %v290
    %v2022 = vunpack.c.l.b16 %v291
    %v2023 = vunpack.c.l.b16 %v292
    %v2024 = vunpack.c.l.b16 %v293
    %v2025 = vunpack.c.l.b16 %v294
    %v2026 = vunpack.c.l.b16 %v295
    %v2027 = vunpack.c.l.b16 %v296
    %v2028 = vunpack.c.l.b16 %v297
    %v2029 = vunpack.c.l.b16 %v298
    %v2030 = vunpack.c.l.b16 %v299
    %v2031 = vunpack.c.l.b16 %v300
    %v2032 = vunpack.c.l.b16 %v301
    %v2033 = vunpack.c.l.b16 %v302
    %v2034 = vunpack.c.l.b16 %v303
    %v2035 = vunpack.c.l.b16 %v304
    %v2036 = vunpack.c.l.b16 %v305
    %v2037 = vunpack.c.l.b16 %v306
    %v2038 = vunpack.c.l.b16 %v307
    %v2039 = vunpack.c.l.b16 %v308
    %v2040 = vunpack.c.l.b16 %v309
    %v2041 = vunpack.c.l.b16 %v310
    %v2042 = vunpack.c.l.b16 %v311
    %v2043 = vunpack.c.l.b16 %v312
    %v2044 = vunpack.c.l.b16 %v313
    %v2045 = vunpack.c.l.b16 %v314
    %v2046 = vunpack.c.l.b16 %v315
    %v2047 = vunpack.c.l.b16 %v316
    %v2048 = vunpack.c.l.b16 %v317
    %v2049 = vunpack.c.l.b16 %v318
    %v2050 = vunpack.c.l.b16 %v319
    %v2051 = vunpack.c.l.b16 %v320
    %v2052 = vunpack.c.l.b16 %v321
    %v2053 = vunpack.c.l.b16 %v322
    %v2054 = vunpack.c.l.b16 %v323
    %v2055 = vunpack.c.l.b16 %v324
    %v2056 = vunpack.c.l.b16 %v325
    %v2057 = vunpack.c.l.b16 %v326
    %v2058 = vunpack.c.l.b16 %v327
    %v2059 = vunpack.c.l.b16 %v328
    %v2060 = vunpack.c.l.b16 %v329
    %v2061 = vunpack.c.l.b16 %v330
    %v2062 = vunpack.c.l.b16 %v331
    %v2063 = vunpack.c.l.b16 %v332
    %v2064 = vunpack.c.l.b16 %v333
    %v2065 = vunpack.c.l.b16 %v334
    %v2066 = vunpack.c.l.b16 %v335
    %v2067 = vunpack.c.l.b16 %v336
    %v2068 = vunpack.c.l.b16 %v337
    %v2069 = vunpack.c.l.b16 %v338
    %v2070 = vunpack.c.l.b16 %v339
    %v2071 = vunpack.c.l.b16 %v340
    %v2072 = vunpack.c.l.b16 %v341
    %v2073 = vunpack.c.l.b16 %v342
    %v2074 = vunpack.c.l.b16 %v343
    %v2075 = vunpack.c.l.b16 %v344
    %v2076 = vunpack.c.l.b16 %v345
    %v2077 = vunpack.c.l.b16 %v346
    %v2078 = vunpack.c.l.b16 %v347
    %v2079 = vunpack.c.l.b16 %v348
    %v2080 = vunpack.c.l.b16 %v349
    %v2081 = vunpack.c.l.b16 %v350
    %v2082 = vunpack.c.l.b16 %v351
    %v2083 = vunpack.c.l.b16 %v352
    %v2084 = vunpack.c.l.b16 %v353
    %v2085 = vunpack.c.l.b16 %v354
    %v2086 = vunpack.c.l.b16 %v355
    %v2087 = vunpack.c.l.b16 %v356
    %v2088 = vunpack.c.l.b16 %v357
    %v2089 = vunpack.c.l.b16 %v358
    %v2090 = vunpack.c.l.b16 %v359
    %v2091 = vunpack.c.l.b16 %v360
    %v2092 = vunpack.c.l.b16 %v361
    %v2093 = vunpack.c.l.b16 %v362
    %v2094 = vunpack.c.l.b16 %v363
    %v2095 = vunpack.c.l.b16 %v364
    %v2096 = vunpack.c.l.b16 %v365
    %v2097 = vunpack.c.l.b16 %v366
    %v2098 = vunpack.c.l.b16 %v367
    %v2099 = vunpack.c.l.b16 %v368
    %v2100 = vunpack.c.l.b16 %v369
    %v2101 = vunpack.c.l.b16 %v370
    %v2102 = vunpack.c.l.b16 %v371
    %v2103 = vunpack.c.l.b16 %v372
    %v2104 = vunpack.c.l.b16 %v373
    %v2105 = vunpack.c.l.b16 %v374
    %v2106 = vunpack.c.l.b16 %v375
    %v2107 = vunpack.c.l.b16 %v376
    %v2108 = vunpack.c.l.b16 %v377
    %v2109 = vunpack.c.l.b16 %v378
    %v2110 = vunpack.c.l.b16 %v379
    %v2111 = vunpack.c.l.b16 %v380
    %v2112 = vunpack.c.l.b16 %v381
    %v2113 = vunpack.c.l.b16 %v382
    %v2114 = vunpack.c.l.b16 %v383
    %v2115 = vunpack.c.l.b16 %v384
    %v2116 = vunpack.c.l.b16 %v385
    %v2117 = vunpack.c.l.b16 %v386
    %v2118 = vunpack.c.l.b16 %v387
    %v2119 = vunpack.c.l.b16 %v388
    %v2120 = vunpack.c.l.b16 %v389
    %v2121 = vunpack.c.l.b16 %v390
    %v2122 = vunpack.c.l.b16 %v391
    %v2123 = vunpack.c.l.b16 %v392
    %v2124 = vunpack.c.l.b16 %v393
    %v2125 = vunpack.c.l.b16 %v394
    %v2126 = vunpack.c.l.b16 %v395
    %v2127 = vunpack.c.l.b16 %v396
    %v2128 = vunpack.c.l.b16 %v397
    %v2129 = vunpack.c.l.b16 %v398
    %v2130 = vunpack.c.l.b16 %v399
    %v2131 = vunpack.c.l.b16 %v400
    %v2132 = vunpack.c.l.b16 %v401
    %v2133 = vunpack.c.l.b16 %v402
    %v2134 = vunpack.c.l.b16 %v403
    %v2135 = vunpack.c.l.b16 %v404
    %v2136 = vunpack.c.l.b16 %v405
    %v2137 = vunpack.c.l.b16 %v406
    %v2138 = vunpack.c.l.b16 %v407
    %v2139 = vunpack.c.l.b16 %v408
    %v2140 = vunpack.c.l.b16 %v409
    %v2141 = vunpack.c.l.b16 %v410
    %v2142 = vunpack.c.l.b16 %v411
    %v2143 = vunpack.c.l.b16 %v412
    %v2144 = vunpack.c.l.b16 %v413
    %v2145 = vunpack.c.l.b16 %v414
    %v2146 = vunpack.c.l.b16 %v415
    %v2147 = vunpack.c.l.b16 %v416
    %v2148 = vunpack.c.l.b16 %v417
    %v2149 = vunpack.c.l.b16 %v418
    %v2150 = vunpack.c.l.b16 %v419
    %v2151 = vunpack.c.l.b16 %v420
    %v2152 = vunpack.c.l.b16 %v421
    %v2153 = vunpack.c.l.b16 %v422
    %v2154 = vunpack.c.l.b16 %v423
    %v2155 = vunpack.c.l.b16 %v424
    %v2156 = vunpack.c.l.b16 %v425
    %v2157 = vunpack.c.l.b16 %v426
    %v2158 = vunpack.c.l.b16 %v427
    %v2159 = vunpack.c.l.b16 %v428
    %v2160 = vunpack.c.l.b16 %v429
    %v2161 = vunpack.c.l.b16 %v430
    %v2162 = vunpack.c.l.b16 %v431
    %v2163 = vunpack.c.l.b16 %v432
    %v2164 = vunpack.c.l.b16 %v433
    %v2165 = vunpack.c.l.b16 %v434
    %v2166 = vunpack.c.l.b16 %v435
    %v2167 = vunpack.c.l.b16 %v436
    %v2168 = vunpack.c.l.b16 %v437
    %v2169 = vunpack.c.l.b16 %v438
    %v2170 = vunpack.c.l.b16 %v439
    %v2171 = vunpack.c.l.b16 %v440
    %v2172 = vunpack.c.l.b16 %v441
    %v2173 = vunpack.c.l.b16 %v442
    %v2174 = vunpack.c.l.b16 %v443
    %v2175 = vunpack.c.l.b16 %v444
    %v2176 = vunpack.c.l.b16 %v445
    %v2177 = vunpack.c.l.b16 %v446
    %v2178 = vunpack.c.l.b16 %v447
    %v2179 = vunpack.c.l.b16 %v448
    %v2180 = vunpack.c.l.b16 %v449
    %v2181 = vunpack.c.l.b16 %v450
    %v2182 = vunpack.c.l.b16 %v451
    %v2183 = vunpack.c.l.b16 %v452
    %v2184 = vunpack.c.l.b16 %v453
    %v2185 = vunpack.c.l.b16 %v454
    %v2186 = vunpack.c.l.b16 %v455
    %v2187 = vunpack.c.l.b16 %v456
    %v2188 = vunpack.c.l.b16 %v457
    %v2189 = vunpack.c.l.b16 %v458
    %v2190 = vunpack.c.l.b16 %v459
    %v2191 = vunpack.c.l.b16 %v460
    %v2192 = vunpack.c.l.b16 %v461
    %v2193 = vunpack.c.l.b16 %v462
    %v2194 = vunpack.c.l.b16 %v463
    %v2195 = vunpack.c.l.b16 %v464
    %v2196 = vunpack.c.l.b16 %v465
    %v2197 = vunpack.c.l.b16 %v466
    %v2198 = vunpack.c.l.b16 %v467
    %v2199 = vunpack.c.l.b16 %v468
    %v2200 = vunpack.c.l.b16 %v469
    %v2201 = vunpack.c.l.b16 %v470
    %v2202 = vunpack.c.l.b16 %v471
    %v2203 = vunpack.c.l.b16 %v472
    %v2204 = vunpack.c.l.b16 %v473
    %v2205 = vunpack.c.l.b16 %v474
    %v2206 = vunpack.c.l.b16 %v475
    %v2207 = vunpack.c.l.b16 %v476
    %v2208 = vunpack.c.l.b16 %v477
    %v2209 = vunpack.c.l.b16 %v478
    %v2210 = vunpack.c.l.b16 %v479
    %v2211 = vunpack.c.l.b16 %v480
    %v2212 = vunpack.c.l.b16 %v481
    %v2213 = vunpack.c.l.b16 %v482
    %v2214 = vunpack.c.l.b16 %v483
    %v2215 = vunpack.c.l.b16 %v484
    %v2216 = vunpack.c.l.b16 %v485
    %v2217 = vunpack.c.l.b16 %v486
    %v2218 = vunpack.c.l.b16 %v487
    %v2219 = vunpack.c.l.b16 %v488
    %v2220 = vunpack.c.l.b16 %v489
    %v2221 = vunpack.c.l.b16 %v490
    %v2222 = vunpack.c.l.b16 %v491
    %v2223 = vunpack.c.l.b16 %v492
    %v2224 = vunpack.c.l.b16 %v493
    %v2225 = vunpack.c.l.b16 %v494
    %v2226 = vunpack.c.l.b16 %v495
    %v2227 = vunpack.c.l.b16 %v496
    %v2228 = vunpack.c.l.b16 %v497
    %v2229 = vunpack.c.l.b16 %v498
    %v2230 = vunpack.c.l.b16 %v499
    %v2231 = vunpack.c.l.b16 %v500
    %v2232 = vunpack.c.l.b16 %v501
    %v2233 = vunpack.c.l.b16 %v502
    %v2234 = vunpack.c.l.b16 %v503
    %v2235 = vunpack.c.l.b16 %v504
    %v2236 = vunpack.c.l.b16 %v505
    %v2237 = vunpack.c.l.b16 %v506
    %v2238 = vunpack.c.l.b16 %v507
    %v2239 = vunpack.c.l.b16 %v508
    %v2240 = vunpack.c.l.b16 %v509
    %v2241 = vunpack.c.l.b16 %v510
    %v2242 = vunpack.c.l.b16 %v511
    %v2243 = vunpack.c.l.b16 %v512
    %v2244 = vunpack.c.l.b16 %v513
    %v2245 = vunpack.c.l.b16 %v514
    %v2246 = vunpack.c.l.b16 %v515
    %v2247 = vunpack.c.l.b16 %v516
    %v2248 = vunpack.c.l.b16 %v517
    %v2249 = vunpack.c.l.b16 %v518
    %v2250 = vunpack.c.l.b16 %v519
    %v2251 = vunpack.c.l.b16 %v520
    %v2252 = vunpack.c.l.b16 %v521
    %v2253 = vunpack.c.l.b16 %v522
    %v2254 = vunpack.c.l.b16 %v523
    %v2255 = vunpack.c.l.b16 %v524
    %v2256 = vunpack.c.l.b16 %v525
    %v2257 = vunpack.c.l.b16 %v526
    %v2258 = vunpack.c.l.b16 %v527
    %v2259 = vunpack.c.l.b16 %v528
    %v2260 = vunpack.c.l.b16 %v529
    %v2261 = vunpack.c.l.b16 %v530
    %v2262 = vunpack.c.l.b16 %v531
    %v2263 = vunpack.c.l.b16 %v532
    %v2264 = vunpack.c.l.b16 %v533
    %v2265 = vunpack.c.l.b16 %v534
    %v2266 = vunpack.c.l.b16 %v535
    %v2267 = vunpack.c.l.b16 %v536
    %v2268 = vunpack.c.l.b16 %v537
    %v2269 = vunpack.c.l.b16 %v538
    %v2270 = vunpack.c.l.b16 %v539
    %v2271 = vunpack.c.l.b16 %v540
    %v2272 = vunpack.c.l.b16 %v541
    %v2273 = vunpack.c.l.b16 %v542
    %v2274 = vunpack.c.l.b16 %v543
    %v2275 = vunpack.c.l.b16 %v544
    %v2276 = vunpack.c.l.b16 %v545
    %v2277 = vunpack.c.l.b16 %v546
    %v2278 = vunpack.c.l.b16 %v547
    %v2279 = vunpack.c.l.b16 %v548
    %v2280 = vunpack.c.l.b16 %v549
    %v2281 = vunpack.c.l.b16 %v550
    %v2282 = vunpack.c.l.b16 %v551
    %v2283 = vunpack.c.l.b16 %v552
    %v2284 = vunpack.c.l.b16 %v553
    %v2285 = vunpack.c.l.b16 %v554
    %v2286 = vunpack.c.l.b16 %v555
    %v2287 = vunpack.c.l.b16 %v556
    %v2288 = vunpack.c.l.b16 %v557
    %v2289 = vunpack.c.l.b16 %v558
    %v2290 = vunpack.c.l.b16 %v559
    %v2291 = vunpack.c.l.b16 %v560
    %v2292 = vunpack.c.l.b16 %v561
    %v2293 = vunpack.c.l.b16 %v562
    %v2294 = vunpack.c.l.b16 %v563
    %v2295 = vunpack.c.l.b16 %v564
    %v2296 = vunpack.c.l.b16 %v565
    %v2297 = vunpack.c.l.b16 %v566
    %v2298 = vunpack.c.l.b16 %v567
    %v2299 = vunpack.c.l.b16 %v568
    %v2300 = vunpack.c.l.b16 %v569
    %v2301 = vunpack.c.l.b16 %v570
    %v2302 = vunpack.c.l.b16 %v571
    %v2303 = vunpack.c.l.b16 %v572
    %v2304 = vunpack.c.l.b16 %v573
    %v2305 = vunpack.c.l.b16 %v574
    %v2306 = vunpack.c.l.b16 %v575
    %v2307 = vunpack.c.l.b16 %v576
    %v2308 = vunpack.c.l.b16 %v577
    %v2309 = vunpack.c.l.b16 %v578
    %v2310 = vunpack.c.l.b16 %v579
    %v2311 = vunpack.c.l.b16 %v580
    %v2312 = vunpack.c.l.b16 %v581
    %v2313 = vunpack.c.l.b16 %v582
    %v2314 = vunpack.c.l.b16 %v583
    %v2315 = vunpack.c.l.b16 %v584
    %v2316 = vunpack.c.l.b16 %v585
    %v2317 = vunpack.c.l.b16 %v586
    %v2318 = vunpack.c.l.b16 %v587
    %v2319 = vunpack.c.l.b16 %v588
    %v2320 = vunpack.c.l.b16 %v589
    %v2321 = vunpack.c.l.b16 %v590
    %v2322 = vunpack.c.l.b16 %v591
    %v2323 = vunpack.c.l.b16 %v592
    %v2324 = vunpack.c.l.b16 %v593
    %v2325 = vunpack.c.l.b16 %v594
    %v2326 = vunpack.c.l.b16 %v595
    %v2327 = vunpack.c.l.b16 %v596
    %v2328 = vunpack.c.l.b16 %v597
    %v2329 = vunpack.c.l.b16 %v598
    %v2330 = vunpack.c.l.b16 %v599
    %v2331 = vunpack.c.l.b16 %v600
    %v2332 = vunpack.c.l.b16 %v601
    %v2333 = vunpack.c.l.b16 %v602
    %v2334 = vunpack.c.l.b16 %v603
    %v2335 = vunpack.c.l.b16 %v604
    %v2336 = vunpack.c.l.b16 %v605
    %v2337 = vunpack.c.l.b16 %v606
    %v2338 = vunpack.c.l.b16 %v607
    %v2339 = vunpack.c.l.b16 %v608
    %v2340 = vunpack.c.l.b16 %v609
    %v2341 = vunpack.c.l.b16 %v610
    %v2342 = vunpack.c.l.b16 %v611
    %v2343 = vunpack.c.l.b16 %v612
    %v2344 = vunpack.c.l.b16 %v613
    %v2345 = vunpack.c.l.b16 %v614
    %v2346 = vunpack.c.l.b16 %v615
    %v2347 = vunpack.c.l.b16 %v616
    %v2348 = vunpack.c.l.b16 %v617
    %v2349 = vunpack.c.l.b16 %v618
    %v2350 = vunpack.c.l.b16 %v619
    %v2351 = vunpack.c.l.b16 %v620
    %v2352 = vunpack.c.l.b16 %v621
    %v2353 = vunpack.c.l.b16 %v622
    %v2354 = vunpack.c.l.b16 %v623
    %v2355 = vunpack.c.l.b16 %v624
    %v2356 = vunpack.c.l.b16 %v625
    %v2357 = vunpack.c.l.b16 %v626
    %v2358 = vunpack.c.l.b16 %v627
    %v2359 = vunpack.c.l.b16 %v628
    %v2360 = vunpack.c.l.b16 %v629
    %v2361 = vunpack.c.l.b16 %v630
    %v2362 = vunpack.c.l.b16 %v631
    %v2363 = vunpack.c.l.b16 %v632
    %v2364 = vunpack.c.l.b16 %v633
    %v2365 = vunpack.c.l.b16 %v634
    %v2366 = vunpack.c.l.b16 %v635
    %v2367 = vunpack.c.l.b16 %v636
    %v2368 = vunpack.c.l.b16 %v637
    %v2369 = vunpack.c.l.b16 %v638
    %v2370 = vunpack.c.l.b16 %v639
    %v2371 = vunpack.c.l.b16 %v640
    %v2372 = vunpack.c.l.b16 %v641
    %v2373 = vunpack.c.l.b16 %v642
    %v2374 = vunpack.c.l.b16 %v643
    %v2375 = vunpack.c.l.b16 %v644
    %v2376 = vunpack.c.l.b16 %v645
    %v2377 = vunpack.c.l.b16 %v646
    %v2378 = vunpack.c.l.b16 %v647
    %v2379 = vunpack.c.l.b16 %v648
    %v2380 = vunpack.c.l.b16 %v649
    %v2381 = vunpack.c.l.b16 %v650
    %v2382 = vunpack.c.l.b16 %v651
    %v2383 = vunpack.c.l.b16 %v652
    %v2384 = vunpack.c.l.b16 %v653
    %v2385 = vunpack.c.l.b16 %v654
    %v2386 = vunpack.c.l.b16 %v655
    %v2387 = vunpack.c.l.b16 %v656
    %v2388 = vunpack.c.l.b16 %v657
    %v2389 = vunpack.c.l.b16 %v658
    %v2390 = vunpack.c.l.b16 %v659
    %v2391 = vunpack.c.l.b16 %v660
    %v2392 = vunpack.c.l.b16 %v661
    %v2393 = vunpack.c.l.b16 %v662
    %v2394 = vunpack.c.l.b16 %v663
    %v2395 = vunpack.c.l.b16 %v664
    %v2396 = vunpack.c.l.b16 %v665
    %v2397 = vunpack.c.l.b16 %v666
    %v2398 = vunpack.c.l.b16 %v667
    %v2399 = vunpack.c.l.b16 %v668
    %v2400 = vunpack.c.l.b16 %v669
    %v2401 = vunpack.c.l.b16 %v670
    %v2402 = vunpack.c.l.b16 %v671
    %v2403 = vunpack.c.l.b16 %v672
    %v2404 = vunpack.c.l.b16 %v673
    %v2405 = vunpack.c.l.b16 %v674
    %v2406 = vunpack.c.l.b16 %v675
    %v2407 = vunpack.c.l.b16 %v676
    %v2408 = vunpack.c.l.b16 %v677
    %v2409 = vunpack.c.l.b16 %v678
    %v2410 = vunpack.c.l.b16 %v679
    %v2411 = vunpack.c.l.b16 %v680
    %v2412 = vunpack.c.l.b16 %v681
    %v2413 = vunpack.c.l.b16 %v682
    %v2414 = vunpack.c.l.b16 %v683
    %v2415 = vunpack.c.l.b16 %v684
    %v2416 = vunpack.c.l.b16 %v685
    %v2417 = vunpack.c.l.b16 %v686
    %v2418 = vunpack.c.l.b16 %v687
    %v2419 = vunpack.c.l.b16 %v688
    %v2420 = vunpack.c.l.b16 %v689
    %v2421 = vunpack.c.l.b16 %v690
    %v2422 = vunpack.c.l.b16 %v691
    %v2423 = vunpack.c.l.b16 %v692
    %v2424 = vunpack.c.l.b16 %v693
    %v2425 = vunpack.c.l.b16 %v694
    %v2426 = vunpack.c.l.b16 %v695
    %v2427 = vunpack.c.l.b16 %v696
    %v2428 = vunpack.c.l.b16 %v697
    %v2429 = vunpack.c.l.b16 %v698
    %v2430 = vunpack.c.l.b16 %v699
    %v2431 = vunpack.c.l.b16 %v700
    %v2432 = vunpack.c.l.b16 %v701
    %v2433 = vunpack.c.l.b16 %v702
    %v2434 = vunpack.c.l.b16 %v703
    %v2435 = vunpack.c.l.b16 %v704
    %v2436 = vunpack.c.l.b16 %v705
    %v2437 = vunpack.c.l.b16 %v706
    %v2438 = vunpack.c.l.b16 %v707
    %v2439 = vunpack.c.l.b16 %v708
    %v2440 = vunpack.c.l.b16 %v709
    %v2441 = vunpack.c.l.b16 %v710
    %v2442 = vunpack.c.l.b16 %v711
    %v2443 = vunpack.c.l.b16 %v712
    %v2444 = vunpack.c.l.b16 %v713
    %v2445 = vunpack.c.l.b16 %v714
    %v2446 = vunpack.c.l.b16 %v715
    %v2447 = vunpack.c.l.b16 %v716
    %v2448 = vunpack.c.l.b16 %v717
    %v2449 = vunpack.c.l.b16 %v718
    %v2450 = vunpack.c.l.b16 %v719
    %v2451 = vunpack.c.l.b16 %v720
    %v2452 = vunpack.c.l.b16 %v721
    %v2453 = vunpack.c.l.b16 %v722
    %v2454 = vunpack.c.l.b16 %v723
    %v2455 = vunpack.c.l.b16 %v724
    %v2456 = vunpack.c.l.b16 %v725
    %v2457 = vunpack.c.l.b16 %v726
    %v2458 = vunpack.c.l.b16 %v727
    %v2459 = vunpack.c.l.b16 %v728
    %v2460 = vunpack.c.l.b16 %v729
    %v2461 = vunpack.c.l.b16 %v730
    %v2462 = vunpack.c.l.b16 %v731
    %v2463 = vunpack.c.l.b16 %v732
    %v2464 = vunpack.c.l.b16 %v733
    %v2465 = vunpack.c.l.b16 %v734
    %v2466 = vunpack.c.l.b16 %v735
    %v2467 = vunpack.c.l.b16 %v736
    %v2468 = vunpack.c.l.b16 %v737
    %v2469 = vunpack.c.l.b16 %v738
    %v2470 = vunpack.c.l.b16 %v739
    %v2471 = vunpack.c.l.b16 %v740
    %v2472 = vunpack.c.l.b16 %v741
    %v2473 = vunpack.c.l.b16 %v742
    %v2474 = vunpack.c.l.b16 %v743
    %v2475 = vunpack.c.l.b16 %v744
    %v2476 = vunpack.c.l.b16 %v745
    %v2477 = vunpack.c.l.b16 %v746
    %v2478 = vunpack.c.l.b16 %v747
    %v2479 = vunpack.c.l.b16 %v748
    %v2480 = vunpack.c.l.b16 %v749
    %v2481 = vunpack.c.l.b16 %v750
    %v2482 = vunpack.c.l.b16 %v751
    %v2483 = vunpack.c.l.b16 %v752
    %v2484 = vunpack.c.l.b16 %v753
    %v2485 = vunpack.c.l.b16 %v754
    %v2486 = vunpack.c.l.b16 %v755
    %v2487 = vunpack.c.l.b16 %v756
    %v2488 = vunpack.c.l.b16 %v757
    %v2489 = vunpack.c.l.b16 %v758
    %v2490 = vunpack.c.l.b16 %v759
    %v2491 = vunpack.c.l.b16 %v760
    %v2492 = vunpack.c.l.b16 %v761
    %v2493 = vunpack.c.l.b16 %v762
    %v2494 = vunpack.c.l.b16 %v763
    %v2495 = vunpack.c.l.b16 %v764
    %v2496 = vunpack.c.l.b16 %v765
    %v2497 = vunpack.c.l.b16 %v766
    %v2498 = vunpack.c.l.b16 %v767
    %v2499 = vunpack.c.l.b16 %v768
    %v2500 = vunpack.c.l.b16 %v769
    %v2501 = vunpack.c.l.b16 %v770
    %v2502 = vunpack.c.l.b16 %v771
    %v2503 = vunpack.c.l.b16 %v772
    %v2504 = vunpack.c.l.b16 %v773
    %v2505 = vunpack.c.l.b16 %v774
    %v2506 = vunpack.c.l.b16 %v775
    %v2507 = vunpack.c.l.b16 %v776
    %v2508 = vunpack.c.l.b16 %v777
    %v2509 = vunpack.c.l.b16 %v778
    %v2510 = vunpack.c.l.b16 %v779
    %v2511 = vunpack.c.l.b16 %v780
    %v2512 = vunpack.c.l.b16 %v781
    %v2513 = vunpack.c.l.b16 %v782
    %v2514 = vunpack.c.l.b16 %v783
    %v2515 = vunpack.c.l.b16 %v784
    %v2516 = vunpack.c.l.b16 %v785
    %v2517 = vunpack.c.l.b16 %v786
    %v2518 = vunpack.c.l.b16 %v787
    %v2519 = vunpack.c.l.b16 %v788
    %v2520 = vunpack.c.l.b16 %v789
    %v2521 = vunpack.c.l.b16 %v790
    %v2522 = vunpack.c.l.b16 %v791
    %v2523 = vunpack.c.l.b16 %v792
    %v2524 = vunpack.c.l.b16 %v793
    %v2525 = vunpack.c.l.b16 %v794
    %v2526 = vunpack.c.l.b16 %v795
    %v2527 = vunpack.c.l.b16 %v796
    %v2528 = vunpack.c.l.b16 %v797
    %v2529 = vunpack.c.l.b16 %v798
    %v2530 = vunpack.c.l.b16 %v799
    %v2531 = vunpack.c.l.b16 %v800
    %v2532 = vunpack.c.l.b16 %v801
    %v2533 = vunpack.c.l.b16 %v802
    %v2534 = vunpack.c.l.b16 %v803
    %v2535 = vunpack.c.l.b16 %v804
    %v2536 = vunpack.c.l.b16 %v805
    %v2537 = vunpack.c.l.b16 %v806
    %v2538 = vunpack.c.l.b16 %v807
    %v2539 = vunpack.c.l.b16 %v808
    %v2540 = vunpack.c.l.b16 %v809
    %v2541 = vunpack.c.l.b16 %v810
    %v2542 = vunpack.c.l.b16 %v811
    %v2543 = vunpack.c.l.b16 %v812
    %v2544 = vunpack.c.l.b16 %v813
    %v2545 = vunpack.c.l.b16 %v814
    %v2546 = vunpack.c.l.b16 %v815
    %v2547 = vunpack.c.l.b16 %v816
    %v2548 = vunpack.c.l.b16 %v817
    %v2549 = vunpack.c.l.b16 %v818
    %v2550 = vunpack.c.l.b16 %v819
    %v2551 = vunpack.c.l.b16 %v820
    %v2552 = vunpack.c.l.b16 %v821
    %v2553 = vunpack.c.l.b16 %v822
    %v2554 = vunpack.c.l.b16 %v823
    %v2555 = vunpack.c.l.b16 %v824
    %v2556 = vunpack.c.l.b16 %v825
    %v2557 = vunpack.c.l.b16 %v826
    %v2558 = vunpack.c.l.b16 %v827
    %v2559 = vunpack.c.l.b16 %v828
    %v2560 = vunpack.c.l.b16 %v829
    %v2561 = vunpack.c.l.b16 %v830
    %v2562 = vunpack.c.l.b16 %v831
    %v2563 = vunpack.c.l.b16 %v832
    %v2564 = vunpack.c.l.b16 %v833
    %v2565 = vunpack.c.l.b16 %v834
    %v2566 = vpack.c.b16 %v1767, %v1766
    %v2567 = vpack.c.b16 %v1769, %v1768
    %v2568 = vpack.c.b16 %v1771, %v1770
    %v2569 = vpack.c.b16 %v1773, %v1772
    %v2570 = vpack.c.b16 %v1775, %v1774
    %v2571 = vpack.c.b16 %v1777, %v1776
    %v2572 = vpack.c.b16 %v1779, %v1778
    %v2573 = vpack.c.b16 %v1781, %v1780
    %v2574 = vpack.c.b16 %v1783, %v1782
    %v2575 = vpack.c.b16 %v1785, %v1784
    %v2576 = vpack.c.b16 %v1787, %v1786
    %v2577 = vpack.c.b16 %v1789, %v1788
    %v2578 = vpack.c.b16 %v1791, %v1790
    %v2579 = vpack.c.b16 %v1793, %v1792
    %v2580 = vpack.c.b16 %v1795, %v1794
    %v2581 = vpack.c.b16 %v1797, %v1796
    %v2582 = vpack.c.b16 %v1799, %v1798
    %v2583 = vpack.c.b16 %v1801, %v1800
    %v2584 = vpack.c.b16 %v1803, %v1802
    %v2585 = vpack.c.b16 %v1805, %v1804
    %v2586 = vpack.c.b16 %v1807, %v1806
    %v2587 = vpack.c.b16 %v1809, %v1808
    %v2588 = vpack.c.b16 %v1811, %v1810
    %v2589 = vpack.c.b16 %v1813, %v1812
    %v2590 = vpack.c.b16 %v1815, %v1814
    %v2591 = vpack.c.b16 %v1817, %v1816
    %v2592 = vpack.c.b16 %v1819, %v1818
    %v2593 = vpack.c.b16 %v1821, %v1820
    %v2594 = vpack.c.b16 %v1823, %v1822
    %v2595 = vpack.c.b16 %v1825, %v1824
    %v2596 = vpack.c.b16 %v1827, %v1826
    %v2597 = vpack.c.b16 %v1829, %v1828
    %v2598 = vpack.c.b16 %v1831, %v1830
    %v2599 = vpack.c.b16 %v1833, %v1832
    %v2600 = vpack.c.b16 %v1835, %v1834
    %v2601 = vpack.c.b16 %v1837, %v1836
    %v2602 = vpack.c.b16 %v1839, %v1838
    %v2603 = vpack.c.b16 %v1841, %v1840
    %v2604 = vpack.c.b16 %v1843, %v1842
    %v2605 = vpack.c.b16 %v1845, %v1844
    %v2606 = vpack.c.b16 %v1847, %v1846
    %v2607 = vpack.c.b16 %v1849, %v1848
    %v2608 = vpack.c.b16 %v1851, %v1850
    %v2609 = vpack.c.b16 %v1853, %v1852
    %v2610 = vpack.c.b16 %v1855, %v1854
    %v2611 = vpack.c.b16 %v1857, %v1856
    %v2612 = vpack.c.b16 %v1859, %v1858
    %v2613 = vpack.c.b16 %v1861, %v1860
    %v2614 = vpack.c.b16 %v1863, %v1862
    %v2615 = vpack.c.b16 %v1865, %v1864
    %v2616 = vpack.c.b16 %v1867, %v1866
    %v2617 = vpack.c.b16 %v1869, %v1868
    %v2618 = vpack.c.b16 %v1871, %v1870
    %v2619 = vpack.c.b16 %v1873, %v1872
    %v2620 = vpack.c.b16 %v1875, %v1874
    %v2621 = vpack.c.b16 %v1877, %v1876
    %v2622 = vpack.c.b16 %v1879, %v1878
    %v2623 = vpack.c.b16 %v1881, %v1880
    %v2624 = vpack.c.b16 %v1883, %v1882
    %v2625 = vpack.c.b16 %v1885, %v1884
    %v2626 = vpack.c.b16 %v1887, %v1886
    %v2627 = vpack.c.b16 %v1889, %v1888
    %v2628 = vpack.c.b16 %v1891, %v1890
    %v2629 = vpack.c.b16 %v1893, %v1892
    %v2630 = vpack.c.b16 %v1895, %v1894
    %v2631 = vpack.c.b16 %v1897, %v1896
    %v2632 = vpack.c.b16 %v1899, %v1898
    %v2633 = vpack.c.b16 %v1901, %v1900
    %v2634 = vpack.c.b16 %v1903, %v1902
    %v2635 = vpack.c.b16 %v1905, %v1904
    %v2636 = vpack.c.b16 %v1907, %v1906
    %v2637 = vpack.c.b16 %v1909, %v1908
    %v2638 = vpack.c.b16 %v1911, %v1910
    %v2639 = vpack.c.b16 %v1913, %v1912
    %v2640 = vpack.c.b16 %v1915, %v1914
    %v2641 = vpack.c.b16 %v1917, %v1916
    %v2642 = vpack.c.b16 %v1919, %v1918
    %v2643 = vpack.c.b16 %v1921, %v1920
    %v2644 = vpack.c.b16 %v1923, %v1922
    %v2645 = vpack.c.b16 %v1925, %v1924
    %v2646 = vpack.c.b16 %v1927, %v1926
    %v2647 = vpack.c.b16 %v1929, %v1928
    %v2648 = vpack.c.b16 %v1931, %v1930
    %v2649 = vpack.c.b16 %v1933, %v1932
    %v2650 = vpack.c.b16 %v1935, %v1934
    %v2651 = vpack.c.b16 %v1937, %v1936
    %v2652 = vpack.c.b16 %v1939, %v1938
    %v2653 = vpack.c.b16 %v1941, %v1940
    %v2654 = vpack.c.b16 %v1943, %v1942
    %v2655 = vpack.c.b16 %v1945, %v1944
    %v2656 = vpack.c.b16 %v1947, %v1946
    %v2657 = vpack.c.b16 %v1949, %v1948
    %v2658 = vpack.c.b16 %v1951, %v1950
    %v2659 = vpack.c.b16 %v1953, %v1952
    %v2660 = vpack.c.b16 %v1955, %v1954
    %v2661 = vpack.c.b16 %v1957, %v1956
    %v2662 = vpack.c.b16 %v1959, %v1958
    %v2663 = vpack.c.b16 %v1961, %v1960
    %v2664 = vpack.c.b16 %v1963, %v1962
    %v2665 = vpack.c.b16 %v1965, %v1964
    %v2666 = vpack.c.b16 %v1967, %v1966
    %v2667 = vpack.c.b16 %v1969, %v1968
    %v2668 = vpack.c.b16 %v1971, %v1970
    %v2669 = vpack.c.b16 %v1973, %v1972
    %v2670 = vpack.c.b16 %v1975, %v1974
    %v2671 = vpack.c.b16 %v1977, %v1976
    %v2672 = vpack.c.b16 %v1979, %v1978
    %v2673 = vpack.c.b16 %v1981, %v1980
    %v2674 = vpack.c.b16 %v1983, %v1982
    %v2675 = vpack.c.b16 %v1985, %v1984
    %v2676 = vpack.c.b16 %v1987, %v1986
    %v2677 = vpack.c.b16 %v1989, %v1988
    %v2678 = vpack.c.b16 %v1991, %v1990
    %v2679 = vpack.c.b16 %v1993, %v1992
    %v2680 = vpack.c.b16 %v1995, %v1994
    %v2681 = vpack.c.b16 %v1997, %v1996
    %v2682 = vpack.c.b16 %v1999, %v1998
    %v2683 = vpack.c.b16 %v2001, %v2000
    %v2684 = vpack.c.b16 %v2003, %v2002
    %v2685 = vpack.c.b16 %v2005, %v2004
    %v2686 = vpack.c.b16 %v2007, %v2006
    %v2687 = vpack.c.b16 %v2009, %v2008
    %v2688 = vpack.c.b16 %v2011, %v2010
    %v2689 = vpack.c.b16 %v2013, %v2012
    %v2690 = vpack.c.b16 %v2015, %v2014
    %v2691 = vpack.c.b16 %v2017, %v2016
    %v2692 = vpack.c.b16 %v2019, %v2018
    %v2693 = vpack.c.b16 %v2021, %v2020
    %v2694 = vpack.c.b16 %v2023, %v2022
    %v2695 = vpack.c.b16 %v2025, %v2024
    %v2696 = vpack.c.b16 %v2027, %v2026
    %v2697 = vpack.c.b16 %v2029, %v2028
    %v2698 = vpack.c.b16 %v2031, %v2030
    %v2699 = vpack.c.b16 %v2033, %v2032
    %v2700 = vpack.c.b16 %v2035, %v2034
    %v2701 = vpack.c.b16 %v2037, %v2036
    %v2702 = vpack.c.b16 %v2039, %v2038
    %v2703 = vpack.c.b16 %v2041, %v2040
    %v2704 = vpack.c.b16 %v2043, %v2042
    %v2705 = vpack.c.b16 %v2045, %v2044
    %v2706 = vpack.c.b16 %v2047, %v2046
    %v2707 = vpack.c.b16 %v2049, %v2048
    %v2708 = vpack.c.b16 %v2051, %v2050
    %v2709 = vpack.c.b16 %v2053, %v2052
    %v2710 = vpack.c.b16 %v2055, %v2054
    %v2711 = vpack.c.b16 %v2057, %v2056
    %v2712 = vpack.c.b16 %v2059, %v2058
    %v2713 = vpack.c.b16 %v2061, %v2060
    %v2714 = vpack.c.b16 %v2063, %v2062
    %v2715 = vpack.c.b16 %v2065, %v2064
    %v2716 = vpack.c.b16 %v2067, %v2066
    %v2717 = vpack.c.b16 %v2069, %v2068
    %v2718 = vpack.c.b16 %v2071, %v2070
    %v2719 = vpack.c.b16 %v2073, %v2072
    %v2720 = vpack.c.b16 %v2075, %v2074
    %v2721 = vpack.c.b16 %v2077, %v2076
    %v2722 = vpack.c.b16 %v2079, %v2078
    %v2723 = vpack.c.b16 %v2081, %v2080
    %v2724 = vpack.c.b16 %v2083, %v2082
    %v2725 = vpack.c.b16 %v2085, %v2084
    %v2726 = vpack.c.b16 %v2087, %v2086
    %v2727 = vpack.c.b16 %v2089, %v2088
    %v2728 = vpack.c.b16 %v2091, %v2090
    %v2729 = vpack.c.b16 %v2093, %v2092
    %v2730 = vpack.c.b16 %v2095, %v2094
    %v2731 = vpack.c.b16 %v2097, %v2096
    %v2732 = vpack.c.b16 %v2099, %v2098
    %v2733 = vpack.c.b16 %v2101, %v2100
    %v2734 = vpack.c.b16 %v2103, %v2102
    %v2735 = vpack.c.b16 %v2105, %v2104
    %v2736 = vpack.c.b16 %v2107, %v2106
    %v2737 = vpack.c.b16 %v2109, %v2108
    %v2738 = vpack.c.b16 %v2111, %v2110
    %v2739 = vpack.c.b16 %v2113, %v2112
    %v2740 = vpack.c.b16 %v2115, %v2114
    %v2741 = vpack.c.b16 %v2117, %v2116
    %v2742 = vpack.c.b16 %v2119, %v2118
    %v2743 = vpack.c.b16 %v2121, %v2120
    %v2744 = vpack.c.b16 %v2123, %v2122
    %v2745 = vpack.c.b16 %v2125, %v2124
    %v2746 = vpack.c.b16 %v2127, %v2126
    %v2747 = vpack.c.b16 %v2129, %v2128
    %v2748 = vpack.c.b16 %v2131, %v2130
    %v2749 = vpack.c.b16 %v2133, %v2132
    %v2750 = vpack.c.b16 %v2135, %v2134
    %v2751 = vpack.c.b16 %v2137, %v2136
    %v2752 = vpack.c.b16 %v2139, %v2138
    %v2753 = vpack.c.b16 %v2141, %v2140
    %v2754 = vpack.c.b16 %v2143, %v2142
    %v2755 = vpack.c.b16 %v2145, %v2144
    %v2756 = vpack.c.b16 %v2147, %v2146
    %v2757 = vpack.c.b16 %v2149, %v2148
    %v2758 = vpack.c.b16 %v2151, %v2150
    %v2759 = vpack.c.b16 %v2153, %v2152
    %v2760 = vpack.c.b16 %v2155, %v2154
    %v2761 = vpack.c.b16 %v2157, %v2156
    %v2762 = vpack.c.b16 %v2159, %v2158
    %v2763 = vpack.c.b16 %v2161, %v2160
    %v2764 = vpack.c.b16 %v2163, %v2162
    %v2765 = vpack.c.b16 %v2165, %v2164
    %v2766 = vpack.c.b16 %v2167, %v2166
    %v2767 = vpack.c.b16 %v2169, %v2168
    %v2768 = vpack.c.b16 %v2171, %v2170
    %v2769 = vpack.c.b16 %v2173, %v2172
    %v2770 = vpack.c.b16 %v2175, %v2174
    %v2771 = vpack.c.b16 %v2177, %v2176
    %v2772 = vpack.c.b16 %v2179, %v2178
    %v2773 = vpack.c.b16 %v2181, %v2180
    %v2774 = vpack.c.b16 %v2183, %v2182
    %v2775 = vpack.c.b16 %v2185, %v2184
    %v2776 = vpack.c.b16 %v2187, %v2186
    %v2777 = vpack.c.b16 %v2189, %v2188
    %v2778 = vpack.c.b16 %v2191, %v2190
    %v2779 = vpack.c.b16 %v2193, %v2192
    %v2780 = vpack.c.b16 %v2195, %v2194
    %v2781 = vpack.c.b16 %v2197, %v2196
    %v2782 = vpack.c.b16 %v2199, %v2198
    %v2783 = vpack.c.b16 %v2201, %v2200
    %v2784 = vpack.c.b16 %v2203, %v2202
    %v2785 = vpack.c.b16 %v2205, %v2204
    %v2786 = vpack.c.b16 %v2207, %v2206
    %v2787 = vpack.c.b16 %v2209, %v2208
    %v2788 = vpack.c.b16 %v2211, %v2210
    %v2789 = vpack.c.b16 %v2213, %v2212
    %v2790 = vpack.c.b16 %v2215, %v2214
    %v2791 = vpack.c.b16 %v2217, %v2216
    %v2792 = vpack.c.b16 %v2219, %v2218
    %v2793 = vpack.c.b16 %v2221, %v2220
    %v2794 = vpack.c.b16 %v2223, %v2222
    %v2795 = vpack.c.b16 %v2225, %v2224
    %v2796 = vpack.c.b16 %v2227, %v2226
    %v2797 = vpack.c.b16 %v2229, %v2228
    %v2798 = vpack.c.b16 %v2231, %v2230
    %v2799 = vpack.c.b16 %v2233, %v2232
    %v2800 = vpack.c.b16 %v2235, %v2234
    %v2801 = vpack.c.b16 %v2237, %v2236
    %v2802 = vpack.c.b16 %v2239, %v2238
    %v2803 = vpack.c.b16 %v2241, %v2240
    %v2804 = vpack.c.b16 %v2243, %v2242
    %v2805 = vpack.c.b16 %v2245, %v2244
    %v2806 = vpack.c.b16 %v2247, %v2246
    %v2807 = vpack.c.b16 %v2249, %v2248
    %v2808 = vpack.c.b16 %v2251, %v2250
    %v2809 = vpack.c.b16 %v2253, %v2252
    %v2810 = vpack.c.b16 %v2255, %v2254
    %v2811 = vpack.c.b16 %v2257, %v2256
    %v2812 = vpack.c.b16 %v2259, %v2258
    %v2813 = vpack.c.b16 %v2261, %v2260
    %v2814 = vpack.c.b16 %v2263, %v2262
    %v2815 = vpack.c.b16 %v2265, %v2264
    %v2816 = vpack.c.b16 %v2267, %v2266
    %v2817 = vpack.c.b16 %v2269, %v2268
    %v2818 = vpack.c.b16 %v2271, %v2270
    %v2819 = vpack.c.b16 %v2273, %v2272
    %v2820 = vpack.c.b16 %v2275, %v2274
    %v2821 = vpack.c.b16 %v2277, %v2276
    %v2822 = vpack.c.b16 %v2279, %v2278
    %v2823 = vpack.c.b16 %v2281, %v2280
    %v2824 = vpack.c.b16 %v2283, %v2282
    %v2825 = vpack.c.b16 %v2285, %v2284
    %v2826 = vpack.c.b16 %v2287, %v2286
    %v2827 = vpack.c.b16 %v2289, %v2288
    %v2828 = vpack.c.b16 %v2291, %v2290
    %v2829 = vpack.c.b16 %v2293, %v2292
    %v2830 = vpack.c.b16 %v2295, %v2294
    %v2831 = vpack.c.b16 %v2297, %v2296
    %v2832 = vpack.c.b16 %v2299, %v2298
    %v2833 = vpack.c.b16 %v2301, %v2300
    %v2834 = vpack.c.b16 %v2303, %v2302
    %v2835 = vpack.c.b16 %v2305, %v2304
    %v2836 = vpack.c.b16 %v2307, %v2306
    %v2837 = vpack.c.b16 %v2309, %v2308
    %v2838 = vpack.c.b16 %v2311, %v2310
    %v2839 = vpack.c.b16 %v2313, %v2312
    %v2840 = vpack.c.b16 %v2315, %v2314
    %v2841 = vpack.c.b16 %v2317, %v2316
    %v2842 = vpack.c.b16 %v2319, %v2318
    %v2843 = vpack.c.b16 %v2321, %v2320
    %v2844 = vpack.c.b16 %v2323, %v2322
    %v2845 = vpack.c.b16 %v2325, %v2324
    %v2846 = vpack.c.b16 %v2327, %v2326
    %v2847 = vpack.c.b16 %v2329, %v2328
    %v2848 = vpack.c.b16 %v2331, %v2330
    %v2849 = vpack.c.b16 %v2333, %v2332
    %v2850 = vpack.c.b16 %v2335, %v2334
    %v2851 = vpack.c.b16 %v2337, %v2336
    %v2852 = vpack.c.b16 %v2339, %v2338
    %v2853 = vpack.c.b16 %v2341, %v2340
    %v2854 = vpack.c.b16 %v2343, %v2342
    %v2855 = vpack.c.b16 %v2345, %v2344
    %v2856 = vpack.c.b16 %v2347, %v2346
    %v2857 = vpack.c.b16 %v2349, %v2348
    %v2858 = vpack.c.b16 %v2351, %v2350
    %v2859 = vpack.c.b16 %v2353, %v2352
    %v2860 = vpack.c.b16 %v2355, %v2354
    %v2861 = vpack.c.b16 %v2357, %v2356
    %v2862 = vpack.c.b16 %v2359, %v2358
    %v2863 = vpack.c.b16 %v2361, %v2360
    %v2864 = vpack.c.b16 %v2363, %v2362
    %v2865 = vpack.c.b16 %v2365, %v2364
    %v2866 = vpack.c.b16 %v2367, %v2366
    %v2867 = vpack.c.b16 %v2369, %v2368
    %v2868 = vpack.c.b16 %v2371, %v2370
    %v2869 = vpack.c.b16 %v2373, %v2372
    %v2870 = vpack.c.b16 %v2375, %v2374
    %v2871 = vpack.c.b16 %v2377, %v2376
    %v2872 = vpack.c.b16 %v2379, %v2378
    %v2873 = vpack.c.b16 %v2381, %v2380
    %v2874 = vpack.c.b16 %v2383, %v2382
    %v2875 = vpack.c.b16 %v2385, %v2384
    %v2876 = vpack.c.b16 %v2387, %v2386
    %v2877 = vpack.c.b16 %v2389, %v2388
    %v2878 = vpack.c.b16 %v2391, %v2390
    %v2879 = vpack.c.b16 %v2393, %v2392
    %v2880 = vpack.c.b16 %v2395, %v2394
    %v2881 = vpack.c.b16 %v2397, %v2396
    %v2882 = vpack.c.b16 %v2399, %v2398
    %v2883 = vpack.c.b16 %v2401, %v2400
    %v2884 = vpack.c.b16 %v2403, %v2402
    %v2885 = vpack.c.b16 %v2405, %v2404
    %v2886 = vpack.c.b16 %v2407, %v2406
    %v2887 = vpack.c.b16 %v2409, %v2408
    %v2888 = vpack.c.b16 %v2411, %v2410
    %v2889 = vpack.c.b16 %v2413, %v2412
    %v2890 = vpack.c.b16 %v2415, %v2414
    %v2891 = vpack.c.b16 %v2417, %v2416
    %v2892 = vpack.c.b16 %v2419, %v2418
    %v2893 = vpack.c.b16 %v2421, %v2420
    %v2894 = vpack.c.b16 %v2423, %v2422
    %v2895 = vpack.c.b16 %v2425, %v2424
    %v2896 = vpack.c.b16 %v2427, %v2426
    %v2897 = vpack.c.b16 %v2429, %v2428
    %v2898 = vpack.c.b16 %v2431, %v2430
    %v2899 = vpack.c.b16 %v2433, %v2432
    %v2900 = vpack.c.b16 %v2435, %v2434
    %v2901 = vpack.c.b16 %v2437, %v2436
    %v2902 = vpack.c.b16 %v2439, %v2438
    %v2903 = vpack.c.b16 %v2441, %v2440
    %v2904 = vpack.c.b16 %v2443, %v2442
    %v2905 = vpack.c.b16 %v2445, %v2444
    %v2906 = vpack.c.b16 %v2447, %v2446
    %v2907 = vpack.c.b16 %v2449, %v2448
    %v2908 = vpack.c.b16 %v2451, %v2450
    %v2909 = vpack.c.b16 %v2453, %v2452
    %v2910 = vpack.c.b16 %v2455, %v2454
    %v2911 = vpack.c.b16 %v2457, %v2456
    %v2912 = vpack.c.b16 %v2459, %v2458
    %v2913 = vpack.c.b16 %v2461, %v2460
    %v2914 = vpack.c.b16 %v2463, %v2462
    %v2915 = vpack.c.b16 %v2465, %v2464
    %v2916 = vpack.c.b16 %v2467, %v2466
    %v2917 = vpack.c.b16 %v2469, %v2468
    %v2918 = vpack.c.b16 %v2471, %v2470
    %v2919 = vpack.c.b16 %v2473, %v2472
    %v2920 = vpack.c.b16 %v2475, %v2474
    %v2921 = vpack.c.b16 %v2477, %v2476
    %v2922 = vpack.c.b16 %v2479, %v2478
    %v2923 = vpack.c.b16 %v2481, %v2480
    %v2924 = vpack.c.b16 %v2483, %v2482
    %v2925 = vpack.c.b16 %v2485, %v2484
    %v2926 = vpack.c.b16 %v2487, %v2486
    %v2927 = vpack.c.b16 %v2489, %v2488
    %v2928 = vpack.c.b16 %v2491, %v2490
    %v2929 = vpack.c.b16 %v2493, %v2492
    %v2930 = vpack.c.b16 %v2495, %v2494
    %v2931 = vpack.c.b16 %v2497, %v2496
    %v2932 = vpack.c.b16 %v2499, %v2498
    %v2933 = vpack.c.b16 %v2501, %v2500
    %v2934 = vpack.c.b16 %v2503, %v2502
    %v2935 = vpack.c.b16 %v2505, %v2504
    %v2936 = vpack.c.b16 %v2507, %v2506
    %v2937 = vpack.c.b16 %v2509, %v2508
    %v2938 = vpack.c.b16 %v2511, %v2510
    %v2939 = vpack.c.b16 %v2513, %v2512
    %v2940 = vpack.c.b16 %v2515, %v2514
    %v2941 = vpack.c.b16 %v2517, %v2516
    %v2942 = vpack.c.b16 %v2519, %v2518
    %v2943 = vpack.c.b16 %v2521, %v2520
    %v2944 = vpack.c.b16 %v2523, %v2522
    %v2945 = vpack.c.b16 %v2525, %v2524
    %v2946 = vpack.c.b16 %v2527, %v2526
    %v2947 = vpack.c.b16 %v2529, %v2528
    %v2948 = vpack.c.b16 %v2531, %v2530
    %v2949 = vpack.c.b16 %v2533, %v2532
    %v2950 = vpack.c.b16 %v2535, %v2534
    %v2951 = vpack.c.b16 %v2537, %v2536
    %v2952 = vpack.c.b16 %v2539, %v2538
    %v2953 = vpack.c.b16 %v2541, %v2540
    %v2954 = vpack.c.b16 %v2543, %v2542
    %v2955 = vpack.c.b16 %v2545, %v2544
    %v2956 = vpack.c.b16 %v2547, %v2546
    %v2957 = vpack.c.b16 %v2549, %v2548
    %v2958 = vpack.c.b16 %v2551, %v2550
    %v2959 = vpack.c.b16 %v2553, %v2552
    %v2960 = vpack.c.b16 %v2555, %v2554
    %v2961 = vpack.c.b16 %v2557, %v2556
    %v2962 = vpack.c.b16 %v2559, %v2558
    %v2963 = vpack.c.b16 %v2561, %v2560
    %v2964 = vpack.c.b16 %v2563, %v2562
    %v2965 = vpack.c.b16 %v2565, %v2564
    %3366 = vmatpush.bf16.msra.mxu0 %v2573
    %3367 = vmatpush.bf16.msra.mxu0 %v2572
    %3368 = vmatpush.bf16.msra.mxu0 %v2571
    %3369 = vmatpush.bf16.msra.mxu0 %v2570
    %3370 = vmatpush.bf16.msra.mxu0 %v2569
    %3371 = vmatpush.bf16.msra.mxu0 %v2568
    %3372 = vmatpush.bf16.msra.mxu0 %v2567
    %3373 = vmatpush.bf16.msra.mxu0 %v2566
    %3374 = vmatmul.bf16.gmra.mxu0 %v844
    %v3375 = vpop.f32.mrf.mxu0
    %v3376 = vadd.f32 %v837, %v3375
    %v3377 = vpop.f32.mrf.mxu0
    %3378 = vdwg.mxu0
    %3379 = vmatpush.bf16.msra.mxu0 %v2581
    %3380 = vmatpush.bf16.msra.mxu0 %v2580
    %3381 = vmatpush.bf16.msra.mxu0 %v2579
    %3382 = vmatpush.bf16.msra.mxu0 %v2578
    %3383 = vmatpush.bf16.msra.mxu0 %v2577
    %3384 = vmatpush.bf16.msra.mxu0 %v2576
    %3385 = vmatpush.bf16.msra.mxu0 %v2575
    %3386 = vmatpush.bf16.msra.mxu0 %v2574
    %3387 = vmatmul.bf16.gmra.mxu0 %v845
    %v3388 = vpop.f32.mrf.mxu0
    %v3389 = vadd.f32 %v3376, %v3388
    %v3390 = vpop.f32.mrf.mxu0
    %3391 = vdwg.mxu0
    %3392 = vmatpush.bf16.msra.mxu0 %v2589
    %3393 = vmatpush.bf16.msra.mxu0 %v2588
    %3394 = vmatpush.bf16.msra.mxu0 %v2587
    %3395 = vmatpush.bf16.msra.mxu0 %v2586
    %3396 = vmatpush.bf16.msra.mxu0 %v2585
    %3397 = vmatpush.bf16.msra.mxu0 %v2584
    %3398 = vmatpush.bf16.msra.mxu0 %v2583
    %3399 = vmatpush.bf16.msra.mxu0 %v2582
    %3400 = vmatmul.bf16.gmra.mxu0 %v846
    %v3401 = vpop.f32.mrf.mxu0
    %v3402 = vadd.f32 %v3389, %v3401
    %v3403 = vpop.f32.mrf.mxu0
    %3404 = vdwg.mxu0
    %3405 = vmatpush.bf16.msra.mxu0 %v2597
    %3406 = vmatpush.bf16.msra.mxu0 %v2596
    %3407 = vmatpush.bf16.msra.mxu0 %v2595
    %3408 = vmatpush.bf16.msra.mxu0 %v2594
    %3409 = vmatpush.bf16.msra.mxu0 %v2593
    %3410 = vmatpush.bf16.msra.mxu0 %v2592
    %3411 = vmatpush.bf16.msra.mxu0 %v2591
    %3412 = vmatpush.bf16.msra.mxu0 %v2590
    %3413 = vmatmul.bf16.gmra.mxu0 %v847
    %v3414 = vpop.f32.mrf.mxu0
    %v3415 = vadd.f32 %v3402, %v3414
    %v3416 = vpop.f32.mrf.mxu0
    %3417 = vdwg.mxu0
    %3418 = vmatpush.bf16.msra.mxu0 %v2605
    %3419 = vmatpush.bf16.msra.mxu0 %v2604
    %3420 = vmatpush.bf16.msra.mxu0 %v2603
    %3421 = vmatpush.bf16.msra.mxu0 %v2602
    %3422 = vmatpush.bf16.msra.mxu0 %v2601
    %3423 = vmatpush.bf16.msra.mxu0 %v2600
    %3424 = vmatpush.bf16.msra.mxu0 %v2599
    %3425 = vmatpush.bf16.msra.mxu0 %v2598
    %3426 = vmatmul.bf16.gmra.mxu0 %v848
    %v3427 = vpop.f32.mrf.mxu0
    %v3428 = vadd.f32 %v3415, %v3427
    %v3429 = vpop.f32.mrf.mxu0
    %3430 = vdwg.mxu0
    %3431 = vmatpush.bf16.msra.mxu0 %v2613
    %3432 = vmatpush.bf16.msra.mxu0 %v2612
    %3433 = vmatpush.bf16.msra.mxu0 %v2611
    %3434 = vmatpush.bf16.msra.mxu0 %v2610
    %3435 = vmatpush.bf16.msra.mxu0 %v2609
    %3436 = vmatpush.bf16.msra.mxu0 %v2608
    %3437 = vmatpush.bf16.msra.mxu0 %v2607
    %3438 = vmatpush.bf16.msra.mxu0 %v2606
    %3439 = vmatmul.bf16.gmra.mxu0 %v849
    %v3440 = vpop.f32.mrf.mxu0
    %v3441 = vadd.f32 %v3428, %v3440
    %v3442 = vpop.f32.mrf.mxu0
    %3443 = vdwg.mxu0
    %3444 = vmatpush.bf16.msra.mxu0 %v2621
    %3445 = vmatpush.bf16.msra.mxu0 %v2620
    %3446 = vmatpush.bf16.msra.mxu0 %v2619
    %3447 = vmatpush.bf16.msra.mxu0 %v2618
    %3448 = vmatpush.bf16.msra.mxu0 %v2617
    %3449 = vmatpush.bf16.msra.mxu0 %v2616
    %3450 = vmatpush.bf16.msra.mxu0 %v2615
    %3451 = vmatpush.bf16.msra.mxu0 %v2614
    %3452 = vmatmul.bf16.gmra.mxu0 %v850
    %v3453 = vpop.f32.mrf.mxu0
    %v3454 = vadd.f32 %v3441, %v3453
    %v3455 = vpop.f32.mrf.mxu0
    %3456 = vdwg.mxu0
    %3457 = vmatpush.bf16.msra.mxu0 %v2629
    %3458 = vmatpush.bf16.msra.mxu0 %v2628
    %3459 = vmatpush.bf16.msra.mxu0 %v2627
    %3460 = vmatpush.bf16.msra.mxu0 %v2626
    %3461 = vmatpush.bf16.msra.mxu0 %v2625
    %3462 = vmatpush.bf16.msra.mxu0 %v2624
    %3463 = vmatpush.bf16.msra.mxu0 %v2623
    %3464 = vmatpush.bf16.msra.mxu0 %v2622
    %3465 = vmatmul.bf16.gmra.mxu0 %v851
    %v3466 = vpop.f32.mrf.mxu0
    %v3467 = vadd.f32 %v3454, %v3466
    %v3468 = vpop.f32.mrf.mxu0
    %3469 = vdwg.mxu0
    %3470 = vmatpush.bf16.msra.mxu0 %v2637
    %3471 = vmatpush.bf16.msra.mxu0 %v2636
    %3472 = vmatpush.bf16.msra.mxu0 %v2635
    %3473 = vmatpush.bf16.msra.mxu0 %v2634
    %3474 = vmatpush.bf16.msra.mxu0 %v2633
    %3475 = vmatpush.bf16.msra.mxu0 %v2632
    %3476 = vmatpush.bf16.msra.mxu0 %v2631
    %3477 = vmatpush.bf16.msra.mxu0 %v2630
    %3478 = vmatmul.bf16.gmra.mxu0 %v856
    %v3479 = vpop.f32.mrf.mxu0
    %v3480 = vadd.f32 %v3467, %v3479
    %v3481 = vpop.f32.mrf.mxu0
    %3482 = vdwg.mxu0
    %3483 = vmatpush.bf16.msra.mxu0 %v2645
    %3484 = vmatpush.bf16.msra.mxu0 %v2644
    %3485 = vmatpush.bf16.msra.mxu0 %v2643
    %3486 = vmatpush.bf16.msra.mxu0 %v2642
    %3487 = vmatpush.bf16.msra.mxu0 %v2641
    %3488 = vmatpush.bf16.msra.mxu0 %v2640
    %3489 = vmatpush.bf16.msra.mxu0 %v2639
    %3490 = vmatpush.bf16.msra.mxu0 %v2638
    %3491 = vmatmul.bf16.gmra.mxu0 %v857
    %v3492 = vpop.f32.mrf.mxu0
    %v3493 = vadd.f32 %v3480, %v3492
    %v3494 = vpop.f32.mrf.mxu0
    %3495 = vdwg.mxu0
    %3496 = vmatpush.bf16.msra.mxu0 %v2653
    %3497 = vmatpush.bf16.msra.mxu0 %v2652
    %3498 = vmatpush.bf16.msra.mxu0 %v2651
    %3499 = vmatpush.bf16.msra.mxu0 %v2650
    %3500 = vmatpush.bf16.msra.mxu0 %v2649
    %3501 = vmatpush.bf16.msra.mxu0 %v2648
    %3502 = vmatpush.bf16.msra.mxu0 %v2647
    %3503 = vmatpush.bf16.msra.mxu0 %v2646
    %3504 = vmatmul.bf16.gmra.mxu0 %v858
    %v3505 = vpop.f32.mrf.mxu0
    %v3506 = vadd.f32 %v3493, %v3505
    %v3507 = vpop.f32.mrf.mxu0
    %3508 = vdwg.mxu0
    %3509 = vmatpush.bf16.msra.mxu0 %v2661
    %3510 = vmatpush.bf16.msra.mxu0 %v2660
    %3511 = vmatpush.bf16.msra.mxu0 %v2659
    %3512 = vmatpush.bf16.msra.mxu0 %v2658
    %3513 = vmatpush.bf16.msra.mxu0 %v2657
    %3514 = vmatpush.bf16.msra.mxu0 %v2656
    %3515 = vmatpush.bf16.msra.mxu0 %v2655
    %3516 = vmatpush.bf16.msra.mxu0 %v2654
    %3517 = vmatmul.bf16.gmra.mxu0 %v859
    %v3518 = vpop.f32.mrf.mxu0
    %v3519 = vadd.f32 %v3506, %v3518
    %v3520 = vpop.f32.mrf.mxu0
    %3521 = vdwg.mxu0
    %3522 = vmatpush.bf16.msra.mxu0 %v2669
    %3523 = vmatpush.bf16.msra.mxu0 %v2668
    %3524 = vmatpush.bf16.msra.mxu0 %v2667
    %3525 = vmatpush.bf16.msra.mxu0 %v2666
    %3526 = vmatpush.bf16.msra.mxu0 %v2665
    %3527 = vmatpush.bf16.msra.mxu0 %v2664
    %3528 = vmatpush.bf16.msra.mxu0 %v2663
    %3529 = vmatpush.bf16.msra.mxu0 %v2662
    %3530 = vmatmul.bf16.gmra.mxu0 %v860
    %v3531 = vpop.f32.mrf.mxu0
    %v3532 = vadd.f32 %v3519, %v3531
    %v3533 = vpop.f32.mrf.mxu0
    %3534 = vdwg.mxu0
    %3535 = vmatpush.bf16.msra.mxu0 %v2677
    %3536 = vmatpush.bf16.msra.mxu0 %v2676
    %3537 = vmatpush.bf16.msra.mxu0 %v2675
    %3538 = vmatpush.bf16.msra.mxu0 %v2674
    %3539 = vmatpush.bf16.msra.mxu0 %v2673
    %3540 = vmatpush.bf16.msra.mxu0 %v2672
    %3541 = vmatpush.bf16.msra.mxu0 %v2671
    %3542 = vmatpush.bf16.msra.mxu0 %v2670
    %3543 = vmatmul.bf16.gmra.mxu0 %v861
    %v3544 = vpop.f32.mrf.mxu0
    %v3545 = vadd.f32 %v3532, %v3544
    %v3546 = vpop.f32.mrf.mxu0
    %3547 = vdwg.mxu0
    %3548 = vmatpush.bf16.msra.mxu0 %v2685
    %3549 = vmatpush.bf16.msra.mxu0 %v2684
    %3550 = vmatpush.bf16.msra.mxu0 %v2683
    %3551 = vmatpush.bf16.msra.mxu0 %v2682
    %3552 = vmatpush.bf16.msra.mxu0 %v2681
    %3553 = vmatpush.bf16.msra.mxu0 %v2680
    %3554 = vmatpush.bf16.msra.mxu0 %v2679
    %3555 = vmatpush.bf16.msra.mxu0 %v2678
    %3556 = vmatmul.bf16.gmra.mxu0 %v862
    %v3557 = vpop.f32.mrf.mxu0
    %v3558 = vadd.f32 %v3545, %v3557
    %v3559 = vpop.f32.mrf.mxu0
    %3560 = vdwg.mxu0
    %3561 = vmatpush.bf16.msra.mxu0 %v2693
    %3562 = vmatpush.bf16.msra.mxu0 %v2692
    %3563 = vmatpush.bf16.msra.mxu0 %v2691
    %3564 = vmatpush.bf16.msra.mxu0 %v2690
    %3565 = vmatpush.bf16.msra.mxu0 %v2689
    %3566 = vmatpush.bf16.msra.mxu0 %v2688
    %3567 = vmatpush.bf16.msra.mxu0 %v2687
    %3568 = vmatpush.bf16.msra.mxu0 %v2686
    %3569 = vmatmul.bf16.gmra.mxu0 %v863
    %v3570 = vpop.f32.mrf.mxu0
    %v3571 = vadd.f32 %v3558, %v3570
    %v3572 = vpop.f32.mrf.mxu0
    %3573 = vdwg.mxu0
    %3574 = vmatpush.bf16.msra.mxu0 %v2701
    %3575 = vmatpush.bf16.msra.mxu0 %v2700
    %3576 = vmatpush.bf16.msra.mxu0 %v2699
    %3577 = vmatpush.bf16.msra.mxu0 %v2698
    %3578 = vmatpush.bf16.msra.mxu0 %v2697
    %3579 = vmatpush.bf16.msra.mxu0 %v2696
    %3580 = vmatpush.bf16.msra.mxu0 %v2695
    %3581 = vmatpush.bf16.msra.mxu0 %v2694
    %3582 = vmatmul.bf16.gmra.mxu0 %v868
    %v3583 = vpop.f32.mrf.mxu0
    %v3584 = vadd.f32 %v3571, %v3583
    %v3585 = vpop.f32.mrf.mxu0
    %3586 = vdwg.mxu0
    %3587 = vmatpush.bf16.msra.mxu0 %v2709
    %3588 = vmatpush.bf16.msra.mxu0 %v2708
    %3589 = vmatpush.bf16.msra.mxu0 %v2707
    %3590 = vmatpush.bf16.msra.mxu0 %v2706
    %3591 = vmatpush.bf16.msra.mxu0 %v2705
    %3592 = vmatpush.bf16.msra.mxu0 %v2704
    %3593 = vmatpush.bf16.msra.mxu0 %v2703
    %3594 = vmatpush.bf16.msra.mxu0 %v2702
    %3595 = vmatmul.bf16.gmra.mxu0 %v869
    %v3596 = vpop.f32.mrf.mxu0
    %v3597 = vadd.f32 %v3584, %v3596
    %v3598 = vpop.f32.mrf.mxu0
    %3599 = vdwg.mxu0
    %3600 = vmatpush.bf16.msra.mxu0 %v2717
    %3601 = vmatpush.bf16.msra.mxu0 %v2716
    %3602 = vmatpush.bf16.msra.mxu0 %v2715
    %3603 = vmatpush.bf16.msra.mxu0 %v2714
    %3604 = vmatpush.bf16.msra.mxu0 %v2713
    %3605 = vmatpush.bf16.msra.mxu0 %v2712
    %3606 = vmatpush.bf16.msra.mxu0 %v2711
    %3607 = vmatpush.bf16.msra.mxu0 %v2710
    %3608 = vmatmul.bf16.gmra.mxu0 %v870
    %v3609 = vpop.f32.mrf.mxu0
    %v3610 = vadd.f32 %v3597, %v3609
    %v3611 = vpop.f32.mrf.mxu0
    %3612 = vdwg.mxu0
    %3613 = vmatpush.bf16.msra.mxu0 %v2725
    %3614 = vmatpush.bf16.msra.mxu0 %v2724
    %3615 = vmatpush.bf16.msra.mxu0 %v2723
    %3616 = vmatpush.bf16.msra.mxu0 %v2722
    %3617 = vmatpush.bf16.msra.mxu0 %v2721
    %3618 = vmatpush.bf16.msra.mxu0 %v2720
    %3619 = vmatpush.bf16.msra.mxu0 %v2719
    %3620 = vmatpush.bf16.msra.mxu0 %v2718
    %3621 = vmatmul.bf16.gmra.mxu0 %v871
    %v3622 = vpop.f32.mrf.mxu0
    %v3623 = vadd.f32 %v3610, %v3622
    %v3624 = vpop.f32.mrf.mxu0
    %3625 = vdwg.mxu0
    %3626 = vmatpush.bf16.msra.mxu0 %v2733
    %3627 = vmatpush.bf16.msra.mxu0 %v2732
    %3628 = vmatpush.bf16.msra.mxu0 %v2731
    %3629 = vmatpush.bf16.msra.mxu0 %v2730
    %3630 = vmatpush.bf16.msra.mxu0 %v2729
    %3631 = vmatpush.bf16.msra.mxu0 %v2728
    %3632 = vmatpush.bf16.msra.mxu0 %v2727
    %3633 = vmatpush.bf16.msra.mxu0 %v2726
    %3634 = vmatmul.bf16.gmra.mxu0 %v872
    %v3635 = vpop.f32.mrf.mxu0
    %v3636 = vadd.f32 %v3623, %v3635
    %v3637 = vpop.f32.mrf.mxu0
    %3638 = vdwg.mxu0
    %3639 = vmatpush.bf16.msra.mxu0 %v2741
    %3640 = vmatpush.bf16.msra.mxu0 %v2740
    %3641 = vmatpush.bf16.msra.mxu0 %v2739
    %3642 = vmatpush.bf16.msra.mxu0 %v2738
    %3643 = vmatpush.bf16.msra.mxu0 %v2737
    %3644 = vmatpush.bf16.msra.mxu0 %v2736
    %3645 = vmatpush.bf16.msra.mxu0 %v2735
    %3646 = vmatpush.bf16.msra.mxu0 %v2734
    %3647 = vmatmul.bf16.gmra.mxu0 %v873
    %v3648 = vpop.f32.mrf.mxu0
    %v3649 = vadd.f32 %v3636, %v3648
    %v3650 = vpop.f32.mrf.mxu0
    %3651 = vdwg.mxu0
    %3652 = vmatpush.bf16.msra.mxu0 %v2749
    %3653 = vmatpush.bf16.msra.mxu0 %v2748
    %3654 = vmatpush.bf16.msra.mxu0 %v2747
    %3655 = vmatpush.bf16.msra.mxu0 %v2746
    %3656 = vmatpush.bf16.msra.mxu0 %v2745
    %3657 = vmatpush.bf16.msra.mxu0 %v2744
    %3658 = vmatpush.bf16.msra.mxu0 %v2743
    %3659 = vmatpush.bf16.msra.mxu0 %v2742
    %3660 = vmatmul.bf16.gmra.mxu0 %v874
    %v3661 = vpop.f32.mrf.mxu0
    %v3662 = vadd.f32 %v3649, %v3661
    %v3663 = vpop.f32.mrf.mxu0
    %3664 = vdwg.mxu0
    %3665 = vmatpush.bf16.msra.mxu0 %v2757
    %3666 = vmatpush.bf16.msra.mxu0 %v2756
    %3667 = vmatpush.bf16.msra.mxu0 %v2755
    %3668 = vmatpush.bf16.msra.mxu0 %v2754
    %3669 = vmatpush.bf16.msra.mxu0 %v2753
    %3670 = vmatpush.bf16.msra.mxu0 %v2752
    %3671 = vmatpush.bf16.msra.mxu0 %v2751
    %3672 = vmatpush.bf16.msra.mxu0 %v2750
    %3673 = vmatmul.bf16.gmra.mxu0 %v875
    %v3674 = vpop.f32.mrf.mxu0
    %v3675 = vadd.f32 %v3662, %v3674
    %v3676 = vpop.f32.mrf.mxu0
    %3677 = vdwg.mxu0
    %3678 = vmatpush.bf16.msra.mxu0 %v2765
    %3679 = vmatpush.bf16.msra.mxu0 %v2764
    %3680 = vmatpush.bf16.msra.mxu0 %v2763
    %3681 = vmatpush.bf16.msra.mxu0 %v2762
    %3682 = vmatpush.bf16.msra.mxu0 %v2761
    %3683 = vmatpush.bf16.msra.mxu0 %v2760
    %3684 = vmatpush.bf16.msra.mxu0 %v2759
    %3685 = vmatpush.bf16.msra.mxu0 %v2758
    %3686 = vmatmul.bf16.gmra.mxu0 %v880
    %v3687 = vpop.f32.mrf.mxu0
    %v3688 = vadd.f32 %v3675, %v3687
    %v3689 = vpop.f32.mrf.mxu0
    %3690 = vdwg.mxu0
    %3691 = vmatpush.bf16.msra.mxu0 %v2773
    %3692 = vmatpush.bf16.msra.mxu0 %v2772
    %3693 = vmatpush.bf16.msra.mxu0 %v2771
    %3694 = vmatpush.bf16.msra.mxu0 %v2770
    %3695 = vmatpush.bf16.msra.mxu0 %v2769
    %3696 = vmatpush.bf16.msra.mxu0 %v2768
    %3697 = vmatpush.bf16.msra.mxu0 %v2767
    %3698 = vmatpush.bf16.msra.mxu0 %v2766
    %3699 = vmatmul.bf16.gmra.mxu0 %v881
    %v3700 = vpop.f32.mrf.mxu0
    %v3701 = vadd.f32 %v3688, %v3700
    %v3702 = vpop.f32.mrf.mxu0
    %3703 = vdwg.mxu0
    %3704 = vmatpush.bf16.msra.mxu0 %v2781
    %3705 = vmatpush.bf16.msra.mxu0 %v2780
    %3706 = vmatpush.bf16.msra.mxu0 %v2779
    %3707 = vmatpush.bf16.msra.mxu0 %v2778
    %3708 = vmatpush.bf16.msra.mxu0 %v2777
    %3709 = vmatpush.bf16.msra.mxu0 %v2776
    %3710 = vmatpush.bf16.msra.mxu0 %v2775
    %3711 = vmatpush.bf16.msra.mxu0 %v2774
    %3712 = vmatmul.bf16.gmra.mxu0 %v882
    %v3713 = vpop.f32.mrf.mxu0
    %v3714 = vadd.f32 %v3701, %v3713
    %v3715 = vpop.f32.mrf.mxu0
    %3716 = vdwg.mxu0
    %3717 = vmatpush.bf16.msra.mxu0 %v2789
    %3718 = vmatpush.bf16.msra.mxu0 %v2788
    %3719 = vmatpush.bf16.msra.mxu0 %v2787
    %3720 = vmatpush.bf16.msra.mxu0 %v2786
    %3721 = vmatpush.bf16.msra.mxu0 %v2785
    %3722 = vmatpush.bf16.msra.mxu0 %v2784
    %3723 = vmatpush.bf16.msra.mxu0 %v2783
    %3724 = vmatpush.bf16.msra.mxu0 %v2782
    %3725 = vmatmul.bf16.gmra.mxu0 %v883
    %v3726 = vpop.f32.mrf.mxu0
    %v3727 = vadd.f32 %v3714, %v3726
    %v3728 = vpop.f32.mrf.mxu0
    %3729 = vdwg.mxu0
    %3730 = vmatpush.bf16.msra.mxu0 %v2797
    %3731 = vmatpush.bf16.msra.mxu0 %v2796
    %3732 = vmatpush.bf16.msra.mxu0 %v2795
    %3733 = vmatpush.bf16.msra.mxu0 %v2794
    %3734 = vmatpush.bf16.msra.mxu0 %v2793
    %3735 = vmatpush.bf16.msra.mxu0 %v2792
    %3736 = vmatpush.bf16.msra.mxu0 %v2791
    %3737 = vmatpush.bf16.msra.mxu0 %v2790
    %3738 = vmatmul.bf16.gmra.mxu0 %v884
    %v3739 = vpop.f32.mrf.mxu0
    %v3740 = vadd.f32 %v3727, %v3739
    %v3741 = vpop.f32.mrf.mxu0
    %3742 = vdwg.mxu0
    %3743 = vmatpush.bf16.msra.mxu0 %v2805
    %3744 = vmatpush.bf16.msra.mxu0 %v2804
    %3745 = vmatpush.bf16.msra.mxu0 %v2803
    %3746 = vmatpush.bf16.msra.mxu0 %v2802
    %3747 = vmatpush.bf16.msra.mxu0 %v2801
    %3748 = vmatpush.bf16.msra.mxu0 %v2800
    %3749 = vmatpush.bf16.msra.mxu0 %v2799
    %3750 = vmatpush.bf16.msra.mxu0 %v2798
    %3751 = vmatmul.bf16.gmra.mxu0 %v885
    %v3752 = vpop.f32.mrf.mxu0
    %v3753 = vadd.f32 %v3740, %v3752
    %v3754 = vpop.f32.mrf.mxu0
    %3755 = vdwg.mxu0
    %3756 = vmatpush.bf16.msra.mxu0 %v2813
    %3757 = vmatpush.bf16.msra.mxu0 %v2812
    %3758 = vmatpush.bf16.msra.mxu0 %v2811
    %3759 = vmatpush.bf16.msra.mxu0 %v2810
    %3760 = vmatpush.bf16.msra.mxu0 %v2809
    %3761 = vmatpush.bf16.msra.mxu0 %v2808
    %3762 = vmatpush.bf16.msra.mxu0 %v2807
    %3763 = vmatpush.bf16.msra.mxu0 %v2806
    %3764 = vmatmul.bf16.gmra.mxu0 %v886
    %v3765 = vpop.f32.mrf.mxu0
    %v3766 = vadd.f32 %v3753, %v3765
    %v3767 = vpop.f32.mrf.mxu0
    %3768 = vdwg.mxu0
    %3769 = vmatpush.bf16.msra.mxu0 %v2821
    %3770 = vmatpush.bf16.msra.mxu0 %v2820
    %3771 = vmatpush.bf16.msra.mxu0 %v2819
    %3772 = vmatpush.bf16.msra.mxu0 %v2818
    %3773 = vmatpush.bf16.msra.mxu0 %v2817
    %3774 = vmatpush.bf16.msra.mxu0 %v2816
    %3775 = vmatpush.bf16.msra.mxu0 %v2815
    %3776 = vmatpush.bf16.msra.mxu0 %v2814
    %3777 = vmatmul.bf16.gmra.mxu0 %v887
    %v3778 = vpop.f32.mrf.mxu0
    %v3779 = vadd.f32 %v3766, %v3778
    %v3780 = vpop.f32.mrf.mxu0
    %3781 = vdwg.mxu0
    %3782 = vmatpush.bf16.msra.mxu0 %v2829
    %3783 = vmatpush.bf16.msra.mxu0 %v2828
    %3784 = vmatpush.bf16.msra.mxu0 %v2827
    %3785 = vmatpush.bf16.msra.mxu0 %v2826
    %3786 = vmatpush.bf16.msra.mxu0 %v2825
    %3787 = vmatpush.bf16.msra.mxu0 %v2824
    %3788 = vmatpush.bf16.msra.mxu0 %v2823
    %3789 = vmatpush.bf16.msra.mxu0 %v2822
    %3790 = vmatmul.bf16.gmra.mxu0 %v892
    %v3791 = vpop.f32.mrf.mxu0
    %v3792 = vadd.f32 %v3779, %v3791
    %v3793 = vpop.f32.mrf.mxu0
    %3794 = vdwg.mxu0
    %3795 = vmatpush.bf16.msra.mxu0 %v2837
    %3796 = vmatpush.bf16.msra.mxu0 %v2836
    %3797 = vmatpush.bf16.msra.mxu0 %v2835
    %3798 = vmatpush.bf16.msra.mxu0 %v2834
    %3799 = vmatpush.bf16.msra.mxu0 %v2833
    %3800 = vmatpush.bf16.msra.mxu0 %v2832
    %3801 = vmatpush.bf16.msra.mxu0 %v2831
    %3802 = vmatpush.bf16.msra.mxu0 %v2830
    %3803 = vmatmul.bf16.gmra.mxu0 %v893
    %v3804 = vpop.f32.mrf.mxu0
    %v3805 = vadd.f32 %v3792, %v3804
    %v3806 = vpop.f32.mrf.mxu0
    %3807 = vdwg.mxu0
    %3808 = vmatpush.bf16.msra.mxu0 %v2845
    %3809 = vmatpush.bf16.msra.mxu0 %v2844
    %3810 = vmatpush.bf16.msra.mxu0 %v2843
    %3811 = vmatpush.bf16.msra.mxu0 %v2842
    %3812 = vmatpush.bf16.msra.mxu0 %v2841
    %3813 = vmatpush.bf16.msra.mxu0 %v2840
    %3814 = vmatpush.bf16.msra.mxu0 %v2839
    %3815 = vmatpush.bf16.msra.mxu0 %v2838
    %3816 = vmatmul.bf16.gmra.mxu0 %v894
    %v3817 = vpop.f32.mrf.mxu0
    %v3818 = vadd.f32 %v3805, %v3817
    %v3819 = vpop.f32.mrf.mxu0
    %3820 = vdwg.mxu0
    %3821 = vmatpush.bf16.msra.mxu0 %v2853
    %3822 = vmatpush.bf16.msra.mxu0 %v2852
    %3823 = vmatpush.bf16.msra.mxu0 %v2851
    %3824 = vmatpush.bf16.msra.mxu0 %v2850
    %3825 = vmatpush.bf16.msra.mxu0 %v2849
    %3826 = vmatpush.bf16.msra.mxu0 %v2848
    %3827 = vmatpush.bf16.msra.mxu0 %v2847
    %3828 = vmatpush.bf16.msra.mxu0 %v2846
    %3829 = vmatmul.bf16.gmra.mxu0 %v895
    %v3830 = vpop.f32.mrf.mxu0
    %v3831 = vadd.f32 %v3818, %v3830
    %v3832 = vpop.f32.mrf.mxu0
    %3833 = vdwg.mxu0
    %3834 = vmatpush.bf16.msra.mxu0 %v2861
    %3835 = vmatpush.bf16.msra.mxu0 %v2860
    %3836 = vmatpush.bf16.msra.mxu0 %v2859
    %3837 = vmatpush.bf16.msra.mxu0 %v2858
    %3838 = vmatpush.bf16.msra.mxu0 %v2857
    %3839 = vmatpush.bf16.msra.mxu0 %v2856
    %3840 = vmatpush.bf16.msra.mxu0 %v2855
    %3841 = vmatpush.bf16.msra.mxu0 %v2854
    %3842 = vmatmul.bf16.gmra.mxu0 %v896
    %v3843 = vpop.f32.mrf.mxu0
    %v3844 = vadd.f32 %v3831, %v3843
    %v3845 = vpop.f32.mrf.mxu0
    %3846 = vdwg.mxu0
    %3847 = vmatpush.bf16.msra.mxu0 %v2869
    %3848 = vmatpush.bf16.msra.mxu0 %v2868
    %3849 = vmatpush.bf16.msra.mxu0 %v2867
    %3850 = vmatpush.bf16.msra.mxu0 %v2866
    %3851 = vmatpush.bf16.msra.mxu0 %v2865
    %3852 = vmatpush.bf16.msra.mxu0 %v2864
    %3853 = vmatpush.bf16.msra.mxu0 %v2863
    %3854 = vmatpush.bf16.msra.mxu0 %v2862
    %3855 = vmatmul.bf16.gmra.mxu0 %v897
    %v3856 = vpop.f32.mrf.mxu0
    %v3857 = vadd.f32 %v3844, %v3856
    %v3858 = vpop.f32.mrf.mxu0
    %3859 = vdwg.mxu0
    %3860 = vmatpush.bf16.msra.mxu0 %v2877
    %3861 = vmatpush.bf16.msra.mxu0 %v2876
    %3862 = vmatpush.bf16.msra.mxu0 %v2875
    %3863 = vmatpush.bf16.msra.mxu0 %v2874
    %3864 = vmatpush.bf16.msra.mxu0 %v2873
    %3865 = vmatpush.bf16.msra.mxu0 %v2872
    %3866 = vmatpush.bf16.msra.mxu0 %v2871
    %3867 = vmatpush.bf16.msra.mxu0 %v2870
    %3868 = vmatmul.bf16.gmra.mxu0 %v898
    %v3869 = vpop.f32.mrf.mxu0
    %v3870 = vadd.f32 %v3857, %v3869
    %v3871 = vpop.f32.mrf.mxu0
    %3872 = vdwg.mxu0
    %3873 = vmatpush.bf16.msra.mxu0 %v2885
    %3874 = vmatpush.bf16.msra.mxu0 %v2884
    %3875 = vmatpush.bf16.msra.mxu0 %v2883
    %3876 = vmatpush.bf16.msra.mxu0 %v2882
    %3877 = vmatpush.bf16.msra.mxu0 %v2881
    %3878 = vmatpush.bf16.msra.mxu0 %v2880
    %3879 = vmatpush.bf16.msra.mxu0 %v2879
    %3880 = vmatpush.bf16.msra.mxu0 %v2878
    %3881 = vmatmul.bf16.gmra.mxu0 %v899
    %v3882 = vpop.f32.mrf.mxu0
    %v3883 = vadd.f32 %v3870, %v3882
    %v3884 = vpop.f32.mrf.mxu0
    %3885 = vdwg.mxu0
    %3886 = vmatpush.bf16.msra.mxu0 %v2893
    %3887 = vmatpush.bf16.msra.mxu0 %v2892
    %3888 = vmatpush.bf16.msra.mxu0 %v2891
    %3889 = vmatpush.bf16.msra.mxu0 %v2890
    %3890 = vmatpush.bf16.msra.mxu0 %v2889
    %3891 = vmatpush.bf16.msra.mxu0 %v2888
    %3892 = vmatpush.bf16.msra.mxu0 %v2887
    %3893 = vmatpush.bf16.msra.mxu0 %v2886
    %3894 = vmatmul.bf16.gmra.mxu0 %v904
    %v3895 = vpop.f32.mrf.mxu0
    %v3896 = vadd.f32 %v3883, %v3895
    %v3897 = vpop.f32.mrf.mxu0
    %3898 = vdwg.mxu0
    %3899 = vmatpush.bf16.msra.mxu0 %v2901
    %3900 = vmatpush.bf16.msra.mxu0 %v2900
    %3901 = vmatpush.bf16.msra.mxu0 %v2899
    %3902 = vmatpush.bf16.msra.mxu0 %v2898
    %3903 = vmatpush.bf16.msra.mxu0 %v2897
    %3904 = vmatpush.bf16.msra.mxu0 %v2896
    %3905 = vmatpush.bf16.msra.mxu0 %v2895
    %3906 = vmatpush.bf16.msra.mxu0 %v2894
    %3907 = vmatmul.bf16.gmra.mxu0 %v905
    %v3908 = vpop.f32.mrf.mxu0
    %v3909 = vadd.f32 %v3896, %v3908
    %v3910 = vpop.f32.mrf.mxu0
    %3911 = vdwg.mxu0
    %3912 = vmatpush.bf16.msra.mxu0 %v2909
    %3913 = vmatpush.bf16.msra.mxu0 %v2908
    %3914 = vmatpush.bf16.msra.mxu0 %v2907
    %3915 = vmatpush.bf16.msra.mxu0 %v2906
    %3916 = vmatpush.bf16.msra.mxu0 %v2905
    %3917 = vmatpush.bf16.msra.mxu0 %v2904
    %3918 = vmatpush.bf16.msra.mxu0 %v2903
    %3919 = vmatpush.bf16.msra.mxu0 %v2902
    %3920 = vmatmul.bf16.gmra.mxu0 %v906
    %v3921 = vpop.f32.mrf.mxu0
    %v3922 = vadd.f32 %v3909, %v3921
    %v3923 = vpop.f32.mrf.mxu0
    %3924 = vdwg.mxu0
    %3925 = vmatpush.bf16.msra.mxu0 %v2917
    %3926 = vmatpush.bf16.msra.mxu0 %v2916
    %3927 = vmatpush.bf16.msra.mxu0 %v2915
    %3928 = vmatpush.bf16.msra.mxu0 %v2914
    %3929 = vmatpush.bf16.msra.mxu0 %v2913
    %3930 = vmatpush.bf16.msra.mxu0 %v2912
    %3931 = vmatpush.bf16.msra.mxu0 %v2911
    %3932 = vmatpush.bf16.msra.mxu0 %v2910
    %3933 = vmatmul.bf16.gmra.mxu0 %v907
    %v3934 = vpop.f32.mrf.mxu0
    %v3935 = vadd.f32 %v3922, %v3934
    %v3936 = vpop.f32.mrf.mxu0
    %3937 = vdwg.mxu0
    %3938 = vmatpush.bf16.msra.mxu0 %v2925
    %3939 = vmatpush.bf16.msra.mxu0 %v2924
    %3940 = vmatpush.bf16.msra.mxu0 %v2923
    %3941 = vmatpush.bf16.msra.mxu0 %v2922
    %3942 = vmatpush.bf16.msra.mxu0 %v2921
    %3943 = vmatpush.bf16.msra.mxu0 %v2920
    %3944 = vmatpush.bf16.msra.mxu0 %v2919
    %3945 = vmatpush.bf16.msra.mxu0 %v2918
    %3946 = vmatmul.bf16.gmra.mxu0 %v908
    %v3947 = vpop.f32.mrf.mxu0
    %v3948 = vadd.f32 %v3935, %v3947
    %v3949 = vpop.f32.mrf.mxu0
    %3950 = vdwg.mxu0
    %3951 = vmatpush.bf16.msra.mxu0 %v2933
    %3952 = vmatpush.bf16.msra.mxu0 %v2932
    %3953 = vmatpush.bf16.msra.mxu0 %v2931
    %3954 = vmatpush.bf16.msra.mxu0 %v2930
    %3955 = vmatpush.bf16.msra.mxu0 %v2929
    %3956 = vmatpush.bf16.msra.mxu0 %v2928
    %3957 = vmatpush.bf16.msra.mxu0 %v2927
    %3958 = vmatpush.bf16.msra.mxu0 %v2926
    %3959 = vmatmul.bf16.gmra.mxu0 %v909
    %v3960 = vpop.f32.mrf.mxu0
    %v3961 = vadd.f32 %v3948, %v3960
    %v3962 = vpop.f32.mrf.mxu0
    %3963 = vdwg.mxu0
    %3964 = vmatpush.bf16.msra.mxu0 %v2941
    %3965 = vmatpush.bf16.msra.mxu0 %v2940
    %3966 = vmatpush.bf16.msra.mxu0 %v2939
    %3967 = vmatpush.bf16.msra.mxu0 %v2938
    %3968 = vmatpush.bf16.msra.mxu0 %v2937
    %3969 = vmatpush.bf16.msra.mxu0 %v2936
    %3970 = vmatpush.bf16.msra.mxu0 %v2935
    %3971 = vmatpush.bf16.msra.mxu0 %v2934
    %3972 = vmatmul.bf16.gmra.mxu0 %v910
    %v3973 = vpop.f32.mrf.mxu0
    %v3974 = vadd.f32 %v3961, %v3973
    %v3975 = vpop.f32.mrf.mxu0
    %3976 = vdwg.mxu0
    %3977 = vmatpush.bf16.msra.mxu0 %v2949
    %3978 = vmatpush.bf16.msra.mxu0 %v2948
    %3979 = vmatpush.bf16.msra.mxu0 %v2947
    %3980 = vmatpush.bf16.msra.mxu0 %v2946
    %3981 = vmatpush.bf16.msra.mxu0 %v2945
    %3982 = vmatpush.bf16.msra.mxu0 %v2944
    %3983 = vmatpush.bf16.msra.mxu0 %v2943
    %3984 = vmatpush.bf16.msra.mxu0 %v2942
    %3985 = vmatmul.bf16.gmra.mxu0 %v911
    %v3986 = vpop.f32.mrf.mxu0
    %v3987 = vadd.f32 %v3974, %v3986
    %v3988 = vpop.f32.mrf.mxu0
    %3989 = vdwg.mxu0
    %3990 = vmatpush.bf16.msra.mxu0 %v2957
    %3991 = vmatpush.bf16.msra.mxu0 %v2956
    %3992 = vmatpush.bf16.msra.mxu0 %v2955
    %3993 = vmatpush.bf16.msra.mxu0 %v2954
    %3994 = vmatpush.bf16.msra.mxu0 %v2953
    %3995 = vmatpush.bf16.msra.mxu0 %v2952
    %3996 = vmatpush.bf16.msra.mxu0 %v2951
    %3997 = vmatpush.bf16.msra.mxu0 %v2950
    %3998 = vmatmul.bf16.gmra.mxu0 %v914
    %v3999 = vpop.f32.mrf.mxu0
    %v4000 = vadd.f32 %v3987, %v3999
    %v4001 = vpop.f32.mrf.mxu0
    %4002 = vdwg.mxu0
    %4003 = vmatpush.bf16.msra.mxu0 %v2965
    %4004 = vmatpush.bf16.msra.mxu0 %v2964
    %4005 = vmatpush.bf16.msra.mxu0 %v2963
    %4006 = vmatpush.bf16.msra.mxu0 %v2962
    %4007 = vmatpush.bf16.msra.mxu0 %v2961
    %4008 = vmatpush.bf16.msra.mxu0 %v2960
    %4009 = vmatpush.bf16.msra.mxu0 %v2959
    %4010 = vmatpush.bf16.msra.mxu0 %v2958
    %4011 = vmatmul.bf16.gmra.mxu0 %v915
    %v4012 = vpop.f32.mrf.mxu0
    %v4013 = vadd.f32 %v4000, %v4012
    %v4014 = vpop.f32.mrf.mxu0
    %4015 = vdwg.mxu0
    %v4016 = vmax.f32 %v4013, 0.0
    %v4017 = vpack.c.bf16 %v4016, %v4016
    %v4018 = vld [vmem:[%s3] sm:$0xf]
    %v4019 = vld [vmem:[%s3 + $0x4] sm:$0xf]
    %v4020 = vld [vmem:[%s3 + $0x8] sm:$0xf]
    %v4021 = vld [vmem:[%s3 + $0xc] sm:$0xf]
    %v4022 = vld [vmem:[%s3 + $0x10] sm:$0xf]
    %v4023 = vld [vmem:[%s3 + $0x14] sm:$0xf]
    %v4024 = vld [vmem:[%s3 + $0x18] sm:$0xf]
    %v4025 = vld [vmem:[%s3 + $0x1c] sm:$0xf]
    %v4026 = vld [vmem:[%s3 + $0x20] sm:$0xf]
    %v4027 = vld [vmem:[%s3 + $0x24] sm:$0xf]
    %v4028 = vld [vmem:[%s3 + $0x28] sm:$0xf]
    %v4029 = vld [vmem:[%s3 + $0x2c] sm:$0xf]
    %v4030 = vld [vmem:[%s3 + $0x30] sm:$0x3]
    %v4031 = vld [vmem:[%s4] sm:$0x1]
    %v4033 = vperm.slane %v4031, 0
    %v4048 = vunpack.c.l.b16 %v4018
    %v4049 = vunpack.c.l.b16 %v4019
    %v4050 = vunpack.c.l.b16 %v4020
    %v4051 = vunpack.c.l.b16 %v4021
    %v4052 = vunpack.c.l.b16 %v4022
    %v4053 = vunpack.c.l.b16 %v4023
    %v4054 = vunpack.c.l.b16 %v4024
    %v4055 = vunpack.c.l.b16 %v4025
    %v4056 = vunpack.c.l.b16 %v4026
    %v4057 = vunpack.c.l.b16 %v4027
    %v4058 = vunpack.c.l.b16 %v4028
    %v4059 = vunpack.c.l.b16 %v4029
    %v4060 = vunpack.c.l.b16 %v4030
    %v4061 = vpack.c.b16 %v4049, %v4048
    %v4062 = vpack.c.b16 %v4051, %v4050
    %v4063 = vpack.c.b16 %v4053, %v4052
    %v4064 = vpack.c.b16 %v4055, %v4054
    %v4065 = vpack.c.b16 %v4057, %v4056
    %v4066 = vpack.c.b16 %v4059, %v4058
    %v4067 = vpack.c.b16 %v4060, %v4060
    %vm4074 = vcmask 818176
    %v4076 = vsel %vm4074, %v4017, 0
    %vm4078 = vcmask 1041408
    %v4080 = vsel %vm4078, %v4067, 0
    %4082 = vmatpush.bf16.msra.mxu0 0
    %4083 = vmatpush.bf16.msra.mxu0 %v4080
    %4084 = vmatpush.bf16.msra.mxu0 %v4066
    %4085 = vmatpush.bf16.msra.mxu0 %v4065
    %4086 = vmatpush.bf16.msra.mxu0 %v4064
    %4087 = vmatpush.bf16.msra.mxu0 %v4063
    %4088 = vmatpush.bf16.msra.mxu0 %v4062
    %4089 = vmatpush.bf16.msra.mxu0 %v4061
    %4090 = vmatmul.bf16.gmra.mxu0 %v4076
    %v4091 = vpop.f32.mrf.mxu0
    %v4092 = vadd.f32 %v4033, %v4091
    %v4093 = vpop.f32.mrf.mxu0
    %4094 = vdwg.mxu0
    %4095 = vst [vmem:[#allocation2] sm:$0xf] %v4092
    // Predicated region
    $region22: #{_lambda_.3} parent=1 // pred_check
      _
    $region23: #{_lambda_.3} parent=1 // pred_check_branch
      %4097 = sbr.rel (0) target = $region25
    $region24: #{_lambda_.3} parent=1 // pred_region
      %4099 = vsyncadd [#allocation3], 0
      %s4101 = sshll.u32 [#allocation2], 4
      %s4102 = int_to_ptr.vmem [resolvable:$true] %s4101
      %s4103 = sshll.u32 %s5, 4
      %s4104 = int_to_ptr.hbm [resolvable:$true] %s4103
      %4106 = dma.vmem_to_hbm [thread:$0]  %s4102, 64, %s4104, [#allocation3]
    $region25: #{_lambda_.3} parent=1 // pred_fallthru
      _
    // Predicated region
    $region26: #{_lambda_.3} parent=1 // pred_check
      _
    $region27: #{_lambda_.3} parent=1 // pred_check_branch
      %4108 = sbr.rel (0) target = $region29
    $region28: #{_lambda_.3} parent=1 // pred_region
      %4110 = dma.done [#allocation3], 64
    $region29: #{_lambda_.3} parent=1 // pred_fallthru
      _
    %4111 = vsyncpa [#allocation3], 1

</llo_original>
